<compile_context>
chip_gen: v7x
topology: tpu7x:2x2x1
jax: 0.10.0
libtpu: 0.0.40
codegen_flags: <defaults>
</compile_context>

<pallas_src>
import functools

import jax
import jax.numpy as jnp
from jax import lax
from jax.experimental import pallas as pl
from jax.experimental.pallas import tpu as pltpu


LANE = 128                      # lane width: Cout padded so outputs stay lane-dense
MAX_TM = 512                    # max output rows (N*Ho*Wo) per tile
MAX_TN = 512                    # max output channels per tile
MAX_TK = 2048                   # contraction columns per tile before K is tiled
VMEM_LIMIT_BYTES = 32 * 1024 * 1024


def _round_up(x, m):
    return (x + m - 1) // m * m


# ------------------------------ Pallas kernel ------------------------------ #

def _conv_bn_relu_kernel(x_ref, w_ref, scale_ref, bias_ref, o_ref, acc_ref):
    # x_ref:     (TM, TK)  bf16 im2col rows for this tile
    # w_ref:     (TK, TN)  bf16 conv weights (HWIO flattened)
    # scale_ref: (1, TN)   f32 folded BN scale = gamma / sqrt(var + eps)
    # bias_ref:  (1, TN)   f32 folded BN shift = beta - mean * scale
    # o_ref:     (TM, TN)  bf16 output tile
    # acc_ref:   (TM, TN)  f32 accumulator scratch (persists across the K axis)
    k = pl.program_id(2)

    @pl.when(k == 0)
    def _():
        acc_ref[...] = jnp.zeros_like(acc_ref)

    acc_ref[...] += jnp.dot(x_ref[...], w_ref[...],
                            preferred_element_type=jnp.float32)

    @pl.when(k == pl.num_programs(2) - 1)
    def _():
        y = acc_ref[...] * scale_ref[...] + bias_ref[...]
        o_ref[...] = jnp.maximum(y, 0.0).astype(o_ref.dtype)


def _pick_tm(m):
    for t in (512, 256, 128):
        if t <= MAX_TM and m % t == 0:
            return t
    return min(256, _round_up(m, 16))


def _pick_tn(n):
    for t in (512, 256, 128):
        if t <= MAX_TN and n % t == 0:
            return t
    return LANE


def _pick_tk(k):
    if k <= MAX_TK:
        return k, k                                  # single full-K block
    for t in range(MAX_TK, LANE - 1, -LANE):         # 128-multiple divisor of K
        if k % t == 0:
            return t, k
    t = _round_up(pl.cdiv(k, pl.cdiv(k, MAX_TK)), LANE)
    return t, _round_up(k, t)                        # pad K as a last resort


def conv_bn_relu_matmul(x2d, w2d, scale, bias):
    """(M,K)bf16 @ (K,Np)bf16 with f32 accumulation + folded BN + ReLU -> bf16.

    Np must already be a multiple of LANE; M and K are padded here as needed.
    """
    m, k = x2d.shape
    k2, n = w2d.shape
    assert k == k2 and n % LANE == 0

    tm = _pick_tm(m)
    mp = _round_up(m, tm)
    tn = _pick_tn(n)
    tk, kp = _pick_tk(k)

    if mp != m or kp != k:
        x2d = jnp.pad(x2d, ((0, mp - m), (0, kp - k)))
    if kp != k:
        w2d = jnp.pad(w2d, ((0, kp - k), (0, 0)))

    grid = (mp // tm, n // tn, kp // tk)
    cost = pl.CostEstimate(
        flops=2 * mp * kp * n,
        transcendentals=0,
        bytes_accessed=(x2d.size * 2 + w2d.size * 2 + mp * n * 2
                        + scale.size * 4 + bias.size * 4))

    out = pl.pallas_call(
        _conv_bn_relu_kernel,
        out_shape=jax.ShapeDtypeStruct((mp, n), jnp.bfloat16),
        grid_spec=pltpu.PrefetchScalarGridSpec(
            num_scalar_prefetch=0,
            grid=grid,
            in_specs=[
                pl.BlockSpec((tm, tk), lambda i, j, kk: (i, kk)),
                pl.BlockSpec((tk, tn), lambda i, j, kk: (kk, j)),
                pl.BlockSpec((1, tn), lambda i, j, kk: (0, j)),
                pl.BlockSpec((1, tn), lambda i, j, kk: (0, j)),
            ],
            out_specs=pl.BlockSpec((tm, tn), lambda i, j, kk: (i, j)),
            scratch_shapes=[pltpu.VMEM((tm, tn), jnp.float32)],
        ),
        compiler_params=pltpu.CompilerParams(
            dimension_semantics=("parallel", "parallel", "arbitrary"),
            vmem_limit_bytes=VMEM_LIMIT_BYTES),
        cost_estimate=cost,
    )(x2d, w2d, scale, bias)
    return out[:m] if mp != m else out


# -------------------------------- JAX glue --------------------------------- #

def im2col_3x3(x_nhwc, stride):
    """Extract 3x3 patches (padding=1) -> (N*Ho*Wo, 9*C)."""
    n, h, w, c = x_nhwc.shape
    xp = jnp.pad(x_nhwc, ((0, 0), (1, 1), (1, 1), (0, 0)))
    ho = (h + 2 - 3) // stride + 1
    wo = (w + 2 - 3) // stride + 1
    cols = []
    for dy in range(3):
        for dx in range(3):
            cols.append(lax.slice(
                xp,
                (0, dy, dx, 0),
                (n, dy + (ho - 1) * stride + 1, dx + (wo - 1) * stride + 1, c),
                (1, stride, stride, 1)))
    patches = jnp.stack(cols, axis=3)          # (N, Ho, Wo, 9, C)
    return patches.reshape(n * ho * wo, 9 * c), ho, wo


def conv_bn_relu(x_nhwc, params, stride):
    """Conv2d(3x3, pad=1, stride, bias=False) + BatchNorm2d(eval) + ReLU.

    `x_nhwc` is bf16 and may carry zero-padded input channels (from the
    previous stage's lane padding). The output carries Cout padded up to a
    multiple of LANE so every kernel output is lane-dense; padded channels are
    exact zeros and are sliced off only at the very end.
    """
    w, gamma, beta, mean, var = params          # w: (3,3,Cin,Cout) HWIO, f32
    eps = 1e-5
    cin, cout = w.shape[2], w.shape[3]
    cin_eff = x_nhwc.shape[3]
    cout_p = _round_up(cout, LANE)

    scale = gamma / jnp.sqrt(var + eps)
    bias = beta - mean * scale
    scale = jnp.pad(scale, (0, cout_p - cout)).reshape(1, cout_p)
    bias = jnp.pad(bias, (0, cout_p - cout)).reshape(1, cout_p)

    wp = jnp.pad(w, ((0, 0), (0, 0), (0, cin_eff - cin), (0, cout_p - cout)))
    w2d = wp.reshape(9 * cin_eff, cout_p).astype(jnp.bfloat16)

    n = x_nhwc.shape[0]
    x2d, ho, wo = im2col_3x3(x_nhwc.astype(jnp.bfloat16), stride)
    out2d = conv_bn_relu_matmul(x2d, w2d, scale, bias)
    return out2d.reshape(n, ho, wo, cout_p)


def double_conv(x_nhwc, p1, p2, first_stride=1):
    # TODO(synk): fuse the two convs into one pallas_call (keep the conv1 tile
    #             in VMEM scratch, halo for conv2) to drop an HBM round-trip.
    x = conv_bn_relu(x_nhwc, p1, first_stride)
    x = conv_bn_relu(x, p2, 1)
    return x


def strided_encoder(x_nchw, params):
    # NCHW -> NHWC (bf16) for the kernels; features returned as f32 NCHW.
    x = jnp.transpose(x_nchw, (0, 2, 3, 1)).astype(jnp.bfloat16)
    x1 = double_conv(x,  *params["initial"], first_stride=1)
    x2 = double_conv(x1, *params["down1"],   first_stride=2)
    x3 = double_conv(x2, *params["down2"],   first_stride=2)
    x4 = double_conv(x3, *params["down3"],   first_stride=2)
    x5 = double_conv(x4, *params["down4"],   first_stride=2)
    feats = (x1, x2, x3, x4, x5)
    names = ["initial", "down1", "down2", "down3", "down4"]
    true_c = [params[nm][1][0].shape[3] for nm in names]   # second conv's Cout
    return tuple(
        jnp.transpose(f[..., :c], (0, 3, 1, 2)).astype(jnp.float32)
        for f, c in zip(feats, true_c))


# --------------------------- pure-JAX reference ----------------------------- #

def _ref_conv_bn_relu(x_nhwc, params, stride):
    w, gamma, beta, mean, var = params
    eps = 1e-5
    y = lax.conv_general_dilated(
        x_nhwc, w, window_strides=(stride, stride), padding=((1, 1), (1, 1)),
        dimension_numbers=("NHWC", "HWIO", "NHWC"))
    scale = gamma / jnp.sqrt(var + eps)
    return jnp.maximum(y * scale + (beta - mean * scale), 0.0)


def _ref_encoder(x_nchw, params):
    x = jnp.transpose(x_nchw, (0, 2, 3, 1)).astype(jnp.float32)
    feats = []
    for name, stride in [("initial", 1), ("down1", 2), ("down2", 2),
                         ("down3", 2), ("down4", 2)]:
        p1, p2 = params[name]
        x = _ref_conv_bn_relu(x, p1, stride)
        x = _ref_conv_bn_relu(x, p2, 1)
        feats.append(jnp.transpose(x, (0, 3, 1, 2)))
    return tuple(feats)


# --------------------------- deterministic params --------------------------- #

def init_conv_bn(key, cin, cout):
    k1, k2, k3, k4, k5 = jax.random.split(key, 5)
    w = jax.random.normal(k1, (3, 3, cin, cout), jnp.float32) / jnp.sqrt(9.0 * cin)
    gamma = 1.0 + 0.1 * jax.random.normal(k2, (cout,), jnp.float32)
    beta = 0.1 * jax.random.normal(k3, (cout,), jnp.float32)
    mean = 0.1 * jax.random.normal(k4, (cout,), jnp.float32)
    var = 1.0 + 0.1 * jnp.abs(jax.random.normal(k5, (cout,), jnp.float32))
    return (w, gamma, beta, mean, var)


def init_block(key, cin, cout):
    k1, k2 = jax.random.split(key)
    return (init_conv_bn(k1, cin, cout), init_conv_bn(k2, cout, cout))


def init_params(key, in_channels, features):
    ks = jax.random.split(key, 5)
    return {
        "initial": init_block(ks[0], in_channels, features[0]),
        "down1":   init_block(ks[1], features[0], features[1]),
        "down2":   init_block(ks[2], features[1], features[2]),
        "down3":   init_block(ks[3], features[2], features[3]),
        "down4":   init_block(ks[4], features[3], features[4]),
    }


# ----------------------------------- main ----------------------------------- #

if __name__ == "__main__":
    key = jax.random.PRNGKey(0)
    k_params, k_x = jax.random.split(key)

    in_channels = 3
    features = [8, 16, 32, 64, 128]      # scaled-down analogue of [64..1024]
    params = init_params(k_params, in_channels, features)

    x = jax.random.normal(k_x, (2, in_channels, 16, 16), jnp.float32)  # NCHW

    fwd = jax.jit(functools.partial(strided_encoder, params=params))
    feats = fwd(x)
    feats = jax.block_until_ready(feats)

    expected = [(2, features[0], 16, 16), (2, features[1], 8, 8),
                (2, features[2], 4, 4), (2, features[3], 2, 2),
                (2, features[4], 1, 1)]
    assert [tuple(f.shape) for f in feats] == expected, \
        [tuple(f.shape) for f in feats]
    assert all(bool(jnp.all(jnp.isfinite(f))) for f in feats)

    # Numerical check vs. pure-JAX f32 reference (bf16 inputs -> loose tol).
    feats_ref = _ref_encoder(x, params)
    for f, r in zip(feats, feats_ref):
        num = jnp.linalg.norm((f - r).ravel())
        den = jnp.linalg.norm(r.ravel()) + 1e-6
        rel = float(num / den)
        assert rel < 0.1, f"relative error {rel} too large"

    print("KERNEL_OK")
</pallas_src>

<mosaic_0001>
module attributes {stable_mosaic.version = 11 : i64} {
  func.func @_conv_bn_relu_kernel(%arg0: i32, %arg1: i32, %arg2: i32, %arg3: memref<512x27xbf16, #tpu.memory_space<vmem>>, %arg4: memref<27x128xbf16, #tpu.memory_space<vmem>>, %arg5: memref<1x128xf32, #tpu.memory_space<vmem>>, %arg6: memref<1x128xf32, #tpu.memory_space<vmem>>, %arg7: memref<512x128xbf16, #tpu.memory_space<vmem>>, %arg8: memref<512x128xf32, #tpu.memory_space<vmem>>) attributes {dimension_semantics = [#tpu.dimension_semantics<parallel>, #tpu.dimension_semantics<parallel>, #tpu.dimension_semantics<arbitrary>], iteration_bounds = array<i64: 1, 1, 1>, scalar_prefetch = 0 : i64, scratch_operands = 1 : i64, tpu.core_type = #tpu.core_type<tc>, window_params = [{transform_indices = @transform_0, window_bounds = array<i64: 512, 27>}, {transform_indices = @transform_1, window_bounds = array<i64: 27, 128>}, {transform_indices = @transform_2, window_bounds = array<i64: 1, 128>}, {transform_indices = @transform_3, window_bounds = array<i64: 1, 128>}, {transform_indices = @transform_4, window_bounds = array<i64: 512, 128>}]} {
    %c0_i32 = arith.constant 0 : i32
    %0 = arith.cmpi eq, %arg2, %c0_i32 : i32
    %1 = arith.extui %0 : i1 to i32
    %c0_i32_0 = arith.constant 0 : i32
    %2 = arith.cmpi ne, %1, %c0_i32_0 : i32
    scf.if %2 {
      %cst_10 = arith.constant 0.000000e+00 : f32
      %12 = vector.broadcast %cst_10 : f32 to vector<512x128xf32>
      %c0_11 = arith.constant 0 : index
      %c0_12 = arith.constant 0 : index
      %13 = vector.load %arg8[%c0_11, %c0_12] : memref<512x128xf32, #tpu.memory_space<vmem>>, vector<512x128xf32>
      tpu.vector_store %arg8[%c0_11, %c0_12], %12 {strides = array<i32>} : memref<512x128xf32, #tpu.memory_space<vmem>>, vector<512x128xf32>,
    } else {
    }
    %c0 = arith.constant 0 : index
    %c0_1 = arith.constant 0 : index
    %3 = vector.load %arg8[%c0, %c0_1] : memref<512x128xf32, #tpu.memory_space<vmem>>, vector<512x128xf32>
    %c0_2 = arith.constant 0 : index
    %c0_3 = arith.constant 0 : index
    %4 = vector.load %arg3[%c0_2, %c0_3] : memref<512x27xbf16, #tpu.memory_space<vmem>>, vector<512x27xbf16>
    %c0_4 = arith.constant 0 : index
    %c0_5 = arith.constant 0 : index
    %5 = vector.load %arg4[%c0_4, %c0_5] : memref<27x128xbf16, #tpu.memory_space<vmem>>, vector<27x128xbf16>
    %cst = arith.constant dense<0.000000e+00> : vector<512x128xf32>
    %6 = tpu.matmul %4, %5, %cst {dimension_numbers = #tpu.dot_dimension_numbers<[1], [0], [0], [1], [0, 0, 1, 1], [], []>} : vector<512x27xbf16>, vector<27x128xbf16>, vector<512x128xf32> -> vector<512x128xf32>
    %7 = arith.addf %3, %6 : vector<512x128xf32>
    %c0_6 = arith.constant 0 : index
    %c0_7 = arith.constant 0 : index
    %8 = vector.load %arg8[%c0_6, %c0_7] : memref<512x128xf32, #tpu.memory_space<vmem>>, vector<512x128xf32>
    tpu.vector_store %arg8[%c0_6, %c0_7], %7 {strides = array<i32>} : memref<512x128xf32, #tpu.memory_space<vmem>>, vector<512x128xf32>,
    %c0_i32_8 = arith.constant 0 : i32
    %9 = arith.cmpi eq, %arg2, %c0_i32_8 : i32
    %10 = arith.extui %9 : i1 to i32
    %c0_i32_9 = arith.constant 0 : i32
    %11 = arith.cmpi ne, %10, %c0_i32_9 : i32
    scf.if %11 {
      %c0_10 = arith.constant 0 : index
      %c0_11 = arith.constant 0 : index
      %12 = vector.load %arg8[%c0_10, %c0_11] : memref<512x128xf32, #tpu.memory_space<vmem>>, vector<512x128xf32>
      %c0_12 = arith.constant 0 : index
      %c0_13 = arith.constant 0 : index
      %13 = vector.load %arg5[%c0_12, %c0_13] : memref<1x128xf32, #tpu.memory_space<vmem>>, vector<1x128xf32>
      %14 = vector.broadcast %13 : vector<1x128xf32> to vector<512x128xf32>
      %15 = arith.mulf %12, %14 : vector<512x128xf32>
      %c0_14 = arith.constant 0 : index
      %c0_15 = arith.constant 0 : index
      %16 = vector.load %arg6[%c0_14, %c0_15] : memref<1x128xf32, #tpu.memory_space<vmem>>, vector<1x128xf32>
      %17 = vector.broadcast %16 : vector<1x128xf32> to vector<512x128xf32>
      %18 = arith.addf %15, %17 : vector<512x128xf32>
      %cst_16 = arith.constant 0.000000e+00 : f32
      %19 = vector.broadcast %cst_16 : f32 to vector<512x128xf32>
      %20 = arith.maximumf %18, %19 : vector<512x128xf32>
      %21 = arith.truncf %20 : vector<512x128xf32> to vector<512x128xbf16>
      %c0_17 = arith.constant 0 : index
      %c0_18 = arith.constant 0 : index
      %22 = vector.load %arg7[%c0_17, %c0_18] : memref<512x128xbf16, #tpu.memory_space<vmem>>, vector<512x128xbf16>
      tpu.vector_store %arg7[%c0_17, %c0_18], %21 {strides = array<i32>} : memref<512x128xbf16, #tpu.memory_space<vmem>>, vector<512x128xbf16>,
    } else {
    }
    return
  }
  func.func @transform_0(%arg0: i32, %arg1: i32, %arg2: i32) -> (i32, i32) {
    %c0_i32 = arith.constant 0 : i32
    return %arg0, %arg2 : i32, i32
  }
  func.func @transform_1(%arg0: i32, %arg1: i32, %arg2: i32) -> (i32, i32) {
    %c0_i32 = arith.constant 0 : i32
    return %arg2, %arg1 : i32, i32
  }
  func.func @transform_2(%arg0: i32, %arg1: i32, %arg2: i32) -> (i32, i32) {
    %c0_i32 = arith.constant 0 : i32
    %c0_i32_0 = arith.constant 0 : i32
    return %c0_i32, %arg1 : i32, i32
  }
  func.func @transform_3(%arg0: i32, %arg1: i32, %arg2: i32) -> (i32, i32) {
    %c0_i32 = arith.constant 0 : i32
    %c0_i32_0 = arith.constant 0 : i32
    return %c0_i32, %arg1 : i32, i32
  }
  func.func @transform_4(%arg0: i32, %arg1: i32, %arg2: i32) -> (i32, i32) {
    %c0_i32 = arith.constant 0 : i32
    return %arg0, %arg1 : i32, i32
  }
}

module attributes {stable_mosaic.version = 11 : i64} {
  func.func @_conv_bn_relu_kernel(%arg0: i32, %arg1: i32, %arg2: i32, %arg3: memref<512x1152xbf16, #tpu.memory_space<vmem>>, %arg4: memref<1152x128xbf16, #tpu.memory_space<vmem>>, %arg5: memref<1x128xf32, #tpu.memory_space<vmem>>, %arg6: memref<1x128xf32, #tpu.memory_space<vmem>>, %arg7: memref<512x128xbf16, #tpu.memory_space<vmem>>, %arg8: memref<512x128xf32, #tpu.memory_space<vmem>>) attributes {dimension_semantics = [#tpu.dimension_semantics<parallel>, #tpu.dimension_semantics<parallel>, #tpu.dimension_semantics<arbitrary>], iteration_bounds = array<i64: 1, 1, 1>, scalar_prefetch = 0 : i64, scratch_operands = 1 : i64, tpu.core_type = #tpu.core_type<tc>, window_params = [{transform_indices = @transform_0, window_bounds = array<i64: 512, 1152>}, {transform_indices = @transform_1, window_bounds = array<i64: 1152, 128>}, {transform_indices = @transform_2, window_bounds = array<i64: 1, 128>}, {transform_indices = @transform_3, window_bounds = array<i64: 1, 128>}, {transform_indices = @transform_4, window_bounds = array<i64: 512, 128>}]} {
    %c0_i32 = arith.constant 0 : i32
    %0 = arith.cmpi eq, %arg2, %c0_i32 : i32
    %1 = arith.extui %0 : i1 to i32
    %c0_i32_0 = arith.constant 0 : i32
    %2 = arith.cmpi ne, %1, %c0_i32_0 : i32
    scf.if %2 {
      %cst_10 = arith.constant 0.000000e+00 : f32
      %12 = vector.broadcast %cst_10 : f32 to vector<512x128xf32>
      %c0_11 = arith.constant 0 : index
      %c0_12 = arith.constant 0 : index
      %13 = vector.load %arg8[%c0_11, %c0_12] : memref<512x128xf32, #tpu.memory_space<vmem>>, vector<512x128xf32>
      tpu.vector_store %arg8[%c0_11, %c0_12], %12 {strides = array<i32>} : memref<512x128xf32, #tpu.memory_space<vmem>>, vector<512x128xf32>,
    } else {
    }
    %c0 = arith.constant 0 : index
    %c0_1 = arith.constant 0 : index
    %3 = vector.load %arg8[%c0, %c0_1] : memref<512x128xf32, #tpu.memory_space<vmem>>, vector<512x128xf32>
    %c0_2 = arith.constant 0 : index
    %c0_3 = arith.constant 0 : index
    %4 = vector.load %arg3[%c0_2, %c0_3] : memref<512x1152xbf16, #tpu.memory_space<vmem>>, vector<512x1152xbf16>
    %c0_4 = arith.constant 0 : index
    %c0_5 = arith.constant 0 : index
    %5 = vector.load %arg4[%c0_4, %c0_5] : memref<1152x128xbf16, #tpu.memory_space<vmem>>, vector<1152x128xbf16>
    %cst = arith.constant dense<0.000000e+00> : vector<512x128xf32>
    %6 = tpu.matmul %4, %5, %cst {dimension_numbers = #tpu.dot_dimension_numbers<[1], [0], [0], [1], [0, 0, 1, 1], [], []>} : vector<512x1152xbf16>, vector<1152x128xbf16>, vector<512x128xf32> -> vector<512x128xf32>
    %7 = arith.addf %3, %6 : vector<512x128xf32>
    %c0_6 = arith.constant 0 : index
    %c0_7 = arith.constant 0 : index
    %8 = vector.load %arg8[%c0_6, %c0_7] : memref<512x128xf32, #tpu.memory_space<vmem>>, vector<512x128xf32>
    tpu.vector_store %arg8[%c0_6, %c0_7], %7 {strides = array<i32>} : memref<512x128xf32, #tpu.memory_space<vmem>>, vector<512x128xf32>,
    %c0_i32_8 = arith.constant 0 : i32
    %9 = arith.cmpi eq, %arg2, %c0_i32_8 : i32
    %10 = arith.extui %9 : i1 to i32
    %c0_i32_9 = arith.constant 0 : i32
    %11 = arith.cmpi ne, %10, %c0_i32_9 : i32
    scf.if %11 {
      %c0_10 = arith.constant 0 : index
      %c0_11 = arith.constant 0 : index
      %12 = vector.load %arg8[%c0_10, %c0_11] : memref<512x128xf32, #tpu.memory_space<vmem>>, vector<512x128xf32>
      %c0_12 = arith.constant 0 : index
      %c0_13 = arith.constant 0 : index
      %13 = vector.load %arg5[%c0_12, %c0_13] : memref<1x128xf32, #tpu.memory_space<vmem>>, vector<1x128xf32>
      %14 = vector.broadcast %13 : vector<1x128xf32> to vector<512x128xf32>
      %15 = arith.mulf %12, %14 : vector<512x128xf32>
      %c0_14 = arith.constant 0 : index
      %c0_15 = arith.constant 0 : index
      %16 = vector.load %arg6[%c0_14, %c0_15] : memref<1x128xf32, #tpu.memory_space<vmem>>, vector<1x128xf32>
      %17 = vector.broadcast %16 : vector<1x128xf32> to vector<512x128xf32>
      %18 = arith.addf %15, %17 : vector<512x128xf32>
      %cst_16 = arith.constant 0.000000e+00 : f32
      %19 = vector.broadcast %cst_16 : f32 to vector<512x128xf32>
      %20 = arith.maximumf %18, %19 : vector<512x128xf32>
      %21 = arith.truncf %20 : vector<512x128xf32> to vector<512x128xbf16>
      %c0_17 = arith.constant 0 : index
      %c0_18 = arith.constant 0 : index
      %22 = vector.load %arg7[%c0_17, %c0_18] : memref<512x128xbf16, #tpu.memory_space<vmem>>, vector<512x128xbf16>
      tpu.vector_store %arg7[%c0_17, %c0_18], %21 {strides = array<i32>} : memref<512x128xbf16, #tpu.memory_space<vmem>>, vector<512x128xbf16>,
    } else {
    }
    return
  }
  func.func @transform_0(%arg0: i32, %arg1: i32, %arg2: i32) -> (i32, i32) {
    %c0_i32 = arith.constant 0 : i32
    return %arg0, %arg2 : i32, i32
  }
  func.func @transform_1(%arg0: i32, %arg1: i32, %arg2: i32) -> (i32, i32) {
    %c0_i32 = arith.constant 0 : i32
    return %arg2, %arg1 : i32, i32
  }
  func.func @transform_2(%arg0: i32, %arg1: i32, %arg2: i32) -> (i32, i32) {
    %c0_i32 = arith.constant 0 : i32
    %c0_i32_0 = arith.constant 0 : i32
    return %c0_i32, %arg1 : i32, i32
  }
  func.func @transform_3(%arg0: i32, %arg1: i32, %arg2: i32) -> (i32, i32) {
    %c0_i32 = arith.constant 0 : i32
    %c0_i32_0 = arith.constant 0 : i32
    return %c0_i32, %arg1 : i32, i32
  }
  func.func @transform_4(%arg0: i32, %arg1: i32, %arg2: i32) -> (i32, i32) {
    %c0_i32 = arith.constant 0 : i32
    return %arg0, %arg1 : i32, i32
  }
}

module attributes {stable_mosaic.version = 11 : i64} {
  func.func @_conv_bn_relu_kernel(%arg0: i32, %arg1: i32, %arg2: i32, %arg3: memref<128x1152xbf16, #tpu.memory_space<vmem>>, %arg4: memref<1152x128xbf16, #tpu.memory_space<vmem>>, %arg5: memref<1x128xf32, #tpu.memory_space<vmem>>, %arg6: memref<1x128xf32, #tpu.memory_space<vmem>>, %arg7: memref<128x128xbf16, #tpu.memory_space<vmem>>, %arg8: memref<128x128xf32, #tpu.memory_space<vmem>>) attributes {dimension_semantics = [#tpu.dimension_semantics<parallel>, #tpu.dimension_semantics<parallel>, #tpu.dimension_semantics<arbitrary>], iteration_bounds = array<i64: 1, 1, 1>, scalar_prefetch = 0 : i64, scratch_operands = 1 : i64, tpu.core_type = #tpu.core_type<tc>, window_params = [{transform_indices = @transform_0, window_bounds = array<i64: 128, 1152>}, {transform_indices = @transform_1, window_bounds = array<i64: 1152, 128>}, {transform_indices = @transform_2, window_bounds = array<i64: 1, 128>}, {transform_indices = @transform_3, window_bounds = array<i64: 1, 128>}, {transform_indices = @transform_4, window_bounds = array<i64: 128, 128>}]} {
    %c0_i32 = arith.constant 0 : i32
    %0 = arith.cmpi eq, %arg2, %c0_i32 : i32
    %1 = arith.extui %0 : i1 to i32
    %c0_i32_0 = arith.constant 0 : i32
    %2 = arith.cmpi ne, %1, %c0_i32_0 : i32
    scf.if %2 {
      %cst_10 = arith.constant 0.000000e+00 : f32
      %12 = vector.broadcast %cst_10 : f32 to vector<128x128xf32>
      %c0_11 = arith.constant 0 : index
      %c0_12 = arith.constant 0 : index
      %13 = vector.load %arg8[%c0_11, %c0_12] : memref<128x128xf32, #tpu.memory_space<vmem>>, vector<128x128xf32>
      tpu.vector_store %arg8[%c0_11, %c0_12], %12 {strides = array<i32>} : memref<128x128xf32, #tpu.memory_space<vmem>>, vector<128x128xf32>,
    } else {
    }
    %c0 = arith.constant 0 : index
    %c0_1 = arith.constant 0 : index
    %3 = vector.load %arg8[%c0, %c0_1] : memref<128x128xf32, #tpu.memory_space<vmem>>, vector<128x128xf32>
    %c0_2 = arith.constant 0 : index
    %c0_3 = arith.constant 0 : index
    %4 = vector.load %arg3[%c0_2, %c0_3] : memref<128x1152xbf16, #tpu.memory_space<vmem>>, vector<128x1152xbf16>
    %c0_4 = arith.constant 0 : index
    %c0_5 = arith.constant 0 : index
    %5 = vector.load %arg4[%c0_4, %c0_5] : memref<1152x128xbf16, #tpu.memory_space<vmem>>, vector<1152x128xbf16>
    %cst = arith.constant dense<0.000000e+00> : vector<128x128xf32>
    %6 = tpu.matmul %4, %5, %cst {dimension_numbers = #tpu.dot_dimension_numbers<[1], [0], [0], [1], [0, 0, 1, 1], [], []>} : vector<128x1152xbf16>, vector<1152x128xbf16>, vector<128x128xf32> -> vector<128x128xf32>
    %7 = arith.addf %3, %6 : vector<128x128xf32>
    %c0_6 = arith.constant 0 : index
    %c0_7 = arith.constant 0 : index
    %8 = vector.load %arg8[%c0_6, %c0_7] : memref<128x128xf32, #tpu.memory_space<vmem>>, vector<128x128xf32>
    tpu.vector_store %arg8[%c0_6, %c0_7], %7 {strides = array<i32>} : memref<128x128xf32, #tpu.memory_space<vmem>>, vector<128x128xf32>,
    %c0_i32_8 = arith.constant 0 : i32
    %9 = arith.cmpi eq, %arg2, %c0_i32_8 : i32
    %10 = arith.extui %9 : i1 to i32
    %c0_i32_9 = arith.constant 0 : i32
    %11 = arith.cmpi ne, %10, %c0_i32_9 : i32
    scf.if %11 {
      %c0_10 = arith.constant 0 : index
      %c0_11 = arith.constant 0 : index
      %12 = vector.load %arg8[%c0_10, %c0_11] : memref<128x128xf32, #tpu.memory_space<vmem>>, vector<128x128xf32>
      %c0_12 = arith.constant 0 : index
      %c0_13 = arith.constant 0 : index
      %13 = vector.load %arg5[%c0_12, %c0_13] : memref<1x128xf32, #tpu.memory_space<vmem>>, vector<1x128xf32>
      %14 = vector.broadcast %13 : vector<1x128xf32> to vector<128x128xf32>
      %15 = arith.mulf %12, %14 : vector<128x128xf32>
      %c0_14 = arith.constant 0 : index
      %c0_15 = arith.constant 0 : index
      %16 = vector.load %arg6[%c0_14, %c0_15] : memref<1x128xf32, #tpu.memory_space<vmem>>, vector<1x128xf32>
      %17 = vector.broadcast %16 : vector<1x128xf32> to vector<128x128xf32>
      %18 = arith.addf %15, %17 : vector<128x128xf32>
      %cst_16 = arith.constant 0.000000e+00 : f32
      %19 = vector.broadcast %cst_16 : f32 to vector<128x128xf32>
      %20 = arith.maximumf %18, %19 : vector<128x128xf32>
      %21 = arith.truncf %20 : vector<128x128xf32> to vector<128x128xbf16>
      %c0_17 = arith.constant 0 : index
      %c0_18 = arith.constant 0 : index
      %22 = vector.load %arg7[%c0_17, %c0_18] : memref<128x128xbf16, #tpu.memory_space<vmem>>, vector<128x128xbf16>
      tpu.vector_store %arg7[%c0_17, %c0_18], %21 {strides = array<i32>} : memref<128x128xbf16, #tpu.memory_space<vmem>>, vector<128x128xbf16>,
    } else {
    }
    return
  }
  func.func @transform_0(%arg0: i32, %arg1: i32, %arg2: i32) -> (i32, i32) {
    %c0_i32 = arith.constant 0 : i32
    return %arg0, %arg2 : i32, i32
  }
  func.func @transform_1(%arg0: i32, %arg1: i32, %arg2: i32) -> (i32, i32) {
    %c0_i32 = arith.constant 0 : i32
    return %arg2, %arg1 : i32, i32
  }
  func.func @transform_2(%arg0: i32, %arg1: i32, %arg2: i32) -> (i32, i32) {
    %c0_i32 = arith.constant 0 : i32
    %c0_i32_0 = arith.constant 0 : i32
    return %c0_i32, %arg1 : i32, i32
  }
  func.func @transform_3(%arg0: i32, %arg1: i32, %arg2: i32) -> (i32, i32) {
    %c0_i32 = arith.constant 0 : i32
    %c0_i32_0 = arith.constant 0 : i32
    return %c0_i32, %arg1 : i32, i32
  }
  func.func @transform_4(%arg0: i32, %arg1: i32, %arg2: i32) -> (i32, i32) {
    %c0_i32 = arith.constant 0 : i32
    return %arg0, %arg1 : i32, i32
  }
}

module attributes {stable_mosaic.version = 11 : i64} {
  func.func @_conv_bn_relu_kernel(%arg0: i32, %arg1: i32, %arg2: i32, %arg3: memref<32x1152xbf16, #tpu.memory_space<vmem>>, %arg4: memref<1152x128xbf16, #tpu.memory_space<vmem>>, %arg5: memref<1x128xf32, #tpu.memory_space<vmem>>, %arg6: memref<1x128xf32, #tpu.memory_space<vmem>>, %arg7: memref<32x128xbf16, #tpu.memory_space<vmem>>, %arg8: memref<32x128xf32, #tpu.memory_space<vmem>>) attributes {dimension_semantics = [#tpu.dimension_semantics<parallel>, #tpu.dimension_semantics<parallel>, #tpu.dimension_semantics<arbitrary>], iteration_bounds = array<i64: 1, 1, 1>, scalar_prefetch = 0 : i64, scratch_operands = 1 : i64, tpu.core_type = #tpu.core_type<tc>, window_params = [{transform_indices = @transform_0, window_bounds = array<i64: 32, 1152>}, {transform_indices = @transform_1, window_bounds = array<i64: 1152, 128>}, {transform_indices = @transform_2, window_bounds = array<i64: 1, 128>}, {transform_indices = @transform_3, window_bounds = array<i64: 1, 128>}, {transform_indices = @transform_4, window_bounds = array<i64: 32, 128>}]} {
    %c0_i32 = arith.constant 0 : i32
    %0 = arith.cmpi eq, %arg2, %c0_i32 : i32
    %1 = arith.extui %0 : i1 to i32
    %c0_i32_0 = arith.constant 0 : i32
    %2 = arith.cmpi ne, %1, %c0_i32_0 : i32
    scf.if %2 {
      %cst_10 = arith.constant 0.000000e+00 : f32
      %12 = vector.broadcast %cst_10 : f32 to vector<32x128xf32>
      %c0_11 = arith.constant 0 : index
      %c0_12 = arith.constant 0 : index
      %13 = vector.load %arg8[%c0_11, %c0_12] : memref<32x128xf32, #tpu.memory_space<vmem>>, vector<32x128xf32>
      tpu.vector_store %arg8[%c0_11, %c0_12], %12 {strides = array<i32>} : memref<32x128xf32, #tpu.memory_space<vmem>>, vector<32x128xf32>,
    } else {
    }
    %c0 = arith.constant 0 : index
    %c0_1 = arith.constant 0 : index
    %3 = vector.load %arg8[%c0, %c0_1] : memref<32x128xf32, #tpu.memory_space<vmem>>, vector<32x128xf32>
    %c0_2 = arith.constant 0 : index
    %c0_3 = arith.constant 0 : index
    %4 = vector.load %arg3[%c0_2, %c0_3] : memref<32x1152xbf16, #tpu.memory_space<vmem>>, vector<32x1152xbf16>
    %c0_4 = arith.constant 0 : index
    %c0_5 = arith.constant 0 : index
    %5 = vector.load %arg4[%c0_4, %c0_5] : memref<1152x128xbf16, #tpu.memory_space<vmem>>, vector<1152x128xbf16>
    %cst = arith.constant dense<0.000000e+00> : vector<32x128xf32>
    %6 = tpu.matmul %4, %5, %cst {dimension_numbers = #tpu.dot_dimension_numbers<[1], [0], [0], [1], [0, 0, 1, 1], [], []>} : vector<32x1152xbf16>, vector<1152x128xbf16>, vector<32x128xf32> -> vector<32x128xf32>
    %7 = arith.addf %3, %6 : vector<32x128xf32>
    %c0_6 = arith.constant 0 : index
    %c0_7 = arith.constant 0 : index
    %8 = vector.load %arg8[%c0_6, %c0_7] : memref<32x128xf32, #tpu.memory_space<vmem>>, vector<32x128xf32>
    tpu.vector_store %arg8[%c0_6, %c0_7], %7 {strides = array<i32>} : memref<32x128xf32, #tpu.memory_space<vmem>>, vector<32x128xf32>,
    %c0_i32_8 = arith.constant 0 : i32
    %9 = arith.cmpi eq, %arg2, %c0_i32_8 : i32
    %10 = arith.extui %9 : i1 to i32
    %c0_i32_9 = arith.constant 0 : i32
    %11 = arith.cmpi ne, %10, %c0_i32_9 : i32
    scf.if %11 {
      %c0_10 = arith.constant 0 : index
      %c0_11 = arith.constant 0 : index
      %12 = vector.load %arg8[%c0_10, %c0_11] : memref<32x128xf32, #tpu.memory_space<vmem>>, vector<32x128xf32>
      %c0_12 = arith.constant 0 : index
      %c0_13 = arith.constant 0 : index
      %13 = vector.load %arg5[%c0_12, %c0_13] : memref<1x128xf32, #tpu.memory_space<vmem>>, vector<1x128xf32>
      %14 = vector.broadcast %13 : vector<1x128xf32> to vector<32x128xf32>
      %15 = arith.mulf %12, %14 : vector<32x128xf32>
      %c0_14 = arith.constant 0 : index
      %c0_15 = arith.constant 0 : index
      %16 = vector.load %arg6[%c0_14, %c0_15] : memref<1x128xf32, #tpu.memory_space<vmem>>, vector<1x128xf32>
      %17 = vector.broadcast %16 : vector<1x128xf32> to vector<32x128xf32>
      %18 = arith.addf %15, %17 : vector<32x128xf32>
      %cst_16 = arith.constant 0.000000e+00 : f32
      %19 = vector.broadcast %cst_16 : f32 to vector<32x128xf32>
      %20 = arith.maximumf %18, %19 : vector<32x128xf32>
      %21 = arith.truncf %20 : vector<32x128xf32> to vector<32x128xbf16>
      %c0_17 = arith.constant 0 : index
      %c0_18 = arith.constant 0 : index
      %22 = vector.load %arg7[%c0_17, %c0_18] : memref<32x128xbf16, #tpu.memory_space<vmem>>, vector<32x128xbf16>
      tpu.vector_store %arg7[%c0_17, %c0_18], %21 {strides = array<i32>} : memref<32x128xbf16, #tpu.memory_space<vmem>>, vector<32x128xbf16>,
    } else {
    }
    return
  }
  func.func @transform_0(%arg0: i32, %arg1: i32, %arg2: i32) -> (i32, i32) {
    %c0_i32 = arith.constant 0 : i32
    return %arg0, %arg2 : i32, i32
  }
  func.func @transform_1(%arg0: i32, %arg1: i32, %arg2: i32) -> (i32, i32) {
    %c0_i32 = arith.constant 0 : i32
    return %arg2, %arg1 : i32, i32
  }
  func.func @transform_2(%arg0: i32, %arg1: i32, %arg2: i32) -> (i32, i32) {
    %c0_i32 = arith.constant 0 : i32
    %c0_i32_0 = arith.constant 0 : i32
    return %c0_i32, %arg1 : i32, i32
  }
  func.func @transform_3(%arg0: i32, %arg1: i32, %arg2: i32) -> (i32, i32) {
    %c0_i32 = arith.constant 0 : i32
    %c0_i32_0 = arith.constant 0 : i32
    return %c0_i32, %arg1 : i32, i32
  }
  func.func @transform_4(%arg0: i32, %arg1: i32, %arg2: i32) -> (i32, i32) {
    %c0_i32 = arith.constant 0 : i32
    return %arg0, %arg1 : i32, i32
  }
}

module attributes {stable_mosaic.version = 11 : i64} {
  func.func @_conv_bn_relu_kernel(%arg0: i32, %arg1: i32, %arg2: i32, %arg3: memref<16x1152xbf16, #tpu.memory_space<vmem>>, %arg4: memref<1152x128xbf16, #tpu.memory_space<vmem>>, %arg5: memref<1x128xf32, #tpu.memory_space<vmem>>, %arg6: memref<1x128xf32, #tpu.memory_space<vmem>>, %arg7: memref<16x128xbf16, #tpu.memory_space<vmem>>, %arg8: memref<16x128xf32, #tpu.memory_space<vmem>>) attributes {dimension_semantics = [#tpu.dimension_semantics<parallel>, #tpu.dimension_semantics<parallel>, #tpu.dimension_semantics<arbitrary>], iteration_bounds = array<i64: 1, 1, 1>, scalar_prefetch = 0 : i64, scratch_operands = 1 : i64, tpu.core_type = #tpu.core_type<tc>, window_params = [{transform_indices = @transform_0, window_bounds = array<i64: 16, 1152>}, {transform_indices = @transform_1, window_bounds = array<i64: 1152, 128>}, {transform_indices = @transform_2, window_bounds = array<i64: 1, 128>}, {transform_indices = @transform_3, window_bounds = array<i64: 1, 128>}, {transform_indices = @transform_4, window_bounds = array<i64: 16, 128>}]} {
    %c0_i32 = arith.constant 0 : i32
    %0 = arith.cmpi eq, %arg2, %c0_i32 : i32
    %1 = arith.extui %0 : i1 to i32
    %c0_i32_0 = arith.constant 0 : i32
    %2 = arith.cmpi ne, %1, %c0_i32_0 : i32
    scf.if %2 {
      %cst_10 = arith.constant 0.000000e+00 : f32
      %12 = vector.broadcast %cst_10 : f32 to vector<16x128xf32>
      %c0_11 = arith.constant 0 : index
      %c0_12 = arith.constant 0 : index
      %13 = vector.load %arg8[%c0_11, %c0_12] : memref<16x128xf32, #tpu.memory_space<vmem>>, vector<16x128xf32>
      tpu.vector_store %arg8[%c0_11, %c0_12], %12 {strides = array<i32>} : memref<16x128xf32, #tpu.memory_space<vmem>>, vector<16x128xf32>,
    } else {
    }
    %c0 = arith.constant 0 : index
    %c0_1 = arith.constant 0 : index
    %3 = vector.load %arg8[%c0, %c0_1] : memref<16x128xf32, #tpu.memory_space<vmem>>, vector<16x128xf32>
    %c0_2 = arith.constant 0 : index
    %c0_3 = arith.constant 0 : index
    %4 = vector.load %arg3[%c0_2, %c0_3] : memref<16x1152xbf16, #tpu.memory_space<vmem>>, vector<16x1152xbf16>
    %c0_4 = arith.constant 0 : index
    %c0_5 = arith.constant 0 : index
    %5 = vector.load %arg4[%c0_4, %c0_5] : memref<1152x128xbf16, #tpu.memory_space<vmem>>, vector<1152x128xbf16>
    %cst = arith.constant dense<0.000000e+00> : vector<16x128xf32>
    %6 = tpu.matmul %4, %5, %cst {dimension_numbers = #tpu.dot_dimension_numbers<[1], [0], [0], [1], [0, 0, 1, 1], [], []>} : vector<16x1152xbf16>, vector<1152x128xbf16>, vector<16x128xf32> -> vector<16x128xf32>
    %7 = arith.addf %3, %6 : vector<16x128xf32>
    %c0_6 = arith.constant 0 : index
    %c0_7 = arith.constant 0 : index
    %8 = vector.load %arg8[%c0_6, %c0_7] : memref<16x128xf32, #tpu.memory_space<vmem>>, vector<16x128xf32>
    tpu.vector_store %arg8[%c0_6, %c0_7], %7 {strides = array<i32>} : memref<16x128xf32, #tpu.memory_space<vmem>>, vector<16x128xf32>,
    %c0_i32_8 = arith.constant 0 : i32
    %9 = arith.cmpi eq, %arg2, %c0_i32_8 : i32
    %10 = arith.extui %9 : i1 to i32
    %c0_i32_9 = arith.constant 0 : i32
    %11 = arith.cmpi ne, %10, %c0_i32_9 : i32
    scf.if %11 {
      %c0_10 = arith.constant 0 : index
      %c0_11 = arith.constant 0 : index
      %12 = vector.load %arg8[%c0_10, %c0_11] : memref<16x128xf32, #tpu.memory_space<vmem>>, vector<16x128xf32>
      %c0_12 = arith.constant 0 : index
      %c0_13 = arith.constant 0 : index
      %13 = vector.load %arg5[%c0_12, %c0_13] : memref<1x128xf32, #tpu.memory_space<vmem>>, vector<1x128xf32>
      %14 = vector.broadcast %13 : vector<1x128xf32> to vector<16x128xf32>
      %15 = arith.mulf %12, %14 : vector<16x128xf32>
      %c0_14 = arith.constant 0 : index
      %c0_15 = arith.constant 0 : index
      %16 = vector.load %arg6[%c0_14, %c0_15] : memref<1x128xf32, #tpu.memory_space<vmem>>, vector<1x128xf32>
      %17 = vector.broadcast %16 : vector<1x128xf32> to vector<16x128xf32>
      %18 = arith.addf %15, %17 : vector<16x128xf32>
      %cst_16 = arith.constant 0.000000e+00 : f32
      %19 = vector.broadcast %cst_16 : f32 to vector<16x128xf32>
      %20 = arith.maximumf %18, %19 : vector<16x128xf32>
      %21 = arith.truncf %20 : vector<16x128xf32> to vector<16x128xbf16>
      %c0_17 = arith.constant 0 : index
      %c0_18 = arith.constant 0 : index
      %22 = vector.load %arg7[%c0_17, %c0_18] : memref<16x128xbf16, #tpu.memory_space<vmem>>, vector<16x128xbf16>
      tpu.vector_store %arg7[%c0_17, %c0_18], %21 {strides = array<i32>} : memref<16x128xbf16, #tpu.memory_space<vmem>>, vector<16x128xbf16>,
    } else {
    }
    return
  }
  func.func @transform_0(%arg0: i32, %arg1: i32, %arg2: i32) -> (i32, i32) {
    %c0_i32 = arith.constant 0 : i32
    return %arg0, %arg2 : i32, i32
  }
  func.func @transform_1(%arg0: i32, %arg1: i32, %arg2: i32) -> (i32, i32) {
    %c0_i32 = arith.constant 0 : i32
    return %arg2, %arg1 : i32, i32
  }
  func.func @transform_2(%arg0: i32, %arg1: i32, %arg2: i32) -> (i32, i32) {
    %c0_i32 = arith.constant 0 : i32
    %c0_i32_0 = arith.constant 0 : i32
    return %c0_i32, %arg1 : i32, i32
  }
  func.func @transform_3(%arg0: i32, %arg1: i32, %arg2: i32) -> (i32, i32) {
    %c0_i32 = arith.constant 0 : i32
    %c0_i32_0 = arith.constant 0 : i32
    return %c0_i32, %arg1 : i32, i32
  }
  func.func @transform_4(%arg0: i32, %arg1: i32, %arg2: i32) -> (i32, i32) {
    %c0_i32 = arith.constant 0 : i32
    return %arg0, %arg1 : i32, i32
  }
}

</mosaic_0001>

<llo_original>
// kernel: strided_encoder.10
$region0: #{strided_encoder.10}
  #allocation0 [shape = 'u32[]', space=smem, size = 0x4, offset = 0x4, fixed_abs, tag = 'smem constant byte address 0x4 - core index']
  #allocation1 [shape = 'u32[144,128]{1,0:T(1,128)}', space=vmem, size = 0x12000, scoped, tag = 'internal scratch']
  #allocation2 [shape = 'f32[512,128]{1,0:T(8,128)}', space=vmem, size = 0x40000, scoped, tag = 'scratch operand']
  %s0 = inlined_call_operand.vmem [shape: bf16[512,27], index: 0, kind: input, shape index: {}]
  %s1 = inlined_call_operand.vmem [shape: bf16[27,128], index: 1, kind: input, shape index: {}]
  %s2 = inlined_call_operand.vmem [shape: f32[1,128], index: 2, kind: input, shape index: {}]
  %s3 = inlined_call_operand.vmem [shape: f32[1,128], index: 3, kind: input, shape index: {}]
  %s4 = inlined_call_operand.vmem [shape: bf16[512,128], index: 4, kind: output, shape index: {}]
  %s5 = sld [smem:[#allocation0]]
  $region34: #{strided_encoder.10} parent=0
    _
  %s7 = ssub.s32 1, %s5
  %s8 = scalar_select 0, %s7, %s5
  // Predicated region
  $region2: #{strided_encoder.10} parent=0 // pred_check
    _
  $region3: #{strided_encoder.10} parent=0 // pred_check_branch
    %10 = sbr.rel (0) target = $region5
  $region4: #{strided_encoder.10} parent=0 // pred_region
    _
  $region5: #{strided_encoder.10} parent=0 // pred_fallthru
    _
  // Predicated region
  $region6: #{strided_encoder.10} parent=0 // pred_check
    _
  $region7: #{strided_encoder.10} parent=0 // pred_check_branch
    %12 = sbr.rel (0) target = $region9
  $region8: #{strided_encoder.10} parent=0 // pred_region
    _
  $region9: #{strided_encoder.10} parent=0 // pred_fallthru
    _
  // Predicated region
  $region10: #{strided_encoder.10} parent=0 // pred_check
    _
  $region11: #{strided_encoder.10} parent=0 // pred_check_branch
    %14 = sbr.rel (0) target = $region13
  $region12: #{strided_encoder.10} parent=0 // pred_region
    _
  $region13: #{strided_encoder.10} parent=0 // pred_fallthru
    _
  // Predicated region
  $region14: #{strided_encoder.10} parent=0 // pred_check
    _
  $region15: #{strided_encoder.10} parent=0 // pred_check_branch
    %16 = sbr.rel (0) target = $region17
  $region16: #{strided_encoder.10} parent=0 // pred_region
    _
  $region17: #{strided_encoder.10} parent=0 // pred_fallthru
    _
  %p18 = scmp.eq.s32.totalorder 0, 0
  // Predicated region
  $region18: #{strided_encoder.10} parent=0 // pred_check
    %p19 = pneg %p18
  $region19: #{strided_encoder.10} parent=0 // pred_check_branch
    %21 = sbr.rel (%p19) target = $region21
  $region20: #{strided_encoder.10} parent=0 // pred_region
    %22 = vst [vmem:[#allocation2] sm:$0xff] 0.0
    %23 = vst [vmem:[#allocation2 + $0x8] sm:$0xff] 0.0
    %24 = vst [vmem:[#allocation2 + $0x10] sm:$0xff] 0.0
    %25 = vst [vmem:[#allocation2 + $0x18] sm:$0xff] 0.0
    %26 = vst [vmem:[#allocation2 + $0x20] sm:$0xff] 0.0
    %27 = vst [vmem:[#allocation2 + $0x28] sm:$0xff] 0.0
    %28 = vst [vmem:[#allocation2 + $0x30] sm:$0xff] 0.0
    %29 = vst [vmem:[#allocation2 + $0x38] sm:$0xff] 0.0
    %30 = vst [vmem:[#allocation2 + $0x40] sm:$0xff] 0.0
    %31 = vst [vmem:[#allocation2 + $0x48] sm:$0xff] 0.0
    %32 = vst [vmem:[#allocation2 + $0x50] sm:$0xff] 0.0
    %33 = vst [vmem:[#allocation2 + $0x58] sm:$0xff] 0.0
    %34 = vst [vmem:[#allocation2 + $0x60] sm:$0xff] 0.0
    %35 = vst [vmem:[#allocation2 + $0x68] sm:$0xff] 0.0
    %36 = vst [vmem:[#allocation2 + $0x70] sm:$0xff] 0.0
    %37 = vst [vmem:[#allocation2 + $0x78] sm:$0xff] 0.0
    %38 = vst [vmem:[#allocation2 + $0x80] sm:$0xff] 0.0
    %39 = vst [vmem:[#allocation2 + $0x88] sm:$0xff] 0.0
    %40 = vst [vmem:[#allocation2 + $0x90] sm:$0xff] 0.0
    %41 = vst [vmem:[#allocation2 + $0x98] sm:$0xff] 0.0
    %42 = vst [vmem:[#allocation2 + $0xa0] sm:$0xff] 0.0
    %43 = vst [vmem:[#allocation2 + $0xa8] sm:$0xff] 0.0
    %44 = vst [vmem:[#allocation2 + $0xb0] sm:$0xff] 0.0
    %45 = vst [vmem:[#allocation2 + $0xb8] sm:$0xff] 0.0
    %46 = vst [vmem:[#allocation2 + $0xc0] sm:$0xff] 0.0
    %47 = vst [vmem:[#allocation2 + $0xc8] sm:$0xff] 0.0
    %48 = vst [vmem:[#allocation2 + $0xd0] sm:$0xff] 0.0
    %49 = vst [vmem:[#allocation2 + $0xd8] sm:$0xff] 0.0
    %50 = vst [vmem:[#allocation2 + $0xe0] sm:$0xff] 0.0
    %51 = vst [vmem:[#allocation2 + $0xe8] sm:$0xff] 0.0
    %52 = vst [vmem:[#allocation2 + $0xf0] sm:$0xff] 0.0
    %53 = vst [vmem:[#allocation2 + $0xf8] sm:$0xff] 0.0
    %54 = vst [vmem:[#allocation2 + $0x100] sm:$0xff] 0.0
    %55 = vst [vmem:[#allocation2 + $0x108] sm:$0xff] 0.0
    %56 = vst [vmem:[#allocation2 + $0x110] sm:$0xff] 0.0
    %57 = vst [vmem:[#allocation2 + $0x118] sm:$0xff] 0.0
    %58 = vst [vmem:[#allocation2 + $0x120] sm:$0xff] 0.0
    %59 = vst [vmem:[#allocation2 + $0x128] sm:$0xff] 0.0
    %60 = vst [vmem:[#allocation2 + $0x130] sm:$0xff] 0.0
    %61 = vst [vmem:[#allocation2 + $0x138] sm:$0xff] 0.0
    %62 = vst [vmem:[#allocation2 + $0x140] sm:$0xff] 0.0
    %63 = vst [vmem:[#allocation2 + $0x148] sm:$0xff] 0.0
    %64 = vst [vmem:[#allocation2 + $0x150] sm:$0xff] 0.0
    %65 = vst [vmem:[#allocation2 + $0x158] sm:$0xff] 0.0
    %66 = vst [vmem:[#allocation2 + $0x160] sm:$0xff] 0.0
    %67 = vst [vmem:[#allocation2 + $0x168] sm:$0xff] 0.0
    %68 = vst [vmem:[#allocation2 + $0x170] sm:$0xff] 0.0
    %69 = vst [vmem:[#allocation2 + $0x178] sm:$0xff] 0.0
    %70 = vst [vmem:[#allocation2 + $0x180] sm:$0xff] 0.0
    %71 = vst [vmem:[#allocation2 + $0x188] sm:$0xff] 0.0
    %72 = vst [vmem:[#allocation2 + $0x190] sm:$0xff] 0.0
    %73 = vst [vmem:[#allocation2 + $0x198] sm:$0xff] 0.0
    %74 = vst [vmem:[#allocation2 + $0x1a0] sm:$0xff] 0.0
    %75 = vst [vmem:[#allocation2 + $0x1a8] sm:$0xff] 0.0
    %76 = vst [vmem:[#allocation2 + $0x1b0] sm:$0xff] 0.0
    %77 = vst [vmem:[#allocation2 + $0x1b8] sm:$0xff] 0.0
    %78 = vst [vmem:[#allocation2 + $0x1c0] sm:$0xff] 0.0
    %79 = vst [vmem:[#allocation2 + $0x1c8] sm:$0xff] 0.0
    %80 = vst [vmem:[#allocation2 + $0x1d0] sm:$0xff] 0.0
    %81 = vst [vmem:[#allocation2 + $0x1d8] sm:$0xff] 0.0
    %82 = vst [vmem:[#allocation2 + $0x1e0] sm:$0xff] 0.0
    %83 = vst [vmem:[#allocation2 + $0x1e8] sm:$0xff] 0.0
    %84 = vst [vmem:[#allocation2 + $0x1f0] sm:$0xff] 0.0
    %85 = vst [vmem:[#allocation2 + $0x1f8] sm:$0xff] 0.0
  $region21: #{strided_encoder.10} parent=0 // pred_fallthru
    _
  %v86 = vld [vmem:[#allocation2] sm:$0xff]
  %v87 = vld [vmem:[#allocation2 + $0x8] sm:$0xff]
  %v88 = vld [vmem:[#allocation2 + $0x10] sm:$0xff]
  %v89 = vld [vmem:[#allocation2 + $0x18] sm:$0xff]
  %v90 = vld [vmem:[#allocation2 + $0x20] sm:$0xff]
  %v91 = vld [vmem:[#allocation2 + $0x28] sm:$0xff]
  %v92 = vld [vmem:[#allocation2 + $0x30] sm:$0xff]
  %v93 = vld [vmem:[#allocation2 + $0x38] sm:$0xff]
  %v94 = vld [vmem:[#allocation2 + $0x40] sm:$0xff]
  %v95 = vld [vmem:[#allocation2 + $0x48] sm:$0xff]
  %v96 = vld [vmem:[#allocation2 + $0x50] sm:$0xff]
  %v97 = vld [vmem:[#allocation2 + $0x58] sm:$0xff]
  %v98 = vld [vmem:[#allocation2 + $0x60] sm:$0xff]
  %v99 = vld [vmem:[#allocation2 + $0x68] sm:$0xff]
  %v100 = vld [vmem:[#allocation2 + $0x70] sm:$0xff]
  %v101 = vld [vmem:[#allocation2 + $0x78] sm:$0xff]
  %v102 = vld [vmem:[#allocation2 + $0x80] sm:$0xff]
  %v103 = vld [vmem:[#allocation2 + $0x88] sm:$0xff]
  %v104 = vld [vmem:[#allocation2 + $0x90] sm:$0xff]
  %v105 = vld [vmem:[#allocation2 + $0x98] sm:$0xff]
  %v106 = vld [vmem:[#allocation2 + $0xa0] sm:$0xff]
  %v107 = vld [vmem:[#allocation2 + $0xa8] sm:$0xff]
  %v108 = vld [vmem:[#allocation2 + $0xb0] sm:$0xff]
  %v109 = vld [vmem:[#allocation2 + $0xb8] sm:$0xff]
  %v110 = vld [vmem:[#allocation2 + $0xc0] sm:$0xff]
  %v111 = vld [vmem:[#allocation2 + $0xc8] sm:$0xff]
  %v112 = vld [vmem:[#allocation2 + $0xd0] sm:$0xff]
  %v113 = vld [vmem:[#allocation2 + $0xd8] sm:$0xff]
  %v114 = vld [vmem:[#allocation2 + $0xe0] sm:$0xff]
  %v115 = vld [vmem:[#allocation2 + $0xe8] sm:$0xff]
  %v116 = vld [vmem:[#allocation2 + $0xf0] sm:$0xff]
  %v117 = vld [vmem:[#allocation2 + $0xf8] sm:$0xff]
  %v118 = vld [vmem:[#allocation2 + $0x100] sm:$0xff]
  %v119 = vld [vmem:[#allocation2 + $0x108] sm:$0xff]
  %v120 = vld [vmem:[#allocation2 + $0x110] sm:$0xff]
  %v121 = vld [vmem:[#allocation2 + $0x118] sm:$0xff]
  %v122 = vld [vmem:[#allocation2 + $0x120] sm:$0xff]
  %v123 = vld [vmem:[#allocation2 + $0x128] sm:$0xff]
  %v124 = vld [vmem:[#allocation2 + $0x130] sm:$0xff]
  %v125 = vld [vmem:[#allocation2 + $0x138] sm:$0xff]
  %v126 = vld [vmem:[#allocation2 + $0x140] sm:$0xff]
  %v127 = vld [vmem:[#allocation2 + $0x148] sm:$0xff]
  %v128 = vld [vmem:[#allocation2 + $0x150] sm:$0xff]
  %v129 = vld [vmem:[#allocation2 + $0x158] sm:$0xff]
  %v130 = vld [vmem:[#allocation2 + $0x160] sm:$0xff]
  %v131 = vld [vmem:[#allocation2 + $0x168] sm:$0xff]
  %v132 = vld [vmem:[#allocation2 + $0x170] sm:$0xff]
  %v133 = vld [vmem:[#allocation2 + $0x178] sm:$0xff]
  %v134 = vld [vmem:[#allocation2 + $0x180] sm:$0xff]
  %v135 = vld [vmem:[#allocation2 + $0x188] sm:$0xff]
  %v136 = vld [vmem:[#allocation2 + $0x190] sm:$0xff]
  %v137 = vld [vmem:[#allocation2 + $0x198] sm:$0xff]
  %v138 = vld [vmem:[#allocation2 + $0x1a0] sm:$0xff]
  %v139 = vld [vmem:[#allocation2 + $0x1a8] sm:$0xff]
  %v140 = vld [vmem:[#allocation2 + $0x1b0] sm:$0xff]
  %v141 = vld [vmem:[#allocation2 + $0x1b8] sm:$0xff]
  %v142 = vld [vmem:[#allocation2 + $0x1c0] sm:$0xff]
  %v143 = vld [vmem:[#allocation2 + $0x1c8] sm:$0xff]
  %v144 = vld [vmem:[#allocation2 + $0x1d0] sm:$0xff]
  %v145 = vld [vmem:[#allocation2 + $0x1d8] sm:$0xff]
  %v146 = vld [vmem:[#allocation2 + $0x1e0] sm:$0xff]
  %v147 = vld [vmem:[#allocation2 + $0x1e8] sm:$0xff]
  %v148 = vld [vmem:[#allocation2 + $0x1f0] sm:$0xff]
  %v149 = vld [vmem:[#allocation2 + $0x1f8] sm:$0xff]
  %v150 = vld [vmem:[%s0] sm:$0xf]
  %v151 = vld [vmem:[%s0 + $0x4] sm:$0xf]
  %v152 = vld [vmem:[%s0 + $0x8] sm:$0xf]
  %v153 = vld [vmem:[%s0 + $0xc] sm:$0xf]
  %v154 = vld [vmem:[%s0 + $0x10] sm:$0xf]
  %v155 = vld [vmem:[%s0 + $0x14] sm:$0xf]
  %v156 = vld [vmem:[%s0 + $0x18] sm:$0xf]
  %v157 = vld [vmem:[%s0 + $0x1c] sm:$0xf]
  %v158 = vld [vmem:[%s0 + $0x20] sm:$0xf]
  %v159 = vld [vmem:[%s0 + $0x24] sm:$0xf]
  %v160 = vld [vmem:[%s0 + $0x28] sm:$0xf]
  %v161 = vld [vmem:[%s0 + $0x2c] sm:$0xf]
  %v162 = vld [vmem:[%s0 + $0x30] sm:$0xf]
  %v163 = vld [vmem:[%s0 + $0x34] sm:$0xf]
  %v164 = vld [vmem:[%s0 + $0x38] sm:$0xf]
  %v165 = vld [vmem:[%s0 + $0x3c] sm:$0xf]
  %v166 = vld [vmem:[%s0 + $0x40] sm:$0xf]
  %v167 = vld [vmem:[%s0 + $0x44] sm:$0xf]
  %v168 = vld [vmem:[%s0 + $0x48] sm:$0xf]
  %v169 = vld [vmem:[%s0 + $0x4c] sm:$0xf]
  %v170 = vld [vmem:[%s0 + $0x50] sm:$0xf]
  %v171 = vld [vmem:[%s0 + $0x54] sm:$0xf]
  %v172 = vld [vmem:[%s0 + $0x58] sm:$0xf]
  %v173 = vld [vmem:[%s0 + $0x5c] sm:$0xf]
  %v174 = vld [vmem:[%s0 + $0x60] sm:$0xf]
  %v175 = vld [vmem:[%s0 + $0x64] sm:$0xf]
  %v176 = vld [vmem:[%s0 + $0x68] sm:$0xf]
  %v177 = vld [vmem:[%s0 + $0x6c] sm:$0xf]
  %v178 = vld [vmem:[%s0 + $0x70] sm:$0xf]
  %v179 = vld [vmem:[%s0 + $0x74] sm:$0xf]
  %v180 = vld [vmem:[%s0 + $0x78] sm:$0xf]
  %v181 = vld [vmem:[%s0 + $0x7c] sm:$0xf]
  %v182 = vld [vmem:[%s0 + $0x80] sm:$0xf]
  %v183 = vld [vmem:[%s0 + $0x84] sm:$0xf]
  %v184 = vld [vmem:[%s0 + $0x88] sm:$0xf]
  %v185 = vld [vmem:[%s0 + $0x8c] sm:$0xf]
  %v186 = vld [vmem:[%s0 + $0x90] sm:$0xf]
  %v187 = vld [vmem:[%s0 + $0x94] sm:$0xf]
  %v188 = vld [vmem:[%s0 + $0x98] sm:$0xf]
  %v189 = vld [vmem:[%s0 + $0x9c] sm:$0xf]
  %v190 = vld [vmem:[%s0 + $0xa0] sm:$0xf]
  %v191 = vld [vmem:[%s0 + $0xa4] sm:$0xf]
  %v192 = vld [vmem:[%s0 + $0xa8] sm:$0xf]
  %v193 = vld [vmem:[%s0 + $0xac] sm:$0xf]
  %v194 = vld [vmem:[%s0 + $0xb0] sm:$0xf]
  %v195 = vld [vmem:[%s0 + $0xb4] sm:$0xf]
  %v196 = vld [vmem:[%s0 + $0xb8] sm:$0xf]
  %v197 = vld [vmem:[%s0 + $0xbc] sm:$0xf]
  %v198 = vld [vmem:[%s0 + $0xc0] sm:$0xf]
  %v199 = vld [vmem:[%s0 + $0xc4] sm:$0xf]
  %v200 = vld [vmem:[%s0 + $0xc8] sm:$0xf]
  %v201 = vld [vmem:[%s0 + $0xcc] sm:$0xf]
  %v202 = vld [vmem:[%s0 + $0xd0] sm:$0xf]
  %v203 = vld [vmem:[%s0 + $0xd4] sm:$0xf]
  %v204 = vld [vmem:[%s0 + $0xd8] sm:$0xf]
  %v205 = vld [vmem:[%s0 + $0xdc] sm:$0xf]
  %v206 = vld [vmem:[%s0 + $0xe0] sm:$0xf]
  %v207 = vld [vmem:[%s0 + $0xe4] sm:$0xf]
  %v208 = vld [vmem:[%s0 + $0xe8] sm:$0xf]
  %v209 = vld [vmem:[%s0 + $0xec] sm:$0xf]
  %v210 = vld [vmem:[%s0 + $0xf0] sm:$0xf]
  %v211 = vld [vmem:[%s0 + $0xf4] sm:$0xf]
  %v212 = vld [vmem:[%s0 + $0xf8] sm:$0xf]
  %v213 = vld [vmem:[%s0 + $0xfc] sm:$0xf]
  %v214 = vld [vmem:[%s1] sm:$0xf]
  %v215 = vld [vmem:[%s1 + $0x4] sm:$0xf]
  %v216 = vld [vmem:[%s1 + $0x8] sm:$0xf]
  %v217 = vld [vmem:[%s1 + $0xc] sm:$0x3]
  %v282 = vunpack.c.l.b16 %v150
  %v283 = vunpack.c.l.b16 %v151
  %v284 = vunpack.c.l.b16 %v152
  %v285 = vunpack.c.l.b16 %v153
  %v286 = vunpack.c.l.b16 %v154
  %v287 = vunpack.c.l.b16 %v155
  %v288 = vunpack.c.l.b16 %v156
  %v289 = vunpack.c.l.b16 %v157
  %v290 = vunpack.c.l.b16 %v158
  %v291 = vunpack.c.l.b16 %v159
  %v292 = vunpack.c.l.b16 %v160
  %v293 = vunpack.c.l.b16 %v161
  %v294 = vunpack.c.l.b16 %v162
  %v295 = vunpack.c.l.b16 %v163
  %v296 = vunpack.c.l.b16 %v164
  %v297 = vunpack.c.l.b16 %v165
  %v298 = vunpack.c.l.b16 %v166
  %v299 = vunpack.c.l.b16 %v167
  %v300 = vunpack.c.l.b16 %v168
  %v301 = vunpack.c.l.b16 %v169
  %v302 = vunpack.c.l.b16 %v170
  %v303 = vunpack.c.l.b16 %v171
  %v304 = vunpack.c.l.b16 %v172
  %v305 = vunpack.c.l.b16 %v173
  %v306 = vunpack.c.l.b16 %v174
  %v307 = vunpack.c.l.b16 %v175
  %v308 = vunpack.c.l.b16 %v176
  %v309 = vunpack.c.l.b16 %v177
  %v310 = vunpack.c.l.b16 %v178
  %v311 = vunpack.c.l.b16 %v179
  %v312 = vunpack.c.l.b16 %v180
  %v313 = vunpack.c.l.b16 %v181
  %v314 = vunpack.c.l.b16 %v182
  %v315 = vunpack.c.l.b16 %v183
  %v316 = vunpack.c.l.b16 %v184
  %v317 = vunpack.c.l.b16 %v185
  %v318 = vunpack.c.l.b16 %v186
  %v319 = vunpack.c.l.b16 %v187
  %v320 = vunpack.c.l.b16 %v188
  %v321 = vunpack.c.l.b16 %v189
  %v322 = vunpack.c.l.b16 %v190
  %v323 = vunpack.c.l.b16 %v191
  %v324 = vunpack.c.l.b16 %v192
  %v325 = vunpack.c.l.b16 %v193
  %v326 = vunpack.c.l.b16 %v194
  %v327 = vunpack.c.l.b16 %v195
  %v328 = vunpack.c.l.b16 %v196
  %v329 = vunpack.c.l.b16 %v197
  %v330 = vunpack.c.l.b16 %v198
  %v331 = vunpack.c.l.b16 %v199
  %v332 = vunpack.c.l.b16 %v200
  %v333 = vunpack.c.l.b16 %v201
  %v334 = vunpack.c.l.b16 %v202
  %v335 = vunpack.c.l.b16 %v203
  %v336 = vunpack.c.l.b16 %v204
  %v337 = vunpack.c.l.b16 %v205
  %v338 = vunpack.c.l.b16 %v206
  %v339 = vunpack.c.l.b16 %v207
  %v340 = vunpack.c.l.b16 %v208
  %v341 = vunpack.c.l.b16 %v209
  %v342 = vunpack.c.l.b16 %v210
  %v343 = vunpack.c.l.b16 %v211
  %v344 = vunpack.c.l.b16 %v212
  %v345 = vunpack.c.l.b16 %v213
  %v346 = vpack.c.b16 %v283, %v282
  %v347 = vpack.c.b16 %v285, %v284
  %v348 = vpack.c.b16 %v287, %v286
  %v349 = vpack.c.b16 %v289, %v288
  %v350 = vpack.c.b16 %v291, %v290
  %v351 = vpack.c.b16 %v293, %v292
  %v352 = vpack.c.b16 %v295, %v294
  %v353 = vpack.c.b16 %v297, %v296
  %v354 = vpack.c.b16 %v299, %v298
  %v355 = vpack.c.b16 %v301, %v300
  %v356 = vpack.c.b16 %v303, %v302
  %v357 = vpack.c.b16 %v305, %v304
  %v358 = vpack.c.b16 %v307, %v306
  %v359 = vpack.c.b16 %v309, %v308
  %v360 = vpack.c.b16 %v311, %v310
  %v361 = vpack.c.b16 %v313, %v312
  %v362 = vpack.c.b16 %v315, %v314
  %v363 = vpack.c.b16 %v317, %v316
  %v364 = vpack.c.b16 %v319, %v318
  %v365 = vpack.c.b16 %v321, %v320
  %v366 = vpack.c.b16 %v323, %v322
  %v367 = vpack.c.b16 %v325, %v324
  %v368 = vpack.c.b16 %v327, %v326
  %v369 = vpack.c.b16 %v329, %v328
  %v370 = vpack.c.b16 %v331, %v330
  %v371 = vpack.c.b16 %v333, %v332
  %v372 = vpack.c.b16 %v335, %v334
  %v373 = vpack.c.b16 %v337, %v336
  %v374 = vpack.c.b16 %v339, %v338
  %v375 = vpack.c.b16 %v341, %v340
  %v376 = vpack.c.b16 %v343, %v342
  %v377 = vpack.c.b16 %v345, %v344
  %v382 = vunpack.c.l.b16 %v214
  %v383 = vunpack.c.l.b16 %v215
  %v384 = vunpack.c.l.b16 %v216
  %v385 = vunpack.c.l.b16 %v217
  %v386 = vpack.c.b16 %v383, %v382
  %v387 = vpack.c.b16 %v385, %v384
  %vm389 = vcmask 220160
  %v391 = vsel %vm389, %v346, 0
  %v394 = vsel %vm389, %v347, 0
  %v397 = vsel %vm389, %v348, 0
  %v400 = vsel %vm389, %v349, 0
  %v403 = vsel %vm389, %v350, 0
  %v406 = vsel %vm389, %v351, 0
  %v409 = vsel %vm389, %v352, 0
  %v412 = vsel %vm389, %v353, 0
  %v415 = vsel %vm389, %v354, 0
  %v418 = vsel %vm389, %v355, 0
  %v421 = vsel %vm389, %v356, 0
  %v424 = vsel %vm389, %v357, 0
  %v427 = vsel %vm389, %v358, 0
  %v430 = vsel %vm389, %v359, 0
  %v433 = vsel %vm389, %v360, 0
  %v436 = vsel %vm389, %v361, 0
  %v439 = vsel %vm389, %v362, 0
  %v442 = vsel %vm389, %v363, 0
  %v445 = vsel %vm389, %v364, 0
  %v448 = vsel %vm389, %v365, 0
  %v451 = vsel %vm389, %v366, 0
  %v454 = vsel %vm389, %v367, 0
  %v457 = vsel %vm389, %v368, 0
  %v460 = vsel %vm389, %v369, 0
  %v463 = vsel %vm389, %v370, 0
  %v466 = vsel %vm389, %v371, 0
  %v469 = vsel %vm389, %v372, 0
  %v472 = vsel %vm389, %v373, 0
  %v475 = vsel %vm389, %v374, 0
  %v478 = vsel %vm389, %v375, 0
  %v481 = vsel %vm389, %v376, 0
  %v484 = vsel %vm389, %v377, 0
  %vm486 = vcmask 1044480
  %vm487 = vcmask 1045504
  %v488 = vsel %vm486, 4294967295, 65535
  %v489 = vsel %vm487, %v488, 0
  %v491 = vand.u32 %v387, %v489
  %493 = vmatprep.subr.bf16.mxu0 0
  %494 = vmatpush1.bf16.msra.mxu0 %v386
  %495 = vmatprep.subr.bf16.mxu0 0
  %496 = vmatpush1.bf16.msra.mxu0 %v491
  %497 = vmatprep.subr.bf16.mxu0 0
  %498 = vmatpush1.bf16.msra.mxu0 0
  %499 = vmatprep.subr.bf16.mxu0 0
  %500 = vmatpush1.bf16.msra.mxu0 0
  %501 = vmatprep.subr.bf16.mxu0 0
  %502 = vmatpush1.bf16.msra.mxu0 0
  %503 = vmatprep.subr.bf16.mxu0 0
  %504 = vmatpush1.bf16.msra.mxu0 0
  %505 = vmatprep.subr.bf16.mxu0 0
  %506 = vmatpush1.bf16.msra.mxu0 0
  %507 = vmatprep.subr.bf16.mxu0 0
  %508 = vmatpush1.bf16.msra.mxu0 0
  %509 = vmatprep.subr.bf16.mxu0 0
  %510 = vmatpush1.bf16.msra.mxu0 0
  %511 = vmatprep.subr.bf16.mxu0 0
  %512 = vmatpush1.bf16.msra.mxu0 0
  %513 = vmatprep.subr.bf16.mxu0 0
  %514 = vmatpush1.bf16.msra.mxu0 0
  %515 = vmatprep.subr.bf16.mxu0 0
  %516 = vmatpush1.bf16.msra.mxu0 0
  %517 = vmatprep.subr.bf16.mxu0 0
  %518 = vmatpush1.bf16.msra.mxu0 0
  %519 = vmatprep.subr.bf16.mxu0 0
  %520 = vmatpush1.bf16.msra.mxu0 0
  %521 = vmatprep.subr.bf16.mxu0 0
  %522 = vmatpush1.bf16.msra.mxu0 0
  %523 = vmatprep.subr.bf16.mxu0 0
  %524 = vmatpush1.bf16.msra.mxu0 0
  %525 = vmatprep.mubr.bf16.mxu0 0
  %526 = vmatmul.mubr.bf16.gmra.mrb[0].mxu0 %v391
  %v527 = vpop.f32.mrb[0].mxu0
  %v528 = vadd.f32 0.0, %v527
  %v529 = vpop.f32.mrb[0].mxu0
  %v530 = vpop.f32.mrb[0].mxu0
  %v531 = vadd.f32 0.0, %v530
  %v532 = vpop.f32.mrb[0].mxu0
  %533 = vmatprep.mubr.bf16.mxu0 0
  %534 = vmatmul.mubr.bf16.gmra.mrb[0].mxu0 %v394
  %v535 = vpop.f32.mrb[0].mxu0
  %v536 = vadd.f32 0.0, %v535
  %v537 = vpop.f32.mrb[0].mxu0
  %v538 = vpop.f32.mrb[0].mxu0
  %v539 = vadd.f32 0.0, %v538
  %v540 = vpop.f32.mrb[0].mxu0
  %541 = vmatprep.mubr.bf16.mxu0 0
  %542 = vmatmul.mubr.bf16.gmra.mrb[0].mxu0 %v397
  %v543 = vpop.f32.mrb[0].mxu0
  %v544 = vadd.f32 0.0, %v543
  %v545 = vpop.f32.mrb[0].mxu0
  %v546 = vpop.f32.mrb[0].mxu0
  %v547 = vadd.f32 0.0, %v546
  %v548 = vpop.f32.mrb[0].mxu0
  %549 = vmatprep.mubr.bf16.mxu0 0
  %550 = vmatmul.mubr.bf16.gmra.mrb[0].mxu0 %v400
  %v551 = vpop.f32.mrb[0].mxu0
  %v552 = vadd.f32 0.0, %v551
  %v553 = vpop.f32.mrb[0].mxu0
  %v554 = vpop.f32.mrb[0].mxu0
  %v555 = vadd.f32 0.0, %v554
  %v556 = vpop.f32.mrb[0].mxu0
  %557 = vmatprep.mubr.bf16.mxu0 0
  %558 = vmatmul.mubr.bf16.gmra.mrb[0].mxu0 %v403
  %v559 = vpop.f32.mrb[0].mxu0
  %v560 = vadd.f32 0.0, %v559
  %v561 = vpop.f32.mrb[0].mxu0
  %v562 = vpop.f32.mrb[0].mxu0
  %v563 = vadd.f32 0.0, %v562
  %v564 = vpop.f32.mrb[0].mxu0
  %565 = vmatprep.mubr.bf16.mxu0 0
  %566 = vmatmul.mubr.bf16.gmra.mrb[0].mxu0 %v406
  %v567 = vpop.f32.mrb[0].mxu0
  %v568 = vadd.f32 0.0, %v567
  %v569 = vpop.f32.mrb[0].mxu0
  %v570 = vpop.f32.mrb[0].mxu0
  %v571 = vadd.f32 0.0, %v570
  %v572 = vpop.f32.mrb[0].mxu0
  %573 = vmatprep.mubr.bf16.mxu0 0
  %574 = vmatmul.mubr.bf16.gmra.mrb[0].mxu0 %v409
  %v575 = vpop.f32.mrb[0].mxu0
  %v576 = vadd.f32 0.0, %v575
  %v577 = vpop.f32.mrb[0].mxu0
  %v578 = vpop.f32.mrb[0].mxu0
  %v579 = vadd.f32 0.0, %v578
  %v580 = vpop.f32.mrb[0].mxu0
  %581 = vmatprep.mubr.bf16.mxu0 0
  %582 = vmatmul.mubr.bf16.gmra.mrb[0].mxu0 %v412
  %v583 = vpop.f32.mrb[0].mxu0
  %v584 = vadd.f32 0.0, %v583
  %v585 = vpop.f32.mrb[0].mxu0
  %v586 = vpop.f32.mrb[0].mxu0
  %v587 = vadd.f32 0.0, %v586
  %v588 = vpop.f32.mrb[0].mxu0
  %589 = vmatprep.mubr.bf16.mxu0 0
  %590 = vmatmul.mubr.bf16.gmra.mrb[0].mxu0 %v415
  %v591 = vpop.f32.mrb[0].mxu0
  %v592 = vadd.f32 0.0, %v591
  %v593 = vpop.f32.mrb[0].mxu0
  %v594 = vpop.f32.mrb[0].mxu0
  %v595 = vadd.f32 0.0, %v594
  %v596 = vpop.f32.mrb[0].mxu0
  %597 = vmatprep.mubr.bf16.mxu0 0
  %598 = vmatmul.mubr.bf16.gmra.mrb[0].mxu0 %v418
  %v599 = vpop.f32.mrb[0].mxu0
  %v600 = vadd.f32 0.0, %v599
  %v601 = vpop.f32.mrb[0].mxu0
  %v602 = vpop.f32.mrb[0].mxu0
  %v603 = vadd.f32 0.0, %v602
  %v604 = vpop.f32.mrb[0].mxu0
  %605 = vmatprep.mubr.bf16.mxu0 0
  %606 = vmatmul.mubr.bf16.gmra.mrb[0].mxu0 %v421
  %v607 = vpop.f32.mrb[0].mxu0
  %v608 = vadd.f32 0.0, %v607
  %v609 = vpop.f32.mrb[0].mxu0
  %v610 = vpop.f32.mrb[0].mxu0
  %v611 = vadd.f32 0.0, %v610
  %v612 = vpop.f32.mrb[0].mxu0
  %613 = vmatprep.mubr.bf16.mxu0 0
  %614 = vmatmul.mubr.bf16.gmra.mrb[0].mxu0 %v424
  %v615 = vpop.f32.mrb[0].mxu0
  %v616 = vadd.f32 0.0, %v615
  %v617 = vpop.f32.mrb[0].mxu0
  %v618 = vpop.f32.mrb[0].mxu0
  %v619 = vadd.f32 0.0, %v618
  %v620 = vpop.f32.mrb[0].mxu0
  %621 = vmatprep.mubr.bf16.mxu0 0
  %622 = vmatmul.mubr.bf16.gmra.mrb[0].mxu0 %v427
  %v623 = vpop.f32.mrb[0].mxu0
  %v624 = vadd.f32 0.0, %v623
  %v625 = vpop.f32.mrb[0].mxu0
  %v626 = vpop.f32.mrb[0].mxu0
  %v627 = vadd.f32 0.0, %v626
  %v628 = vpop.f32.mrb[0].mxu0
  %629 = vmatprep.mubr.bf16.mxu0 0
  %630 = vmatmul.mubr.bf16.gmra.mrb[0].mxu0 %v430
  %v631 = vpop.f32.mrb[0].mxu0
  %v632 = vadd.f32 0.0, %v631
  %v633 = vpop.f32.mrb[0].mxu0
  %v634 = vpop.f32.mrb[0].mxu0
  %v635 = vadd.f32 0.0, %v634
  %v636 = vpop.f32.mrb[0].mxu0
  %637 = vmatprep.mubr.bf16.mxu0 0
  %638 = vmatmul.mubr.bf16.gmra.mrb[0].mxu0 %v433
  %v639 = vpop.f32.mrb[0].mxu0
  %v640 = vadd.f32 0.0, %v639
  %v641 = vpop.f32.mrb[0].mxu0
  %v642 = vpop.f32.mrb[0].mxu0
  %v643 = vadd.f32 0.0, %v642
  %v644 = vpop.f32.mrb[0].mxu0
  %645 = vmatprep.mubr.bf16.mxu0 0
  %646 = vmatmul.mubr.bf16.gmra.mrb[0].mxu0 %v436
  %v647 = vpop.f32.mrb[0].mxu0
  %v648 = vadd.f32 0.0, %v647
  %v649 = vpop.f32.mrb[0].mxu0
  %v650 = vpop.f32.mrb[0].mxu0
  %v651 = vadd.f32 0.0, %v650
  %v652 = vpop.f32.mrb[0].mxu0
  %653 = vmatprep.mubr.bf16.mxu0 0
  %654 = vmatmul.mubr.bf16.gmra.mrb[0].mxu0 %v439
  %v655 = vpop.f32.mrb[0].mxu0
  %v656 = vadd.f32 0.0, %v655
  %v657 = vpop.f32.mrb[0].mxu0
  %v658 = vpop.f32.mrb[0].mxu0
  %v659 = vadd.f32 0.0, %v658
  %v660 = vpop.f32.mrb[0].mxu0
  %661 = vmatprep.mubr.bf16.mxu0 0
  %662 = vmatmul.mubr.bf16.gmra.mrb[0].mxu0 %v442
  %v663 = vpop.f32.mrb[0].mxu0
  %v664 = vadd.f32 0.0, %v663
  %v665 = vpop.f32.mrb[0].mxu0
  %v666 = vpop.f32.mrb[0].mxu0
  %v667 = vadd.f32 0.0, %v666
  %v668 = vpop.f32.mrb[0].mxu0
  %669 = vmatprep.mubr.bf16.mxu0 0
  %670 = vmatmul.mubr.bf16.gmra.mrb[0].mxu0 %v445
  %v671 = vpop.f32.mrb[0].mxu0
  %v672 = vadd.f32 0.0, %v671
  %v673 = vpop.f32.mrb[0].mxu0
  %v674 = vpop.f32.mrb[0].mxu0
  %v675 = vadd.f32 0.0, %v674
  %v676 = vpop.f32.mrb[0].mxu0
  %677 = vmatprep.mubr.bf16.mxu0 0
  %678 = vmatmul.mubr.bf16.gmra.mrb[0].mxu0 %v448
  %v679 = vpop.f32.mrb[0].mxu0
  %v680 = vadd.f32 0.0, %v679
  %v681 = vpop.f32.mrb[0].mxu0
  %v682 = vpop.f32.mrb[0].mxu0
  %v683 = vadd.f32 0.0, %v682
  %v684 = vpop.f32.mrb[0].mxu0
  %685 = vmatprep.mubr.bf16.mxu0 0
  %686 = vmatmul.mubr.bf16.gmra.mrb[0].mxu0 %v451
  %v687 = vpop.f32.mrb[0].mxu0
  %v688 = vadd.f32 0.0, %v687
  %v689 = vpop.f32.mrb[0].mxu0
  %v690 = vpop.f32.mrb[0].mxu0
  %v691 = vadd.f32 0.0, %v690
  %v692 = vpop.f32.mrb[0].mxu0
  %693 = vmatprep.mubr.bf16.mxu0 0
  %694 = vmatmul.mubr.bf16.gmra.mrb[0].mxu0 %v454
  %v695 = vpop.f32.mrb[0].mxu0
  %v696 = vadd.f32 0.0, %v695
  %v697 = vpop.f32.mrb[0].mxu0
  %v698 = vpop.f32.mrb[0].mxu0
  %v699 = vadd.f32 0.0, %v698
  %v700 = vpop.f32.mrb[0].mxu0
  %701 = vmatprep.mubr.bf16.mxu0 0
  %702 = vmatmul.mubr.bf16.gmra.mrb[0].mxu0 %v457
  %v703 = vpop.f32.mrb[0].mxu0
  %v704 = vadd.f32 0.0, %v703
  %v705 = vpop.f32.mrb[0].mxu0
  %v706 = vpop.f32.mrb[0].mxu0
  %v707 = vadd.f32 0.0, %v706
  %v708 = vpop.f32.mrb[0].mxu0
  %709 = vmatprep.mubr.bf16.mxu0 0
  %710 = vmatmul.mubr.bf16.gmra.mrb[0].mxu0 %v460
  %v711 = vpop.f32.mrb[0].mxu0
  %v712 = vadd.f32 0.0, %v711
  %v713 = vpop.f32.mrb[0].mxu0
  %v714 = vpop.f32.mrb[0].mxu0
  %v715 = vadd.f32 0.0, %v714
  %v716 = vpop.f32.mrb[0].mxu0
  %717 = vmatprep.mubr.bf16.mxu0 0
  %718 = vmatmul.mubr.bf16.gmra.mrb[0].mxu0 %v463
  %v719 = vpop.f32.mrb[0].mxu0
  %v720 = vadd.f32 0.0, %v719
  %v721 = vpop.f32.mrb[0].mxu0
  %v722 = vpop.f32.mrb[0].mxu0
  %v723 = vadd.f32 0.0, %v722
  %v724 = vpop.f32.mrb[0].mxu0
  %725 = vmatprep.mubr.bf16.mxu0 0
  %726 = vmatmul.mubr.bf16.gmra.mrb[0].mxu0 %v466
  %v727 = vpop.f32.mrb[0].mxu0
  %v728 = vadd.f32 0.0, %v727
  %v729 = vpop.f32.mrb[0].mxu0
  %v730 = vpop.f32.mrb[0].mxu0
  %v731 = vadd.f32 0.0, %v730
  %v732 = vpop.f32.mrb[0].mxu0
  %733 = vmatprep.mubr.bf16.mxu0 0
  %734 = vmatmul.mubr.bf16.gmra.mrb[0].mxu0 %v469
  %v735 = vpop.f32.mrb[0].mxu0
  %v736 = vadd.f32 0.0, %v735
  %v737 = vpop.f32.mrb[0].mxu0
  %v738 = vpop.f32.mrb[0].mxu0
  %v739 = vadd.f32 0.0, %v738
  %v740 = vpop.f32.mrb[0].mxu0
  %741 = vmatprep.mubr.bf16.mxu0 0
  %742 = vmatmul.mubr.bf16.gmra.mrb[0].mxu0 %v472
  %v743 = vpop.f32.mrb[0].mxu0
  %v744 = vadd.f32 0.0, %v743
  %v745 = vpop.f32.mrb[0].mxu0
  %v746 = vpop.f32.mrb[0].mxu0
  %v747 = vadd.f32 0.0, %v746
  %v748 = vpop.f32.mrb[0].mxu0
  %749 = vmatprep.mubr.bf16.mxu0 0
  %750 = vmatmul.mubr.bf16.gmra.mrb[0].mxu0 %v475
  %v751 = vpop.f32.mrb[0].mxu0
  %v752 = vadd.f32 0.0, %v751
  %v753 = vpop.f32.mrb[0].mxu0
  %v754 = vpop.f32.mrb[0].mxu0
  %v755 = vadd.f32 0.0, %v754
  %v756 = vpop.f32.mrb[0].mxu0
  %757 = vmatprep.mubr.bf16.mxu0 0
  %758 = vmatmul.mubr.bf16.gmra.mrb[0].mxu0 %v478
  %v759 = vpop.f32.mrb[0].mxu0
  %v760 = vadd.f32 0.0, %v759
  %v761 = vpop.f32.mrb[0].mxu0
  %v762 = vpop.f32.mrb[0].mxu0
  %v763 = vadd.f32 0.0, %v762
  %v764 = vpop.f32.mrb[0].mxu0
  %765 = vmatprep.mubr.bf16.mxu0 0
  %766 = vmatmul.mubr.bf16.gmra.mrb[0].mxu0 %v481
  %v767 = vpop.f32.mrb[0].mxu0
  %v768 = vadd.f32 0.0, %v767
  %v769 = vpop.f32.mrb[0].mxu0
  %v770 = vpop.f32.mrb[0].mxu0
  %v771 = vadd.f32 0.0, %v770
  %v772 = vpop.f32.mrb[0].mxu0
  %773 = vmatprep.mubr.bf16.mxu0 0
  %774 = vmatmul.mubr.bf16.gmra.mrb[0].mxu0 %v484
  %v775 = vpop.f32.mrb[0].mxu0
  %v776 = vadd.f32 0.0, %v775
  %v777 = vpop.f32.mrb[0].mxu0
  %v778 = vpop.f32.mrb[0].mxu0
  %v779 = vadd.f32 0.0, %v778
  %v780 = vpop.f32.mrb[0].mxu0
  %781 = vdwg.mxu0
  %v782 = vadd.f32 %v86, %v528
  %v783 = vadd.f32 %v87, %v531
  %v784 = vadd.f32 %v88, %v536
  %v785 = vadd.f32 %v89, %v539
  %v786 = vadd.f32 %v90, %v544
  %v787 = vadd.f32 %v91, %v547
  %v788 = vadd.f32 %v92, %v552
  %v789 = vadd.f32 %v93, %v555
  %v790 = vadd.f32 %v94, %v560
  %v791 = vadd.f32 %v95, %v563
  %v792 = vadd.f32 %v96, %v568
  %v793 = vadd.f32 %v97, %v571
  %v794 = vadd.f32 %v98, %v576
  %v795 = vadd.f32 %v99, %v579
  %v796 = vadd.f32 %v100, %v584
  %v797 = vadd.f32 %v101, %v587
  %v798 = vadd.f32 %v102, %v592
  %v799 = vadd.f32 %v103, %v595
  %v800 = vadd.f32 %v104, %v600
  %v801 = vadd.f32 %v105, %v603
  %v802 = vadd.f32 %v106, %v608
  %v803 = vadd.f32 %v107, %v611
  %v804 = vadd.f32 %v108, %v616
  %v805 = vadd.f32 %v109, %v619
  %v806 = vadd.f32 %v110, %v624
  %v807 = vadd.f32 %v111, %v627
  %v808 = vadd.f32 %v112, %v632
  %v809 = vadd.f32 %v113, %v635
  %v810 = vadd.f32 %v114, %v640
  %v811 = vadd.f32 %v115, %v643
  %v812 = vadd.f32 %v116, %v648
  %v813 = vadd.f32 %v117, %v651
  %v814 = vadd.f32 %v118, %v656
  %v815 = vadd.f32 %v119, %v659
  %v816 = vadd.f32 %v120, %v664
  %v817 = vadd.f32 %v121, %v667
  %v818 = vadd.f32 %v122, %v672
  %v819 = vadd.f32 %v123, %v675
  %v820 = vadd.f32 %v124, %v680
  %v821 = vadd.f32 %v125, %v683
  %v822 = vadd.f32 %v126, %v688
  %v823 = vadd.f32 %v127, %v691
  %v824 = vadd.f32 %v128, %v696
  %v825 = vadd.f32 %v129, %v699
  %v826 = vadd.f32 %v130, %v704
  %v827 = vadd.f32 %v131, %v707
  %v828 = vadd.f32 %v132, %v712
  %v829 = vadd.f32 %v133, %v715
  %v830 = vadd.f32 %v134, %v720
  %v831 = vadd.f32 %v135, %v723
  %v832 = vadd.f32 %v136, %v728
  %v833 = vadd.f32 %v137, %v731
  %v834 = vadd.f32 %v138, %v736
  %v835 = vadd.f32 %v139, %v739
  %v836 = vadd.f32 %v140, %v744
  %v837 = vadd.f32 %v141, %v747
  %v838 = vadd.f32 %v142, %v752
  %v839 = vadd.f32 %v143, %v755
  %v840 = vadd.f32 %v144, %v760
  %v841 = vadd.f32 %v145, %v763
  %v842 = vadd.f32 %v146, %v768
  %v843 = vadd.f32 %v147, %v771
  %v844 = vadd.f32 %v148, %v776
  %v845 = vadd.f32 %v149, %v779
  %846 = vst [vmem:[#allocation2] sm:$0xff] %v782
  %847 = vst [vmem:[#allocation2 + $0x8] sm:$0xff] %v783
  %848 = vst [vmem:[#allocation2 + $0x10] sm:$0xff] %v784
  %849 = vst [vmem:[#allocation2 + $0x18] sm:$0xff] %v785
  %850 = vst [vmem:[#allocation2 + $0x20] sm:$0xff] %v786
  %851 = vst [vmem:[#allocation2 + $0x28] sm:$0xff] %v787
  %852 = vst [vmem:[#allocation2 + $0x30] sm:$0xff] %v788
  %853 = vst [vmem:[#allocation2 + $0x38] sm:$0xff] %v789
  %854 = vst [vmem:[#allocation2 + $0x40] sm:$0xff] %v790
  %855 = vst [vmem:[#allocation2 + $0x48] sm:$0xff] %v791
  %856 = vst [vmem:[#allocation2 + $0x50] sm:$0xff] %v792
  %857 = vst [vmem:[#allocation2 + $0x58] sm:$0xff] %v793
  %858 = vst [vmem:[#allocation2 + $0x60] sm:$0xff] %v794
  %859 = vst [vmem:[#allocation2 + $0x68] sm:$0xff] %v795
  %860 = vst [vmem:[#allocation2 + $0x70] sm:$0xff] %v796
  %861 = vst [vmem:[#allocation2 + $0x78] sm:$0xff] %v797
  %862 = vst [vmem:[#allocation2 + $0x80] sm:$0xff] %v798
  %863 = vst [vmem:[#allocation2 + $0x88] sm:$0xff] %v799
  %864 = vst [vmem:[#allocation2 + $0x90] sm:$0xff] %v800
  %865 = vst [vmem:[#allocation2 + $0x98] sm:$0xff] %v801
  %866 = vst [vmem:[#allocation2 + $0xa0] sm:$0xff] %v802
  %867 = vst [vmem:[#allocation2 + $0xa8] sm:$0xff] %v803
  %868 = vst [vmem:[#allocation2 + $0xb0] sm:$0xff] %v804
  %869 = vst [vmem:[#allocation2 + $0xb8] sm:$0xff] %v805
  %870 = vst [vmem:[#allocation2 + $0xc0] sm:$0xff] %v806
  %871 = vst [vmem:[#allocation2 + $0xc8] sm:$0xff] %v807
  %872 = vst [vmem:[#allocation2 + $0xd0] sm:$0xff] %v808
  %873 = vst [vmem:[#allocation2 + $0xd8] sm:$0xff] %v809
  %874 = vst [vmem:[#allocation2 + $0xe0] sm:$0xff] %v810
  %875 = vst [vmem:[#allocation2 + $0xe8] sm:$0xff] %v811
  %876 = vst [vmem:[#allocation2 + $0xf0] sm:$0xff] %v812
  %877 = vst [vmem:[#allocation2 + $0xf8] sm:$0xff] %v813
  %878 = vst [vmem:[#allocation2 + $0x100] sm:$0xff] %v814
  %879 = vst [vmem:[#allocation2 + $0x108] sm:$0xff] %v815
  %880 = vst [vmem:[#allocation2 + $0x110] sm:$0xff] %v816
  %881 = vst [vmem:[#allocation2 + $0x118] sm:$0xff] %v817
  %882 = vst [vmem:[#allocation2 + $0x120] sm:$0xff] %v818
  %883 = vst [vmem:[#allocation2 + $0x128] sm:$0xff] %v819
  %884 = vst [vmem:[#allocation2 + $0x130] sm:$0xff] %v820
  %885 = vst [vmem:[#allocation2 + $0x138] sm:$0xff] %v821
  %886 = vst [vmem:[#allocation2 + $0x140] sm:$0xff] %v822
  %887 = vst [vmem:[#allocation2 + $0x148] sm:$0xff] %v823
  %888 = vst [vmem:[#allocation2 + $0x150] sm:$0xff] %v824
  %889 = vst [vmem:[#allocation2 + $0x158] sm:$0xff] %v825
  %890 = vst [vmem:[#allocation2 + $0x160] sm:$0xff] %v826
  %891 = vst [vmem:[#allocation2 + $0x168] sm:$0xff] %v827
  %892 = vst [vmem:[#allocation2 + $0x170] sm:$0xff] %v828
  %893 = vst [vmem:[#allocation2 + $0x178] sm:$0xff] %v829
  %894 = vst [vmem:[#allocation2 + $0x180] sm:$0xff] %v830
  %895 = vst [vmem:[#allocation2 + $0x188] sm:$0xff] %v831
  %896 = vst [vmem:[#allocation2 + $0x190] sm:$0xff] %v832
  %897 = vst [vmem:[#allocation2 + $0x198] sm:$0xff] %v833
  %898 = vst [vmem:[#allocation2 + $0x1a0] sm:$0xff] %v834
  %899 = vst [vmem:[#allocation2 + $0x1a8] sm:$0xff] %v835
  %900 = vst [vmem:[#allocation2 + $0x1b0] sm:$0xff] %v836
  %901 = vst [vmem:[#allocation2 + $0x1b8] sm:$0xff] %v837
  %902 = vst [vmem:[#allocation2 + $0x1c0] sm:$0xff] %v838
  %903 = vst [vmem:[#allocation2 + $0x1c8] sm:$0xff] %v839
  %904 = vst [vmem:[#allocation2 + $0x1d0] sm:$0xff] %v840
  %905 = vst [vmem:[#allocation2 + $0x1d8] sm:$0xff] %v841
  %906 = vst [vmem:[#allocation2 + $0x1e0] sm:$0xff] %v842
  %907 = vst [vmem:[#allocation2 + $0x1e8] sm:$0xff] %v843
  %908 = vst [vmem:[#allocation2 + $0x1f0] sm:$0xff] %v844
  %909 = vst [vmem:[#allocation2 + $0x1f8] sm:$0xff] %v845
  // Predicated region
  $region22: #{strided_encoder.10} parent=0 // pred_check
    %p910 = pneg %p18
  $region23: #{strided_encoder.10} parent=0 // pred_check_branch
    %912 = sbr.rel (%p910) target = $region25
  $region24: #{strided_encoder.10} parent=0 // pred_region
    %v913 = vld [vmem:[#allocation2] sm:$0xff]
    %v914 = vld [vmem:[#allocation2 + $0x8] sm:$0xff]
    %v915 = vld [vmem:[#allocation2 + $0x10] sm:$0xff]
    %v916 = vld [vmem:[#allocation2 + $0x18] sm:$0xff]
    %v917 = vld [vmem:[#allocation2 + $0x20] sm:$0xff]
    %v918 = vld [vmem:[#allocation2 + $0x28] sm:$0xff]
    %v919 = vld [vmem:[#allocation2 + $0x30] sm:$0xff]
    %v920 = vld [vmem:[#allocation2 + $0x38] sm:$0xff]
    %v921 = vld [vmem:[#allocation2 + $0x40] sm:$0xff]
    %v922 = vld [vmem:[#allocation2 + $0x48] sm:$0xff]
    %v923 = vld [vmem:[#allocation2 + $0x50] sm:$0xff]
    %v924 = vld [vmem:[#allocation2 + $0x58] sm:$0xff]
    %v925 = vld [vmem:[#allocation2 + $0x60] sm:$0xff]
    %v926 = vld [vmem:[#allocation2 + $0x68] sm:$0xff]
    %v927 = vld [vmem:[#allocation2 + $0x70] sm:$0xff]
    %v928 = vld [vmem:[#allocation2 + $0x78] sm:$0xff]
    %v929 = vld [vmem:[#allocation2 + $0x80] sm:$0xff]
    %v930 = vld [vmem:[#allocation2 + $0x88] sm:$0xff]
    %v931 = vld [vmem:[#allocation2 + $0x90] sm:$0xff]
    %v932 = vld [vmem:[#allocation2 + $0x98] sm:$0xff]
    %v933 = vld [vmem:[#allocation2 + $0xa0] sm:$0xff]
    %v934 = vld [vmem:[#allocation2 + $0xa8] sm:$0xff]
    %v935 = vld [vmem:[#allocation2 + $0xb0] sm:$0xff]
    %v936 = vld [vmem:[#allocation2 + $0xb8] sm:$0xff]
    %v937 = vld [vmem:[#allocation2 + $0xc0] sm:$0xff]
    %v938 = vld [vmem:[#allocation2 + $0xc8] sm:$0xff]
    %v939 = vld [vmem:[#allocation2 + $0xd0] sm:$0xff]
    %v940 = vld [vmem:[#allocation2 + $0xd8] sm:$0xff]
    %v941 = vld [vmem:[#allocation2 + $0xe0] sm:$0xff]
    %v942 = vld [vmem:[#allocation2 + $0xe8] sm:$0xff]
    %v943 = vld [vmem:[#allocation2 + $0xf0] sm:$0xff]
    %v944 = vld [vmem:[#allocation2 + $0xf8] sm:$0xff]
    %v945 = vld [vmem:[#allocation2 + $0x100] sm:$0xff]
    %v946 = vld [vmem:[#allocation2 + $0x108] sm:$0xff]
    %v947 = vld [vmem:[#allocation2 + $0x110] sm:$0xff]
    %v948 = vld [vmem:[#allocation2 + $0x118] sm:$0xff]
    %v949 = vld [vmem:[#allocation2 + $0x120] sm:$0xff]
    %v950 = vld [vmem:[#allocation2 + $0x128] sm:$0xff]
    %v951 = vld [vmem:[#allocation2 + $0x130] sm:$0xff]
    %v952 = vld [vmem:[#allocation2 + $0x138] sm:$0xff]
    %v953 = vld [vmem:[#allocation2 + $0x140] sm:$0xff]
    %v954 = vld [vmem:[#allocation2 + $0x148] sm:$0xff]
    %v955 = vld [vmem:[#allocation2 + $0x150] sm:$0xff]
    %v956 = vld [vmem:[#allocation2 + $0x158] sm:$0xff]
    %v957 = vld [vmem:[#allocation2 + $0x160] sm:$0xff]
    %v958 = vld [vmem:[#allocation2 + $0x168] sm:$0xff]
    %v959 = vld [vmem:[#allocation2 + $0x170] sm:$0xff]
    %v960 = vld [vmem:[#allocation2 + $0x178] sm:$0xff]
    %v961 = vld [vmem:[#allocation2 + $0x180] sm:$0xff]
    %v962 = vld [vmem:[#allocation2 + $0x188] sm:$0xff]
    %v963 = vld [vmem:[#allocation2 + $0x190] sm:$0xff]
    %v964 = vld [vmem:[#allocation2 + $0x198] sm:$0xff]
    %v965 = vld [vmem:[#allocation2 + $0x1a0] sm:$0xff]
    %v966 = vld [vmem:[#allocation2 + $0x1a8] sm:$0xff]
    %v967 = vld [vmem:[#allocation2 + $0x1b0] sm:$0xff]
    %v968 = vld [vmem:[#allocation2 + $0x1b8] sm:$0xff]
    %v969 = vld [vmem:[#allocation2 + $0x1c0] sm:$0xff]
    %v970 = vld [vmem:[#allocation2 + $0x1c8] sm:$0xff]
    %v971 = vld [vmem:[#allocation2 + $0x1d0] sm:$0xff]
    %v972 = vld [vmem:[#allocation2 + $0x1d8] sm:$0xff]
    %v973 = vld [vmem:[#allocation2 + $0x1e0] sm:$0xff]
    %v974 = vld [vmem:[#allocation2 + $0x1e8] sm:$0xff]
    %v975 = vld [vmem:[#allocation2 + $0x1f0] sm:$0xff]
    %v976 = vld [vmem:[#allocation2 + $0x1f8] sm:$0xff]
    %v977 = vld [vmem:[%s2] sm:$0x1]
    %v979 = vlaneseq
    %v980 = vshrl.u32 %v979, 7
    %v981 = vsub.s32 0, %v980
    %v982 = vrot.slane %v977, %v981
    %v984 = vmul.f32 %v913, %v982
    %v985 = vmul.f32 %v914, %v982
    %v986 = vmul.f32 %v915, %v982
    %v987 = vmul.f32 %v916, %v982
    %v988 = vmul.f32 %v917, %v982
    %v989 = vmul.f32 %v918, %v982
    %v990 = vmul.f32 %v919, %v982
    %v991 = vmul.f32 %v920, %v982
    %v992 = vmul.f32 %v921, %v982
    %v993 = vmul.f32 %v922, %v982
    %v994 = vmul.f32 %v923, %v982
    %v995 = vmul.f32 %v924, %v982
    %v996 = vmul.f32 %v925, %v982
    %v997 = vmul.f32 %v926, %v982
    %v998 = vmul.f32 %v927, %v982
    %v999 = vmul.f32 %v928, %v982
    %v1000 = vmul.f32 %v929, %v982
    %v1001 = vmul.f32 %v930, %v982
    %v1002 = vmul.f32 %v931, %v982
    %v1003 = vmul.f32 %v932, %v982
    %v1004 = vmul.f32 %v933, %v982
    %v1005 = vmul.f32 %v934, %v982
    %v1006 = vmul.f32 %v935, %v982
    %v1007 = vmul.f32 %v936, %v982
    %v1008 = vmul.f32 %v937, %v982
    %v1009 = vmul.f32 %v938, %v982
    %v1010 = vmul.f32 %v939, %v982
    %v1011 = vmul.f32 %v940, %v982
    %v1012 = vmul.f32 %v941, %v982
    %v1013 = vmul.f32 %v942, %v982
    %v1014 = vmul.f32 %v943, %v982
    %v1015 = vmul.f32 %v944, %v982
    %v1016 = vmul.f32 %v945, %v982
    %v1017 = vmul.f32 %v946, %v982
    %v1018 = vmul.f32 %v947, %v982
    %v1019 = vmul.f32 %v948, %v982
    %v1020 = vmul.f32 %v949, %v982
    %v1021 = vmul.f32 %v950, %v982
    %v1022 = vmul.f32 %v951, %v982
    %v1023 = vmul.f32 %v952, %v982
    %v1024 = vmul.f32 %v953, %v982
    %v1025 = vmul.f32 %v954, %v982
    %v1026 = vmul.f32 %v955, %v982
    %v1027 = vmul.f32 %v956, %v982
    %v1028 = vmul.f32 %v957, %v982
    %v1029 = vmul.f32 %v958, %v982
    %v1030 = vmul.f32 %v959, %v982
    %v1031 = vmul.f32 %v960, %v982
    %v1032 = vmul.f32 %v961, %v982
    %v1033 = vmul.f32 %v962, %v982
    %v1034 = vmul.f32 %v963, %v982
    %v1035 = vmul.f32 %v964, %v982
    %v1036 = vmul.f32 %v965, %v982
    %v1037 = vmul.f32 %v966, %v982
    %v1038 = vmul.f32 %v967, %v982
    %v1039 = vmul.f32 %v968, %v982
    %v1040 = vmul.f32 %v969, %v982
    %v1041 = vmul.f32 %v970, %v982
    %v1042 = vmul.f32 %v971, %v982
    %v1043 = vmul.f32 %v972, %v982
    %v1044 = vmul.f32 %v973, %v982
    %v1045 = vmul.f32 %v974, %v982
    %v1046 = vmul.f32 %v975, %v982
    %v1047 = vmul.f32 %v976, %v982
    %v1048 = vld [vmem:[%s3] sm:$0x1]
    %v1050 = vlaneseq
    %v1051 = vshrl.u32 %v1050, 7
    %v1052 = vsub.s32 0, %v1051
    %v1053 = vrot.slane %v1048, %v1052
    %v1055 = vadd.f32 %v984, %v1053
    %v1056 = vadd.f32 %v985, %v1053
    %v1057 = vadd.f32 %v986, %v1053
    %v1058 = vadd.f32 %v987, %v1053
    %v1059 = vadd.f32 %v988, %v1053
    %v1060 = vadd.f32 %v989, %v1053
    %v1061 = vadd.f32 %v990, %v1053
    %v1062 = vadd.f32 %v991, %v1053
    %v1063 = vadd.f32 %v992, %v1053
    %v1064 = vadd.f32 %v993, %v1053
    %v1065 = vadd.f32 %v994, %v1053
    %v1066 = vadd.f32 %v995, %v1053
    %v1067 = vadd.f32 %v996, %v1053
    %v1068 = vadd.f32 %v997, %v1053
    %v1069 = vadd.f32 %v998, %v1053
    %v1070 = vadd.f32 %v999, %v1053
    %v1071 = vadd.f32 %v1000, %v1053
    %v1072 = vadd.f32 %v1001, %v1053
    %v1073 = vadd.f32 %v1002, %v1053
    %v1074 = vadd.f32 %v1003, %v1053
    %v1075 = vadd.f32 %v1004, %v1053
    %v1076 = vadd.f32 %v1005, %v1053
    %v1077 = vadd.f32 %v1006, %v1053
    %v1078 = vadd.f32 %v1007, %v1053
    %v1079 = vadd.f32 %v1008, %v1053
    %v1080 = vadd.f32 %v1009, %v1053
    %v1081 = vadd.f32 %v1010, %v1053
    %v1082 = vadd.f32 %v1011, %v1053
    %v1083 = vadd.f32 %v1012, %v1053
    %v1084 = vadd.f32 %v1013, %v1053
    %v1085 = vadd.f32 %v1014, %v1053
    %v1086 = vadd.f32 %v1015, %v1053
    %v1087 = vadd.f32 %v1016, %v1053
    %v1088 = vadd.f32 %v1017, %v1053
    %v1089 = vadd.f32 %v1018, %v1053
    %v1090 = vadd.f32 %v1019, %v1053
    %v1091 = vadd.f32 %v1020, %v1053
    %v1092 = vadd.f32 %v1021, %v1053
    %v1093 = vadd.f32 %v1022, %v1053
    %v1094 = vadd.f32 %v1023, %v1053
    %v1095 = vadd.f32 %v1024, %v1053
    %v1096 = vadd.f32 %v1025, %v1053
    %v1097 = vadd.f32 %v1026, %v1053
    %v1098 = vadd.f32 %v1027, %v1053
    %v1099 = vadd.f32 %v1028, %v1053
    %v1100 = vadd.f32 %v1029, %v1053
    %v1101 = vadd.f32 %v1030, %v1053
    %v1102 = vadd.f32 %v1031, %v1053
    %v1103 = vadd.f32 %v1032, %v1053
    %v1104 = vadd.f32 %v1033, %v1053
    %v1105 = vadd.f32 %v1034, %v1053
    %v1106 = vadd.f32 %v1035, %v1053
    %v1107 = vadd.f32 %v1036, %v1053
    %v1108 = vadd.f32 %v1037, %v1053
    %v1109 = vadd.f32 %v1038, %v1053
    %v1110 = vadd.f32 %v1039, %v1053
    %v1111 = vadd.f32 %v1040, %v1053
    %v1112 = vadd.f32 %v1041, %v1053
    %v1113 = vadd.f32 %v1042, %v1053
    %v1114 = vadd.f32 %v1043, %v1053
    %v1115 = vadd.f32 %v1044, %v1053
    %v1116 = vadd.f32 %v1045, %v1053
    %v1117 = vadd.f32 %v1046, %v1053
    %v1118 = vadd.f32 %v1047, %v1053
    %v1119 = vmax.f32 %v1055, 0.0
    %v1120 = vmax.f32 %v1056, 0.0
    %v1121 = vmax.f32 %v1057, 0.0
    %v1122 = vmax.f32 %v1058, 0.0
    %v1123 = vmax.f32 %v1059, 0.0
    %v1124 = vmax.f32 %v1060, 0.0
    %v1125 = vmax.f32 %v1061, 0.0
    %v1126 = vmax.f32 %v1062, 0.0
    %v1127 = vmax.f32 %v1063, 0.0
    %v1128 = vmax.f32 %v1064, 0.0
    %v1129 = vmax.f32 %v1065, 0.0
    %v1130 = vmax.f32 %v1066, 0.0
    %v1131 = vmax.f32 %v1067, 0.0
    %v1132 = vmax.f32 %v1068, 0.0
    %v1133 = vmax.f32 %v1069, 0.0
    %v1134 = vmax.f32 %v1070, 0.0
    %v1135 = vmax.f32 %v1071, 0.0
    %v1136 = vmax.f32 %v1072, 0.0
    %v1137 = vmax.f32 %v1073, 0.0
    %v1138 = vmax.f32 %v1074, 0.0
    %v1139 = vmax.f32 %v1075, 0.0
    %v1140 = vmax.f32 %v1076, 0.0
    %v1141 = vmax.f32 %v1077, 0.0
    %v1142 = vmax.f32 %v1078, 0.0
    %v1143 = vmax.f32 %v1079, 0.0
    %v1144 = vmax.f32 %v1080, 0.0
    %v1145 = vmax.f32 %v1081, 0.0
    %v1146 = vmax.f32 %v1082, 0.0
    %v1147 = vmax.f32 %v1083, 0.0
    %v1148 = vmax.f32 %v1084, 0.0
    %v1149 = vmax.f32 %v1085, 0.0
    %v1150 = vmax.f32 %v1086, 0.0
    %v1151 = vmax.f32 %v1087, 0.0
    %v1152 = vmax.f32 %v1088, 0.0
    %v1153 = vmax.f32 %v1089, 0.0
    %v1154 = vmax.f32 %v1090, 0.0
    %v1155 = vmax.f32 %v1091, 0.0
    %v1156 = vmax.f32 %v1092, 0.0
    %v1157 = vmax.f32 %v1093, 0.0
    %v1158 = vmax.f32 %v1094, 0.0
    %v1159 = vmax.f32 %v1095, 0.0
    %v1160 = vmax.f32 %v1096, 0.0
    %v1161 = vmax.f32 %v1097, 0.0
    %v1162 = vmax.f32 %v1098, 0.0
    %v1163 = vmax.f32 %v1099, 0.0
    %v1164 = vmax.f32 %v1100, 0.0
    %v1165 = vmax.f32 %v1101, 0.0
    %v1166 = vmax.f32 %v1102, 0.0
    %v1167 = vmax.f32 %v1103, 0.0
    %v1168 = vmax.f32 %v1104, 0.0
    %v1169 = vmax.f32 %v1105, 0.0
    %v1170 = vmax.f32 %v1106, 0.0
    %v1171 = vmax.f32 %v1107, 0.0
    %v1172 = vmax.f32 %v1108, 0.0
    %v1173 = vmax.f32 %v1109, 0.0
    %v1174 = vmax.f32 %v1110, 0.0
    %v1175 = vmax.f32 %v1111, 0.0
    %v1176 = vmax.f32 %v1112, 0.0
    %v1177 = vmax.f32 %v1113, 0.0
    %v1178 = vmax.f32 %v1114, 0.0
    %v1179 = vmax.f32 %v1115, 0.0
    %v1180 = vmax.f32 %v1116, 0.0
    %v1181 = vmax.f32 %v1117, 0.0
    %v1182 = vmax.f32 %v1118, 0.0
    %v1183 = vpack.c.bf16 %v1120, %v1119
    %v1184 = vpack.c.bf16 %v1122, %v1121
    %v1185 = vpack.c.bf16 %v1124, %v1123
    %v1186 = vpack.c.bf16 %v1126, %v1125
    %v1187 = vpack.c.bf16 %v1128, %v1127
    %v1188 = vpack.c.bf16 %v1130, %v1129
    %v1189 = vpack.c.bf16 %v1132, %v1131
    %v1190 = vpack.c.bf16 %v1134, %v1133
    %v1191 = vpack.c.bf16 %v1136, %v1135
    %v1192 = vpack.c.bf16 %v1138, %v1137
    %v1193 = vpack.c.bf16 %v1140, %v1139
    %v1194 = vpack.c.bf16 %v1142, %v1141
    %v1195 = vpack.c.bf16 %v1144, %v1143
    %v1196 = vpack.c.bf16 %v1146, %v1145
    %v1197 = vpack.c.bf16 %v1148, %v1147
    %v1198 = vpack.c.bf16 %v1150, %v1149
    %v1199 = vpack.c.bf16 %v1152, %v1151
    %v1200 = vpack.c.bf16 %v1154, %v1153
    %v1201 = vpack.c.bf16 %v1156, %v1155
    %v1202 = vpack.c.bf16 %v1158, %v1157
    %v1203 = vpack.c.bf16 %v1160, %v1159
    %v1204 = vpack.c.bf16 %v1162, %v1161
    %v1205 = vpack.c.bf16 %v1164, %v1163
    %v1206 = vpack.c.bf16 %v1166, %v1165
    %v1207 = vpack.c.bf16 %v1168, %v1167
    %v1208 = vpack.c.bf16 %v1170, %v1169
    %v1209 = vpack.c.bf16 %v1172, %v1171
    %v1210 = vpack.c.bf16 %v1174, %v1173
    %v1211 = vpack.c.bf16 %v1176, %v1175
    %v1212 = vpack.c.bf16 %v1178, %v1177
    %v1213 = vpack.c.bf16 %v1180, %v1179
    %v1214 = vpack.c.bf16 %v1182, %v1181
    %v1247 = vunpack.c.l.b16 %v1183
    %v1248 = vunpack.c.h.b16 %v1183
    %v1249 = vunpack.c.l.b16 %v1184
    %v1250 = vunpack.c.h.b16 %v1184
    %v1251 = vunpack.c.l.b16 %v1185
    %v1252 = vunpack.c.h.b16 %v1185
    %v1253 = vunpack.c.l.b16 %v1186
    %v1254 = vunpack.c.h.b16 %v1186
    %v1255 = vunpack.c.l.b16 %v1187
    %v1256 = vunpack.c.h.b16 %v1187
    %v1257 = vunpack.c.l.b16 %v1188
    %v1258 = vunpack.c.h.b16 %v1188
    %v1259 = vunpack.c.l.b16 %v1189
    %v1260 = vunpack.c.h.b16 %v1189
    %v1261 = vunpack.c.l.b16 %v1190
    %v1262 = vunpack.c.h.b16 %v1190
    %v1263 = vunpack.c.l.b16 %v1191
    %v1264 = vunpack.c.h.b16 %v1191
    %v1265 = vunpack.c.l.b16 %v1192
    %v1266 = vunpack.c.h.b16 %v1192
    %v1267 = vunpack.c.l.b16 %v1193
    %v1268 = vunpack.c.h.b16 %v1193
    %v1269 = vunpack.c.l.b16 %v1194
    %v1270 = vunpack.c.h.b16 %v1194
    %v1271 = vunpack.c.l.b16 %v1195
    %v1272 = vunpack.c.h.b16 %v1195
    %v1273 = vunpack.c.l.b16 %v1196
    %v1274 = vunpack.c.h.b16 %v1196
    %v1275 = vunpack.c.l.b16 %v1197
    %v1276 = vunpack.c.h.b16 %v1197
    %v1277 = vunpack.c.l.b16 %v1198
    %v1278 = vunpack.c.h.b16 %v1198
    %v1279 = vunpack.c.l.b16 %v1199
    %v1280 = vunpack.c.h.b16 %v1199
    %v1281 = vunpack.c.l.b16 %v1200
    %v1282 = vunpack.c.h.b16 %v1200
    %v1283 = vunpack.c.l.b16 %v1201
    %v1284 = vunpack.c.h.b16 %v1201
    %v1285 = vunpack.c.l.b16 %v1202
    %v1286 = vunpack.c.h.b16 %v1202
    %v1287 = vunpack.c.l.b16 %v1203
    %v1288 = vunpack.c.h.b16 %v1203
    %v1289 = vunpack.c.l.b16 %v1204
    %v1290 = vunpack.c.h.b16 %v1204
    %v1291 = vunpack.c.l.b16 %v1205
    %v1292 = vunpack.c.h.b16 %v1205
    %v1293 = vunpack.c.l.b16 %v1206
    %v1294 = vunpack.c.h.b16 %v1206
    %v1295 = vunpack.c.l.b16 %v1207
    %v1296 = vunpack.c.h.b16 %v1207
    %v1297 = vunpack.c.l.b16 %v1208
    %v1298 = vunpack.c.h.b16 %v1208
    %v1299 = vunpack.c.l.b16 %v1209
    %v1300 = vunpack.c.h.b16 %v1209
    %v1301 = vunpack.c.l.b16 %v1210
    %v1302 = vunpack.c.h.b16 %v1210
    %v1303 = vunpack.c.l.b16 %v1211
    %v1304 = vunpack.c.h.b16 %v1211
    %v1305 = vunpack.c.l.b16 %v1212
    %v1306 = vunpack.c.h.b16 %v1212
    %v1307 = vunpack.c.l.b16 %v1213
    %v1308 = vunpack.c.h.b16 %v1213
    %v1309 = vunpack.c.l.b16 %v1214
    %v1310 = vunpack.c.h.b16 %v1214
    %v1311 = vpack.c.b16 %v1247, %v1247
    %v1312 = vpack.c.b16 %v1248, %v1248
    %v1313 = vpack.c.b16 %v1249, %v1249
    %v1314 = vpack.c.b16 %v1250, %v1250
    %v1315 = vpack.c.b16 %v1251, %v1251
    %v1316 = vpack.c.b16 %v1252, %v1252
    %v1317 = vpack.c.b16 %v1253, %v1253
    %v1318 = vpack.c.b16 %v1254, %v1254
    %v1319 = vpack.c.b16 %v1255, %v1255
    %v1320 = vpack.c.b16 %v1256, %v1256
    %v1321 = vpack.c.b16 %v1257, %v1257
    %v1322 = vpack.c.b16 %v1258, %v1258
    %v1323 = vpack.c.b16 %v1259, %v1259
    %v1324 = vpack.c.b16 %v1260, %v1260
    %v1325 = vpack.c.b16 %v1261, %v1261
    %v1326 = vpack.c.b16 %v1262, %v1262
    %v1327 = vpack.c.b16 %v1263, %v1263
    %v1328 = vpack.c.b16 %v1264, %v1264
    %v1329 = vpack.c.b16 %v1265, %v1265
    %v1330 = vpack.c.b16 %v1266, %v1266
    %v1331 = vpack.c.b16 %v1267, %v1267
    %v1332 = vpack.c.b16 %v1268, %v1268
    %v1333 = vpack.c.b16 %v1269, %v1269
    %v1334 = vpack.c.b16 %v1270, %v1270
    %v1335 = vpack.c.b16 %v1271, %v1271
    %v1336 = vpack.c.b16 %v1272, %v1272
    %v1337 = vpack.c.b16 %v1273, %v1273
    %v1338 = vpack.c.b16 %v1274, %v1274
    %v1339 = vpack.c.b16 %v1275, %v1275
    %v1340 = vpack.c.b16 %v1276, %v1276
    %v1341 = vpack.c.b16 %v1277, %v1277
    %v1342 = vpack.c.b16 %v1278, %v1278
    %v1343 = vpack.c.b16 %v1279, %v1279
    %v1344 = vpack.c.b16 %v1280, %v1280
    %v1345 = vpack.c.b16 %v1281, %v1281
    %v1346 = vpack.c.b16 %v1282, %v1282
    %v1347 = vpack.c.b16 %v1283, %v1283
    %v1348 = vpack.c.b16 %v1284, %v1284
    %v1349 = vpack.c.b16 %v1285, %v1285
    %v1350 = vpack.c.b16 %v1286, %v1286
    %v1351 = vpack.c.b16 %v1287, %v1287
    %v1352 = vpack.c.b16 %v1288, %v1288
    %v1353 = vpack.c.b16 %v1289, %v1289
    %v1354 = vpack.c.b16 %v1290, %v1290
    %v1355 = vpack.c.b16 %v1291, %v1291
    %v1356 = vpack.c.b16 %v1292, %v1292
    %v1357 = vpack.c.b16 %v1293, %v1293
    %v1358 = vpack.c.b16 %v1294, %v1294
    %v1359 = vpack.c.b16 %v1295, %v1295
    %v1360 = vpack.c.b16 %v1296, %v1296
    %v1361 = vpack.c.b16 %v1297, %v1297
    %v1362 = vpack.c.b16 %v1298, %v1298
    %v1363 = vpack.c.b16 %v1299, %v1299
    %v1364 = vpack.c.b16 %v1300, %v1300
    %v1365 = vpack.c.b16 %v1301, %v1301
    %v1366 = vpack.c.b16 %v1302, %v1302
    %v1367 = vpack.c.b16 %v1303, %v1303
    %v1368 = vpack.c.b16 %v1304, %v1304
    %v1369 = vpack.c.b16 %v1305, %v1305
    %v1370 = vpack.c.b16 %v1306, %v1306
    %v1371 = vpack.c.b16 %v1307, %v1307
    %v1372 = vpack.c.b16 %v1308, %v1308
    %v1373 = vpack.c.b16 %v1309, %v1309
    %v1374 = vpack.c.b16 %v1310, %v1310
    %1439 = vst [vmem:[%s4] sm:$0xf] %v1311
    %1440 = vst [vmem:[%s4 + $0x4] sm:$0xf] %v1312
    %1441 = vst [vmem:[%s4 + $0x8] sm:$0xf] %v1313
    %1442 = vst [vmem:[%s4 + $0xc] sm:$0xf] %v1314
    %1443 = vst [vmem:[%s4 + $0x10] sm:$0xf] %v1315
    %1444 = vst [vmem:[%s4 + $0x14] sm:$0xf] %v1316
    %1445 = vst [vmem:[%s4 + $0x18] sm:$0xf] %v1317
    %1446 = vst [vmem:[%s4 + $0x1c] sm:$0xf] %v1318
    %1447 = vst [vmem:[%s4 + $0x20] sm:$0xf] %v1319
    %1448 = vst [vmem:[%s4 + $0x24] sm:$0xf] %v1320
    %1449 = vst [vmem:[%s4 + $0x28] sm:$0xf] %v1321
    %1450 = vst [vmem:[%s4 + $0x2c] sm:$0xf] %v1322
    %1451 = vst [vmem:[%s4 + $0x30] sm:$0xf] %v1323
    %1452 = vst [vmem:[%s4 + $0x34] sm:$0xf] %v1324
    %1453 = vst [vmem:[%s4 + $0x38] sm:$0xf] %v1325
    %1454 = vst [vmem:[%s4 + $0x3c] sm:$0xf] %v1326
    %1455 = vst [vmem:[%s4 + $0x40] sm:$0xf] %v1327
    %1456 = vst [vmem:[%s4 + $0x44] sm:$0xf] %v1328
    %1457 = vst [vmem:[%s4 + $0x48] sm:$0xf] %v1329
    %1458 = vst [vmem:[%s4 + $0x4c] sm:$0xf] %v1330
    %1459 = vst [vmem:[%s4 + $0x50] sm:$0xf] %v1331
    %1460 = vst [vmem:[%s4 + $0x54] sm:$0xf] %v1332
    %1461 = vst [vmem:[%s4 + $0x58] sm:$0xf] %v1333
    %1462 = vst [vmem:[%s4 + $0x5c] sm:$0xf] %v1334
    %1463 = vst [vmem:[%s4 + $0x60] sm:$0xf] %v1335
    %1464 = vst [vmem:[%s4 + $0x64] sm:$0xf] %v1336
    %1465 = vst [vmem:[%s4 + $0x68] sm:$0xf] %v1337
    %1466 = vst [vmem:[%s4 + $0x6c] sm:$0xf] %v1338
    %1467 = vst [vmem:[%s4 + $0x70] sm:$0xf] %v1339
    %1468 = vst [vmem:[%s4 + $0x74] sm:$0xf] %v1340
    %1469 = vst [vmem:[%s4 + $0x78] sm:$0xf] %v1341
    %1470 = vst [vmem:[%s4 + $0x7c] sm:$0xf] %v1342
    %1471 = vst [vmem:[%s4 + $0x80] sm:$0xf] %v1343
    %1472 = vst [vmem:[%s4 + $0x84] sm:$0xf] %v1344
    %1473 = vst [vmem:[%s4 + $0x88] sm:$0xf] %v1345
    %1474 = vst [vmem:[%s4 + $0x8c] sm:$0xf] %v1346
    %1475 = vst [vmem:[%s4 + $0x90] sm:$0xf] %v1347
    %1476 = vst [vmem:[%s4 + $0x94] sm:$0xf] %v1348
    %1477 = vst [vmem:[%s4 + $0x98] sm:$0xf] %v1349
    %1478 = vst [vmem:[%s4 + $0x9c] sm:$0xf] %v1350
    %1479 = vst [vmem:[%s4 + $0xa0] sm:$0xf] %v1351
    %1480 = vst [vmem:[%s4 + $0xa4] sm:$0xf] %v1352
    %1481 = vst [vmem:[%s4 + $0xa8] sm:$0xf] %v1353
    %1482 = vst [vmem:[%s4 + $0xac] sm:$0xf] %v1354
    %1483 = vst [vmem:[%s4 + $0xb0] sm:$0xf] %v1355
    %1484 = vst [vmem:[%s4 + $0xb4] sm:$0xf] %v1356
    %1485 = vst [vmem:[%s4 + $0xb8] sm:$0xf] %v1357
    %1486 = vst [vmem:[%s4 + $0xbc] sm:$0xf] %v1358
    %1487 = vst [vmem:[%s4 + $0xc0] sm:$0xf] %v1359
    %1488 = vst [vmem:[%s4 + $0xc4] sm:$0xf] %v1360
    %1489 = vst [vmem:[%s4 + $0xc8] sm:$0xf] %v1361
    %1490 = vst [vmem:[%s4 + $0xcc] sm:$0xf] %v1362
    %1491 = vst [vmem:[%s4 + $0xd0] sm:$0xf] %v1363
    %1492 = vst [vmem:[%s4 + $0xd4] sm:$0xf] %v1364
    %1493 = vst [vmem:[%s4 + $0xd8] sm:$0xf] %v1365
    %1494 = vst [vmem:[%s4 + $0xdc] sm:$0xf] %v1366
    %1495 = vst [vmem:[%s4 + $0xe0] sm:$0xf] %v1367
    %1496 = vst [vmem:[%s4 + $0xe4] sm:$0xf] %v1368
    %1497 = vst [vmem:[%s4 + $0xe8] sm:$0xf] %v1369
    %1498 = vst [vmem:[%s4 + $0xec] sm:$0xf] %v1370
    %1499 = vst [vmem:[%s4 + $0xf0] sm:$0xf] %v1371
    %1500 = vst [vmem:[%s4 + $0xf4] sm:$0xf] %v1372
    %1501 = vst [vmem:[%s4 + $0xf8] sm:$0xf] %v1373
    %1502 = vst [vmem:[%s4 + $0xfc] sm:$0xf] %v1374
  $region25: #{strided_encoder.10} parent=0 // pred_fallthru
    _
  // Predicated region
  $region26: #{strided_encoder.10} parent=0 // pred_check
    _
  $region27: #{strided_encoder.10} parent=0 // pred_check_branch
    %1504 = sbr.rel (0) target = $region29
  $region28: #{strided_encoder.10} parent=0 // pred_region
    _
  $region29: #{strided_encoder.10} parent=0 // pred_fallthru
    _
  // Predicated region
  $region30: #{strided_encoder.10} parent=0 // pred_check
    _
  $region31: #{strided_encoder.10} parent=0 // pred_check_branch
    %1506 = sbr.rel (0) target = $region33
  $region32: #{strided_encoder.10} parent=0 // pred_region
    _
  $region33: #{strided_encoder.10} parent=0 // pred_fallthru
    _

// kernel: strided_encoder.11
$region0: #{strided_encoder.11}
  #allocation0 [shape = 'u32[]', space=smem, size = 0x4, offset = 0x4, fixed_abs, tag = 'smem constant byte address 0x4 - core index']
  #allocation1 [shape = 'u32[144,128]{1,0:T(1,128)}', space=vmem, size = 0x12000, scoped, tag = 'internal scratch']
  #allocation2 [shape = 'f32[512,128]{1,0:T(8,128)}', space=vmem, size = 0x40000, scoped, tag = 'scratch operand']
  %s0 = inlined_call_operand.vmem [shape: bf16[512,1152], index: 0, kind: input, shape index: {}]
  %s1 = inlined_call_operand.vmem [shape: bf16[1152,128], index: 1, kind: input, shape index: {}]
  %s2 = inlined_call_operand.vmem [shape: f32[1,128], index: 2, kind: input, shape index: {}]
  %s3 = inlined_call_operand.vmem [shape: f32[1,128], index: 3, kind: input, shape index: {}]
  %s4 = inlined_call_operand.vmem [shape: bf16[512,128], index: 4, kind: output, shape index: {}]
  %s5 = sld [smem:[#allocation0]]
  $region34: #{strided_encoder.11} parent=0
    _
  %s7 = ssub.s32 1, %s5
  %s8 = scalar_select 0, %s7, %s5
  // Predicated region
  $region2: #{strided_encoder.11} parent=0 // pred_check
    _
  $region3: #{strided_encoder.11} parent=0 // pred_check_branch
    %10 = sbr.rel (0) target = $region5
  $region4: #{strided_encoder.11} parent=0 // pred_region
    _
  $region5: #{strided_encoder.11} parent=0 // pred_fallthru
    _
  // Predicated region
  $region6: #{strided_encoder.11} parent=0 // pred_check
    _
  $region7: #{strided_encoder.11} parent=0 // pred_check_branch
    %12 = sbr.rel (0) target = $region9
  $region8: #{strided_encoder.11} parent=0 // pred_region
    _
  $region9: #{strided_encoder.11} parent=0 // pred_fallthru
    _
  // Predicated region
  $region10: #{strided_encoder.11} parent=0 // pred_check
    _
  $region11: #{strided_encoder.11} parent=0 // pred_check_branch
    %14 = sbr.rel (0) target = $region13
  $region12: #{strided_encoder.11} parent=0 // pred_region
    _
  $region13: #{strided_encoder.11} parent=0 // pred_fallthru
    _
  // Predicated region
  $region14: #{strided_encoder.11} parent=0 // pred_check
    _
  $region15: #{strided_encoder.11} parent=0 // pred_check_branch
    %16 = sbr.rel (0) target = $region17
  $region16: #{strided_encoder.11} parent=0 // pred_region
    _
  $region17: #{strided_encoder.11} parent=0 // pred_fallthru
    _
  %p18 = scmp.eq.s32.totalorder 0, 0
  // Predicated region
  $region18: #{strided_encoder.11} parent=0 // pred_check
    %p19 = pneg %p18
  $region19: #{strided_encoder.11} parent=0 // pred_check_branch
    %21 = sbr.rel (%p19) target = $region21
  $region20: #{strided_encoder.11} parent=0 // pred_region
    %22 = vst [vmem:[#allocation2] sm:$0xff] 0.0
    %23 = vst [vmem:[#allocation2 + $0x8] sm:$0xff] 0.0
    %24 = vst [vmem:[#allocation2 + $0x10] sm:$0xff] 0.0
    %25 = vst [vmem:[#allocation2 + $0x18] sm:$0xff] 0.0
    %26 = vst [vmem:[#allocation2 + $0x20] sm:$0xff] 0.0
    %27 = vst [vmem:[#allocation2 + $0x28] sm:$0xff] 0.0
    %28 = vst [vmem:[#allocation2 + $0x30] sm:$0xff] 0.0
    %29 = vst [vmem:[#allocation2 + $0x38] sm:$0xff] 0.0
    %30 = vst [vmem:[#allocation2 + $0x40] sm:$0xff] 0.0
    %31 = vst [vmem:[#allocation2 + $0x48] sm:$0xff] 0.0
    %32 = vst [vmem:[#allocation2 + $0x50] sm:$0xff] 0.0
    %33 = vst [vmem:[#allocation2 + $0x58] sm:$0xff] 0.0
    %34 = vst [vmem:[#allocation2 + $0x60] sm:$0xff] 0.0
    %35 = vst [vmem:[#allocation2 + $0x68] sm:$0xff] 0.0
    %36 = vst [vmem:[#allocation2 + $0x70] sm:$0xff] 0.0
    %37 = vst [vmem:[#allocation2 + $0x78] sm:$0xff] 0.0
    %38 = vst [vmem:[#allocation2 + $0x80] sm:$0xff] 0.0
    %39 = vst [vmem:[#allocation2 + $0x88] sm:$0xff] 0.0
    %40 = vst [vmem:[#allocation2 + $0x90] sm:$0xff] 0.0
    %41 = vst [vmem:[#allocation2 + $0x98] sm:$0xff] 0.0
    %42 = vst [vmem:[#allocation2 + $0xa0] sm:$0xff] 0.0
    %43 = vst [vmem:[#allocation2 + $0xa8] sm:$0xff] 0.0
    %44 = vst [vmem:[#allocation2 + $0xb0] sm:$0xff] 0.0
    %45 = vst [vmem:[#allocation2 + $0xb8] sm:$0xff] 0.0
    %46 = vst [vmem:[#allocation2 + $0xc0] sm:$0xff] 0.0
    %47 = vst [vmem:[#allocation2 + $0xc8] sm:$0xff] 0.0
    %48 = vst [vmem:[#allocation2 + $0xd0] sm:$0xff] 0.0
    %49 = vst [vmem:[#allocation2 + $0xd8] sm:$0xff] 0.0
    %50 = vst [vmem:[#allocation2 + $0xe0] sm:$0xff] 0.0
    %51 = vst [vmem:[#allocation2 + $0xe8] sm:$0xff] 0.0
    %52 = vst [vmem:[#allocation2 + $0xf0] sm:$0xff] 0.0
    %53 = vst [vmem:[#allocation2 + $0xf8] sm:$0xff] 0.0
    %54 = vst [vmem:[#allocation2 + $0x100] sm:$0xff] 0.0
    %55 = vst [vmem:[#allocation2 + $0x108] sm:$0xff] 0.0
    %56 = vst [vmem:[#allocation2 + $0x110] sm:$0xff] 0.0
    %57 = vst [vmem:[#allocation2 + $0x118] sm:$0xff] 0.0
    %58 = vst [vmem:[#allocation2 + $0x120] sm:$0xff] 0.0
    %59 = vst [vmem:[#allocation2 + $0x128] sm:$0xff] 0.0
    %60 = vst [vmem:[#allocation2 + $0x130] sm:$0xff] 0.0
    %61 = vst [vmem:[#allocation2 + $0x138] sm:$0xff] 0.0
    %62 = vst [vmem:[#allocation2 + $0x140] sm:$0xff] 0.0
    %63 = vst [vmem:[#allocation2 + $0x148] sm:$0xff] 0.0
    %64 = vst [vmem:[#allocation2 + $0x150] sm:$0xff] 0.0
    %65 = vst [vmem:[#allocation2 + $0x158] sm:$0xff] 0.0
    %66 = vst [vmem:[#allocation2 + $0x160] sm:$0xff] 0.0
    %67 = vst [vmem:[#allocation2 + $0x168] sm:$0xff] 0.0
    %68 = vst [vmem:[#allocation2 + $0x170] sm:$0xff] 0.0
    %69 = vst [vmem:[#allocation2 + $0x178] sm:$0xff] 0.0
    %70 = vst [vmem:[#allocation2 + $0x180] sm:$0xff] 0.0
    %71 = vst [vmem:[#allocation2 + $0x188] sm:$0xff] 0.0
    %72 = vst [vmem:[#allocation2 + $0x190] sm:$0xff] 0.0
    %73 = vst [vmem:[#allocation2 + $0x198] sm:$0xff] 0.0
    %74 = vst [vmem:[#allocation2 + $0x1a0] sm:$0xff] 0.0
    %75 = vst [vmem:[#allocation2 + $0x1a8] sm:$0xff] 0.0
    %76 = vst [vmem:[#allocation2 + $0x1b0] sm:$0xff] 0.0
    %77 = vst [vmem:[#allocation2 + $0x1b8] sm:$0xff] 0.0
    %78 = vst [vmem:[#allocation2 + $0x1c0] sm:$0xff] 0.0
    %79 = vst [vmem:[#allocation2 + $0x1c8] sm:$0xff] 0.0
    %80 = vst [vmem:[#allocation2 + $0x1d0] sm:$0xff] 0.0
    %81 = vst [vmem:[#allocation2 + $0x1d8] sm:$0xff] 0.0
    %82 = vst [vmem:[#allocation2 + $0x1e0] sm:$0xff] 0.0
    %83 = vst [vmem:[#allocation2 + $0x1e8] sm:$0xff] 0.0
    %84 = vst [vmem:[#allocation2 + $0x1f0] sm:$0xff] 0.0
    %85 = vst [vmem:[#allocation2 + $0x1f8] sm:$0xff] 0.0
  $region21: #{strided_encoder.11} parent=0 // pred_fallthru
    _
  %v86 = vld [vmem:[#allocation2] sm:$0xff]
  %v87 = vld [vmem:[#allocation2 + $0x8] sm:$0xff]
  %v88 = vld [vmem:[#allocation2 + $0x10] sm:$0xff]
  %v89 = vld [vmem:[#allocation2 + $0x18] sm:$0xff]
  %v90 = vld [vmem:[#allocation2 + $0x20] sm:$0xff]
  %v91 = vld [vmem:[#allocation2 + $0x28] sm:$0xff]
  %v92 = vld [vmem:[#allocation2 + $0x30] sm:$0xff]
  %v93 = vld [vmem:[#allocation2 + $0x38] sm:$0xff]
  %v94 = vld [vmem:[#allocation2 + $0x40] sm:$0xff]
  %v95 = vld [vmem:[#allocation2 + $0x48] sm:$0xff]
  %v96 = vld [vmem:[#allocation2 + $0x50] sm:$0xff]
  %v97 = vld [vmem:[#allocation2 + $0x58] sm:$0xff]
  %v98 = vld [vmem:[#allocation2 + $0x60] sm:$0xff]
  %v99 = vld [vmem:[#allocation2 + $0x68] sm:$0xff]
  %v100 = vld [vmem:[#allocation2 + $0x70] sm:$0xff]
  %v101 = vld [vmem:[#allocation2 + $0x78] sm:$0xff]
  %v102 = vld [vmem:[#allocation2 + $0x80] sm:$0xff]
  %v103 = vld [vmem:[#allocation2 + $0x88] sm:$0xff]
  %v104 = vld [vmem:[#allocation2 + $0x90] sm:$0xff]
  %v105 = vld [vmem:[#allocation2 + $0x98] sm:$0xff]
  %v106 = vld [vmem:[#allocation2 + $0xa0] sm:$0xff]
  %v107 = vld [vmem:[#allocation2 + $0xa8] sm:$0xff]
  %v108 = vld [vmem:[#allocation2 + $0xb0] sm:$0xff]
  %v109 = vld [vmem:[#allocation2 + $0xb8] sm:$0xff]
  %v110 = vld [vmem:[#allocation2 + $0xc0] sm:$0xff]
  %v111 = vld [vmem:[#allocation2 + $0xc8] sm:$0xff]
  %v112 = vld [vmem:[#allocation2 + $0xd0] sm:$0xff]
  %v113 = vld [vmem:[#allocation2 + $0xd8] sm:$0xff]
  %v114 = vld [vmem:[#allocation2 + $0xe0] sm:$0xff]
  %v115 = vld [vmem:[#allocation2 + $0xe8] sm:$0xff]
  %v116 = vld [vmem:[#allocation2 + $0xf0] sm:$0xff]
  %v117 = vld [vmem:[#allocation2 + $0xf8] sm:$0xff]
  %v118 = vld [vmem:[#allocation2 + $0x100] sm:$0xff]
  %v119 = vld [vmem:[#allocation2 + $0x108] sm:$0xff]
  %v120 = vld [vmem:[#allocation2 + $0x110] sm:$0xff]
  %v121 = vld [vmem:[#allocation2 + $0x118] sm:$0xff]
  %v122 = vld [vmem:[#allocation2 + $0x120] sm:$0xff]
  %v123 = vld [vmem:[#allocation2 + $0x128] sm:$0xff]
  %v124 = vld [vmem:[#allocation2 + $0x130] sm:$0xff]
  %v125 = vld [vmem:[#allocation2 + $0x138] sm:$0xff]
  %v126 = vld [vmem:[#allocation2 + $0x140] sm:$0xff]
  %v127 = vld [vmem:[#allocation2 + $0x148] sm:$0xff]
  %v128 = vld [vmem:[#allocation2 + $0x150] sm:$0xff]
  %v129 = vld [vmem:[#allocation2 + $0x158] sm:$0xff]
  %v130 = vld [vmem:[#allocation2 + $0x160] sm:$0xff]
  %v131 = vld [vmem:[#allocation2 + $0x168] sm:$0xff]
  %v132 = vld [vmem:[#allocation2 + $0x170] sm:$0xff]
  %v133 = vld [vmem:[#allocation2 + $0x178] sm:$0xff]
  %v134 = vld [vmem:[#allocation2 + $0x180] sm:$0xff]
  %v135 = vld [vmem:[#allocation2 + $0x188] sm:$0xff]
  %v136 = vld [vmem:[#allocation2 + $0x190] sm:$0xff]
  %v137 = vld [vmem:[#allocation2 + $0x198] sm:$0xff]
  %v138 = vld [vmem:[#allocation2 + $0x1a0] sm:$0xff]
  %v139 = vld [vmem:[#allocation2 + $0x1a8] sm:$0xff]
  %v140 = vld [vmem:[#allocation2 + $0x1b0] sm:$0xff]
  %v141 = vld [vmem:[#allocation2 + $0x1b8] sm:$0xff]
  %v142 = vld [vmem:[#allocation2 + $0x1c0] sm:$0xff]
  %v143 = vld [vmem:[#allocation2 + $0x1c8] sm:$0xff]
  %v144 = vld [vmem:[#allocation2 + $0x1d0] sm:$0xff]
  %v145 = vld [vmem:[#allocation2 + $0x1d8] sm:$0xff]
  %v146 = vld [vmem:[#allocation2 + $0x1e0] sm:$0xff]
  %v147 = vld [vmem:[#allocation2 + $0x1e8] sm:$0xff]
  %v148 = vld [vmem:[#allocation2 + $0x1f0] sm:$0xff]
  %v149 = vld [vmem:[#allocation2 + $0x1f8] sm:$0xff]
  %v150 = vld [vmem:[%s0] sm:$0xff]
  %v151 = vld [vmem:[%s0 + $0x8] sm:$0xff]
  %v152 = vld [vmem:[%s0 + $0x10] sm:$0xff]
  %v153 = vld [vmem:[%s0 + $0x18] sm:$0xff]
  %v154 = vld [vmem:[%s0 + $0x20] sm:$0xf]
  %v155 = vld [vmem:[%s0 + $0x24] sm:$0xff]
  %v156 = vld [vmem:[%s0 + $0x2c] sm:$0xff]
  %v157 = vld [vmem:[%s0 + $0x34] sm:$0xff]
  %v158 = vld [vmem:[%s0 + $0x3c] sm:$0xff]
  %v159 = vld [vmem:[%s0 + $0x44] sm:$0xf]
  %v160 = vld [vmem:[%s0 + $0x48] sm:$0xff]
  %v161 = vld [vmem:[%s0 + $0x50] sm:$0xff]
  %v162 = vld [vmem:[%s0 + $0x58] sm:$0xff]
  %v163 = vld [vmem:[%s0 + $0x60] sm:$0xff]
  %v164 = vld [vmem:[%s0 + $0x68] sm:$0xf]
  %v165 = vld [vmem:[%s0 + $0x6c] sm:$0xff]
  %v166 = vld [vmem:[%s0 + $0x74] sm:$0xff]
  %v167 = vld [vmem:[%s0 + $0x7c] sm:$0xff]
  %v168 = vld [vmem:[%s0 + $0x84] sm:$0xff]
  %v169 = vld [vmem:[%s0 + $0x8c] sm:$0xf]
  %v170 = vld [vmem:[%s0 + $0x90] sm:$0xff]
  %v171 = vld [vmem:[%s0 + $0x98] sm:$0xff]
  %v172 = vld [vmem:[%s0 + $0xa0] sm:$0xff]
  %v173 = vld [vmem:[%s0 + $0xa8] sm:$0xff]
  %v174 = vld [vmem:[%s0 + $0xb0] sm:$0xf]
  %v175 = vld [vmem:[%s0 + $0xb4] sm:$0xff]
  %v176 = vld [vmem:[%s0 + $0xbc] sm:$0xff]
  %v177 = vld [vmem:[%s0 + $0xc4] sm:$0xff]
  %v178 = vld [vmem:[%s0 + $0xcc] sm:$0xff]
  %v179 = vld [vmem:[%s0 + $0xd4] sm:$0xf]
  %v180 = vld [vmem:[%s0 + $0xd8] sm:$0xff]
  %v181 = vld [vmem:[%s0 + $0xe0] sm:$0xff]
  %v182 = vld [vmem:[%s0 + $0xe8] sm:$0xff]
  %v183 = vld [vmem:[%s0 + $0xf0] sm:$0xff]
  %v184 = vld [vmem:[%s0 + $0xf8] sm:$0xf]
  %v185 = vld [vmem:[%s0 + $0xfc] sm:$0xff]
  %v186 = vld [vmem:[%s0 + $0x104] sm:$0xff]
  %v187 = vld [vmem:[%s0 + $0x10c] sm:$0xff]
  %v188 = vld [vmem:[%s0 + $0x114] sm:$0xff]
  %v189 = vld [vmem:[%s0 + $0x11c] sm:$0xf]
  %v190 = vld [vmem:[%s0 + $0x120] sm:$0xff]
  %v191 = vld [vmem:[%s0 + $0x128] sm:$0xff]
  %v192 = vld [vmem:[%s0 + $0x130] sm:$0xff]
  %v193 = vld [vmem:[%s0 + $0x138] sm:$0xff]
  %v194 = vld [vmem:[%s0 + $0x140] sm:$0xf]
  %v195 = vld [vmem:[%s0 + $0x144] sm:$0xff]
  %v196 = vld [vmem:[%s0 + $0x14c] sm:$0xff]
  %v197 = vld [vmem:[%s0 + $0x154] sm:$0xff]
  %v198 = vld [vmem:[%s0 + $0x15c] sm:$0xff]
  %v199 = vld [vmem:[%s0 + $0x164] sm:$0xf]
  %v200 = vld [vmem:[%s0 + $0x168] sm:$0xff]
  %v201 = vld [vmem:[%s0 + $0x170] sm:$0xff]
  %v202 = vld [vmem:[%s0 + $0x178] sm:$0xff]
  %v203 = vld [vmem:[%s0 + $0x180] sm:$0xff]
  %v204 = vld [vmem:[%s0 + $0x188] sm:$0xf]
  %v205 = vld [vmem:[%s0 + $0x18c] sm:$0xff]
  %v206 = vld [vmem:[%s0 + $0x194] sm:$0xff]
  %v207 = vld [vmem:[%s0 + $0x19c] sm:$0xff]
  %v208 = vld [vmem:[%s0 + $0x1a4] sm:$0xff]
  %v209 = vld [vmem:[%s0 + $0x1ac] sm:$0xf]
  %v210 = vld [vmem:[%s0 + $0x1b0] sm:$0xff]
  %v211 = vld [vmem:[%s0 + $0x1b8] sm:$0xff]
  %v212 = vld [vmem:[%s0 + $0x1c0] sm:$0xff]
  %v213 = vld [vmem:[%s0 + $0x1c8] sm:$0xff]
  %v214 = vld [vmem:[%s0 + $0x1d0] sm:$0xf]
  %v215 = vld [vmem:[%s0 + $0x1d4] sm:$0xff]
  %v216 = vld [vmem:[%s0 + $0x1dc] sm:$0xff]
  %v217 = vld [vmem:[%s0 + $0x1e4] sm:$0xff]
  %v218 = vld [vmem:[%s0 + $0x1ec] sm:$0xff]
  %v219 = vld [vmem:[%s0 + $0x1f4] sm:$0xf]
  %v220 = vld [vmem:[%s0 + $0x1f8] sm:$0xff]
  %v221 = vld [vmem:[%s0 + $0x200] sm:$0xff]
  %v222 = vld [vmem:[%s0 + $0x208] sm:$0xff]
  %v223 = vld [vmem:[%s0 + $0x210] sm:$0xff]
  %v224 = vld [vmem:[%s0 + $0x218] sm:$0xf]
  %v225 = vld [vmem:[%s0 + $0x21c] sm:$0xff]
  %v226 = vld [vmem:[%s0 + $0x224] sm:$0xff]
  %v227 = vld [vmem:[%s0 + $0x22c] sm:$0xff]
  %v228 = vld [vmem:[%s0 + $0x234] sm:$0xff]
  %v229 = vld [vmem:[%s0 + $0x23c] sm:$0xf]
  %v230 = vld [vmem:[%s0 + $0x240] sm:$0xff]
  %v231 = vld [vmem:[%s0 + $0x248] sm:$0xff]
  %v232 = vld [vmem:[%s0 + $0x250] sm:$0xff]
  %v233 = vld [vmem:[%s0 + $0x258] sm:$0xff]
  %v234 = vld [vmem:[%s0 + $0x260] sm:$0xf]
  %v235 = vld [vmem:[%s0 + $0x264] sm:$0xff]
  %v236 = vld [vmem:[%s0 + $0x26c] sm:$0xff]
  %v237 = vld [vmem:[%s0 + $0x274] sm:$0xff]
  %v238 = vld [vmem:[%s0 + $0x27c] sm:$0xff]
  %v239 = vld [vmem:[%s0 + $0x284] sm:$0xf]
  %v240 = vld [vmem:[%s0 + $0x288] sm:$0xff]
  %v241 = vld [vmem:[%s0 + $0x290] sm:$0xff]
  %v242 = vld [vmem:[%s0 + $0x298] sm:$0xff]
  %v243 = vld [vmem:[%s0 + $0x2a0] sm:$0xff]
  %v244 = vld [vmem:[%s0 + $0x2a8] sm:$0xf]
  %v245 = vld [vmem:[%s0 + $0x2ac] sm:$0xff]
  %v246 = vld [vmem:[%s0 + $0x2b4] sm:$0xff]
  %v247 = vld [vmem:[%s0 + $0x2bc] sm:$0xff]
  %v248 = vld [vmem:[%s0 + $0x2c4] sm:$0xff]
  %v249 = vld [vmem:[%s0 + $0x2cc] sm:$0xf]
  %v250 = vld [vmem:[%s0 + $0x2d0] sm:$0xff]
  %v251 = vld [vmem:[%s0 + $0x2d8] sm:$0xff]
  %v252 = vld [vmem:[%s0 + $0x2e0] sm:$0xff]
  %v253 = vld [vmem:[%s0 + $0x2e8] sm:$0xff]
  %v254 = vld [vmem:[%s0 + $0x2f0] sm:$0xf]
  %v255 = vld [vmem:[%s0 + $0x2f4] sm:$0xff]
  %v256 = vld [vmem:[%s0 + $0x2fc] sm:$0xff]
  %v257 = vld [vmem:[%s0 + $0x304] sm:$0xff]
  %v258 = vld [vmem:[%s0 + $0x30c] sm:$0xff]
  %v259 = vld [vmem:[%s0 + $0x314] sm:$0xf]
  %v260 = vld [vmem:[%s0 + $0x318] sm:$0xff]
  %v261 = vld [vmem:[%s0 + $0x320] sm:$0xff]
  %v262 = vld [vmem:[%s0 + $0x328] sm:$0xff]
  %v263 = vld [vmem:[%s0 + $0x330] sm:$0xff]
  %v264 = vld [vmem:[%s0 + $0x338] sm:$0xf]
  %v265 = vld [vmem:[%s0 + $0x33c] sm:$0xff]
  %v266 = vld [vmem:[%s0 + $0x344] sm:$0xff]
  %v267 = vld [vmem:[%s0 + $0x34c] sm:$0xff]
  %v268 = vld [vmem:[%s0 + $0x354] sm:$0xff]
  %v269 = vld [vmem:[%s0 + $0x35c] sm:$0xf]
  %v270 = vld [vmem:[%s0 + $0x360] sm:$0xff]
  %v271 = vld [vmem:[%s0 + $0x368] sm:$0xff]
  %v272 = vld [vmem:[%s0 + $0x370] sm:$0xff]
  %v273 = vld [vmem:[%s0 + $0x378] sm:$0xff]
  %v274 = vld [vmem:[%s0 + $0x380] sm:$0xf]
  %v275 = vld [vmem:[%s0 + $0x384] sm:$0xff]
  %v276 = vld [vmem:[%s0 + $0x38c] sm:$0xff]
  %v277 = vld [vmem:[%s0 + $0x394] sm:$0xff]
  %v278 = vld [vmem:[%s0 + $0x39c] sm:$0xff]
  %v279 = vld [vmem:[%s0 + $0x3a4] sm:$0xf]
  %v280 = vld [vmem:[%s0 + $0x3a8] sm:$0xff]
  %v281 = vld [vmem:[%s0 + $0x3b0] sm:$0xff]
  %v282 = vld [vmem:[%s0 + $0x3b8] sm:$0xff]
  %v283 = vld [vmem:[%s0 + $0x3c0] sm:$0xff]
  %v284 = vld [vmem:[%s0 + $0x3c8] sm:$0xf]
  %v285 = vld [vmem:[%s0 + $0x3cc] sm:$0xff]
  %v286 = vld [vmem:[%s0 + $0x3d4] sm:$0xff]
  %v287 = vld [vmem:[%s0 + $0x3dc] sm:$0xff]
  %v288 = vld [vmem:[%s0 + $0x3e4] sm:$0xff]
  %v289 = vld [vmem:[%s0 + $0x3ec] sm:$0xf]
  %v290 = vld [vmem:[%s0 + $0x3f0] sm:$0xff]
  %v291 = vld [vmem:[%s0 + $0x3f8] sm:$0xff]
  %v292 = vld [vmem:[%s0 + $0x400] sm:$0xff]
  %v293 = vld [vmem:[%s0 + $0x408] sm:$0xff]
  %v294 = vld [vmem:[%s0 + $0x410] sm:$0xf]
  %v295 = vld [vmem:[%s0 + $0x414] sm:$0xff]
  %v296 = vld [vmem:[%s0 + $0x41c] sm:$0xff]
  %v297 = vld [vmem:[%s0 + $0x424] sm:$0xff]
  %v298 = vld [vmem:[%s0 + $0x42c] sm:$0xff]
  %v299 = vld [vmem:[%s0 + $0x434] sm:$0xf]
  %v300 = vld [vmem:[%s0 + $0x438] sm:$0xff]
  %v301 = vld [vmem:[%s0 + $0x440] sm:$0xff]
  %v302 = vld [vmem:[%s0 + $0x448] sm:$0xff]
  %v303 = vld [vmem:[%s0 + $0x450] sm:$0xff]
  %v304 = vld [vmem:[%s0 + $0x458] sm:$0xf]
  %v305 = vld [vmem:[%s0 + $0x45c] sm:$0xff]
  %v306 = vld [vmem:[%s0 + $0x464] sm:$0xff]
  %v307 = vld [vmem:[%s0 + $0x46c] sm:$0xff]
  %v308 = vld [vmem:[%s0 + $0x474] sm:$0xff]
  %v309 = vld [vmem:[%s0 + $0x47c] sm:$0xf]
  %v310 = vld [vmem:[%s0 + $0x480] sm:$0xff]
  %v311 = vld [vmem:[%s0 + $0x488] sm:$0xff]
  %v312 = vld [vmem:[%s0 + $0x490] sm:$0xff]
  %v313 = vld [vmem:[%s0 + $0x498] sm:$0xff]
  %v314 = vld [vmem:[%s0 + $0x4a0] sm:$0xf]
  %v315 = vld [vmem:[%s0 + $0x4a4] sm:$0xff]
  %v316 = vld [vmem:[%s0 + $0x4ac] sm:$0xff]
  %v317 = vld [vmem:[%s0 + $0x4b4] sm:$0xff]
  %v318 = vld [vmem:[%s0 + $0x4bc] sm:$0xff]
  %v319 = vld [vmem:[%s0 + $0x4c4] sm:$0xf]
  %v320 = vld [vmem:[%s0 + $0x4c8] sm:$0xff]
  %v321 = vld [vmem:[%s0 + $0x4d0] sm:$0xff]
  %v322 = vld [vmem:[%s0 + $0x4d8] sm:$0xff]
  %v323 = vld [vmem:[%s0 + $0x4e0] sm:$0xff]
  %v324 = vld [vmem:[%s0 + $0x4e8] sm:$0xf]
  %v325 = vld [vmem:[%s0 + $0x4ec] sm:$0xff]
  %v326 = vld [vmem:[%s0 + $0x4f4] sm:$0xff]
  %v327 = vld [vmem:[%s0 + $0x4fc] sm:$0xff]
  %v328 = vld [vmem:[%s0 + $0x504] sm:$0xff]
  %v329 = vld [vmem:[%s0 + $0x50c] sm:$0xf]
  %v330 = vld [vmem:[%s0 + $0x510] sm:$0xff]
  %v331 = vld [vmem:[%s0 + $0x518] sm:$0xff]
  %v332 = vld [vmem:[%s0 + $0x520] sm:$0xff]
  %v333 = vld [vmem:[%s0 + $0x528] sm:$0xff]
  %v334 = vld [vmem:[%s0 + $0x530] sm:$0xf]
  %v335 = vld [vmem:[%s0 + $0x534] sm:$0xff]
  %v336 = vld [vmem:[%s0 + $0x53c] sm:$0xff]
  %v337 = vld [vmem:[%s0 + $0x544] sm:$0xff]
  %v338 = vld [vmem:[%s0 + $0x54c] sm:$0xff]
  %v339 = vld [vmem:[%s0 + $0x554] sm:$0xf]
  %v340 = vld [vmem:[%s0 + $0x558] sm:$0xff]
  %v341 = vld [vmem:[%s0 + $0x560] sm:$0xff]
  %v342 = vld [vmem:[%s0 + $0x568] sm:$0xff]
  %v343 = vld [vmem:[%s0 + $0x570] sm:$0xff]
  %v344 = vld [vmem:[%s0 + $0x578] sm:$0xf]
  %v345 = vld [vmem:[%s0 + $0x57c] sm:$0xff]
  %v346 = vld [vmem:[%s0 + $0x584] sm:$0xff]
  %v347 = vld [vmem:[%s0 + $0x58c] sm:$0xff]
  %v348 = vld [vmem:[%s0 + $0x594] sm:$0xff]
  %v349 = vld [vmem:[%s0 + $0x59c] sm:$0xf]
  %v350 = vld [vmem:[%s0 + $0x5a0] sm:$0xff]
  %v351 = vld [vmem:[%s0 + $0x5a8] sm:$0xff]
  %v352 = vld [vmem:[%s0 + $0x5b0] sm:$0xff]
  %v353 = vld [vmem:[%s0 + $0x5b8] sm:$0xff]
  %v354 = vld [vmem:[%s0 + $0x5c0] sm:$0xf]
  %v355 = vld [vmem:[%s0 + $0x5c4] sm:$0xff]
  %v356 = vld [vmem:[%s0 + $0x5cc] sm:$0xff]
  %v357 = vld [vmem:[%s0 + $0x5d4] sm:$0xff]
  %v358 = vld [vmem:[%s0 + $0x5dc] sm:$0xff]
  %v359 = vld [vmem:[%s0 + $0x5e4] sm:$0xf]
  %v360 = vld [vmem:[%s0 + $0x5e8] sm:$0xff]
  %v361 = vld [vmem:[%s0 + $0x5f0] sm:$0xff]
  %v362 = vld [vmem:[%s0 + $0x5f8] sm:$0xff]
  %v363 = vld [vmem:[%s0 + $0x600] sm:$0xff]
  %v364 = vld [vmem:[%s0 + $0x608] sm:$0xf]
  %v365 = vld [vmem:[%s0 + $0x60c] sm:$0xff]
  %v366 = vld [vmem:[%s0 + $0x614] sm:$0xff]
  %v367 = vld [vmem:[%s0 + $0x61c] sm:$0xff]
  %v368 = vld [vmem:[%s0 + $0x624] sm:$0xff]
  %v369 = vld [vmem:[%s0 + $0x62c] sm:$0xf]
  %v370 = vld [vmem:[%s0 + $0x630] sm:$0xff]
  %v371 = vld [vmem:[%s0 + $0x638] sm:$0xff]
  %v372 = vld [vmem:[%s0 + $0x640] sm:$0xff]
  %v373 = vld [vmem:[%s0 + $0x648] sm:$0xff]
  %v374 = vld [vmem:[%s0 + $0x650] sm:$0xf]
  %v375 = vld [vmem:[%s0 + $0x654] sm:$0xff]
  %v376 = vld [vmem:[%s0 + $0x65c] sm:$0xff]
  %v377 = vld [vmem:[%s0 + $0x664] sm:$0xff]
  %v378 = vld [vmem:[%s0 + $0x66c] sm:$0xff]
  %v379 = vld [vmem:[%s0 + $0x674] sm:$0xf]
  %v380 = vld [vmem:[%s0 + $0x678] sm:$0xff]
  %v381 = vld [vmem:[%s0 + $0x680] sm:$0xff]
  %v382 = vld [vmem:[%s0 + $0x688] sm:$0xff]
  %v383 = vld [vmem:[%s0 + $0x690] sm:$0xff]
  %v384 = vld [vmem:[%s0 + $0x698] sm:$0xf]
  %v385 = vld [vmem:[%s0 + $0x69c] sm:$0xff]
  %v386 = vld [vmem:[%s0 + $0x6a4] sm:$0xff]
  %v387 = vld [vmem:[%s0 + $0x6ac] sm:$0xff]
  %v388 = vld [vmem:[%s0 + $0x6b4] sm:$0xff]
  %v389 = vld [vmem:[%s0 + $0x6bc] sm:$0xf]
  %v390 = vld [vmem:[%s0 + $0x6c0] sm:$0xff]
  %v391 = vld [vmem:[%s0 + $0x6c8] sm:$0xff]
  %v392 = vld [vmem:[%s0 + $0x6d0] sm:$0xff]
  %v393 = vld [vmem:[%s0 + $0x6d8] sm:$0xff]
  %v394 = vld [vmem:[%s0 + $0x6e0] sm:$0xf]
  %v395 = vld [vmem:[%s0 + $0x6e4] sm:$0xff]
  %v396 = vld [vmem:[%s0 + $0x6ec] sm:$0xff]
  %v397 = vld [vmem:[%s0 + $0x6f4] sm:$0xff]
  %v398 = vld [vmem:[%s0 + $0x6fc] sm:$0xff]
  %v399 = vld [vmem:[%s0 + $0x704] sm:$0xf]
  %v400 = vld [vmem:[%s0 + $0x708] sm:$0xff]
  %v401 = vld [vmem:[%s0 + $0x710] sm:$0xff]
  %v402 = vld [vmem:[%s0 + $0x718] sm:$0xff]
  %v403 = vld [vmem:[%s0 + $0x720] sm:$0xff]
  %v404 = vld [vmem:[%s0 + $0x728] sm:$0xf]
  %v405 = vld [vmem:[%s0 + $0x72c] sm:$0xff]
  %v406 = vld [vmem:[%s0 + $0x734] sm:$0xff]
  %v407 = vld [vmem:[%s0 + $0x73c] sm:$0xff]
  %v408 = vld [vmem:[%s0 + $0x744] sm:$0xff]
  %v409 = vld [vmem:[%s0 + $0x74c] sm:$0xf]
  %v410 = vld [vmem:[%s0 + $0x750] sm:$0xff]
  %v411 = vld [vmem:[%s0 + $0x758] sm:$0xff]
  %v412 = vld [vmem:[%s0 + $0x760] sm:$0xff]
  %v413 = vld [vmem:[%s0 + $0x768] sm:$0xff]
  %v414 = vld [vmem:[%s0 + $0x770] sm:$0xf]
  %v415 = vld [vmem:[%s0 + $0x774] sm:$0xff]
  %v416 = vld [vmem:[%s0 + $0x77c] sm:$0xff]
  %v417 = vld [vmem:[%s0 + $0x784] sm:$0xff]
  %v418 = vld [vmem:[%s0 + $0x78c] sm:$0xff]
  %v419 = vld [vmem:[%s0 + $0x794] sm:$0xf]
  %v420 = vld [vmem:[%s0 + $0x798] sm:$0xff]
  %v421 = vld [vmem:[%s0 + $0x7a0] sm:$0xff]
  %v422 = vld [vmem:[%s0 + $0x7a8] sm:$0xff]
  %v423 = vld [vmem:[%s0 + $0x7b0] sm:$0xff]
  %v424 = vld [vmem:[%s0 + $0x7b8] sm:$0xf]
  %v425 = vld [vmem:[%s0 + $0x7bc] sm:$0xff]
  %v426 = vld [vmem:[%s0 + $0x7c4] sm:$0xff]
  %v427 = vld [vmem:[%s0 + $0x7cc] sm:$0xff]
  %v428 = vld [vmem:[%s0 + $0x7d4] sm:$0xff]
  %v429 = vld [vmem:[%s0 + $0x7dc] sm:$0xf]
  %v430 = vld [vmem:[%s0 + $0x7e0] sm:$0xff]
  %v431 = vld [vmem:[%s0 + $0x7e8] sm:$0xff]
  %v432 = vld [vmem:[%s0 + $0x7f0] sm:$0xff]
  %v433 = vld [vmem:[%s0 + $0x7f8] sm:$0xff]
  %v434 = vld [vmem:[%s0 + $0x800] sm:$0xf]
  %v435 = vld [vmem:[%s0 + $0x804] sm:$0xff]
  %v436 = vld [vmem:[%s0 + $0x80c] sm:$0xff]
  %v437 = vld [vmem:[%s0 + $0x814] sm:$0xff]
  %v438 = vld [vmem:[%s0 + $0x81c] sm:$0xff]
  %v439 = vld [vmem:[%s0 + $0x824] sm:$0xf]
  %v440 = vld [vmem:[%s0 + $0x828] sm:$0xff]
  %v441 = vld [vmem:[%s0 + $0x830] sm:$0xff]
  %v442 = vld [vmem:[%s0 + $0x838] sm:$0xff]
  %v443 = vld [vmem:[%s0 + $0x840] sm:$0xff]
  %v444 = vld [vmem:[%s0 + $0x848] sm:$0xf]
  %v445 = vld [vmem:[%s0 + $0x84c] sm:$0xff]
  %v446 = vld [vmem:[%s0 + $0x854] sm:$0xff]
  %v447 = vld [vmem:[%s0 + $0x85c] sm:$0xff]
  %v448 = vld [vmem:[%s0 + $0x864] sm:$0xff]
  %v449 = vld [vmem:[%s0 + $0x86c] sm:$0xf]
  %v450 = vld [vmem:[%s0 + $0x870] sm:$0xff]
  %v451 = vld [vmem:[%s0 + $0x878] sm:$0xff]
  %v452 = vld [vmem:[%s0 + $0x880] sm:$0xff]
  %v453 = vld [vmem:[%s0 + $0x888] sm:$0xff]
  %v454 = vld [vmem:[%s0 + $0x890] sm:$0xf]
  %v455 = vld [vmem:[%s0 + $0x894] sm:$0xff]
  %v456 = vld [vmem:[%s0 + $0x89c] sm:$0xff]
  %v457 = vld [vmem:[%s0 + $0x8a4] sm:$0xff]
  %v458 = vld [vmem:[%s0 + $0x8ac] sm:$0xff]
  %v459 = vld [vmem:[%s0 + $0x8b4] sm:$0xf]
  %v460 = vld [vmem:[%s0 + $0x8b8] sm:$0xff]
  %v461 = vld [vmem:[%s0 + $0x8c0] sm:$0xff]
  %v462 = vld [vmem:[%s0 + $0x8c8] sm:$0xff]
  %v463 = vld [vmem:[%s0 + $0x8d0] sm:$0xff]
  %v464 = vld [vmem:[%s0 + $0x8d8] sm:$0xf]
  %v465 = vld [vmem:[%s0 + $0x8dc] sm:$0xff]
  %v466 = vld [vmem:[%s0 + $0x8e4] sm:$0xff]
  %v467 = vld [vmem:[%s0 + $0x8ec] sm:$0xff]
  %v468 = vld [vmem:[%s0 + $0x8f4] sm:$0xff]
  %v469 = vld [vmem:[%s0 + $0x8fc] sm:$0xf]
  %v470 = vld [vmem:[%s1] sm:$0xf]
  %v471 = vld [vmem:[%s1 + $0x4] sm:$0xf]
  %v472 = vld [vmem:[%s1 + $0x8] sm:$0xf]
  %v473 = vld [vmem:[%s1 + $0xc] sm:$0xf]
  %v474 = vld [vmem:[%s1 + $0x10] sm:$0xf]
  %v475 = vld [vmem:[%s1 + $0x14] sm:$0xf]
  %v476 = vld [vmem:[%s1 + $0x18] sm:$0xf]
  %v477 = vld [vmem:[%s1 + $0x1c] sm:$0xf]
  %v478 = vld [vmem:[%s1 + $0x20] sm:$0xf]
  %v479 = vld [vmem:[%s1 + $0x24] sm:$0xf]
  %v480 = vld [vmem:[%s1 + $0x28] sm:$0xf]
  %v481 = vld [vmem:[%s1 + $0x2c] sm:$0xf]
  %v482 = vld [vmem:[%s1 + $0x30] sm:$0xf]
  %v483 = vld [vmem:[%s1 + $0x34] sm:$0xf]
  %v484 = vld [vmem:[%s1 + $0x38] sm:$0xf]
  %v485 = vld [vmem:[%s1 + $0x3c] sm:$0xf]
  %v486 = vld [vmem:[%s1 + $0x40] sm:$0xf]
  %v487 = vld [vmem:[%s1 + $0x44] sm:$0xf]
  %v488 = vld [vmem:[%s1 + $0x48] sm:$0xf]
  %v489 = vld [vmem:[%s1 + $0x4c] sm:$0xf]
  %v490 = vld [vmem:[%s1 + $0x50] sm:$0xf]
  %v491 = vld [vmem:[%s1 + $0x54] sm:$0xf]
  %v492 = vld [vmem:[%s1 + $0x58] sm:$0xf]
  %v493 = vld [vmem:[%s1 + $0x5c] sm:$0xf]
  %v494 = vld [vmem:[%s1 + $0x60] sm:$0xf]
  %v495 = vld [vmem:[%s1 + $0x64] sm:$0xf]
  %v496 = vld [vmem:[%s1 + $0x68] sm:$0xf]
  %v497 = vld [vmem:[%s1 + $0x6c] sm:$0xf]
  %v498 = vld [vmem:[%s1 + $0x70] sm:$0xf]
  %v499 = vld [vmem:[%s1 + $0x74] sm:$0xf]
  %v500 = vld [vmem:[%s1 + $0x78] sm:$0xf]
  %v501 = vld [vmem:[%s1 + $0x7c] sm:$0xf]
  %v502 = vld [vmem:[%s1 + $0x80] sm:$0xf]
  %v503 = vld [vmem:[%s1 + $0x84] sm:$0xf]
  %v504 = vld [vmem:[%s1 + $0x88] sm:$0xf]
  %v505 = vld [vmem:[%s1 + $0x8c] sm:$0xf]
  %v506 = vld [vmem:[%s1 + $0x90] sm:$0xf]
  %v507 = vld [vmem:[%s1 + $0x94] sm:$0xf]
  %v508 = vld [vmem:[%s1 + $0x98] sm:$0xf]
  %v509 = vld [vmem:[%s1 + $0x9c] sm:$0xf]
  %v510 = vld [vmem:[%s1 + $0xa0] sm:$0xf]
  %v511 = vld [vmem:[%s1 + $0xa4] sm:$0xf]
  %v512 = vld [vmem:[%s1 + $0xa8] sm:$0xf]
  %v513 = vld [vmem:[%s1 + $0xac] sm:$0xf]
  %v514 = vld [vmem:[%s1 + $0xb0] sm:$0xf]
  %v515 = vld [vmem:[%s1 + $0xb4] sm:$0xf]
  %v516 = vld [vmem:[%s1 + $0xb8] sm:$0xf]
  %v517 = vld [vmem:[%s1 + $0xbc] sm:$0xf]
  %v518 = vld [vmem:[%s1 + $0xc0] sm:$0xf]
  %v519 = vld [vmem:[%s1 + $0xc4] sm:$0xf]
  %v520 = vld [vmem:[%s1 + $0xc8] sm:$0xf]
  %v521 = vld [vmem:[%s1 + $0xcc] sm:$0xf]
  %v522 = vld [vmem:[%s1 + $0xd0] sm:$0xf]
  %v523 = vld [vmem:[%s1 + $0xd4] sm:$0xf]
  %v524 = vld [vmem:[%s1 + $0xd8] sm:$0xf]
  %v525 = vld [vmem:[%s1 + $0xdc] sm:$0xf]
  %v526 = vld [vmem:[%s1 + $0xe0] sm:$0xf]
  %v527 = vld [vmem:[%s1 + $0xe4] sm:$0xf]
  %v528 = vld [vmem:[%s1 + $0xe8] sm:$0xf]
  %v529 = vld [vmem:[%s1 + $0xec] sm:$0xf]
  %v530 = vld [vmem:[%s1 + $0xf0] sm:$0xf]
  %v531 = vld [vmem:[%s1 + $0xf4] sm:$0xf]
  %v532 = vld [vmem:[%s1 + $0xf8] sm:$0xf]
  %v533 = vld [vmem:[%s1 + $0xfc] sm:$0xf]
  %v534 = vld [vmem:[%s1 + $0x100] sm:$0xf]
  %v535 = vld [vmem:[%s1 + $0x104] sm:$0xf]
  %v536 = vld [vmem:[%s1 + $0x108] sm:$0xf]
  %v537 = vld [vmem:[%s1 + $0x10c] sm:$0xf]
  %v538 = vld [vmem:[%s1 + $0x110] sm:$0xf]
  %v539 = vld [vmem:[%s1 + $0x114] sm:$0xf]
  %v540 = vld [vmem:[%s1 + $0x118] sm:$0xf]
  %v541 = vld [vmem:[%s1 + $0x11c] sm:$0xf]
  %v542 = vld [vmem:[%s1 + $0x120] sm:$0xf]
  %v543 = vld [vmem:[%s1 + $0x124] sm:$0xf]
  %v544 = vld [vmem:[%s1 + $0x128] sm:$0xf]
  %v545 = vld [vmem:[%s1 + $0x12c] sm:$0xf]
  %v546 = vld [vmem:[%s1 + $0x130] sm:$0xf]
  %v547 = vld [vmem:[%s1 + $0x134] sm:$0xf]
  %v548 = vld [vmem:[%s1 + $0x138] sm:$0xf]
  %v549 = vld [vmem:[%s1 + $0x13c] sm:$0xf]
  %v550 = vld [vmem:[%s1 + $0x140] sm:$0xf]
  %v551 = vld [vmem:[%s1 + $0x144] sm:$0xf]
  %v552 = vld [vmem:[%s1 + $0x148] sm:$0xf]
  %v553 = vld [vmem:[%s1 + $0x14c] sm:$0xf]
  %v554 = vld [vmem:[%s1 + $0x150] sm:$0xf]
  %v555 = vld [vmem:[%s1 + $0x154] sm:$0xf]
  %v556 = vld [vmem:[%s1 + $0x158] sm:$0xf]
  %v557 = vld [vmem:[%s1 + $0x15c] sm:$0xf]
  %v558 = vld [vmem:[%s1 + $0x160] sm:$0xf]
  %v559 = vld [vmem:[%s1 + $0x164] sm:$0xf]
  %v560 = vld [vmem:[%s1 + $0x168] sm:$0xf]
  %v561 = vld [vmem:[%s1 + $0x16c] sm:$0xf]
  %v562 = vld [vmem:[%s1 + $0x170] sm:$0xf]
  %v563 = vld [vmem:[%s1 + $0x174] sm:$0xf]
  %v564 = vld [vmem:[%s1 + $0x178] sm:$0xf]
  %v565 = vld [vmem:[%s1 + $0x17c] sm:$0xf]
  %v566 = vld [vmem:[%s1 + $0x180] sm:$0xf]
  %v567 = vld [vmem:[%s1 + $0x184] sm:$0xf]
  %v568 = vld [vmem:[%s1 + $0x188] sm:$0xf]
  %v569 = vld [vmem:[%s1 + $0x18c] sm:$0xf]
  %v570 = vld [vmem:[%s1 + $0x190] sm:$0xf]
  %v571 = vld [vmem:[%s1 + $0x194] sm:$0xf]
  %v572 = vld [vmem:[%s1 + $0x198] sm:$0xf]
  %v573 = vld [vmem:[%s1 + $0x19c] sm:$0xf]
  %v574 = vld [vmem:[%s1 + $0x1a0] sm:$0xf]
  %v575 = vld [vmem:[%s1 + $0x1a4] sm:$0xf]
  %v576 = vld [vmem:[%s1 + $0x1a8] sm:$0xf]
  %v577 = vld [vmem:[%s1 + $0x1ac] sm:$0xf]
  %v578 = vld [vmem:[%s1 + $0x1b0] sm:$0xf]
  %v579 = vld [vmem:[%s1 + $0x1b4] sm:$0xf]
  %v580 = vld [vmem:[%s1 + $0x1b8] sm:$0xf]
  %v581 = vld [vmem:[%s1 + $0x1bc] sm:$0xf]
  %v582 = vld [vmem:[%s1 + $0x1c0] sm:$0xf]
  %v583 = vld [vmem:[%s1 + $0x1c4] sm:$0xf]
  %v584 = vld [vmem:[%s1 + $0x1c8] sm:$0xf]
  %v585 = vld [vmem:[%s1 + $0x1cc] sm:$0xf]
  %v586 = vld [vmem:[%s1 + $0x1d0] sm:$0xf]
  %v587 = vld [vmem:[%s1 + $0x1d4] sm:$0xf]
  %v588 = vld [vmem:[%s1 + $0x1d8] sm:$0xf]
  %v589 = vld [vmem:[%s1 + $0x1dc] sm:$0xf]
  %v590 = vld [vmem:[%s1 + $0x1e0] sm:$0xf]
  %v591 = vld [vmem:[%s1 + $0x1e4] sm:$0xf]
  %v592 = vld [vmem:[%s1 + $0x1e8] sm:$0xf]
  %v593 = vld [vmem:[%s1 + $0x1ec] sm:$0xf]
  %v594 = vld [vmem:[%s1 + $0x1f0] sm:$0xf]
  %v595 = vld [vmem:[%s1 + $0x1f4] sm:$0xf]
  %v596 = vld [vmem:[%s1 + $0x1f8] sm:$0xf]
  %v597 = vld [vmem:[%s1 + $0x1fc] sm:$0xf]
  %v598 = vld [vmem:[%s1 + $0x200] sm:$0xf]
  %v599 = vld [vmem:[%s1 + $0x204] sm:$0xf]
  %v600 = vld [vmem:[%s1 + $0x208] sm:$0xf]
  %v601 = vld [vmem:[%s1 + $0x20c] sm:$0xf]
  %v602 = vld [vmem:[%s1 + $0x210] sm:$0xf]
  %v603 = vld [vmem:[%s1 + $0x214] sm:$0xf]
  %v604 = vld [vmem:[%s1 + $0x218] sm:$0xf]
  %v605 = vld [vmem:[%s1 + $0x21c] sm:$0xf]
  %v606 = vld [vmem:[%s1 + $0x220] sm:$0xf]
  %v607 = vld [vmem:[%s1 + $0x224] sm:$0xf]
  %v608 = vld [vmem:[%s1 + $0x228] sm:$0xf]
  %v609 = vld [vmem:[%s1 + $0x22c] sm:$0xf]
  %v610 = vld [vmem:[%s1 + $0x230] sm:$0xf]
  %v611 = vld [vmem:[%s1 + $0x234] sm:$0xf]
  %v612 = vld [vmem:[%s1 + $0x238] sm:$0xf]
  %v613 = vld [vmem:[%s1 + $0x23c] sm:$0xf]
  %v934 = vunpack.c.l.b16 %v150
  %v935 = vunpack.c.h.b16 %v150
  %v936 = vunpack.c.l.b16 %v151
  %v937 = vunpack.c.h.b16 %v151
  %v938 = vunpack.c.l.b16 %v152
  %v939 = vunpack.c.h.b16 %v152
  %v940 = vunpack.c.l.b16 %v153
  %v941 = vunpack.c.h.b16 %v153
  %v942 = vunpack.c.l.b16 %v154
  %v943 = vunpack.c.l.b16 %v155
  %v944 = vunpack.c.h.b16 %v155
  %v945 = vunpack.c.l.b16 %v156
  %v946 = vunpack.c.h.b16 %v156
  %v947 = vunpack.c.l.b16 %v157
  %v948 = vunpack.c.h.b16 %v157
  %v949 = vunpack.c.l.b16 %v158
  %v950 = vunpack.c.h.b16 %v158
  %v951 = vunpack.c.l.b16 %v159
  %v952 = vunpack.c.l.b16 %v160
  %v953 = vunpack.c.h.b16 %v160
  %v954 = vunpack.c.l.b16 %v161
  %v955 = vunpack.c.h.b16 %v161
  %v956 = vunpack.c.l.b16 %v162
  %v957 = vunpack.c.h.b16 %v162
  %v958 = vunpack.c.l.b16 %v163
  %v959 = vunpack.c.h.b16 %v163
  %v960 = vunpack.c.l.b16 %v164
  %v961 = vunpack.c.l.b16 %v165
  %v962 = vunpack.c.h.b16 %v165
  %v963 = vunpack.c.l.b16 %v166
  %v964 = vunpack.c.h.b16 %v166
  %v965 = vunpack.c.l.b16 %v167
  %v966 = vunpack.c.h.b16 %v167
  %v967 = vunpack.c.l.b16 %v168
  %v968 = vunpack.c.h.b16 %v168
  %v969 = vunpack.c.l.b16 %v169
  %v970 = vunpack.c.l.b16 %v170
  %v971 = vunpack.c.h.b16 %v170
  %v972 = vunpack.c.l.b16 %v171
  %v973 = vunpack.c.h.b16 %v171
  %v974 = vunpack.c.l.b16 %v172
  %v975 = vunpack.c.h.b16 %v172
  %v976 = vunpack.c.l.b16 %v173
  %v977 = vunpack.c.h.b16 %v173
  %v978 = vunpack.c.l.b16 %v174
  %v979 = vunpack.c.l.b16 %v175
  %v980 = vunpack.c.h.b16 %v175
  %v981 = vunpack.c.l.b16 %v176
  %v982 = vunpack.c.h.b16 %v176
  %v983 = vunpack.c.l.b16 %v177
  %v984 = vunpack.c.h.b16 %v177
  %v985 = vunpack.c.l.b16 %v178
  %v986 = vunpack.c.h.b16 %v178
  %v987 = vunpack.c.l.b16 %v179
  %v988 = vunpack.c.l.b16 %v180
  %v989 = vunpack.c.h.b16 %v180
  %v990 = vunpack.c.l.b16 %v181
  %v991 = vunpack.c.h.b16 %v181
  %v992 = vunpack.c.l.b16 %v182
  %v993 = vunpack.c.h.b16 %v182
  %v994 = vunpack.c.l.b16 %v183
  %v995 = vunpack.c.h.b16 %v183
  %v996 = vunpack.c.l.b16 %v184
  %v997 = vunpack.c.l.b16 %v185
  %v998 = vunpack.c.h.b16 %v185
  %v999 = vunpack.c.l.b16 %v186
  %v1000 = vunpack.c.h.b16 %v186
  %v1001 = vunpack.c.l.b16 %v187
  %v1002 = vunpack.c.h.b16 %v187
  %v1003 = vunpack.c.l.b16 %v188
  %v1004 = vunpack.c.h.b16 %v188
  %v1005 = vunpack.c.l.b16 %v189
  %v1006 = vunpack.c.l.b16 %v190
  %v1007 = vunpack.c.h.b16 %v190
  %v1008 = vunpack.c.l.b16 %v191
  %v1009 = vunpack.c.h.b16 %v191
  %v1010 = vunpack.c.l.b16 %v192
  %v1011 = vunpack.c.h.b16 %v192
  %v1012 = vunpack.c.l.b16 %v193
  %v1013 = vunpack.c.h.b16 %v193
  %v1014 = vunpack.c.l.b16 %v194
  %v1015 = vunpack.c.l.b16 %v195
  %v1016 = vunpack.c.h.b16 %v195
  %v1017 = vunpack.c.l.b16 %v196
  %v1018 = vunpack.c.h.b16 %v196
  %v1019 = vunpack.c.l.b16 %v197
  %v1020 = vunpack.c.h.b16 %v197
  %v1021 = vunpack.c.l.b16 %v198
  %v1022 = vunpack.c.h.b16 %v198
  %v1023 = vunpack.c.l.b16 %v199
  %v1024 = vunpack.c.l.b16 %v200
  %v1025 = vunpack.c.h.b16 %v200
  %v1026 = vunpack.c.l.b16 %v201
  %v1027 = vunpack.c.h.b16 %v201
  %v1028 = vunpack.c.l.b16 %v202
  %v1029 = vunpack.c.h.b16 %v202
  %v1030 = vunpack.c.l.b16 %v203
  %v1031 = vunpack.c.h.b16 %v203
  %v1032 = vunpack.c.l.b16 %v204
  %v1033 = vunpack.c.l.b16 %v205
  %v1034 = vunpack.c.h.b16 %v205
  %v1035 = vunpack.c.l.b16 %v206
  %v1036 = vunpack.c.h.b16 %v206
  %v1037 = vunpack.c.l.b16 %v207
  %v1038 = vunpack.c.h.b16 %v207
  %v1039 = vunpack.c.l.b16 %v208
  %v1040 = vunpack.c.h.b16 %v208
  %v1041 = vunpack.c.l.b16 %v209
  %v1042 = vunpack.c.l.b16 %v210
  %v1043 = vunpack.c.h.b16 %v210
  %v1044 = vunpack.c.l.b16 %v211
  %v1045 = vunpack.c.h.b16 %v211
  %v1046 = vunpack.c.l.b16 %v212
  %v1047 = vunpack.c.h.b16 %v212
  %v1048 = vunpack.c.l.b16 %v213
  %v1049 = vunpack.c.h.b16 %v213
  %v1050 = vunpack.c.l.b16 %v214
  %v1051 = vunpack.c.l.b16 %v215
  %v1052 = vunpack.c.h.b16 %v215
  %v1053 = vunpack.c.l.b16 %v216
  %v1054 = vunpack.c.h.b16 %v216
  %v1055 = vunpack.c.l.b16 %v217
  %v1056 = vunpack.c.h.b16 %v217
  %v1057 = vunpack.c.l.b16 %v218
  %v1058 = vunpack.c.h.b16 %v218
  %v1059 = vunpack.c.l.b16 %v219
  %v1060 = vunpack.c.l.b16 %v220
  %v1061 = vunpack.c.h.b16 %v220
  %v1062 = vunpack.c.l.b16 %v221
  %v1063 = vunpack.c.h.b16 %v221
  %v1064 = vunpack.c.l.b16 %v222
  %v1065 = vunpack.c.h.b16 %v222
  %v1066 = vunpack.c.l.b16 %v223
  %v1067 = vunpack.c.h.b16 %v223
  %v1068 = vunpack.c.l.b16 %v224
  %v1069 = vunpack.c.l.b16 %v225
  %v1070 = vunpack.c.h.b16 %v225
  %v1071 = vunpack.c.l.b16 %v226
  %v1072 = vunpack.c.h.b16 %v226
  %v1073 = vunpack.c.l.b16 %v227
  %v1074 = vunpack.c.h.b16 %v227
  %v1075 = vunpack.c.l.b16 %v228
  %v1076 = vunpack.c.h.b16 %v228
  %v1077 = vunpack.c.l.b16 %v229
  %v1078 = vunpack.c.l.b16 %v230
  %v1079 = vunpack.c.h.b16 %v230
  %v1080 = vunpack.c.l.b16 %v231
  %v1081 = vunpack.c.h.b16 %v231
  %v1082 = vunpack.c.l.b16 %v232
  %v1083 = vunpack.c.h.b16 %v232
  %v1084 = vunpack.c.l.b16 %v233
  %v1085 = vunpack.c.h.b16 %v233
  %v1086 = vunpack.c.l.b16 %v234
  %v1087 = vunpack.c.l.b16 %v235
  %v1088 = vunpack.c.h.b16 %v235
  %v1089 = vunpack.c.l.b16 %v236
  %v1090 = vunpack.c.h.b16 %v236
  %v1091 = vunpack.c.l.b16 %v237
  %v1092 = vunpack.c.h.b16 %v237
  %v1093 = vunpack.c.l.b16 %v238
  %v1094 = vunpack.c.h.b16 %v238
  %v1095 = vunpack.c.l.b16 %v239
  %v1096 = vunpack.c.l.b16 %v240
  %v1097 = vunpack.c.h.b16 %v240
  %v1098 = vunpack.c.l.b16 %v241
  %v1099 = vunpack.c.h.b16 %v241
  %v1100 = vunpack.c.l.b16 %v242
  %v1101 = vunpack.c.h.b16 %v242
  %v1102 = vunpack.c.l.b16 %v243
  %v1103 = vunpack.c.h.b16 %v243
  %v1104 = vunpack.c.l.b16 %v244
  %v1105 = vunpack.c.l.b16 %v245
  %v1106 = vunpack.c.h.b16 %v245
  %v1107 = vunpack.c.l.b16 %v246
  %v1108 = vunpack.c.h.b16 %v246
  %v1109 = vunpack.c.l.b16 %v247
  %v1110 = vunpack.c.h.b16 %v247
  %v1111 = vunpack.c.l.b16 %v248
  %v1112 = vunpack.c.h.b16 %v248
  %v1113 = vunpack.c.l.b16 %v249
  %v1114 = vunpack.c.l.b16 %v250
  %v1115 = vunpack.c.h.b16 %v250
  %v1116 = vunpack.c.l.b16 %v251
  %v1117 = vunpack.c.h.b16 %v251
  %v1118 = vunpack.c.l.b16 %v252
  %v1119 = vunpack.c.h.b16 %v252
  %v1120 = vunpack.c.l.b16 %v253
  %v1121 = vunpack.c.h.b16 %v253
  %v1122 = vunpack.c.l.b16 %v254
  %v1123 = vunpack.c.l.b16 %v255
  %v1124 = vunpack.c.h.b16 %v255
  %v1125 = vunpack.c.l.b16 %v256
  %v1126 = vunpack.c.h.b16 %v256
  %v1127 = vunpack.c.l.b16 %v257
  %v1128 = vunpack.c.h.b16 %v257
  %v1129 = vunpack.c.l.b16 %v258
  %v1130 = vunpack.c.h.b16 %v258
  %v1131 = vunpack.c.l.b16 %v259
  %v1132 = vunpack.c.l.b16 %v260
  %v1133 = vunpack.c.h.b16 %v260
  %v1134 = vunpack.c.l.b16 %v261
  %v1135 = vunpack.c.h.b16 %v261
  %v1136 = vunpack.c.l.b16 %v262
  %v1137 = vunpack.c.h.b16 %v262
  %v1138 = vunpack.c.l.b16 %v263
  %v1139 = vunpack.c.h.b16 %v263
  %v1140 = vunpack.c.l.b16 %v264
  %v1141 = vunpack.c.l.b16 %v265
  %v1142 = vunpack.c.h.b16 %v265
  %v1143 = vunpack.c.l.b16 %v266
  %v1144 = vunpack.c.h.b16 %v266
  %v1145 = vunpack.c.l.b16 %v267
  %v1146 = vunpack.c.h.b16 %v267
  %v1147 = vunpack.c.l.b16 %v268
  %v1148 = vunpack.c.h.b16 %v268
  %v1149 = vunpack.c.l.b16 %v269
  %v1150 = vunpack.c.l.b16 %v270
  %v1151 = vunpack.c.h.b16 %v270
  %v1152 = vunpack.c.l.b16 %v271
  %v1153 = vunpack.c.h.b16 %v271
  %v1154 = vunpack.c.l.b16 %v272
  %v1155 = vunpack.c.h.b16 %v272
  %v1156 = vunpack.c.l.b16 %v273
  %v1157 = vunpack.c.h.b16 %v273
  %v1158 = vunpack.c.l.b16 %v274
  %v1159 = vunpack.c.l.b16 %v275
  %v1160 = vunpack.c.h.b16 %v275
  %v1161 = vunpack.c.l.b16 %v276
  %v1162 = vunpack.c.h.b16 %v276
  %v1163 = vunpack.c.l.b16 %v277
  %v1164 = vunpack.c.h.b16 %v277
  %v1165 = vunpack.c.l.b16 %v278
  %v1166 = vunpack.c.h.b16 %v278
  %v1167 = vunpack.c.l.b16 %v279
  %v1168 = vunpack.c.l.b16 %v280
  %v1169 = vunpack.c.h.b16 %v280
  %v1170 = vunpack.c.l.b16 %v281
  %v1171 = vunpack.c.h.b16 %v281
  %v1172 = vunpack.c.l.b16 %v282
  %v1173 = vunpack.c.h.b16 %v282
  %v1174 = vunpack.c.l.b16 %v283
  %v1175 = vunpack.c.h.b16 %v283
  %v1176 = vunpack.c.l.b16 %v284
  %v1177 = vunpack.c.l.b16 %v285
  %v1178 = vunpack.c.h.b16 %v285
  %v1179 = vunpack.c.l.b16 %v286
  %v1180 = vunpack.c.h.b16 %v286
  %v1181 = vunpack.c.l.b16 %v287
  %v1182 = vunpack.c.h.b16 %v287
  %v1183 = vunpack.c.l.b16 %v288
  %v1184 = vunpack.c.h.b16 %v288
  %v1185 = vunpack.c.l.b16 %v289
  %v1186 = vunpack.c.l.b16 %v290
  %v1187 = vunpack.c.h.b16 %v290
  %v1188 = vunpack.c.l.b16 %v291
  %v1189 = vunpack.c.h.b16 %v291
  %v1190 = vunpack.c.l.b16 %v292
  %v1191 = vunpack.c.h.b16 %v292
  %v1192 = vunpack.c.l.b16 %v293
  %v1193 = vunpack.c.h.b16 %v293
  %v1194 = vunpack.c.l.b16 %v294
  %v1195 = vunpack.c.l.b16 %v295
  %v1196 = vunpack.c.h.b16 %v295
  %v1197 = vunpack.c.l.b16 %v296
  %v1198 = vunpack.c.h.b16 %v296
  %v1199 = vunpack.c.l.b16 %v297
  %v1200 = vunpack.c.h.b16 %v297
  %v1201 = vunpack.c.l.b16 %v298
  %v1202 = vunpack.c.h.b16 %v298
  %v1203 = vunpack.c.l.b16 %v299
  %v1204 = vunpack.c.l.b16 %v300
  %v1205 = vunpack.c.h.b16 %v300
  %v1206 = vunpack.c.l.b16 %v301
  %v1207 = vunpack.c.h.b16 %v301
  %v1208 = vunpack.c.l.b16 %v302
  %v1209 = vunpack.c.h.b16 %v302
  %v1210 = vunpack.c.l.b16 %v303
  %v1211 = vunpack.c.h.b16 %v303
  %v1212 = vunpack.c.l.b16 %v304
  %v1213 = vunpack.c.l.b16 %v305
  %v1214 = vunpack.c.h.b16 %v305
  %v1215 = vunpack.c.l.b16 %v306
  %v1216 = vunpack.c.h.b16 %v306
  %v1217 = vunpack.c.l.b16 %v307
  %v1218 = vunpack.c.h.b16 %v307
  %v1219 = vunpack.c.l.b16 %v308
  %v1220 = vunpack.c.h.b16 %v308
  %v1221 = vunpack.c.l.b16 %v309
  %v1222 = vunpack.c.l.b16 %v310
  %v1223 = vunpack.c.h.b16 %v310
  %v1224 = vunpack.c.l.b16 %v311
  %v1225 = vunpack.c.h.b16 %v311
  %v1226 = vunpack.c.l.b16 %v312
  %v1227 = vunpack.c.h.b16 %v312
  %v1228 = vunpack.c.l.b16 %v313
  %v1229 = vunpack.c.h.b16 %v313
  %v1230 = vunpack.c.l.b16 %v314
  %v1231 = vunpack.c.l.b16 %v315
  %v1232 = vunpack.c.h.b16 %v315
  %v1233 = vunpack.c.l.b16 %v316
  %v1234 = vunpack.c.h.b16 %v316
  %v1235 = vunpack.c.l.b16 %v317
  %v1236 = vunpack.c.h.b16 %v317
  %v1237 = vunpack.c.l.b16 %v318
  %v1238 = vunpack.c.h.b16 %v318
  %v1239 = vunpack.c.l.b16 %v319
  %v1240 = vunpack.c.l.b16 %v320
  %v1241 = vunpack.c.h.b16 %v320
  %v1242 = vunpack.c.l.b16 %v321
  %v1243 = vunpack.c.h.b16 %v321
  %v1244 = vunpack.c.l.b16 %v322
  %v1245 = vunpack.c.h.b16 %v322
  %v1246 = vunpack.c.l.b16 %v323
  %v1247 = vunpack.c.h.b16 %v323
  %v1248 = vunpack.c.l.b16 %v324
  %v1249 = vunpack.c.l.b16 %v325
  %v1250 = vunpack.c.h.b16 %v325
  %v1251 = vunpack.c.l.b16 %v326
  %v1252 = vunpack.c.h.b16 %v326
  %v1253 = vunpack.c.l.b16 %v327
  %v1254 = vunpack.c.h.b16 %v327
  %v1255 = vunpack.c.l.b16 %v328
  %v1256 = vunpack.c.h.b16 %v328
  %v1257 = vunpack.c.l.b16 %v329
  %v1258 = vunpack.c.l.b16 %v330
  %v1259 = vunpack.c.h.b16 %v330
  %v1260 = vunpack.c.l.b16 %v331
  %v1261 = vunpack.c.h.b16 %v331
  %v1262 = vunpack.c.l.b16 %v332
  %v1263 = vunpack.c.h.b16 %v332
  %v1264 = vunpack.c.l.b16 %v333
  %v1265 = vunpack.c.h.b16 %v333
  %v1266 = vunpack.c.l.b16 %v334
  %v1267 = vunpack.c.l.b16 %v335
  %v1268 = vunpack.c.h.b16 %v335
  %v1269 = vunpack.c.l.b16 %v336
  %v1270 = vunpack.c.h.b16 %v336
  %v1271 = vunpack.c.l.b16 %v337
  %v1272 = vunpack.c.h.b16 %v337
  %v1273 = vunpack.c.l.b16 %v338
  %v1274 = vunpack.c.h.b16 %v338
  %v1275 = vunpack.c.l.b16 %v339
  %v1276 = vunpack.c.l.b16 %v340
  %v1277 = vunpack.c.h.b16 %v340
  %v1278 = vunpack.c.l.b16 %v341
  %v1279 = vunpack.c.h.b16 %v341
  %v1280 = vunpack.c.l.b16 %v342
  %v1281 = vunpack.c.h.b16 %v342
  %v1282 = vunpack.c.l.b16 %v343
  %v1283 = vunpack.c.h.b16 %v343
  %v1284 = vunpack.c.l.b16 %v344
  %v1285 = vunpack.c.l.b16 %v345
  %v1286 = vunpack.c.h.b16 %v345
  %v1287 = vunpack.c.l.b16 %v346
  %v1288 = vunpack.c.h.b16 %v346
  %v1289 = vunpack.c.l.b16 %v347
  %v1290 = vunpack.c.h.b16 %v347
  %v1291 = vunpack.c.l.b16 %v348
  %v1292 = vunpack.c.h.b16 %v348
  %v1293 = vunpack.c.l.b16 %v349
  %v1294 = vunpack.c.l.b16 %v350
  %v1295 = vunpack.c.h.b16 %v350
  %v1296 = vunpack.c.l.b16 %v351
  %v1297 = vunpack.c.h.b16 %v351
  %v1298 = vunpack.c.l.b16 %v352
  %v1299 = vunpack.c.h.b16 %v352
  %v1300 = vunpack.c.l.b16 %v353
  %v1301 = vunpack.c.h.b16 %v353
  %v1302 = vunpack.c.l.b16 %v354
  %v1303 = vunpack.c.l.b16 %v355
  %v1304 = vunpack.c.h.b16 %v355
  %v1305 = vunpack.c.l.b16 %v356
  %v1306 = vunpack.c.h.b16 %v356
  %v1307 = vunpack.c.l.b16 %v357
  %v1308 = vunpack.c.h.b16 %v357
  %v1309 = vunpack.c.l.b16 %v358
  %v1310 = vunpack.c.h.b16 %v358
  %v1311 = vunpack.c.l.b16 %v359
  %v1312 = vunpack.c.l.b16 %v360
  %v1313 = vunpack.c.h.b16 %v360
  %v1314 = vunpack.c.l.b16 %v361
  %v1315 = vunpack.c.h.b16 %v361
  %v1316 = vunpack.c.l.b16 %v362
  %v1317 = vunpack.c.h.b16 %v362
  %v1318 = vunpack.c.l.b16 %v363
  %v1319 = vunpack.c.h.b16 %v363
  %v1320 = vunpack.c.l.b16 %v364
  %v1321 = vunpack.c.l.b16 %v365
  %v1322 = vunpack.c.h.b16 %v365
  %v1323 = vunpack.c.l.b16 %v366
  %v1324 = vunpack.c.h.b16 %v366
  %v1325 = vunpack.c.l.b16 %v367
  %v1326 = vunpack.c.h.b16 %v367
  %v1327 = vunpack.c.l.b16 %v368
  %v1328 = vunpack.c.h.b16 %v368
  %v1329 = vunpack.c.l.b16 %v369
  %v1330 = vunpack.c.l.b16 %v370
  %v1331 = vunpack.c.h.b16 %v370
  %v1332 = vunpack.c.l.b16 %v371
  %v1333 = vunpack.c.h.b16 %v371
  %v1334 = vunpack.c.l.b16 %v372
  %v1335 = vunpack.c.h.b16 %v372
  %v1336 = vunpack.c.l.b16 %v373
  %v1337 = vunpack.c.h.b16 %v373
  %v1338 = vunpack.c.l.b16 %v374
  %v1339 = vunpack.c.l.b16 %v375
  %v1340 = vunpack.c.h.b16 %v375
  %v1341 = vunpack.c.l.b16 %v376
  %v1342 = vunpack.c.h.b16 %v376
  %v1343 = vunpack.c.l.b16 %v377
  %v1344 = vunpack.c.h.b16 %v377
  %v1345 = vunpack.c.l.b16 %v378
  %v1346 = vunpack.c.h.b16 %v378
  %v1347 = vunpack.c.l.b16 %v379
  %v1348 = vunpack.c.l.b16 %v380
  %v1349 = vunpack.c.h.b16 %v380
  %v1350 = vunpack.c.l.b16 %v381
  %v1351 = vunpack.c.h.b16 %v381
  %v1352 = vunpack.c.l.b16 %v382
  %v1353 = vunpack.c.h.b16 %v382
  %v1354 = vunpack.c.l.b16 %v383
  %v1355 = vunpack.c.h.b16 %v383
  %v1356 = vunpack.c.l.b16 %v384
  %v1357 = vunpack.c.l.b16 %v385
  %v1358 = vunpack.c.h.b16 %v385
  %v1359 = vunpack.c.l.b16 %v386
  %v1360 = vunpack.c.h.b16 %v386
  %v1361 = vunpack.c.l.b16 %v387
  %v1362 = vunpack.c.h.b16 %v387
  %v1363 = vunpack.c.l.b16 %v388
  %v1364 = vunpack.c.h.b16 %v388
  %v1365 = vunpack.c.l.b16 %v389
  %v1366 = vunpack.c.l.b16 %v390
  %v1367 = vunpack.c.h.b16 %v390
  %v1368 = vunpack.c.l.b16 %v391
  %v1369 = vunpack.c.h.b16 %v391
  %v1370 = vunpack.c.l.b16 %v392
  %v1371 = vunpack.c.h.b16 %v392
  %v1372 = vunpack.c.l.b16 %v393
  %v1373 = vunpack.c.h.b16 %v393
  %v1374 = vunpack.c.l.b16 %v394
  %v1375 = vunpack.c.l.b16 %v395
  %v1376 = vunpack.c.h.b16 %v395
  %v1377 = vunpack.c.l.b16 %v396
  %v1378 = vunpack.c.h.b16 %v396
  %v1379 = vunpack.c.l.b16 %v397
  %v1380 = vunpack.c.h.b16 %v397
  %v1381 = vunpack.c.l.b16 %v398
  %v1382 = vunpack.c.h.b16 %v398
  %v1383 = vunpack.c.l.b16 %v399
  %v1384 = vunpack.c.l.b16 %v400
  %v1385 = vunpack.c.h.b16 %v400
  %v1386 = vunpack.c.l.b16 %v401
  %v1387 = vunpack.c.h.b16 %v401
  %v1388 = vunpack.c.l.b16 %v402
  %v1389 = vunpack.c.h.b16 %v402
  %v1390 = vunpack.c.l.b16 %v403
  %v1391 = vunpack.c.h.b16 %v403
  %v1392 = vunpack.c.l.b16 %v404
  %v1393 = vunpack.c.l.b16 %v405
  %v1394 = vunpack.c.h.b16 %v405
  %v1395 = vunpack.c.l.b16 %v406
  %v1396 = vunpack.c.h.b16 %v406
  %v1397 = vunpack.c.l.b16 %v407
  %v1398 = vunpack.c.h.b16 %v407
  %v1399 = vunpack.c.l.b16 %v408
  %v1400 = vunpack.c.h.b16 %v408
  %v1401 = vunpack.c.l.b16 %v409
  %v1402 = vunpack.c.l.b16 %v410
  %v1403 = vunpack.c.h.b16 %v410
  %v1404 = vunpack.c.l.b16 %v411
  %v1405 = vunpack.c.h.b16 %v411
  %v1406 = vunpack.c.l.b16 %v412
  %v1407 = vunpack.c.h.b16 %v412
  %v1408 = vunpack.c.l.b16 %v413
  %v1409 = vunpack.c.h.b16 %v413
  %v1410 = vunpack.c.l.b16 %v414
  %v1411 = vunpack.c.l.b16 %v415
  %v1412 = vunpack.c.h.b16 %v415
  %v1413 = vunpack.c.l.b16 %v416
  %v1414 = vunpack.c.h.b16 %v416
  %v1415 = vunpack.c.l.b16 %v417
  %v1416 = vunpack.c.h.b16 %v417
  %v1417 = vunpack.c.l.b16 %v418
  %v1418 = vunpack.c.h.b16 %v418
  %v1419 = vunpack.c.l.b16 %v419
  %v1420 = vunpack.c.l.b16 %v420
  %v1421 = vunpack.c.h.b16 %v420
  %v1422 = vunpack.c.l.b16 %v421
  %v1423 = vunpack.c.h.b16 %v421
  %v1424 = vunpack.c.l.b16 %v422
  %v1425 = vunpack.c.h.b16 %v422
  %v1426 = vunpack.c.l.b16 %v423
  %v1427 = vunpack.c.h.b16 %v423
  %v1428 = vunpack.c.l.b16 %v424
  %v1429 = vunpack.c.l.b16 %v425
  %v1430 = vunpack.c.h.b16 %v425
  %v1431 = vunpack.c.l.b16 %v426
  %v1432 = vunpack.c.h.b16 %v426
  %v1433 = vunpack.c.l.b16 %v427
  %v1434 = vunpack.c.h.b16 %v427
  %v1435 = vunpack.c.l.b16 %v428
  %v1436 = vunpack.c.h.b16 %v428
  %v1437 = vunpack.c.l.b16 %v429
  %v1438 = vunpack.c.l.b16 %v430
  %v1439 = vunpack.c.h.b16 %v430
  %v1440 = vunpack.c.l.b16 %v431
  %v1441 = vunpack.c.h.b16 %v431
  %v1442 = vunpack.c.l.b16 %v432
  %v1443 = vunpack.c.h.b16 %v432
  %v1444 = vunpack.c.l.b16 %v433
  %v1445 = vunpack.c.h.b16 %v433
  %v1446 = vunpack.c.l.b16 %v434
  %v1447 = vunpack.c.l.b16 %v435
  %v1448 = vunpack.c.h.b16 %v435
  %v1449 = vunpack.c.l.b16 %v436
  %v1450 = vunpack.c.h.b16 %v436
  %v1451 = vunpack.c.l.b16 %v437
  %v1452 = vunpack.c.h.b16 %v437
  %v1453 = vunpack.c.l.b16 %v438
  %v1454 = vunpack.c.h.b16 %v438
  %v1455 = vunpack.c.l.b16 %v439
  %v1456 = vunpack.c.l.b16 %v440
  %v1457 = vunpack.c.h.b16 %v440
  %v1458 = vunpack.c.l.b16 %v441
  %v1459 = vunpack.c.h.b16 %v441
  %v1460 = vunpack.c.l.b16 %v442
  %v1461 = vunpack.c.h.b16 %v442
  %v1462 = vunpack.c.l.b16 %v443
  %v1463 = vunpack.c.h.b16 %v443
  %v1464 = vunpack.c.l.b16 %v444
  %v1465 = vunpack.c.l.b16 %v445
  %v1466 = vunpack.c.h.b16 %v445
  %v1467 = vunpack.c.l.b16 %v446
  %v1468 = vunpack.c.h.b16 %v446
  %v1469 = vunpack.c.l.b16 %v447
  %v1470 = vunpack.c.h.b16 %v447
  %v1471 = vunpack.c.l.b16 %v448
  %v1472 = vunpack.c.h.b16 %v448
  %v1473 = vunpack.c.l.b16 %v449
  %v1474 = vunpack.c.l.b16 %v450
  %v1475 = vunpack.c.h.b16 %v450
  %v1476 = vunpack.c.l.b16 %v451
  %v1477 = vunpack.c.h.b16 %v451
  %v1478 = vunpack.c.l.b16 %v452
  %v1479 = vunpack.c.h.b16 %v452
  %v1480 = vunpack.c.l.b16 %v453
  %v1481 = vunpack.c.h.b16 %v453
  %v1482 = vunpack.c.l.b16 %v454
  %v1483 = vunpack.c.l.b16 %v455
  %v1484 = vunpack.c.h.b16 %v455
  %v1485 = vunpack.c.l.b16 %v456
  %v1486 = vunpack.c.h.b16 %v456
  %v1487 = vunpack.c.l.b16 %v457
  %v1488 = vunpack.c.h.b16 %v457
  %v1489 = vunpack.c.l.b16 %v458
  %v1490 = vunpack.c.h.b16 %v458
  %v1491 = vunpack.c.l.b16 %v459
  %v1492 = vunpack.c.l.b16 %v460
  %v1493 = vunpack.c.h.b16 %v460
  %v1494 = vunpack.c.l.b16 %v461
  %v1495 = vunpack.c.h.b16 %v461
  %v1496 = vunpack.c.l.b16 %v462
  %v1497 = vunpack.c.h.b16 %v462
  %v1498 = vunpack.c.l.b16 %v463
  %v1499 = vunpack.c.h.b16 %v463
  %v1500 = vunpack.c.l.b16 %v464
  %v1501 = vunpack.c.l.b16 %v465
  %v1502 = vunpack.c.h.b16 %v465
  %v1503 = vunpack.c.l.b16 %v466
  %v1504 = vunpack.c.h.b16 %v466
  %v1505 = vunpack.c.l.b16 %v467
  %v1506 = vunpack.c.h.b16 %v467
  %v1507 = vunpack.c.l.b16 %v468
  %v1508 = vunpack.c.h.b16 %v468
  %v1509 = vunpack.c.l.b16 %v469
  %v1510 = vpack.c.b16 %v943, %v934
  %v1511 = vpack.c.b16 %v944, %v935
  %v1512 = vpack.c.b16 %v945, %v936
  %v1513 = vpack.c.b16 %v946, %v937
  %v1514 = vpack.c.b16 %v947, %v938
  %v1515 = vpack.c.b16 %v948, %v939
  %v1516 = vpack.c.b16 %v949, %v940
  %v1517 = vpack.c.b16 %v950, %v941
  %v1518 = vpack.c.b16 %v951, %v942
  %v1519 = vpack.c.b16 %v961, %v952
  %v1520 = vpack.c.b16 %v962, %v953
  %v1521 = vpack.c.b16 %v963, %v954
  %v1522 = vpack.c.b16 %v964, %v955
  %v1523 = vpack.c.b16 %v965, %v956
  %v1524 = vpack.c.b16 %v966, %v957
  %v1525 = vpack.c.b16 %v967, %v958
  %v1526 = vpack.c.b16 %v968, %v959
  %v1527 = vpack.c.b16 %v969, %v960
  %v1528 = vpack.c.b16 %v979, %v970
  %v1529 = vpack.c.b16 %v980, %v971
  %v1530 = vpack.c.b16 %v981, %v972
  %v1531 = vpack.c.b16 %v982, %v973
  %v1532 = vpack.c.b16 %v983, %v974
  %v1533 = vpack.c.b16 %v984, %v975
  %v1534 = vpack.c.b16 %v985, %v976
  %v1535 = vpack.c.b16 %v986, %v977
  %v1536 = vpack.c.b16 %v987, %v978
  %v1537 = vpack.c.b16 %v997, %v988
  %v1538 = vpack.c.b16 %v998, %v989
  %v1539 = vpack.c.b16 %v999, %v990
  %v1540 = vpack.c.b16 %v1000, %v991
  %v1541 = vpack.c.b16 %v1001, %v992
  %v1542 = vpack.c.b16 %v1002, %v993
  %v1543 = vpack.c.b16 %v1003, %v994
  %v1544 = vpack.c.b16 %v1004, %v995
  %v1545 = vpack.c.b16 %v1005, %v996
  %v1546 = vpack.c.b16 %v1015, %v1006
  %v1547 = vpack.c.b16 %v1016, %v1007
  %v1548 = vpack.c.b16 %v1017, %v1008
  %v1549 = vpack.c.b16 %v1018, %v1009
  %v1550 = vpack.c.b16 %v1019, %v1010
  %v1551 = vpack.c.b16 %v1020, %v1011
  %v1552 = vpack.c.b16 %v1021, %v1012
  %v1553 = vpack.c.b16 %v1022, %v1013
  %v1554 = vpack.c.b16 %v1023, %v1014
  %v1555 = vpack.c.b16 %v1033, %v1024
  %v1556 = vpack.c.b16 %v1034, %v1025
  %v1557 = vpack.c.b16 %v1035, %v1026
  %v1558 = vpack.c.b16 %v1036, %v1027
  %v1559 = vpack.c.b16 %v1037, %v1028
  %v1560 = vpack.c.b16 %v1038, %v1029
  %v1561 = vpack.c.b16 %v1039, %v1030
  %v1562 = vpack.c.b16 %v1040, %v1031
  %v1563 = vpack.c.b16 %v1041, %v1032
  %v1564 = vpack.c.b16 %v1051, %v1042
  %v1565 = vpack.c.b16 %v1052, %v1043
  %v1566 = vpack.c.b16 %v1053, %v1044
  %v1567 = vpack.c.b16 %v1054, %v1045
  %v1568 = vpack.c.b16 %v1055, %v1046
  %v1569 = vpack.c.b16 %v1056, %v1047
  %v1570 = vpack.c.b16 %v1057, %v1048
  %v1571 = vpack.c.b16 %v1058, %v1049
  %v1572 = vpack.c.b16 %v1059, %v1050
  %v1573 = vpack.c.b16 %v1069, %v1060
  %v1574 = vpack.c.b16 %v1070, %v1061
  %v1575 = vpack.c.b16 %v1071, %v1062
  %v1576 = vpack.c.b16 %v1072, %v1063
  %v1577 = vpack.c.b16 %v1073, %v1064
  %v1578 = vpack.c.b16 %v1074, %v1065
  %v1579 = vpack.c.b16 %v1075, %v1066
  %v1580 = vpack.c.b16 %v1076, %v1067
  %v1581 = vpack.c.b16 %v1077, %v1068
  %v1582 = vpack.c.b16 %v1087, %v1078
  %v1583 = vpack.c.b16 %v1088, %v1079
  %v1584 = vpack.c.b16 %v1089, %v1080
  %v1585 = vpack.c.b16 %v1090, %v1081
  %v1586 = vpack.c.b16 %v1091, %v1082
  %v1587 = vpack.c.b16 %v1092, %v1083
  %v1588 = vpack.c.b16 %v1093, %v1084
  %v1589 = vpack.c.b16 %v1094, %v1085
  %v1590 = vpack.c.b16 %v1095, %v1086
  %v1591 = vpack.c.b16 %v1105, %v1096
  %v1592 = vpack.c.b16 %v1106, %v1097
  %v1593 = vpack.c.b16 %v1107, %v1098
  %v1594 = vpack.c.b16 %v1108, %v1099
  %v1595 = vpack.c.b16 %v1109, %v1100
  %v1596 = vpack.c.b16 %v1110, %v1101
  %v1597 = vpack.c.b16 %v1111, %v1102
  %v1598 = vpack.c.b16 %v1112, %v1103
  %v1599 = vpack.c.b16 %v1113, %v1104
  %v1600 = vpack.c.b16 %v1123, %v1114
  %v1601 = vpack.c.b16 %v1124, %v1115
  %v1602 = vpack.c.b16 %v1125, %v1116
  %v1603 = vpack.c.b16 %v1126, %v1117
  %v1604 = vpack.c.b16 %v1127, %v1118
  %v1605 = vpack.c.b16 %v1128, %v1119
  %v1606 = vpack.c.b16 %v1129, %v1120
  %v1607 = vpack.c.b16 %v1130, %v1121
  %v1608 = vpack.c.b16 %v1131, %v1122
  %v1609 = vpack.c.b16 %v1141, %v1132
  %v1610 = vpack.c.b16 %v1142, %v1133
  %v1611 = vpack.c.b16 %v1143, %v1134
  %v1612 = vpack.c.b16 %v1144, %v1135
  %v1613 = vpack.c.b16 %v1145, %v1136
  %v1614 = vpack.c.b16 %v1146, %v1137
  %v1615 = vpack.c.b16 %v1147, %v1138
  %v1616 = vpack.c.b16 %v1148, %v1139
  %v1617 = vpack.c.b16 %v1149, %v1140
  %v1618 = vpack.c.b16 %v1159, %v1150
  %v1619 = vpack.c.b16 %v1160, %v1151
  %v1620 = vpack.c.b16 %v1161, %v1152
  %v1621 = vpack.c.b16 %v1162, %v1153
  %v1622 = vpack.c.b16 %v1163, %v1154
  %v1623 = vpack.c.b16 %v1164, %v1155
  %v1624 = vpack.c.b16 %v1165, %v1156
  %v1625 = vpack.c.b16 %v1166, %v1157
  %v1626 = vpack.c.b16 %v1167, %v1158
  %v1627 = vpack.c.b16 %v1177, %v1168
  %v1628 = vpack.c.b16 %v1178, %v1169
  %v1629 = vpack.c.b16 %v1179, %v1170
  %v1630 = vpack.c.b16 %v1180, %v1171
  %v1631 = vpack.c.b16 %v1181, %v1172
  %v1632 = vpack.c.b16 %v1182, %v1173
  %v1633 = vpack.c.b16 %v1183, %v1174
  %v1634 = vpack.c.b16 %v1184, %v1175
  %v1635 = vpack.c.b16 %v1185, %v1176
  %v1636 = vpack.c.b16 %v1195, %v1186
  %v1637 = vpack.c.b16 %v1196, %v1187
  %v1638 = vpack.c.b16 %v1197, %v1188
  %v1639 = vpack.c.b16 %v1198, %v1189
  %v1640 = vpack.c.b16 %v1199, %v1190
  %v1641 = vpack.c.b16 %v1200, %v1191
  %v1642 = vpack.c.b16 %v1201, %v1192
  %v1643 = vpack.c.b16 %v1202, %v1193
  %v1644 = vpack.c.b16 %v1203, %v1194
  %v1645 = vpack.c.b16 %v1213, %v1204
  %v1646 = vpack.c.b16 %v1214, %v1205
  %v1647 = vpack.c.b16 %v1215, %v1206
  %v1648 = vpack.c.b16 %v1216, %v1207
  %v1649 = vpack.c.b16 %v1217, %v1208
  %v1650 = vpack.c.b16 %v1218, %v1209
  %v1651 = vpack.c.b16 %v1219, %v1210
  %v1652 = vpack.c.b16 %v1220, %v1211
  %v1653 = vpack.c.b16 %v1221, %v1212
  %v1654 = vpack.c.b16 %v1231, %v1222
  %v1655 = vpack.c.b16 %v1232, %v1223
  %v1656 = vpack.c.b16 %v1233, %v1224
  %v1657 = vpack.c.b16 %v1234, %v1225
  %v1658 = vpack.c.b16 %v1235, %v1226
  %v1659 = vpack.c.b16 %v1236, %v1227
  %v1660 = vpack.c.b16 %v1237, %v1228
  %v1661 = vpack.c.b16 %v1238, %v1229
  %v1662 = vpack.c.b16 %v1239, %v1230
  %v1663 = vpack.c.b16 %v1249, %v1240
  %v1664 = vpack.c.b16 %v1250, %v1241
  %v1665 = vpack.c.b16 %v1251, %v1242
  %v1666 = vpack.c.b16 %v1252, %v1243
  %v1667 = vpack.c.b16 %v1253, %v1244
  %v1668 = vpack.c.b16 %v1254, %v1245
  %v1669 = vpack.c.b16 %v1255, %v1246
  %v1670 = vpack.c.b16 %v1256, %v1247
  %v1671 = vpack.c.b16 %v1257, %v1248
  %v1672 = vpack.c.b16 %v1267, %v1258
  %v1673 = vpack.c.b16 %v1268, %v1259
  %v1674 = vpack.c.b16 %v1269, %v1260
  %v1675 = vpack.c.b16 %v1270, %v1261
  %v1676 = vpack.c.b16 %v1271, %v1262
  %v1677 = vpack.c.b16 %v1272, %v1263
  %v1678 = vpack.c.b16 %v1273, %v1264
  %v1679 = vpack.c.b16 %v1274, %v1265
  %v1680 = vpack.c.b16 %v1275, %v1266
  %v1681 = vpack.c.b16 %v1285, %v1276
  %v1682 = vpack.c.b16 %v1286, %v1277
  %v1683 = vpack.c.b16 %v1287, %v1278
  %v1684 = vpack.c.b16 %v1288, %v1279
  %v1685 = vpack.c.b16 %v1289, %v1280
  %v1686 = vpack.c.b16 %v1290, %v1281
  %v1687 = vpack.c.b16 %v1291, %v1282
  %v1688 = vpack.c.b16 %v1292, %v1283
  %v1689 = vpack.c.b16 %v1293, %v1284
  %v1690 = vpack.c.b16 %v1303, %v1294
  %v1691 = vpack.c.b16 %v1304, %v1295
  %v1692 = vpack.c.b16 %v1305, %v1296
  %v1693 = vpack.c.b16 %v1306, %v1297
  %v1694 = vpack.c.b16 %v1307, %v1298
  %v1695 = vpack.c.b16 %v1308, %v1299
  %v1696 = vpack.c.b16 %v1309, %v1300
  %v1697 = vpack.c.b16 %v1310, %v1301
  %v1698 = vpack.c.b16 %v1311, %v1302
  %v1699 = vpack.c.b16 %v1321, %v1312
  %v1700 = vpack.c.b16 %v1322, %v1313
  %v1701 = vpack.c.b16 %v1323, %v1314
  %v1702 = vpack.c.b16 %v1324, %v1315
  %v1703 = vpack.c.b16 %v1325, %v1316
  %v1704 = vpack.c.b16 %v1326, %v1317
  %v1705 = vpack.c.b16 %v1327, %v1318
  %v1706 = vpack.c.b16 %v1328, %v1319
  %v1707 = vpack.c.b16 %v1329, %v1320
  %v1708 = vpack.c.b16 %v1339, %v1330
  %v1709 = vpack.c.b16 %v1340, %v1331
  %v1710 = vpack.c.b16 %v1341, %v1332
  %v1711 = vpack.c.b16 %v1342, %v1333
  %v1712 = vpack.c.b16 %v1343, %v1334
  %v1713 = vpack.c.b16 %v1344, %v1335
  %v1714 = vpack.c.b16 %v1345, %v1336
  %v1715 = vpack.c.b16 %v1346, %v1337
  %v1716 = vpack.c.b16 %v1347, %v1338
  %v1717 = vpack.c.b16 %v1357, %v1348
  %v1718 = vpack.c.b16 %v1358, %v1349
  %v1719 = vpack.c.b16 %v1359, %v1350
  %v1720 = vpack.c.b16 %v1360, %v1351
  %v1721 = vpack.c.b16 %v1361, %v1352
  %v1722 = vpack.c.b16 %v1362, %v1353
  %v1723 = vpack.c.b16 %v1363, %v1354
  %v1724 = vpack.c.b16 %v1364, %v1355
  %v1725 = vpack.c.b16 %v1365, %v1356
  %v1726 = vpack.c.b16 %v1375, %v1366
  %v1727 = vpack.c.b16 %v1376, %v1367
  %v1728 = vpack.c.b16 %v1377, %v1368
  %v1729 = vpack.c.b16 %v1378, %v1369
  %v1730 = vpack.c.b16 %v1379, %v1370
  %v1731 = vpack.c.b16 %v1380, %v1371
  %v1732 = vpack.c.b16 %v1381, %v1372
  %v1733 = vpack.c.b16 %v1382, %v1373
  %v1734 = vpack.c.b16 %v1383, %v1374
  %v1735 = vpack.c.b16 %v1393, %v1384
  %v1736 = vpack.c.b16 %v1394, %v1385
  %v1737 = vpack.c.b16 %v1395, %v1386
  %v1738 = vpack.c.b16 %v1396, %v1387
  %v1739 = vpack.c.b16 %v1397, %v1388
  %v1740 = vpack.c.b16 %v1398, %v1389
  %v1741 = vpack.c.b16 %v1399, %v1390
  %v1742 = vpack.c.b16 %v1400, %v1391
  %v1743 = vpack.c.b16 %v1401, %v1392
  %v1744 = vpack.c.b16 %v1411, %v1402
  %v1745 = vpack.c.b16 %v1412, %v1403
  %v1746 = vpack.c.b16 %v1413, %v1404
  %v1747 = vpack.c.b16 %v1414, %v1405
  %v1748 = vpack.c.b16 %v1415, %v1406
  %v1749 = vpack.c.b16 %v1416, %v1407
  %v1750 = vpack.c.b16 %v1417, %v1408
  %v1751 = vpack.c.b16 %v1418, %v1409
  %v1752 = vpack.c.b16 %v1419, %v1410
  %v1753 = vpack.c.b16 %v1429, %v1420
  %v1754 = vpack.c.b16 %v1430, %v1421
  %v1755 = vpack.c.b16 %v1431, %v1422
  %v1756 = vpack.c.b16 %v1432, %v1423
  %v1757 = vpack.c.b16 %v1433, %v1424
  %v1758 = vpack.c.b16 %v1434, %v1425
  %v1759 = vpack.c.b16 %v1435, %v1426
  %v1760 = vpack.c.b16 %v1436, %v1427
  %v1761 = vpack.c.b16 %v1437, %v1428
  %v1762 = vpack.c.b16 %v1447, %v1438
  %v1763 = vpack.c.b16 %v1448, %v1439
  %v1764 = vpack.c.b16 %v1449, %v1440
  %v1765 = vpack.c.b16 %v1450, %v1441
  %v1766 = vpack.c.b16 %v1451, %v1442
  %v1767 = vpack.c.b16 %v1452, %v1443
  %v1768 = vpack.c.b16 %v1453, %v1444
  %v1769 = vpack.c.b16 %v1454, %v1445
  %v1770 = vpack.c.b16 %v1455, %v1446
  %v1771 = vpack.c.b16 %v1465, %v1456
  %v1772 = vpack.c.b16 %v1466, %v1457
  %v1773 = vpack.c.b16 %v1467, %v1458
  %v1774 = vpack.c.b16 %v1468, %v1459
  %v1775 = vpack.c.b16 %v1469, %v1460
  %v1776 = vpack.c.b16 %v1470, %v1461
  %v1777 = vpack.c.b16 %v1471, %v1462
  %v1778 = vpack.c.b16 %v1472, %v1463
  %v1779 = vpack.c.b16 %v1473, %v1464
  %v1780 = vpack.c.b16 %v1483, %v1474
  %v1781 = vpack.c.b16 %v1484, %v1475
  %v1782 = vpack.c.b16 %v1485, %v1476
  %v1783 = vpack.c.b16 %v1486, %v1477
  %v1784 = vpack.c.b16 %v1487, %v1478
  %v1785 = vpack.c.b16 %v1488, %v1479
  %v1786 = vpack.c.b16 %v1489, %v1480
  %v1787 = vpack.c.b16 %v1490, %v1481
  %v1788 = vpack.c.b16 %v1491, %v1482
  %v1789 = vpack.c.b16 %v1501, %v1492
  %v1790 = vpack.c.b16 %v1502, %v1493
  %v1791 = vpack.c.b16 %v1503, %v1494
  %v1792 = vpack.c.b16 %v1504, %v1495
  %v1793 = vpack.c.b16 %v1505, %v1496
  %v1794 = vpack.c.b16 %v1506, %v1497
  %v1795 = vpack.c.b16 %v1507, %v1498
  %v1796 = vpack.c.b16 %v1508, %v1499
  %v1797 = vpack.c.b16 %v1509, %v1500
  %v2230 = vunpack.c.l.b16 %v470
  %v2231 = vunpack.c.l.b16 %v471
  %v2232 = vunpack.c.l.b16 %v472
  %v2233 = vunpack.c.l.b16 %v473
  %v2234 = vunpack.c.l.b16 %v474
  %v2235 = vunpack.c.l.b16 %v475
  %v2236 = vunpack.c.l.b16 %v476
  %v2237 = vunpack.c.l.b16 %v477
  %v2238 = vunpack.c.l.b16 %v478
  %v2239 = vunpack.c.l.b16 %v479
  %v2240 = vunpack.c.l.b16 %v480
  %v2241 = vunpack.c.l.b16 %v481
  %v2242 = vunpack.c.l.b16 %v482
  %v2243 = vunpack.c.l.b16 %v483
  %v2244 = vunpack.c.l.b16 %v484
  %v2245 = vunpack.c.l.b16 %v485
  %v2246 = vunpack.c.l.b16 %v486
  %v2247 = vunpack.c.l.b16 %v487
  %v2248 = vunpack.c.l.b16 %v488
  %v2249 = vunpack.c.l.b16 %v489
  %v2250 = vunpack.c.l.b16 %v490
  %v2251 = vunpack.c.l.b16 %v491
  %v2252 = vunpack.c.l.b16 %v492
  %v2253 = vunpack.c.l.b16 %v493
  %v2254 = vunpack.c.l.b16 %v494
  %v2255 = vunpack.c.l.b16 %v495
  %v2256 = vunpack.c.l.b16 %v496
  %v2257 = vunpack.c.l.b16 %v497
  %v2258 = vunpack.c.l.b16 %v498
  %v2259 = vunpack.c.l.b16 %v499
  %v2260 = vunpack.c.l.b16 %v500
  %v2261 = vunpack.c.l.b16 %v501
  %v2262 = vunpack.c.l.b16 %v502
  %v2263 = vunpack.c.l.b16 %v503
  %v2264 = vunpack.c.l.b16 %v504
  %v2265 = vunpack.c.l.b16 %v505
  %v2266 = vunpack.c.l.b16 %v506
  %v2267 = vunpack.c.l.b16 %v507
  %v2268 = vunpack.c.l.b16 %v508
  %v2269 = vunpack.c.l.b16 %v509
  %v2270 = vunpack.c.l.b16 %v510
  %v2271 = vunpack.c.l.b16 %v511
  %v2272 = vunpack.c.l.b16 %v512
  %v2273 = vunpack.c.l.b16 %v513
  %v2274 = vunpack.c.l.b16 %v514
  %v2275 = vunpack.c.l.b16 %v515
  %v2276 = vunpack.c.l.b16 %v516
  %v2277 = vunpack.c.l.b16 %v517
  %v2278 = vunpack.c.l.b16 %v518
  %v2279 = vunpack.c.l.b16 %v519
  %v2280 = vunpack.c.l.b16 %v520
  %v2281 = vunpack.c.l.b16 %v521
  %v2282 = vunpack.c.l.b16 %v522
  %v2283 = vunpack.c.l.b16 %v523
  %v2284 = vunpack.c.l.b16 %v524
  %v2285 = vunpack.c.l.b16 %v525
  %v2286 = vunpack.c.l.b16 %v526
  %v2287 = vunpack.c.l.b16 %v527
  %v2288 = vunpack.c.l.b16 %v528
  %v2289 = vunpack.c.l.b16 %v529
  %v2290 = vunpack.c.l.b16 %v530
  %v2291 = vunpack.c.l.b16 %v531
  %v2292 = vunpack.c.l.b16 %v532
  %v2293 = vunpack.c.l.b16 %v533
  %v2294 = vunpack.c.l.b16 %v534
  %v2295 = vunpack.c.l.b16 %v535
  %v2296 = vunpack.c.l.b16 %v536
  %v2297 = vunpack.c.l.b16 %v537
  %v2298 = vunpack.c.l.b16 %v538
  %v2299 = vunpack.c.l.b16 %v539
  %v2300 = vunpack.c.l.b16 %v540
  %v2301 = vunpack.c.l.b16 %v541
  %v2302 = vunpack.c.l.b16 %v542
  %v2303 = vunpack.c.l.b16 %v543
  %v2304 = vunpack.c.l.b16 %v544
  %v2305 = vunpack.c.l.b16 %v545
  %v2306 = vunpack.c.l.b16 %v546
  %v2307 = vunpack.c.l.b16 %v547
  %v2308 = vunpack.c.l.b16 %v548
  %v2309 = vunpack.c.l.b16 %v549
  %v2310 = vunpack.c.l.b16 %v550
  %v2311 = vunpack.c.l.b16 %v551
  %v2312 = vunpack.c.l.b16 %v552
  %v2313 = vunpack.c.l.b16 %v553
  %v2314 = vunpack.c.l.b16 %v554
  %v2315 = vunpack.c.l.b16 %v555
  %v2316 = vunpack.c.l.b16 %v556
  %v2317 = vunpack.c.l.b16 %v557
  %v2318 = vunpack.c.l.b16 %v558
  %v2319 = vunpack.c.l.b16 %v559
  %v2320 = vunpack.c.l.b16 %v560
  %v2321 = vunpack.c.l.b16 %v561
  %v2322 = vunpack.c.l.b16 %v562
  %v2323 = vunpack.c.l.b16 %v563
  %v2324 = vunpack.c.l.b16 %v564
  %v2325 = vunpack.c.l.b16 %v565
  %v2326 = vunpack.c.l.b16 %v566
  %v2327 = vunpack.c.l.b16 %v567
  %v2328 = vunpack.c.l.b16 %v568
  %v2329 = vunpack.c.l.b16 %v569
  %v2330 = vunpack.c.l.b16 %v570
  %v2331 = vunpack.c.l.b16 %v571
  %v2332 = vunpack.c.l.b16 %v572
  %v2333 = vunpack.c.l.b16 %v573
  %v2334 = vunpack.c.l.b16 %v574
  %v2335 = vunpack.c.l.b16 %v575
  %v2336 = vunpack.c.l.b16 %v576
  %v2337 = vunpack.c.l.b16 %v577
  %v2338 = vunpack.c.l.b16 %v578
  %v2339 = vunpack.c.l.b16 %v579
  %v2340 = vunpack.c.l.b16 %v580
  %v2341 = vunpack.c.l.b16 %v581
  %v2342 = vunpack.c.l.b16 %v582
  %v2343 = vunpack.c.l.b16 %v583
  %v2344 = vunpack.c.l.b16 %v584
  %v2345 = vunpack.c.l.b16 %v585
  %v2346 = vunpack.c.l.b16 %v586
  %v2347 = vunpack.c.l.b16 %v587
  %v2348 = vunpack.c.l.b16 %v588
  %v2349 = vunpack.c.l.b16 %v589
  %v2350 = vunpack.c.l.b16 %v590
  %v2351 = vunpack.c.l.b16 %v591
  %v2352 = vunpack.c.l.b16 %v592
  %v2353 = vunpack.c.l.b16 %v593
  %v2354 = vunpack.c.l.b16 %v594
  %v2355 = vunpack.c.l.b16 %v595
  %v2356 = vunpack.c.l.b16 %v596
  %v2357 = vunpack.c.l.b16 %v597
  %v2358 = vunpack.c.l.b16 %v598
  %v2359 = vunpack.c.l.b16 %v599
  %v2360 = vunpack.c.l.b16 %v600
  %v2361 = vunpack.c.l.b16 %v601
  %v2362 = vunpack.c.l.b16 %v602
  %v2363 = vunpack.c.l.b16 %v603
  %v2364 = vunpack.c.l.b16 %v604
  %v2365 = vunpack.c.l.b16 %v605
  %v2366 = vunpack.c.l.b16 %v606
  %v2367 = vunpack.c.l.b16 %v607
  %v2368 = vunpack.c.l.b16 %v608
  %v2369 = vunpack.c.l.b16 %v609
  %v2370 = vunpack.c.l.b16 %v610
  %v2371 = vunpack.c.l.b16 %v611
  %v2372 = vunpack.c.l.b16 %v612
  %v2373 = vunpack.c.l.b16 %v613
  %v2374 = vpack.c.b16 %v2231, %v2230
  %v2375 = vpack.c.b16 %v2233, %v2232
  %v2376 = vpack.c.b16 %v2235, %v2234
  %v2377 = vpack.c.b16 %v2237, %v2236
  %v2378 = vpack.c.b16 %v2239, %v2238
  %v2379 = vpack.c.b16 %v2241, %v2240
  %v2380 = vpack.c.b16 %v2243, %v2242
  %v2381 = vpack.c.b16 %v2245, %v2244
  %v2382 = vpack.c.b16 %v2247, %v2246
  %v2383 = vpack.c.b16 %v2249, %v2248
  %v2384 = vpack.c.b16 %v2251, %v2250
  %v2385 = vpack.c.b16 %v2253, %v2252
  %v2386 = vpack.c.b16 %v2255, %v2254
  %v2387 = vpack.c.b16 %v2257, %v2256
  %v2388 = vpack.c.b16 %v2259, %v2258
  %v2389 = vpack.c.b16 %v2261, %v2260
  %v2390 = vpack.c.b16 %v2263, %v2262
  %v2391 = vpack.c.b16 %v2265, %v2264
  %v2392 = vpack.c.b16 %v2267, %v2266
  %v2393 = vpack.c.b16 %v2269, %v2268
  %v2394 = vpack.c.b16 %v2271, %v2270
  %v2395 = vpack.c.b16 %v2273, %v2272
  %v2396 = vpack.c.b16 %v2275, %v2274
  %v2397 = vpack.c.b16 %v2277, %v2276
  %v2398 = vpack.c.b16 %v2279, %v2278
  %v2399 = vpack.c.b16 %v2281, %v2280
  %v2400 = vpack.c.b16 %v2283, %v2282
  %v2401 = vpack.c.b16 %v2285, %v2284
  %v2402 = vpack.c.b16 %v2287, %v2286
  %v2403 = vpack.c.b16 %v2289, %v2288
  %v2404 = vpack.c.b16 %v2291, %v2290
  %v2405 = vpack.c.b16 %v2293, %v2292
  %v2406 = vpack.c.b16 %v2295, %v2294
  %v2407 = vpack.c.b16 %v2297, %v2296
  %v2408 = vpack.c.b16 %v2299, %v2298
  %v2409 = vpack.c.b16 %v2301, %v2300
  %v2410 = vpack.c.b16 %v2303, %v2302
  %v2411 = vpack.c.b16 %v2305, %v2304
  %v2412 = vpack.c.b16 %v2307, %v2306
  %v2413 = vpack.c.b16 %v2309, %v2308
  %v2414 = vpack.c.b16 %v2311, %v2310
  %v2415 = vpack.c.b16 %v2313, %v2312
  %v2416 = vpack.c.b16 %v2315, %v2314
  %v2417 = vpack.c.b16 %v2317, %v2316
  %v2418 = vpack.c.b16 %v2319, %v2318
  %v2419 = vpack.c.b16 %v2321, %v2320
  %v2420 = vpack.c.b16 %v2323, %v2322
  %v2421 = vpack.c.b16 %v2325, %v2324
  %v2422 = vpack.c.b16 %v2327, %v2326
  %v2423 = vpack.c.b16 %v2329, %v2328
  %v2424 = vpack.c.b16 %v2331, %v2330
  %v2425 = vpack.c.b16 %v2333, %v2332
  %v2426 = vpack.c.b16 %v2335, %v2334
  %v2427 = vpack.c.b16 %v2337, %v2336
  %v2428 = vpack.c.b16 %v2339, %v2338
  %v2429 = vpack.c.b16 %v2341, %v2340
  %v2430 = vpack.c.b16 %v2343, %v2342
  %v2431 = vpack.c.b16 %v2345, %v2344
  %v2432 = vpack.c.b16 %v2347, %v2346
  %v2433 = vpack.c.b16 %v2349, %v2348
  %v2434 = vpack.c.b16 %v2351, %v2350
  %v2435 = vpack.c.b16 %v2353, %v2352
  %v2436 = vpack.c.b16 %v2355, %v2354
  %v2437 = vpack.c.b16 %v2357, %v2356
  %v2438 = vpack.c.b16 %v2359, %v2358
  %v2439 = vpack.c.b16 %v2361, %v2360
  %v2440 = vpack.c.b16 %v2363, %v2362
  %v2441 = vpack.c.b16 %v2365, %v2364
  %v2442 = vpack.c.b16 %v2367, %v2366
  %v2443 = vpack.c.b16 %v2369, %v2368
  %v2444 = vpack.c.b16 %v2371, %v2370
  %v2445 = vpack.c.b16 %v2373, %v2372
  %2518 = vmatprep.subr.bf16.mxu0 0
  %2519 = vmatpush1.bf16.msra.mxu0 %v2374
  %2520 = vmatprep.subr.bf16.mxu0 0
  %2521 = vmatpush1.bf16.msra.mxu0 %v2375
  %2522 = vmatprep.subr.bf16.mxu0 0
  %2523 = vmatpush1.bf16.msra.mxu0 %v2376
  %2524 = vmatprep.subr.bf16.mxu0 0
  %2525 = vmatpush1.bf16.msra.mxu0 %v2377
  %2526 = vmatprep.subr.bf16.mxu0 0
  %2527 = vmatpush1.bf16.msra.mxu0 %v2378
  %2528 = vmatprep.subr.bf16.mxu0 0
  %2529 = vmatpush1.bf16.msra.mxu0 %v2379
  %2530 = vmatprep.subr.bf16.mxu0 0
  %2531 = vmatpush1.bf16.msra.mxu0 %v2380
  %2532 = vmatprep.subr.bf16.mxu0 0
  %2533 = vmatpush1.bf16.msra.mxu0 %v2381
  %2534 = vmatprep.subr.bf16.mxu0 0
  %2535 = vmatpush1.bf16.msra.mxu0 %v2382
  %2536 = vmatprep.subr.bf16.mxu0 0
  %2537 = vmatpush1.bf16.msra.mxu0 %v2383
  %2538 = vmatprep.subr.bf16.mxu0 0
  %2539 = vmatpush1.bf16.msra.mxu0 %v2384
  %2540 = vmatprep.subr.bf16.mxu0 0
  %2541 = vmatpush1.bf16.msra.mxu0 %v2385
  %2542 = vmatprep.subr.bf16.mxu0 0
  %2543 = vmatpush1.bf16.msra.mxu0 %v2386
  %2544 = vmatprep.subr.bf16.mxu0 0
  %2545 = vmatpush1.bf16.msra.mxu0 %v2387
  %2546 = vmatprep.subr.bf16.mxu0 0
  %2547 = vmatpush1.bf16.msra.mxu0 %v2388
  %2548 = vmatprep.subr.bf16.mxu0 0
  %2549 = vmatpush1.bf16.msra.mxu0 %v2389
  %2550 = vmatprep.mubr.bf16.mxu0 %v1511
  %2551 = vmatmul.mubr.bf16.gmra.mrb[0].mxu0 %v1510
  %v2552 = vpop.f32.mrb[0].mxu0
  %v2553 = vadd.f32 0.0, %v2552
  %v2554 = vpop.f32.mrb[0].mxu0
  %v2555 = vpop.f32.mrb[0].mxu0
  %v2556 = vadd.f32 0.0, %v2555
  %v2557 = vpop.f32.mrb[0].mxu0
  %2558 = vmatprep.mubr.bf16.mxu0 %v1520
  %2559 = vmatmul.mubr.bf16.gmra.mrb[0].mxu0 %v1519
  %v2560 = vpop.f32.mrb[0].mxu0
  %v2561 = vadd.f32 0.0, %v2560
  %v2562 = vpop.f32.mrb[0].mxu0
  %v2563 = vpop.f32.mrb[0].mxu0
  %v2564 = vadd.f32 0.0, %v2563
  %v2565 = vpop.f32.mrb[0].mxu0
  %2566 = vmatprep.mubr.bf16.mxu0 %v1529
  %2567 = vmatmul.mubr.bf16.gmra.mrb[0].mxu0 %v1528
  %v2568 = vpop.f32.mrb[0].mxu0
  %v2569 = vadd.f32 0.0, %v2568
  %v2570 = vpop.f32.mrb[0].mxu0
  %v2571 = vpop.f32.mrb[0].mxu0
  %v2572 = vadd.f32 0.0, %v2571
  %v2573 = vpop.f32.mrb[0].mxu0
  %2574 = vmatprep.mubr.bf16.mxu0 %v1538
  %2575 = vmatmul.mubr.bf16.gmra.mrb[0].mxu0 %v1537
  %v2576 = vpop.f32.mrb[0].mxu0
  %v2577 = vadd.f32 0.0, %v2576
  %v2578 = vpop.f32.mrb[0].mxu0
  %v2579 = vpop.f32.mrb[0].mxu0
  %v2580 = vadd.f32 0.0, %v2579
  %v2581 = vpop.f32.mrb[0].mxu0
  %2582 = vmatprep.mubr.bf16.mxu0 %v1547
  %2583 = vmatmul.mubr.bf16.gmra.mrb[0].mxu0 %v1546
  %v2584 = vpop.f32.mrb[0].mxu0
  %v2585 = vadd.f32 0.0, %v2584
  %v2586 = vpop.f32.mrb[0].mxu0
  %v2587 = vpop.f32.mrb[0].mxu0
  %v2588 = vadd.f32 0.0, %v2587
  %v2589 = vpop.f32.mrb[0].mxu0
  %2590 = vmatprep.mubr.bf16.mxu0 %v1556
  %2591 = vmatmul.mubr.bf16.gmra.mrb[0].mxu0 %v1555
  %v2592 = vpop.f32.mrb[0].mxu0
  %v2593 = vadd.f32 0.0, %v2592
  %v2594 = vpop.f32.mrb[0].mxu0
  %v2595 = vpop.f32.mrb[0].mxu0
  %v2596 = vadd.f32 0.0, %v2595
  %v2597 = vpop.f32.mrb[0].mxu0
  %2598 = vmatprep.mubr.bf16.mxu0 %v1565
  %2599 = vmatmul.mubr.bf16.gmra.mrb[0].mxu0 %v1564
  %v2600 = vpop.f32.mrb[0].mxu0
  %v2601 = vadd.f32 0.0, %v2600
  %v2602 = vpop.f32.mrb[0].mxu0
  %v2603 = vpop.f32.mrb[0].mxu0
  %v2604 = vadd.f32 0.0, %v2603
  %v2605 = vpop.f32.mrb[0].mxu0
  %2606 = vmatprep.mubr.bf16.mxu0 %v1574
  %2607 = vmatmul.mubr.bf16.gmra.mrb[0].mxu0 %v1573
  %v2608 = vpop.f32.mrb[0].mxu0
  %v2609 = vadd.f32 0.0, %v2608
  %v2610 = vpop.f32.mrb[0].mxu0
  %v2611 = vpop.f32.mrb[0].mxu0
  %v2612 = vadd.f32 0.0, %v2611
  %v2613 = vpop.f32.mrb[0].mxu0
  %2614 = vmatprep.mubr.bf16.mxu0 %v1583
  %2615 = vmatmul.mubr.bf16.gmra.mrb[0].mxu0 %v1582
  %v2616 = vpop.f32.mrb[0].mxu0
  %v2617 = vadd.f32 0.0, %v2616
  %v2618 = vpop.f32.mrb[0].mxu0
  %v2619 = vpop.f32.mrb[0].mxu0
  %v2620 = vadd.f32 0.0, %v2619
  %v2621 = vpop.f32.mrb[0].mxu0
  %2622 = vmatprep.mubr.bf16.mxu0 %v1592
  %2623 = vmatmul.mubr.bf16.gmra.mrb[0].mxu0 %v1591
  %v2624 = vpop.f32.mrb[0].mxu0
  %v2625 = vadd.f32 0.0, %v2624
  %v2626 = vpop.f32.mrb[0].mxu0
  %v2627 = vpop.f32.mrb[0].mxu0
  %v2628 = vadd.f32 0.0, %v2627
  %v2629 = vpop.f32.mrb[0].mxu0
  %2630 = vmatprep.mubr.bf16.mxu0 %v1601
  %2631 = vmatmul.mubr.bf16.gmra.mrb[0].mxu0 %v1600
  %v2632 = vpop.f32.mrb[0].mxu0
  %v2633 = vadd.f32 0.0, %v2632
  %v2634 = vpop.f32.mrb[0].mxu0
  %v2635 = vpop.f32.mrb[0].mxu0
  %v2636 = vadd.f32 0.0, %v2635
  %v2637 = vpop.f32.mrb[0].mxu0
  %2638 = vmatprep.mubr.bf16.mxu0 %v1610
  %2639 = vmatmul.mubr.bf16.gmra.mrb[0].mxu0 %v1609
  %v2640 = vpop.f32.mrb[0].mxu0
  %v2641 = vadd.f32 0.0, %v2640
  %v2642 = vpop.f32.mrb[0].mxu0
  %v2643 = vpop.f32.mrb[0].mxu0
  %v2644 = vadd.f32 0.0, %v2643
  %v2645 = vpop.f32.mrb[0].mxu0
  %2646 = vmatprep.mubr.bf16.mxu0 %v1619
  %2647 = vmatmul.mubr.bf16.gmra.mrb[0].mxu0 %v1618
  %v2648 = vpop.f32.mrb[0].mxu0
  %v2649 = vadd.f32 0.0, %v2648
  %v2650 = vpop.f32.mrb[0].mxu0
  %v2651 = vpop.f32.mrb[0].mxu0
  %v2652 = vadd.f32 0.0, %v2651
  %v2653 = vpop.f32.mrb[0].mxu0
  %2654 = vmatprep.mubr.bf16.mxu0 %v1628
  %2655 = vmatmul.mubr.bf16.gmra.mrb[0].mxu0 %v1627
  %v2656 = vpop.f32.mrb[0].mxu0
  %v2657 = vadd.f32 0.0, %v2656
  %v2658 = vpop.f32.mrb[0].mxu0
  %v2659 = vpop.f32.mrb[0].mxu0
  %v2660 = vadd.f32 0.0, %v2659
  %v2661 = vpop.f32.mrb[0].mxu0
  %2662 = vmatprep.mubr.bf16.mxu0 %v1637
  %2663 = vmatmul.mubr.bf16.gmra.mrb[0].mxu0 %v1636
  %v2664 = vpop.f32.mrb[0].mxu0
  %v2665 = vadd.f32 0.0, %v2664
  %v2666 = vpop.f32.mrb[0].mxu0
  %v2667 = vpop.f32.mrb[0].mxu0
  %v2668 = vadd.f32 0.0, %v2667
  %v2669 = vpop.f32.mrb[0].mxu0
  %2670 = vmatprep.mubr.bf16.mxu0 %v1646
  %2671 = vmatmul.mubr.bf16.gmra.mrb[0].mxu0 %v1645
  %v2672 = vpop.f32.mrb[0].mxu0
  %v2673 = vadd.f32 0.0, %v2672
  %v2674 = vpop.f32.mrb[0].mxu0
  %v2675 = vpop.f32.mrb[0].mxu0
  %v2676 = vadd.f32 0.0, %v2675
  %v2677 = vpop.f32.mrb[0].mxu0
  %2678 = vmatprep.mubr.bf16.mxu0 %v1655
  %2679 = vmatmul.mubr.bf16.gmra.mrb[0].mxu0 %v1654
  %v2680 = vpop.f32.mrb[0].mxu0
  %v2681 = vadd.f32 0.0, %v2680
  %v2682 = vpop.f32.mrb[0].mxu0
  %v2683 = vpop.f32.mrb[0].mxu0
  %v2684 = vadd.f32 0.0, %v2683
  %v2685 = vpop.f32.mrb[0].mxu0
  %2686 = vmatprep.mubr.bf16.mxu0 %v1664
  %2687 = vmatmul.mubr.bf16.gmra.mrb[0].mxu0 %v1663
  %v2688 = vpop.f32.mrb[0].mxu0
  %v2689 = vadd.f32 0.0, %v2688
  %v2690 = vpop.f32.mrb[0].mxu0
  %v2691 = vpop.f32.mrb[0].mxu0
  %v2692 = vadd.f32 0.0, %v2691
  %v2693 = vpop.f32.mrb[0].mxu0
  %2694 = vmatprep.mubr.bf16.mxu0 %v1673
  %2695 = vmatmul.mubr.bf16.gmra.mrb[0].mxu0 %v1672
  %v2696 = vpop.f32.mrb[0].mxu0
  %v2697 = vadd.f32 0.0, %v2696
  %v2698 = vpop.f32.mrb[0].mxu0
  %v2699 = vpop.f32.mrb[0].mxu0
  %v2700 = vadd.f32 0.0, %v2699
  %v2701 = vpop.f32.mrb[0].mxu0
  %2702 = vmatprep.mubr.bf16.mxu0 %v1682
  %2703 = vmatmul.mubr.bf16.gmra.mrb[0].mxu0 %v1681
  %v2704 = vpop.f32.mrb[0].mxu0
  %v2705 = vadd.f32 0.0, %v2704
  %v2706 = vpop.f32.mrb[0].mxu0
  %v2707 = vpop.f32.mrb[0].mxu0
  %v2708 = vadd.f32 0.0, %v2707
  %v2709 = vpop.f32.mrb[0].mxu0
  %2710 = vmatprep.mubr.bf16.mxu0 %v1691
  %2711 = vmatmul.mubr.bf16.gmra.mrb[0].mxu0 %v1690
  %v2712 = vpop.f32.mrb[0].mxu0
  %v2713 = vadd.f32 0.0, %v2712
  %v2714 = vpop.f32.mrb[0].mxu0
  %v2715 = vpop.f32.mrb[0].mxu0
  %v2716 = vadd.f32 0.0, %v2715
  %v2717 = vpop.f32.mrb[0].mxu0
  %2718 = vmatprep.mubr.bf16.mxu0 %v1700
  %2719 = vmatmul.mubr.bf16.gmra.mrb[0].mxu0 %v1699
  %v2720 = vpop.f32.mrb[0].mxu0
  %v2721 = vadd.f32 0.0, %v2720
  %v2722 = vpop.f32.mrb[0].mxu0
  %v2723 = vpop.f32.mrb[0].mxu0
  %v2724 = vadd.f32 0.0, %v2723
  %v2725 = vpop.f32.mrb[0].mxu0
  %2726 = vmatprep.mubr.bf16.mxu0 %v1709
  %2727 = vmatmul.mubr.bf16.gmra.mrb[0].mxu0 %v1708
  %v2728 = vpop.f32.mrb[0].mxu0
  %v2729 = vadd.f32 0.0, %v2728
  %v2730 = vpop.f32.mrb[0].mxu0
  %v2731 = vpop.f32.mrb[0].mxu0
  %v2732 = vadd.f32 0.0, %v2731
  %v2733 = vpop.f32.mrb[0].mxu0
  %2734 = vmatprep.mubr.bf16.mxu0 %v1718
  %2735 = vmatmul.mubr.bf16.gmra.mrb[0].mxu0 %v1717
  %v2736 = vpop.f32.mrb[0].mxu0
  %v2737 = vadd.f32 0.0, %v2736
  %v2738 = vpop.f32.mrb[0].mxu0
  %v2739 = vpop.f32.mrb[0].mxu0
  %v2740 = vadd.f32 0.0, %v2739
  %v2741 = vpop.f32.mrb[0].mxu0
  %2742 = vmatprep.mubr.bf16.mxu0 %v1727
  %2743 = vmatmul.mubr.bf16.gmra.mrb[0].mxu0 %v1726
  %v2744 = vpop.f32.mrb[0].mxu0
  %v2745 = vadd.f32 0.0, %v2744
  %v2746 = vpop.f32.mrb[0].mxu0
  %v2747 = vpop.f32.mrb[0].mxu0
  %v2748 = vadd.f32 0.0, %v2747
  %v2749 = vpop.f32.mrb[0].mxu0
  %2750 = vmatprep.mubr.bf16.mxu0 %v1736
  %2751 = vmatmul.mubr.bf16.gmra.mrb[0].mxu0 %v1735
  %v2752 = vpop.f32.mrb[0].mxu0
  %v2753 = vadd.f32 0.0, %v2752
  %v2754 = vpop.f32.mrb[0].mxu0
  %v2755 = vpop.f32.mrb[0].mxu0
  %v2756 = vadd.f32 0.0, %v2755
  %v2757 = vpop.f32.mrb[0].mxu0
  %2758 = vmatprep.mubr.bf16.mxu0 %v1745
  %2759 = vmatmul.mubr.bf16.gmra.mrb[0].mxu0 %v1744
  %v2760 = vpop.f32.mrb[0].mxu0
  %v2761 = vadd.f32 0.0, %v2760
  %v2762 = vpop.f32.mrb[0].mxu0
  %v2763 = vpop.f32.mrb[0].mxu0
  %v2764 = vadd.f32 0.0, %v2763
  %v2765 = vpop.f32.mrb[0].mxu0
  %2766 = vmatprep.mubr.bf16.mxu0 %v1754
  %2767 = vmatmul.mubr.bf16.gmra.mrb[0].mxu0 %v1753
  %v2768 = vpop.f32.mrb[0].mxu0
  %v2769 = vadd.f32 0.0, %v2768
  %v2770 = vpop.f32.mrb[0].mxu0
  %v2771 = vpop.f32.mrb[0].mxu0
  %v2772 = vadd.f32 0.0, %v2771
  %v2773 = vpop.f32.mrb[0].mxu0
  %2774 = vmatprep.mubr.bf16.mxu0 %v1763
  %2775 = vmatmul.mubr.bf16.gmra.mrb[0].mxu0 %v1762
  %v2776 = vpop.f32.mrb[0].mxu0
  %v2777 = vadd.f32 0.0, %v2776
  %v2778 = vpop.f32.mrb[0].mxu0
  %v2779 = vpop.f32.mrb[0].mxu0
  %v2780 = vadd.f32 0.0, %v2779
  %v2781 = vpop.f32.mrb[0].mxu0
  %2782 = vmatprep.mubr.bf16.mxu0 %v1772
  %2783 = vmatmul.mubr.bf16.gmra.mrb[0].mxu0 %v1771
  %v2784 = vpop.f32.mrb[0].mxu0
  %v2785 = vadd.f32 0.0, %v2784
  %v2786 = vpop.f32.mrb[0].mxu0
  %v2787 = vpop.f32.mrb[0].mxu0
  %v2788 = vadd.f32 0.0, %v2787
  %v2789 = vpop.f32.mrb[0].mxu0
  %2790 = vmatprep.mubr.bf16.mxu0 %v1781
  %2791 = vmatmul.mubr.bf16.gmra.mrb[0].mxu0 %v1780
  %v2792 = vpop.f32.mrb[0].mxu0
  %v2793 = vadd.f32 0.0, %v2792
  %v2794 = vpop.f32.mrb[0].mxu0
  %v2795 = vpop.f32.mrb[0].mxu0
  %v2796 = vadd.f32 0.0, %v2795
  %v2797 = vpop.f32.mrb[0].mxu0
  %2798 = vmatprep.mubr.bf16.mxu0 %v1790
  %2799 = vmatmul.mubr.bf16.gmra.mrb[0].mxu0 %v1789
  %v2800 = vpop.f32.mrb[0].mxu0
  %v2801 = vadd.f32 0.0, %v2800
  %v2802 = vpop.f32.mrb[0].mxu0
  %v2803 = vpop.f32.mrb[0].mxu0
  %v2804 = vadd.f32 0.0, %v2803
  %v2805 = vpop.f32.mrb[0].mxu0
  %2806 = vdwg.mxu0
  %2807 = vmatprep.subr.bf16.mxu0 0
  %2808 = vmatpush1.bf16.msra.mxu0 %v2390
  %2809 = vmatprep.subr.bf16.mxu0 0
  %2810 = vmatpush1.bf16.msra.mxu0 %v2391
  %2811 = vmatprep.subr.bf16.mxu0 0
  %2812 = vmatpush1.bf16.msra.mxu0 %v2392
  %2813 = vmatprep.subr.bf16.mxu0 0
  %2814 = vmatpush1.bf16.msra.mxu0 %v2393
  %2815 = vmatprep.subr.bf16.mxu0 0
  %2816 = vmatpush1.bf16.msra.mxu0 %v2394
  %2817 = vmatprep.subr.bf16.mxu0 0
  %2818 = vmatpush1.bf16.msra.mxu0 %v2395
  %2819 = vmatprep.subr.bf16.mxu0 0
  %2820 = vmatpush1.bf16.msra.mxu0 %v2396
  %2821 = vmatprep.subr.bf16.mxu0 0
  %2822 = vmatpush1.bf16.msra.mxu0 %v2397
  %2823 = vmatprep.subr.bf16.mxu0 0
  %2824 = vmatpush1.bf16.msra.mxu0 %v2398
  %2825 = vmatprep.subr.bf16.mxu0 0
  %2826 = vmatpush1.bf16.msra.mxu0 %v2399
  %2827 = vmatprep.subr.bf16.mxu0 0
  %2828 = vmatpush1.bf16.msra.mxu0 %v2400
  %2829 = vmatprep.subr.bf16.mxu0 0
  %2830 = vmatpush1.bf16.msra.mxu0 %v2401
  %2831 = vmatprep.subr.bf16.mxu0 0
  %2832 = vmatpush1.bf16.msra.mxu0 %v2402
  %2833 = vmatprep.subr.bf16.mxu0 0
  %2834 = vmatpush1.bf16.msra.mxu0 %v2403
  %2835 = vmatprep.subr.bf16.mxu0 0
  %2836 = vmatpush1.bf16.msra.mxu0 %v2404
  %2837 = vmatprep.subr.bf16.mxu0 0
  %2838 = vmatpush1.bf16.msra.mxu0 %v2405
  %2839 = vmatprep.mubr.bf16.mxu0 %v1513
  %2840 = vmatmul.mubr.bf16.gmra.mrb[0].mxu0 %v1512
  %v2841 = vpop.f32.mrb[0].mxu0
  %v2842 = vadd.f32 %v2553, %v2841
  %v2843 = vpop.f32.mrb[0].mxu0
  %v2844 = vpop.f32.mrb[0].mxu0
  %v2845 = vadd.f32 %v2556, %v2844
  %v2846 = vpop.f32.mrb[0].mxu0
  %2847 = vmatprep.mubr.bf16.mxu0 %v1522
  %2848 = vmatmul.mubr.bf16.gmra.mrb[0].mxu0 %v1521
  %v2849 = vpop.f32.mrb[0].mxu0
  %v2850 = vadd.f32 %v2561, %v2849
  %v2851 = vpop.f32.mrb[0].mxu0
  %v2852 = vpop.f32.mrb[0].mxu0
  %v2853 = vadd.f32 %v2564, %v2852
  %v2854 = vpop.f32.mrb[0].mxu0
  %2855 = vmatprep.mubr.bf16.mxu0 %v1531
  %2856 = vmatmul.mubr.bf16.gmra.mrb[0].mxu0 %v1530
  %v2857 = vpop.f32.mrb[0].mxu0
  %v2858 = vadd.f32 %v2569, %v2857
  %v2859 = vpop.f32.mrb[0].mxu0
  %v2860 = vpop.f32.mrb[0].mxu0
  %v2861 = vadd.f32 %v2572, %v2860
  %v2862 = vpop.f32.mrb[0].mxu0
  %2863 = vmatprep.mubr.bf16.mxu0 %v1540
  %2864 = vmatmul.mubr.bf16.gmra.mrb[0].mxu0 %v1539
  %v2865 = vpop.f32.mrb[0].mxu0
  %v2866 = vadd.f32 %v2577, %v2865
  %v2867 = vpop.f32.mrb[0].mxu0
  %v2868 = vpop.f32.mrb[0].mxu0
  %v2869 = vadd.f32 %v2580, %v2868
  %v2870 = vpop.f32.mrb[0].mxu0
  %2871 = vmatprep.mubr.bf16.mxu0 %v1549
  %2872 = vmatmul.mubr.bf16.gmra.mrb[0].mxu0 %v1548
  %v2873 = vpop.f32.mrb[0].mxu0
  %v2874 = vadd.f32 %v2585, %v2873
  %v2875 = vpop.f32.mrb[0].mxu0
  %v2876 = vpop.f32.mrb[0].mxu0
  %v2877 = vadd.f32 %v2588, %v2876
  %v2878 = vpop.f32.mrb[0].mxu0
  %2879 = vmatprep.mubr.bf16.mxu0 %v1558
  %2880 = vmatmul.mubr.bf16.gmra.mrb[0].mxu0 %v1557
  %v2881 = vpop.f32.mrb[0].mxu0
  %v2882 = vadd.f32 %v2593, %v2881
  %v2883 = vpop.f32.mrb[0].mxu0
  %v2884 = vpop.f32.mrb[0].mxu0
  %v2885 = vadd.f32 %v2596, %v2884
  %v2886 = vpop.f32.mrb[0].mxu0
  %2887 = vmatprep.mubr.bf16.mxu0 %v1567
  %2888 = vmatmul.mubr.bf16.gmra.mrb[0].mxu0 %v1566
  %v2889 = vpop.f32.mrb[0].mxu0
  %v2890 = vadd.f32 %v2601, %v2889
  %v2891 = vpop.f32.mrb[0].mxu0
  %v2892 = vpop.f32.mrb[0].mxu0
  %v2893 = vadd.f32 %v2604, %v2892
  %v2894 = vpop.f32.mrb[0].mxu0
  %2895 = vmatprep.mubr.bf16.mxu0 %v1576
  %2896 = vmatmul.mubr.bf16.gmra.mrb[0].mxu0 %v1575
  %v2897 = vpop.f32.mrb[0].mxu0
  %v2898 = vadd.f32 %v2609, %v2897
  %v2899 = vpop.f32.mrb[0].mxu0
  %v2900 = vpop.f32.mrb[0].mxu0
  %v2901 = vadd.f32 %v2612, %v2900
  %v2902 = vpop.f32.mrb[0].mxu0
  %2903 = vmatprep.mubr.bf16.mxu0 %v1585
  %2904 = vmatmul.mubr.bf16.gmra.mrb[0].mxu0 %v1584
  %v2905 = vpop.f32.mrb[0].mxu0
  %v2906 = vadd.f32 %v2617, %v2905
  %v2907 = vpop.f32.mrb[0].mxu0
  %v2908 = vpop.f32.mrb[0].mxu0
  %v2909 = vadd.f32 %v2620, %v2908
  %v2910 = vpop.f32.mrb[0].mxu0
  %2911 = vmatprep.mubr.bf16.mxu0 %v1594
  %2912 = vmatmul.mubr.bf16.gmra.mrb[0].mxu0 %v1593
  %v2913 = vpop.f32.mrb[0].mxu0
  %v2914 = vadd.f32 %v2625, %v2913
  %v2915 = vpop.f32.mrb[0].mxu0
  %v2916 = vpop.f32.mrb[0].mxu0
  %v2917 = vadd.f32 %v2628, %v2916
  %v2918 = vpop.f32.mrb[0].mxu0
  %2919 = vmatprep.mubr.bf16.mxu0 %v1603
  %2920 = vmatmul.mubr.bf16.gmra.mrb[0].mxu0 %v1602
  %v2921 = vpop.f32.mrb[0].mxu0
  %v2922 = vadd.f32 %v2633, %v2921
  %v2923 = vpop.f32.mrb[0].mxu0
  %v2924 = vpop.f32.mrb[0].mxu0
  %v2925 = vadd.f32 %v2636, %v2924
  %v2926 = vpop.f32.mrb[0].mxu0
  %2927 = vmatprep.mubr.bf16.mxu0 %v1612
  %2928 = vmatmul.mubr.bf16.gmra.mrb[0].mxu0 %v1611
  %v2929 = vpop.f32.mrb[0].mxu0
  %v2930 = vadd.f32 %v2641, %v2929
  %v2931 = vpop.f32.mrb[0].mxu0
  %v2932 = vpop.f32.mrb[0].mxu0
  %v2933 = vadd.f32 %v2644, %v2932
  %v2934 = vpop.f32.mrb[0].mxu0
  %2935 = vmatprep.mubr.bf16.mxu0 %v1621
  %2936 = vmatmul.mubr.bf16.gmra.mrb[0].mxu0 %v1620
  %v2937 = vpop.f32.mrb[0].mxu0
  %v2938 = vadd.f32 %v2649, %v2937
  %v2939 = vpop.f32.mrb[0].mxu0
  %v2940 = vpop.f32.mrb[0].mxu0
  %v2941 = vadd.f32 %v2652, %v2940
  %v2942 = vpop.f32.mrb[0].mxu0
  %2943 = vmatprep.mubr.bf16.mxu0 %v1630
  %2944 = vmatmul.mubr.bf16.gmra.mrb[0].mxu0 %v1629
  %v2945 = vpop.f32.mrb[0].mxu0
  %v2946 = vadd.f32 %v2657, %v2945
  %v2947 = vpop.f32.mrb[0].mxu0
  %v2948 = vpop.f32.mrb[0].mxu0
  %v2949 = vadd.f32 %v2660, %v2948
  %v2950 = vpop.f32.mrb[0].mxu0
  %2951 = vmatprep.mubr.bf16.mxu0 %v1639
  %2952 = vmatmul.mubr.bf16.gmra.mrb[0].mxu0 %v1638
  %v2953 = vpop.f32.mrb[0].mxu0
  %v2954 = vadd.f32 %v2665, %v2953
  %v2955 = vpop.f32.mrb[0].mxu0
  %v2956 = vpop.f32.mrb[0].mxu0
  %v2957 = vadd.f32 %v2668, %v2956
  %v2958 = vpop.f32.mrb[0].mxu0
  %2959 = vmatprep.mubr.bf16.mxu0 %v1648
  %2960 = vmatmul.mubr.bf16.gmra.mrb[0].mxu0 %v1647
  %v2961 = vpop.f32.mrb[0].mxu0
  %v2962 = vadd.f32 %v2673, %v2961
  %v2963 = vpop.f32.mrb[0].mxu0
  %v2964 = vpop.f32.mrb[0].mxu0
  %v2965 = vadd.f32 %v2676, %v2964
  %v2966 = vpop.f32.mrb[0].mxu0
  %2967 = vmatprep.mubr.bf16.mxu0 %v1657
  %2968 = vmatmul.mubr.bf16.gmra.mrb[0].mxu0 %v1656
  %v2969 = vpop.f32.mrb[0].mxu0
  %v2970 = vadd.f32 %v2681, %v2969
  %v2971 = vpop.f32.mrb[0].mxu0
  %v2972 = vpop.f32.mrb[0].mxu0
  %v2973 = vadd.f32 %v2684, %v2972
  %v2974 = vpop.f32.mrb[0].mxu0
  %2975 = vmatprep.mubr.bf16.mxu0 %v1666
  %2976 = vmatmul.mubr.bf16.gmra.mrb[0].mxu0 %v1665
  %v2977 = vpop.f32.mrb[0].mxu0
  %v2978 = vadd.f32 %v2689, %v2977
  %v2979 = vpop.f32.mrb[0].mxu0
  %v2980 = vpop.f32.mrb[0].mxu0
  %v2981 = vadd.f32 %v2692, %v2980
  %v2982 = vpop.f32.mrb[0].mxu0
  %2983 = vmatprep.mubr.bf16.mxu0 %v1675
  %2984 = vmatmul.mubr.bf16.gmra.mrb[0].mxu0 %v1674
  %v2985 = vpop.f32.mrb[0].mxu0
  %v2986 = vadd.f32 %v2697, %v2985
  %v2987 = vpop.f32.mrb[0].mxu0
  %v2988 = vpop.f32.mrb[0].mxu0
  %v2989 = vadd.f32 %v2700, %v2988
  %v2990 = vpop.f32.mrb[0].mxu0
  %2991 = vmatprep.mubr.bf16.mxu0 %v1684
  %2992 = vmatmul.mubr.bf16.gmra.mrb[0].mxu0 %v1683
  %v2993 = vpop.f32.mrb[0].mxu0
  %v2994 = vadd.f32 %v2705, %v2993
  %v2995 = vpop.f32.mrb[0].mxu0
  %v2996 = vpop.f32.mrb[0].mxu0
  %v2997 = vadd.f32 %v2708, %v2996
  %v2998 = vpop.f32.mrb[0].mxu0
  %2999 = vmatprep.mubr.bf16.mxu0 %v1693
  %3000 = vmatmul.mubr.bf16.gmra.mrb[0].mxu0 %v1692
  %v3001 = vpop.f32.mrb[0].mxu0
  %v3002 = vadd.f32 %v2713, %v3001
  %v3003 = vpop.f32.mrb[0].mxu0
  %v3004 = vpop.f32.mrb[0].mxu0
  %v3005 = vadd.f32 %v2716, %v3004
  %v3006 = vpop.f32.mrb[0].mxu0
  %3007 = vmatprep.mubr.bf16.mxu0 %v1702
  %3008 = vmatmul.mubr.bf16.gmra.mrb[0].mxu0 %v1701
  %v3009 = vpop.f32.mrb[0].mxu0
  %v3010 = vadd.f32 %v2721, %v3009
  %v3011 = vpop.f32.mrb[0].mxu0
  %v3012 = vpop.f32.mrb[0].mxu0
  %v3013 = vadd.f32 %v2724, %v3012
  %v3014 = vpop.f32.mrb[0].mxu0
  %3015 = vmatprep.mubr.bf16.mxu0 %v1711
  %3016 = vmatmul.mubr.bf16.gmra.mrb[0].mxu0 %v1710
  %v3017 = vpop.f32.mrb[0].mxu0
  %v3018 = vadd.f32 %v2729, %v3017
  %v3019 = vpop.f32.mrb[0].mxu0
  %v3020 = vpop.f32.mrb[0].mxu0
  %v3021 = vadd.f32 %v2732, %v3020
  %v3022 = vpop.f32.mrb[0].mxu0
  %3023 = vmatprep.mubr.bf16.mxu0 %v1720
  %3024 = vmatmul.mubr.bf16.gmra.mrb[0].mxu0 %v1719
  %v3025 = vpop.f32.mrb[0].mxu0
  %v3026 = vadd.f32 %v2737, %v3025
  %v3027 = vpop.f32.mrb[0].mxu0
  %v3028 = vpop.f32.mrb[0].mxu0
  %v3029 = vadd.f32 %v2740, %v3028
  %v3030 = vpop.f32.mrb[0].mxu0
  %3031 = vmatprep.mubr.bf16.mxu0 %v1729
  %3032 = vmatmul.mubr.bf16.gmra.mrb[0].mxu0 %v1728
  %v3033 = vpop.f32.mrb[0].mxu0
  %v3034 = vadd.f32 %v2745, %v3033
  %v3035 = vpop.f32.mrb[0].mxu0
  %v3036 = vpop.f32.mrb[0].mxu0
  %v3037 = vadd.f32 %v2748, %v3036
  %v3038 = vpop.f32.mrb[0].mxu0
  %3039 = vmatprep.mubr.bf16.mxu0 %v1738
  %3040 = vmatmul.mubr.bf16.gmra.mrb[0].mxu0 %v1737
  %v3041 = vpop.f32.mrb[0].mxu0
  %v3042 = vadd.f32 %v2753, %v3041
  %v3043 = vpop.f32.mrb[0].mxu0
  %v3044 = vpop.f32.mrb[0].mxu0
  %v3045 = vadd.f32 %v2756, %v3044
  %v3046 = vpop.f32.mrb[0].mxu0
  %3047 = vmatprep.mubr.bf16.mxu0 %v1747
  %3048 = vmatmul.mubr.bf16.gmra.mrb[0].mxu0 %v1746
  %v3049 = vpop.f32.mrb[0].mxu0
  %v3050 = vadd.f32 %v2761, %v3049
  %v3051 = vpop.f32.mrb[0].mxu0
  %v3052 = vpop.f32.mrb[0].mxu0
  %v3053 = vadd.f32 %v2764, %v3052
  %v3054 = vpop.f32.mrb[0].mxu0
  %3055 = vmatprep.mubr.bf16.mxu0 %v1756
  %3056 = vmatmul.mubr.bf16.gmra.mrb[0].mxu0 %v1755
  %v3057 = vpop.f32.mrb[0].mxu0
  %v3058 = vadd.f32 %v2769, %v3057
  %v3059 = vpop.f32.mrb[0].mxu0
  %v3060 = vpop.f32.mrb[0].mxu0
  %v3061 = vadd.f32 %v2772, %v3060
  %v3062 = vpop.f32.mrb[0].mxu0
  %3063 = vmatprep.mubr.bf16.mxu0 %v1765
  %3064 = vmatmul.mubr.bf16.gmra.mrb[0].mxu0 %v1764
  %v3065 = vpop.f32.mrb[0].mxu0
  %v3066 = vadd.f32 %v2777, %v3065
  %v3067 = vpop.f32.mrb[0].mxu0
  %v3068 = vpop.f32.mrb[0].mxu0
  %v3069 = vadd.f32 %v2780, %v3068
  %v3070 = vpop.f32.mrb[0].mxu0
  %3071 = vmatprep.mubr.bf16.mxu0 %v1774
  %3072 = vmatmul.mubr.bf16.gmra.mrb[0].mxu0 %v1773
  %v3073 = vpop.f32.mrb[0].mxu0
  %v3074 = vadd.f32 %v2785, %v3073
  %v3075 = vpop.f32.mrb[0].mxu0
  %v3076 = vpop.f32.mrb[0].mxu0
  %v3077 = vadd.f32 %v2788, %v3076
  %v3078 = vpop.f32.mrb[0].mxu0
  %3079 = vmatprep.mubr.bf16.mxu0 %v1783
  %3080 = vmatmul.mubr.bf16.gmra.mrb[0].mxu0 %v1782
  %v3081 = vpop.f32.mrb[0].mxu0
  %v3082 = vadd.f32 %v2793, %v3081
  %v3083 = vpop.f32.mrb[0].mxu0
  %v3084 = vpop.f32.mrb[0].mxu0
  %v3085 = vadd.f32 %v2796, %v3084
  %v3086 = vpop.f32.mrb[0].mxu0
  %3087 = vmatprep.mubr.bf16.mxu0 %v1792
  %3088 = vmatmul.mubr.bf16.gmra.mrb[0].mxu0 %v1791
  %v3089 = vpop.f32.mrb[0].mxu0
  %v3090 = vadd.f32 %v2801, %v3089
  %v3091 = vpop.f32.mrb[0].mxu0
  %v3092 = vpop.f32.mrb[0].mxu0
  %v3093 = vadd.f32 %v2804, %v3092
  %v3094 = vpop.f32.mrb[0].mxu0
  %3095 = vdwg.mxu0
  %3096 = vmatprep.subr.bf16.mxu0 0
  %3097 = vmatpush1.bf16.msra.mxu0 %v2406
  %3098 = vmatprep.subr.bf16.mxu0 0
  %3099 = vmatpush1.bf16.msra.mxu0 %v2407
  %3100 = vmatprep.subr.bf16.mxu0 0
  %3101 = vmatpush1.bf16.msra.mxu0 %v2408
  %3102 = vmatprep.subr.bf16.mxu0 0
  %3103 = vmatpush1.bf16.msra.mxu0 %v2409
  %3104 = vmatprep.subr.bf16.mxu0 0
  %3105 = vmatpush1.bf16.msra.mxu0 %v2410
  %3106 = vmatprep.subr.bf16.mxu0 0
  %3107 = vmatpush1.bf16.msra.mxu0 %v2411
  %3108 = vmatprep.subr.bf16.mxu0 0
  %3109 = vmatpush1.bf16.msra.mxu0 %v2412
  %3110 = vmatprep.subr.bf16.mxu0 0
  %3111 = vmatpush1.bf16.msra.mxu0 %v2413
  %3112 = vmatprep.subr.bf16.mxu0 0
  %3113 = vmatpush1.bf16.msra.mxu0 %v2414
  %3114 = vmatprep.subr.bf16.mxu0 0
  %3115 = vmatpush1.bf16.msra.mxu0 %v2415
  %3116 = vmatprep.subr.bf16.mxu0 0
  %3117 = vmatpush1.bf16.msra.mxu0 %v2416
  %3118 = vmatprep.subr.bf16.mxu0 0
  %3119 = vmatpush1.bf16.msra.mxu0 %v2417
  %3120 = vmatprep.subr.bf16.mxu0 0
  %3121 = vmatpush1.bf16.msra.mxu0 %v2418
  %3122 = vmatprep.subr.bf16.mxu0 0
  %3123 = vmatpush1.bf16.msra.mxu0 %v2419
  %3124 = vmatprep.subr.bf16.mxu0 0
  %3125 = vmatpush1.bf16.msra.mxu0 %v2420
  %3126 = vmatprep.subr.bf16.mxu0 0
  %3127 = vmatpush1.bf16.msra.mxu0 %v2421
  %3128 = vmatprep.mubr.bf16.mxu0 %v1515
  %3129 = vmatmul.mubr.bf16.gmra.mrb[0].mxu0 %v1514
  %v3130 = vpop.f32.mrb[0].mxu0
  %v3131 = vadd.f32 %v2842, %v3130
  %v3132 = vpop.f32.mrb[0].mxu0
  %v3133 = vpop.f32.mrb[0].mxu0
  %v3134 = vadd.f32 %v2845, %v3133
  %v3135 = vpop.f32.mrb[0].mxu0
  %3136 = vmatprep.mubr.bf16.mxu0 %v1524
  %3137 = vmatmul.mubr.bf16.gmra.mrb[0].mxu0 %v1523
  %v3138 = vpop.f32.mrb[0].mxu0
  %v3139 = vadd.f32 %v2850, %v3138
  %v3140 = vpop.f32.mrb[0].mxu0
  %v3141 = vpop.f32.mrb[0].mxu0
  %v3142 = vadd.f32 %v2853, %v3141
  %v3143 = vpop.f32.mrb[0].mxu0
  %3144 = vmatprep.mubr.bf16.mxu0 %v1533
  %3145 = vmatmul.mubr.bf16.gmra.mrb[0].mxu0 %v1532
  %v3146 = vpop.f32.mrb[0].mxu0
  %v3147 = vadd.f32 %v2858, %v3146
  %v3148 = vpop.f32.mrb[0].mxu0
  %v3149 = vpop.f32.mrb[0].mxu0
  %v3150 = vadd.f32 %v2861, %v3149
  %v3151 = vpop.f32.mrb[0].mxu0
  %3152 = vmatprep.mubr.bf16.mxu0 %v1542
  %3153 = vmatmul.mubr.bf16.gmra.mrb[0].mxu0 %v1541
  %v3154 = vpop.f32.mrb[0].mxu0
  %v3155 = vadd.f32 %v2866, %v3154
  %v3156 = vpop.f32.mrb[0].mxu0
  %v3157 = vpop.f32.mrb[0].mxu0
  %v3158 = vadd.f32 %v2869, %v3157
  %v3159 = vpop.f32.mrb[0].mxu0
  %3160 = vmatprep.mubr.bf16.mxu0 %v1551
  %3161 = vmatmul.mubr.bf16.gmra.mrb[0].mxu0 %v1550
  %v3162 = vpop.f32.mrb[0].mxu0
  %v3163 = vadd.f32 %v2874, %v3162
  %v3164 = vpop.f32.mrb[0].mxu0
  %v3165 = vpop.f32.mrb[0].mxu0
  %v3166 = vadd.f32 %v2877, %v3165
  %v3167 = vpop.f32.mrb[0].mxu0
  %3168 = vmatprep.mubr.bf16.mxu0 %v1560
  %3169 = vmatmul.mubr.bf16.gmra.mrb[0].mxu0 %v1559
  %v3170 = vpop.f32.mrb[0].mxu0
  %v3171 = vadd.f32 %v2882, %v3170
  %v3172 = vpop.f32.mrb[0].mxu0
  %v3173 = vpop.f32.mrb[0].mxu0
  %v3174 = vadd.f32 %v2885, %v3173
  %v3175 = vpop.f32.mrb[0].mxu0
  %3176 = vmatprep.mubr.bf16.mxu0 %v1569
  %3177 = vmatmul.mubr.bf16.gmra.mrb[0].mxu0 %v1568
  %v3178 = vpop.f32.mrb[0].mxu0
  %v3179 = vadd.f32 %v2890, %v3178
  %v3180 = vpop.f32.mrb[0].mxu0
  %v3181 = vpop.f32.mrb[0].mxu0
  %v3182 = vadd.f32 %v2893, %v3181
  %v3183 = vpop.f32.mrb[0].mxu0
  %3184 = vmatprep.mubr.bf16.mxu0 %v1578
  %3185 = vmatmul.mubr.bf16.gmra.mrb[0].mxu0 %v1577
  %v3186 = vpop.f32.mrb[0].mxu0
  %v3187 = vadd.f32 %v2898, %v3186
  %v3188 = vpop.f32.mrb[0].mxu0
  %v3189 = vpop.f32.mrb[0].mxu0
  %v3190 = vadd.f32 %v2901, %v3189
  %v3191 = vpop.f32.mrb[0].mxu0
  %3192 = vmatprep.mubr.bf16.mxu0 %v1587
  %3193 = vmatmul.mubr.bf16.gmra.mrb[0].mxu0 %v1586
  %v3194 = vpop.f32.mrb[0].mxu0
  %v3195 = vadd.f32 %v2906, %v3194
  %v3196 = vpop.f32.mrb[0].mxu0
  %v3197 = vpop.f32.mrb[0].mxu0
  %v3198 = vadd.f32 %v2909, %v3197
  %v3199 = vpop.f32.mrb[0].mxu0
  %3200 = vmatprep.mubr.bf16.mxu0 %v1596
  %3201 = vmatmul.mubr.bf16.gmra.mrb[0].mxu0 %v1595
  %v3202 = vpop.f32.mrb[0].mxu0
  %v3203 = vadd.f32 %v2914, %v3202
  %v3204 = vpop.f32.mrb[0].mxu0
  %v3205 = vpop.f32.mrb[0].mxu0
  %v3206 = vadd.f32 %v2917, %v3205
  %v3207 = vpop.f32.mrb[0].mxu0
  %3208 = vmatprep.mubr.bf16.mxu0 %v1605
  %3209 = vmatmul.mubr.bf16.gmra.mrb[0].mxu0 %v1604
  %v3210 = vpop.f32.mrb[0].mxu0
  %v3211 = vadd.f32 %v2922, %v3210
  %v3212 = vpop.f32.mrb[0].mxu0
  %v3213 = vpop.f32.mrb[0].mxu0
  %v3214 = vadd.f32 %v2925, %v3213
  %v3215 = vpop.f32.mrb[0].mxu0
  %3216 = vmatprep.mubr.bf16.mxu0 %v1614
  %3217 = vmatmul.mubr.bf16.gmra.mrb[0].mxu0 %v1613
  %v3218 = vpop.f32.mrb[0].mxu0
  %v3219 = vadd.f32 %v2930, %v3218
  %v3220 = vpop.f32.mrb[0].mxu0
  %v3221 = vpop.f32.mrb[0].mxu0
  %v3222 = vadd.f32 %v2933, %v3221
  %v3223 = vpop.f32.mrb[0].mxu0
  %3224 = vmatprep.mubr.bf16.mxu0 %v1623
  %3225 = vmatmul.mubr.bf16.gmra.mrb[0].mxu0 %v1622
  %v3226 = vpop.f32.mrb[0].mxu0
  %v3227 = vadd.f32 %v2938, %v3226
  %v3228 = vpop.f32.mrb[0].mxu0
  %v3229 = vpop.f32.mrb[0].mxu0
  %v3230 = vadd.f32 %v2941, %v3229
  %v3231 = vpop.f32.mrb[0].mxu0
  %3232 = vmatprep.mubr.bf16.mxu0 %v1632
  %3233 = vmatmul.mubr.bf16.gmra.mrb[0].mxu0 %v1631
  %v3234 = vpop.f32.mrb[0].mxu0
  %v3235 = vadd.f32 %v2946, %v3234
  %v3236 = vpop.f32.mrb[0].mxu0
  %v3237 = vpop.f32.mrb[0].mxu0
  %v3238 = vadd.f32 %v2949, %v3237
  %v3239 = vpop.f32.mrb[0].mxu0
  %3240 = vmatprep.mubr.bf16.mxu0 %v1641
  %3241 = vmatmul.mubr.bf16.gmra.mrb[0].mxu0 %v1640
  %v3242 = vpop.f32.mrb[0].mxu0
  %v3243 = vadd.f32 %v2954, %v3242
  %v3244 = vpop.f32.mrb[0].mxu0
  %v3245 = vpop.f32.mrb[0].mxu0
  %v3246 = vadd.f32 %v2957, %v3245
  %v3247 = vpop.f32.mrb[0].mxu0
  %3248 = vmatprep.mubr.bf16.mxu0 %v1650
  %3249 = vmatmul.mubr.bf16.gmra.mrb[0].mxu0 %v1649
  %v3250 = vpop.f32.mrb[0].mxu0
  %v3251 = vadd.f32 %v2962, %v3250
  %v3252 = vpop.f32.mrb[0].mxu0
  %v3253 = vpop.f32.mrb[0].mxu0
  %v3254 = vadd.f32 %v2965, %v3253
  %v3255 = vpop.f32.mrb[0].mxu0
  %3256 = vmatprep.mubr.bf16.mxu0 %v1659
  %3257 = vmatmul.mubr.bf16.gmra.mrb[0].mxu0 %v1658
  %v3258 = vpop.f32.mrb[0].mxu0
  %v3259 = vadd.f32 %v2970, %v3258
  %v3260 = vpop.f32.mrb[0].mxu0
  %v3261 = vpop.f32.mrb[0].mxu0
  %v3262 = vadd.f32 %v2973, %v3261
  %v3263 = vpop.f32.mrb[0].mxu0
  %3264 = vmatprep.mubr.bf16.mxu0 %v1668
  %3265 = vmatmul.mubr.bf16.gmra.mrb[0].mxu0 %v1667
  %v3266 = vpop.f32.mrb[0].mxu0
  %v3267 = vadd.f32 %v2978, %v3266
  %v3268 = vpop.f32.mrb[0].mxu0
  %v3269 = vpop.f32.mrb[0].mxu0
  %v3270 = vadd.f32 %v2981, %v3269
  %v3271 = vpop.f32.mrb[0].mxu0
  %3272 = vmatprep.mubr.bf16.mxu0 %v1677
  %3273 = vmatmul.mubr.bf16.gmra.mrb[0].mxu0 %v1676
  %v3274 = vpop.f32.mrb[0].mxu0
  %v3275 = vadd.f32 %v2986, %v3274
  %v3276 = vpop.f32.mrb[0].mxu0
  %v3277 = vpop.f32.mrb[0].mxu0
  %v3278 = vadd.f32 %v2989, %v3277
  %v3279 = vpop.f32.mrb[0].mxu0
  %3280 = vmatprep.mubr.bf16.mxu0 %v1686
  %3281 = vmatmul.mubr.bf16.gmra.mrb[0].mxu0 %v1685
  %v3282 = vpop.f32.mrb[0].mxu0
  %v3283 = vadd.f32 %v2994, %v3282
  %v3284 = vpop.f32.mrb[0].mxu0
  %v3285 = vpop.f32.mrb[0].mxu0
  %v3286 = vadd.f32 %v2997, %v3285
  %v3287 = vpop.f32.mrb[0].mxu0
  %3288 = vmatprep.mubr.bf16.mxu0 %v1695
  %3289 = vmatmul.mubr.bf16.gmra.mrb[0].mxu0 %v1694
  %v3290 = vpop.f32.mrb[0].mxu0
  %v3291 = vadd.f32 %v3002, %v3290
  %v3292 = vpop.f32.mrb[0].mxu0
  %v3293 = vpop.f32.mrb[0].mxu0
  %v3294 = vadd.f32 %v3005, %v3293
  %v3295 = vpop.f32.mrb[0].mxu0
  %3296 = vmatprep.mubr.bf16.mxu0 %v1704
  %3297 = vmatmul.mubr.bf16.gmra.mrb[0].mxu0 %v1703
  %v3298 = vpop.f32.mrb[0].mxu0
  %v3299 = vadd.f32 %v3010, %v3298
  %v3300 = vpop.f32.mrb[0].mxu0
  %v3301 = vpop.f32.mrb[0].mxu0
  %v3302 = vadd.f32 %v3013, %v3301
  %v3303 = vpop.f32.mrb[0].mxu0
  %3304 = vmatprep.mubr.bf16.mxu0 %v1713
  %3305 = vmatmul.mubr.bf16.gmra.mrb[0].mxu0 %v1712
  %v3306 = vpop.f32.mrb[0].mxu0
  %v3307 = vadd.f32 %v3018, %v3306
  %v3308 = vpop.f32.mrb[0].mxu0
  %v3309 = vpop.f32.mrb[0].mxu0
  %v3310 = vadd.f32 %v3021, %v3309
  %v3311 = vpop.f32.mrb[0].mxu0
  %3312 = vmatprep.mubr.bf16.mxu0 %v1722
  %3313 = vmatmul.mubr.bf16.gmra.mrb[0].mxu0 %v1721
  %v3314 = vpop.f32.mrb[0].mxu0
  %v3315 = vadd.f32 %v3026, %v3314
  %v3316 = vpop.f32.mrb[0].mxu0
  %v3317 = vpop.f32.mrb[0].mxu0
  %v3318 = vadd.f32 %v3029, %v3317
  %v3319 = vpop.f32.mrb[0].mxu0
  %3320 = vmatprep.mubr.bf16.mxu0 %v1731
  %3321 = vmatmul.mubr.bf16.gmra.mrb[0].mxu0 %v1730
  %v3322 = vpop.f32.mrb[0].mxu0
  %v3323 = vadd.f32 %v3034, %v3322
  %v3324 = vpop.f32.mrb[0].mxu0
  %v3325 = vpop.f32.mrb[0].mxu0
  %v3326 = vadd.f32 %v3037, %v3325
  %v3327 = vpop.f32.mrb[0].mxu0
  %3328 = vmatprep.mubr.bf16.mxu0 %v1740
  %3329 = vmatmul.mubr.bf16.gmra.mrb[0].mxu0 %v1739
  %v3330 = vpop.f32.mrb[0].mxu0
  %v3331 = vadd.f32 %v3042, %v3330
  %v3332 = vpop.f32.mrb[0].mxu0
  %v3333 = vpop.f32.mrb[0].mxu0
  %v3334 = vadd.f32 %v3045, %v3333
  %v3335 = vpop.f32.mrb[0].mxu0
  %3336 = vmatprep.mubr.bf16.mxu0 %v1749
  %3337 = vmatmul.mubr.bf16.gmra.mrb[0].mxu0 %v1748
  %v3338 = vpop.f32.mrb[0].mxu0
  %v3339 = vadd.f32 %v3050, %v3338
  %v3340 = vpop.f32.mrb[0].mxu0
  %v3341 = vpop.f32.mrb[0].mxu0
  %v3342 = vadd.f32 %v3053, %v3341
  %v3343 = vpop.f32.mrb[0].mxu0
  %3344 = vmatprep.mubr.bf16.mxu0 %v1758
  %3345 = vmatmul.mubr.bf16.gmra.mrb[0].mxu0 %v1757
  %v3346 = vpop.f32.mrb[0].mxu0
  %v3347 = vadd.f32 %v3058, %v3346
  %v3348 = vpop.f32.mrb[0].mxu0
  %v3349 = vpop.f32.mrb[0].mxu0
  %v3350 = vadd.f32 %v3061, %v3349
  %v3351 = vpop.f32.mrb[0].mxu0
  %3352 = vmatprep.mubr.bf16.mxu0 %v1767
  %3353 = vmatmul.mubr.bf16.gmra.mrb[0].mxu0 %v1766
  %v3354 = vpop.f32.mrb[0].mxu0
  %v3355 = vadd.f32 %v3066, %v3354
  %v3356 = vpop.f32.mrb[0].mxu0
  %v3357 = vpop.f32.mrb[0].mxu0
  %v3358 = vadd.f32 %v3069, %v3357
  %v3359 = vpop.f32.mrb[0].mxu0
  %3360 = vmatprep.mubr.bf16.mxu0 %v1776
  %3361 = vmatmul.mubr.bf16.gmra.mrb[0].mxu0 %v1775
  %v3362 = vpop.f32.mrb[0].mxu0
  %v3363 = vadd.f32 %v3074, %v3362
  %v3364 = vpop.f32.mrb[0].mxu0
  %v3365 = vpop.f32.mrb[0].mxu0
  %v3366 = vadd.f32 %v3077, %v3365
  %v3367 = vpop.f32.mrb[0].mxu0
  %3368 = vmatprep.mubr.bf16.mxu0 %v1785
  %3369 = vmatmul.mubr.bf16.gmra.mrb[0].mxu0 %v1784
  %v3370 = vpop.f32.mrb[0].mxu0
  %v3371 = vadd.f32 %v3082, %v3370
  %v3372 = vpop.f32.mrb[0].mxu0
  %v3373 = vpop.f32.mrb[0].mxu0
  %v3374 = vadd.f32 %v3085, %v3373
  %v3375 = vpop.f32.mrb[0].mxu0
  %3376 = vmatprep.mubr.bf16.mxu0 %v1794
  %3377 = vmatmul.mubr.bf16.gmra.mrb[0].mxu0 %v1793
  %v3378 = vpop.f32.mrb[0].mxu0
  %v3379 = vadd.f32 %v3090, %v3378
  %v3380 = vpop.f32.mrb[0].mxu0
  %v3381 = vpop.f32.mrb[0].mxu0
  %v3382 = vadd.f32 %v3093, %v3381
  %v3383 = vpop.f32.mrb[0].mxu0
  %3384 = vdwg.mxu0
  %3385 = vmatprep.subr.bf16.mxu0 0
  %3386 = vmatpush1.bf16.msra.mxu0 %v2422
  %3387 = vmatprep.subr.bf16.mxu0 0
  %3388 = vmatpush1.bf16.msra.mxu0 %v2423
  %3389 = vmatprep.subr.bf16.mxu0 0
  %3390 = vmatpush1.bf16.msra.mxu0 %v2424
  %3391 = vmatprep.subr.bf16.mxu0 0
  %3392 = vmatpush1.bf16.msra.mxu0 %v2425
  %3393 = vmatprep.subr.bf16.mxu0 0
  %3394 = vmatpush1.bf16.msra.mxu0 %v2426
  %3395 = vmatprep.subr.bf16.mxu0 0
  %3396 = vmatpush1.bf16.msra.mxu0 %v2427
  %3397 = vmatprep.subr.bf16.mxu0 0
  %3398 = vmatpush1.bf16.msra.mxu0 %v2428
  %3399 = vmatprep.subr.bf16.mxu0 0
  %3400 = vmatpush1.bf16.msra.mxu0 %v2429
  %3401 = vmatprep.subr.bf16.mxu0 0
  %3402 = vmatpush1.bf16.msra.mxu0 %v2430
  %3403 = vmatprep.subr.bf16.mxu0 0
  %3404 = vmatpush1.bf16.msra.mxu0 %v2431
  %3405 = vmatprep.subr.bf16.mxu0 0
  %3406 = vmatpush1.bf16.msra.mxu0 %v2432
  %3407 = vmatprep.subr.bf16.mxu0 0
  %3408 = vmatpush1.bf16.msra.mxu0 %v2433
  %3409 = vmatprep.subr.bf16.mxu0 0
  %3410 = vmatpush1.bf16.msra.mxu0 %v2434
  %3411 = vmatprep.subr.bf16.mxu0 0
  %3412 = vmatpush1.bf16.msra.mxu0 %v2435
  %3413 = vmatprep.subr.bf16.mxu0 0
  %3414 = vmatpush1.bf16.msra.mxu0 %v2436
  %3415 = vmatprep.subr.bf16.mxu0 0
  %3416 = vmatpush1.bf16.msra.mxu0 %v2437
  %3417 = vmatprep.mubr.bf16.mxu0 %v1517
  %3418 = vmatmul.mubr.bf16.gmra.mrb[0].mxu0 %v1516
  %v3419 = vpop.f32.mrb[0].mxu0
  %v3420 = vadd.f32 %v3131, %v3419
  %v3421 = vpop.f32.mrb[0].mxu0
  %v3422 = vpop.f32.mrb[0].mxu0
  %v3423 = vadd.f32 %v3134, %v3422
  %v3424 = vpop.f32.mrb[0].mxu0
  %3425 = vmatprep.mubr.bf16.mxu0 %v1526
  %3426 = vmatmul.mubr.bf16.gmra.mrb[0].mxu0 %v1525
  %v3427 = vpop.f32.mrb[0].mxu0
  %v3428 = vadd.f32 %v3139, %v3427
  %v3429 = vpop.f32.mrb[0].mxu0
  %v3430 = vpop.f32.mrb[0].mxu0
  %v3431 = vadd.f32 %v3142, %v3430
  %v3432 = vpop.f32.mrb[0].mxu0
  %3433 = vmatprep.mubr.bf16.mxu0 %v1535
  %3434 = vmatmul.mubr.bf16.gmra.mrb[0].mxu0 %v1534
  %v3435 = vpop.f32.mrb[0].mxu0
  %v3436 = vadd.f32 %v3147, %v3435
  %v3437 = vpop.f32.mrb[0].mxu0
  %v3438 = vpop.f32.mrb[0].mxu0
  %v3439 = vadd.f32 %v3150, %v3438
  %v3440 = vpop.f32.mrb[0].mxu0
  %3441 = vmatprep.mubr.bf16.mxu0 %v1544
  %3442 = vmatmul.mubr.bf16.gmra.mrb[0].mxu0 %v1543
  %v3443 = vpop.f32.mrb[0].mxu0
  %v3444 = vadd.f32 %v3155, %v3443
  %v3445 = vpop.f32.mrb[0].mxu0
  %v3446 = vpop.f32.mrb[0].mxu0
  %v3447 = vadd.f32 %v3158, %v3446
  %v3448 = vpop.f32.mrb[0].mxu0
  %3449 = vmatprep.mubr.bf16.mxu0 %v1553
  %3450 = vmatmul.mubr.bf16.gmra.mrb[0].mxu0 %v1552
  %v3451 = vpop.f32.mrb[0].mxu0
  %v3452 = vadd.f32 %v3163, %v3451
  %v3453 = vpop.f32.mrb[0].mxu0
  %v3454 = vpop.f32.mrb[0].mxu0
  %v3455 = vadd.f32 %v3166, %v3454
  %v3456 = vpop.f32.mrb[0].mxu0
  %3457 = vmatprep.mubr.bf16.mxu0 %v1562
  %3458 = vmatmul.mubr.bf16.gmra.mrb[0].mxu0 %v1561
  %v3459 = vpop.f32.mrb[0].mxu0
  %v3460 = vadd.f32 %v3171, %v3459
  %v3461 = vpop.f32.mrb[0].mxu0
  %v3462 = vpop.f32.mrb[0].mxu0
  %v3463 = vadd.f32 %v3174, %v3462
  %v3464 = vpop.f32.mrb[0].mxu0
  %3465 = vmatprep.mubr.bf16.mxu0 %v1571
  %3466 = vmatmul.mubr.bf16.gmra.mrb[0].mxu0 %v1570
  %v3467 = vpop.f32.mrb[0].mxu0
  %v3468 = vadd.f32 %v3179, %v3467
  %v3469 = vpop.f32.mrb[0].mxu0
  %v3470 = vpop.f32.mrb[0].mxu0
  %v3471 = vadd.f32 %v3182, %v3470
  %v3472 = vpop.f32.mrb[0].mxu0
  %3473 = vmatprep.mubr.bf16.mxu0 %v1580
  %3474 = vmatmul.mubr.bf16.gmra.mrb[0].mxu0 %v1579
  %v3475 = vpop.f32.mrb[0].mxu0
  %v3476 = vadd.f32 %v3187, %v3475
  %v3477 = vpop.f32.mrb[0].mxu0
  %v3478 = vpop.f32.mrb[0].mxu0
  %v3479 = vadd.f32 %v3190, %v3478
  %v3480 = vpop.f32.mrb[0].mxu0
  %3481 = vmatprep.mubr.bf16.mxu0 %v1589
  %3482 = vmatmul.mubr.bf16.gmra.mrb[0].mxu0 %v1588
  %v3483 = vpop.f32.mrb[0].mxu0
  %v3484 = vadd.f32 %v3195, %v3483
  %v3485 = vpop.f32.mrb[0].mxu0
  %v3486 = vpop.f32.mrb[0].mxu0
  %v3487 = vadd.f32 %v3198, %v3486
  %v3488 = vpop.f32.mrb[0].mxu0
  %3489 = vmatprep.mubr.bf16.mxu0 %v1598
  %3490 = vmatmul.mubr.bf16.gmra.mrb[0].mxu0 %v1597
  %v3491 = vpop.f32.mrb[0].mxu0
  %v3492 = vadd.f32 %v3203, %v3491
  %v3493 = vpop.f32.mrb[0].mxu0
  %v3494 = vpop.f32.mrb[0].mxu0
  %v3495 = vadd.f32 %v3206, %v3494
  %v3496 = vpop.f32.mrb[0].mxu0
  %3497 = vmatprep.mubr.bf16.mxu0 %v1607
  %3498 = vmatmul.mubr.bf16.gmra.mrb[0].mxu0 %v1606
  %v3499 = vpop.f32.mrb[0].mxu0
  %v3500 = vadd.f32 %v3211, %v3499
  %v3501 = vpop.f32.mrb[0].mxu0
  %v3502 = vpop.f32.mrb[0].mxu0
  %v3503 = vadd.f32 %v3214, %v3502
  %v3504 = vpop.f32.mrb[0].mxu0
  %3505 = vmatprep.mubr.bf16.mxu0 %v1616
  %3506 = vmatmul.mubr.bf16.gmra.mrb[0].mxu0 %v1615
  %v3507 = vpop.f32.mrb[0].mxu0
  %v3508 = vadd.f32 %v3219, %v3507
  %v3509 = vpop.f32.mrb[0].mxu0
  %v3510 = vpop.f32.mrb[0].mxu0
  %v3511 = vadd.f32 %v3222, %v3510
  %v3512 = vpop.f32.mrb[0].mxu0
  %3513 = vmatprep.mubr.bf16.mxu0 %v1625
  %3514 = vmatmul.mubr.bf16.gmra.mrb[0].mxu0 %v1624
  %v3515 = vpop.f32.mrb[0].mxu0
  %v3516 = vadd.f32 %v3227, %v3515
  %v3517 = vpop.f32.mrb[0].mxu0
  %v3518 = vpop.f32.mrb[0].mxu0
  %v3519 = vadd.f32 %v3230, %v3518
  %v3520 = vpop.f32.mrb[0].mxu0
  %3521 = vmatprep.mubr.bf16.mxu0 %v1634
  %3522 = vmatmul.mubr.bf16.gmra.mrb[0].mxu0 %v1633
  %v3523 = vpop.f32.mrb[0].mxu0
  %v3524 = vadd.f32 %v3235, %v3523
  %v3525 = vpop.f32.mrb[0].mxu0
  %v3526 = vpop.f32.mrb[0].mxu0
  %v3527 = vadd.f32 %v3238, %v3526
  %v3528 = vpop.f32.mrb[0].mxu0
  %3529 = vmatprep.mubr.bf16.mxu0 %v1643
  %3530 = vmatmul.mubr.bf16.gmra.mrb[0].mxu0 %v1642
  %v3531 = vpop.f32.mrb[0].mxu0
  %v3532 = vadd.f32 %v3243, %v3531
  %v3533 = vpop.f32.mrb[0].mxu0
  %v3534 = vpop.f32.mrb[0].mxu0
  %v3535 = vadd.f32 %v3246, %v3534
  %v3536 = vpop.f32.mrb[0].mxu0
  %3537 = vmatprep.mubr.bf16.mxu0 %v1652
  %3538 = vmatmul.mubr.bf16.gmra.mrb[0].mxu0 %v1651
  %v3539 = vpop.f32.mrb[0].mxu0
  %v3540 = vadd.f32 %v3251, %v3539
  %v3541 = vpop.f32.mrb[0].mxu0
  %v3542 = vpop.f32.mrb[0].mxu0
  %v3543 = vadd.f32 %v3254, %v3542
  %v3544 = vpop.f32.mrb[0].mxu0
  %3545 = vmatprep.mubr.bf16.mxu0 %v1661
  %3546 = vmatmul.mubr.bf16.gmra.mrb[0].mxu0 %v1660
  %v3547 = vpop.f32.mrb[0].mxu0
  %v3548 = vadd.f32 %v3259, %v3547
  %v3549 = vpop.f32.mrb[0].mxu0
  %v3550 = vpop.f32.mrb[0].mxu0
  %v3551 = vadd.f32 %v3262, %v3550
  %v3552 = vpop.f32.mrb[0].mxu0
  %3553 = vmatprep.mubr.bf16.mxu0 %v1670
  %3554 = vmatmul.mubr.bf16.gmra.mrb[0].mxu0 %v1669
  %v3555 = vpop.f32.mrb[0].mxu0
  %v3556 = vadd.f32 %v3267, %v3555
  %v3557 = vpop.f32.mrb[0].mxu0
  %v3558 = vpop.f32.mrb[0].mxu0
  %v3559 = vadd.f32 %v3270, %v3558
  %v3560 = vpop.f32.mrb[0].mxu0
  %3561 = vmatprep.mubr.bf16.mxu0 %v1679
  %3562 = vmatmul.mubr.bf16.gmra.mrb[0].mxu0 %v1678
  %v3563 = vpop.f32.mrb[0].mxu0
  %v3564 = vadd.f32 %v3275, %v3563
  %v3565 = vpop.f32.mrb[0].mxu0
  %v3566 = vpop.f32.mrb[0].mxu0
  %v3567 = vadd.f32 %v3278, %v3566
  %v3568 = vpop.f32.mrb[0].mxu0
  %3569 = vmatprep.mubr.bf16.mxu0 %v1688
  %3570 = vmatmul.mubr.bf16.gmra.mrb[0].mxu0 %v1687
  %v3571 = vpop.f32.mrb[0].mxu0
  %v3572 = vadd.f32 %v3283, %v3571
  %v3573 = vpop.f32.mrb[0].mxu0
  %v3574 = vpop.f32.mrb[0].mxu0
  %v3575 = vadd.f32 %v3286, %v3574
  %v3576 = vpop.f32.mrb[0].mxu0
  %3577 = vmatprep.mubr.bf16.mxu0 %v1697
  %3578 = vmatmul.mubr.bf16.gmra.mrb[0].mxu0 %v1696
  %v3579 = vpop.f32.mrb[0].mxu0
  %v3580 = vadd.f32 %v3291, %v3579
  %v3581 = vpop.f32.mrb[0].mxu0
  %v3582 = vpop.f32.mrb[0].mxu0
  %v3583 = vadd.f32 %v3294, %v3582
  %v3584 = vpop.f32.mrb[0].mxu0
  %3585 = vmatprep.mubr.bf16.mxu0 %v1706
  %3586 = vmatmul.mubr.bf16.gmra.mrb[0].mxu0 %v1705
  %v3587 = vpop.f32.mrb[0].mxu0
  %v3588 = vadd.f32 %v3299, %v3587
  %v3589 = vpop.f32.mrb[0].mxu0
  %v3590 = vpop.f32.mrb[0].mxu0
  %v3591 = vadd.f32 %v3302, %v3590
  %v3592 = vpop.f32.mrb[0].mxu0
  %3593 = vmatprep.mubr.bf16.mxu0 %v1715
  %3594 = vmatmul.mubr.bf16.gmra.mrb[0].mxu0 %v1714
  %v3595 = vpop.f32.mrb[0].mxu0
  %v3596 = vadd.f32 %v3307, %v3595
  %v3597 = vpop.f32.mrb[0].mxu0
  %v3598 = vpop.f32.mrb[0].mxu0
  %v3599 = vadd.f32 %v3310, %v3598
  %v3600 = vpop.f32.mrb[0].mxu0
  %3601 = vmatprep.mubr.bf16.mxu0 %v1724
  %3602 = vmatmul.mubr.bf16.gmra.mrb[0].mxu0 %v1723
  %v3603 = vpop.f32.mrb[0].mxu0
  %v3604 = vadd.f32 %v3315, %v3603
  %v3605 = vpop.f32.mrb[0].mxu0
  %v3606 = vpop.f32.mrb[0].mxu0
  %v3607 = vadd.f32 %v3318, %v3606
  %v3608 = vpop.f32.mrb[0].mxu0
  %3609 = vmatprep.mubr.bf16.mxu0 %v1733
  %3610 = vmatmul.mubr.bf16.gmra.mrb[0].mxu0 %v1732
  %v3611 = vpop.f32.mrb[0].mxu0
  %v3612 = vadd.f32 %v3323, %v3611
  %v3613 = vpop.f32.mrb[0].mxu0
  %v3614 = vpop.f32.mrb[0].mxu0
  %v3615 = vadd.f32 %v3326, %v3614
  %v3616 = vpop.f32.mrb[0].mxu0
  %3617 = vmatprep.mubr.bf16.mxu0 %v1742
  %3618 = vmatmul.mubr.bf16.gmra.mrb[0].mxu0 %v1741
  %v3619 = vpop.f32.mrb[0].mxu0
  %v3620 = vadd.f32 %v3331, %v3619
  %v3621 = vpop.f32.mrb[0].mxu0
  %v3622 = vpop.f32.mrb[0].mxu0
  %v3623 = vadd.f32 %v3334, %v3622
  %v3624 = vpop.f32.mrb[0].mxu0
  %3625 = vmatprep.mubr.bf16.mxu0 %v1751
  %3626 = vmatmul.mubr.bf16.gmra.mrb[0].mxu0 %v1750
  %v3627 = vpop.f32.mrb[0].mxu0
  %v3628 = vadd.f32 %v3339, %v3627
  %v3629 = vpop.f32.mrb[0].mxu0
  %v3630 = vpop.f32.mrb[0].mxu0
  %v3631 = vadd.f32 %v3342, %v3630
  %v3632 = vpop.f32.mrb[0].mxu0
  %3633 = vmatprep.mubr.bf16.mxu0 %v1760
  %3634 = vmatmul.mubr.bf16.gmra.mrb[0].mxu0 %v1759
  %v3635 = vpop.f32.mrb[0].mxu0
  %v3636 = vadd.f32 %v3347, %v3635
  %v3637 = vpop.f32.mrb[0].mxu0
  %v3638 = vpop.f32.mrb[0].mxu0
  %v3639 = vadd.f32 %v3350, %v3638
  %v3640 = vpop.f32.mrb[0].mxu0
  %3641 = vmatprep.mubr.bf16.mxu0 %v1769
  %3642 = vmatmul.mubr.bf16.gmra.mrb[0].mxu0 %v1768
  %v3643 = vpop.f32.mrb[0].mxu0
  %v3644 = vadd.f32 %v3355, %v3643
  %v3645 = vpop.f32.mrb[0].mxu0
  %v3646 = vpop.f32.mrb[0].mxu0
  %v3647 = vadd.f32 %v3358, %v3646
  %v3648 = vpop.f32.mrb[0].mxu0
  %3649 = vmatprep.mubr.bf16.mxu0 %v1778
  %3650 = vmatmul.mubr.bf16.gmra.mrb[0].mxu0 %v1777
  %v3651 = vpop.f32.mrb[0].mxu0
  %v3652 = vadd.f32 %v3363, %v3651
  %v3653 = vpop.f32.mrb[0].mxu0
  %v3654 = vpop.f32.mrb[0].mxu0
  %v3655 = vadd.f32 %v3366, %v3654
  %v3656 = vpop.f32.mrb[0].mxu0
  %3657 = vmatprep.mubr.bf16.mxu0 %v1787
  %3658 = vmatmul.mubr.bf16.gmra.mrb[0].mxu0 %v1786
  %v3659 = vpop.f32.mrb[0].mxu0
  %v3660 = vadd.f32 %v3371, %v3659
  %v3661 = vpop.f32.mrb[0].mxu0
  %v3662 = vpop.f32.mrb[0].mxu0
  %v3663 = vadd.f32 %v3374, %v3662
  %v3664 = vpop.f32.mrb[0].mxu0
  %3665 = vmatprep.mubr.bf16.mxu0 %v1796
  %3666 = vmatmul.mubr.bf16.gmra.mrb[0].mxu0 %v1795
  %v3667 = vpop.f32.mrb[0].mxu0
  %v3668 = vadd.f32 %v3379, %v3667
  %v3669 = vpop.f32.mrb[0].mxu0
  %v3670 = vpop.f32.mrb[0].mxu0
  %v3671 = vadd.f32 %v3382, %v3670
  %v3672 = vpop.f32.mrb[0].mxu0
  %3673 = vdwg.mxu0
  %3674 = vmatprep.subr.bf16.mxu0 0
  %3675 = vmatpush1.bf16.msra.mxu0 %v2438
  %3676 = vmatprep.subr.bf16.mxu0 0
  %3677 = vmatpush1.bf16.msra.mxu0 %v2439
  %3678 = vmatprep.subr.bf16.mxu0 0
  %3679 = vmatpush1.bf16.msra.mxu0 %v2440
  %3680 = vmatprep.subr.bf16.mxu0 0
  %3681 = vmatpush1.bf16.msra.mxu0 %v2441
  %3682 = vmatprep.subr.bf16.mxu0 0
  %3683 = vmatpush1.bf16.msra.mxu0 %v2442
  %3684 = vmatprep.subr.bf16.mxu0 0
  %3685 = vmatpush1.bf16.msra.mxu0 %v2443
  %3686 = vmatprep.subr.bf16.mxu0 0
  %3687 = vmatpush1.bf16.msra.mxu0 %v2444
  %3688 = vmatprep.subr.bf16.mxu0 0
  %3689 = vmatpush1.bf16.msra.mxu0 %v2445
  %3690 = vmatprep.subr.bf16.mxu0 0
  %3691 = vmatpush1.bf16.msra.mxu0 0
  %3692 = vmatprep.subr.bf16.mxu0 0
  %3693 = vmatpush1.bf16.msra.mxu0 0
  %3694 = vmatprep.subr.bf16.mxu0 0
  %3695 = vmatpush1.bf16.msra.mxu0 0
  %3696 = vmatprep.subr.bf16.mxu0 0
  %3697 = vmatpush1.bf16.msra.mxu0 0
  %3698 = vmatprep.subr.bf16.mxu0 0
  %3699 = vmatpush1.bf16.msra.mxu0 0
  %3700 = vmatprep.subr.bf16.mxu0 0
  %3701 = vmatpush1.bf16.msra.mxu0 0
  %3702 = vmatprep.subr.bf16.mxu0 0
  %3703 = vmatpush1.bf16.msra.mxu0 0
  %3704 = vmatprep.subr.bf16.mxu0 0
  %3705 = vmatpush1.bf16.msra.mxu0 0
  %3706 = vmatprep.mubr.bf16.mxu0 0
  %3707 = vmatmul.mubr.bf16.gmra.mrb[0].mxu0 %v1518
  %v3708 = vpop.f32.mrb[0].mxu0
  %v3709 = vadd.f32 %v3420, %v3708
  %v3710 = vpop.f32.mrb[0].mxu0
  %v3711 = vpop.f32.mrb[0].mxu0
  %v3712 = vadd.f32 %v3423, %v3711
  %v3713 = vpop.f32.mrb[0].mxu0
  %3714 = vmatprep.mubr.bf16.mxu0 0
  %3715 = vmatmul.mubr.bf16.gmra.mrb[0].mxu0 %v1527
  %v3716 = vpop.f32.mrb[0].mxu0
  %v3717 = vadd.f32 %v3428, %v3716
  %v3718 = vpop.f32.mrb[0].mxu0
  %v3719 = vpop.f32.mrb[0].mxu0
  %v3720 = vadd.f32 %v3431, %v3719
  %v3721 = vpop.f32.mrb[0].mxu0
  %3722 = vmatprep.mubr.bf16.mxu0 0
  %3723 = vmatmul.mubr.bf16.gmra.mrb[0].mxu0 %v1536
  %v3724 = vpop.f32.mrb[0].mxu0
  %v3725 = vadd.f32 %v3436, %v3724
  %v3726 = vpop.f32.mrb[0].mxu0
  %v3727 = vpop.f32.mrb[0].mxu0
  %v3728 = vadd.f32 %v3439, %v3727
  %v3729 = vpop.f32.mrb[0].mxu0
  %3730 = vmatprep.mubr.bf16.mxu0 0
  %3731 = vmatmul.mubr.bf16.gmra.mrb[0].mxu0 %v1545
  %v3732 = vpop.f32.mrb[0].mxu0
  %v3733 = vadd.f32 %v3444, %v3732
  %v3734 = vpop.f32.mrb[0].mxu0
  %v3735 = vpop.f32.mrb[0].mxu0
  %v3736 = vadd.f32 %v3447, %v3735
  %v3737 = vpop.f32.mrb[0].mxu0
  %3738 = vmatprep.mubr.bf16.mxu0 0
  %3739 = vmatmul.mubr.bf16.gmra.mrb[0].mxu0 %v1554
  %v3740 = vpop.f32.mrb[0].mxu0
  %v3741 = vadd.f32 %v3452, %v3740
  %v3742 = vpop.f32.mrb[0].mxu0
  %v3743 = vpop.f32.mrb[0].mxu0
  %v3744 = vadd.f32 %v3455, %v3743
  %v3745 = vpop.f32.mrb[0].mxu0
  %3746 = vmatprep.mubr.bf16.mxu0 0
  %3747 = vmatmul.mubr.bf16.gmra.mrb[0].mxu0 %v1563
  %v3748 = vpop.f32.mrb[0].mxu0
  %v3749 = vadd.f32 %v3460, %v3748
  %v3750 = vpop.f32.mrb[0].mxu0
  %v3751 = vpop.f32.mrb[0].mxu0
  %v3752 = vadd.f32 %v3463, %v3751
  %v3753 = vpop.f32.mrb[0].mxu0
  %3754 = vmatprep.mubr.bf16.mxu0 0
  %3755 = vmatmul.mubr.bf16.gmra.mrb[0].mxu0 %v1572
  %v3756 = vpop.f32.mrb[0].mxu0
  %v3757 = vadd.f32 %v3468, %v3756
  %v3758 = vpop.f32.mrb[0].mxu0
  %v3759 = vpop.f32.mrb[0].mxu0
  %v3760 = vadd.f32 %v3471, %v3759
  %v3761 = vpop.f32.mrb[0].mxu0
  %3762 = vmatprep.mubr.bf16.mxu0 0
  %3763 = vmatmul.mubr.bf16.gmra.mrb[0].mxu0 %v1581
  %v3764 = vpop.f32.mrb[0].mxu0
  %v3765 = vadd.f32 %v3476, %v3764
  %v3766 = vpop.f32.mrb[0].mxu0
  %v3767 = vpop.f32.mrb[0].mxu0
  %v3768 = vadd.f32 %v3479, %v3767
  %v3769 = vpop.f32.mrb[0].mxu0
  %3770 = vmatprep.mubr.bf16.mxu0 0
  %3771 = vmatmul.mubr.bf16.gmra.mrb[0].mxu0 %v1590
  %v3772 = vpop.f32.mrb[0].mxu0
  %v3773 = vadd.f32 %v3484, %v3772
  %v3774 = vpop.f32.mrb[0].mxu0
  %v3775 = vpop.f32.mrb[0].mxu0
  %v3776 = vadd.f32 %v3487, %v3775
  %v3777 = vpop.f32.mrb[0].mxu0
  %3778 = vmatprep.mubr.bf16.mxu0 0
  %3779 = vmatmul.mubr.bf16.gmra.mrb[0].mxu0 %v1599
  %v3780 = vpop.f32.mrb[0].mxu0
  %v3781 = vadd.f32 %v3492, %v3780
  %v3782 = vpop.f32.mrb[0].mxu0
  %v3783 = vpop.f32.mrb[0].mxu0
  %v3784 = vadd.f32 %v3495, %v3783
  %v3785 = vpop.f32.mrb[0].mxu0
  %3786 = vmatprep.mubr.bf16.mxu0 0
  %3787 = vmatmul.mubr.bf16.gmra.mrb[0].mxu0 %v1608
  %v3788 = vpop.f32.mrb[0].mxu0
  %v3789 = vadd.f32 %v3500, %v3788
  %v3790 = vpop.f32.mrb[0].mxu0
  %v3791 = vpop.f32.mrb[0].mxu0
  %v3792 = vadd.f32 %v3503, %v3791
  %v3793 = vpop.f32.mrb[0].mxu0
  %3794 = vmatprep.mubr.bf16.mxu0 0
  %3795 = vmatmul.mubr.bf16.gmra.mrb[0].mxu0 %v1617
  %v3796 = vpop.f32.mrb[0].mxu0
  %v3797 = vadd.f32 %v3508, %v3796
  %v3798 = vpop.f32.mrb[0].mxu0
  %v3799 = vpop.f32.mrb[0].mxu0
  %v3800 = vadd.f32 %v3511, %v3799
  %v3801 = vpop.f32.mrb[0].mxu0
  %3802 = vmatprep.mubr.bf16.mxu0 0
  %3803 = vmatmul.mubr.bf16.gmra.mrb[0].mxu0 %v1626
  %v3804 = vpop.f32.mrb[0].mxu0
  %v3805 = vadd.f32 %v3516, %v3804
  %v3806 = vpop.f32.mrb[0].mxu0
  %v3807 = vpop.f32.mrb[0].mxu0
  %v3808 = vadd.f32 %v3519, %v3807
  %v3809 = vpop.f32.mrb[0].mxu0
  %3810 = vmatprep.mubr.bf16.mxu0 0
  %3811 = vmatmul.mubr.bf16.gmra.mrb[0].mxu0 %v1635
  %v3812 = vpop.f32.mrb[0].mxu0
  %v3813 = vadd.f32 %v3524, %v3812
  %v3814 = vpop.f32.mrb[0].mxu0
  %v3815 = vpop.f32.mrb[0].mxu0
  %v3816 = vadd.f32 %v3527, %v3815
  %v3817 = vpop.f32.mrb[0].mxu0
  %3818 = vmatprep.mubr.bf16.mxu0 0
  %3819 = vmatmul.mubr.bf16.gmra.mrb[0].mxu0 %v1644
  %v3820 = vpop.f32.mrb[0].mxu0
  %v3821 = vadd.f32 %v3532, %v3820
  %v3822 = vpop.f32.mrb[0].mxu0
  %v3823 = vpop.f32.mrb[0].mxu0
  %v3824 = vadd.f32 %v3535, %v3823
  %v3825 = vpop.f32.mrb[0].mxu0
  %3826 = vmatprep.mubr.bf16.mxu0 0
  %3827 = vmatmul.mubr.bf16.gmra.mrb[0].mxu0 %v1653
  %v3828 = vpop.f32.mrb[0].mxu0
  %v3829 = vadd.f32 %v3540, %v3828
  %v3830 = vpop.f32.mrb[0].mxu0
  %v3831 = vpop.f32.mrb[0].mxu0
  %v3832 = vadd.f32 %v3543, %v3831
  %v3833 = vpop.f32.mrb[0].mxu0
  %3834 = vmatprep.mubr.bf16.mxu0 0
  %3835 = vmatmul.mubr.bf16.gmra.mrb[0].mxu0 %v1662
  %v3836 = vpop.f32.mrb[0].mxu0
  %v3837 = vadd.f32 %v3548, %v3836
  %v3838 = vpop.f32.mrb[0].mxu0
  %v3839 = vpop.f32.mrb[0].mxu0
  %v3840 = vadd.f32 %v3551, %v3839
  %v3841 = vpop.f32.mrb[0].mxu0
  %3842 = vmatprep.mubr.bf16.mxu0 0
  %3843 = vmatmul.mubr.bf16.gmra.mrb[0].mxu0 %v1671
  %v3844 = vpop.f32.mrb[0].mxu0
  %v3845 = vadd.f32 %v3556, %v3844
  %v3846 = vpop.f32.mrb[0].mxu0
  %v3847 = vpop.f32.mrb[0].mxu0
  %v3848 = vadd.f32 %v3559, %v3847
  %v3849 = vpop.f32.mrb[0].mxu0
  %3850 = vmatprep.mubr.bf16.mxu0 0
  %3851 = vmatmul.mubr.bf16.gmra.mrb[0].mxu0 %v1680
  %v3852 = vpop.f32.mrb[0].mxu0
  %v3853 = vadd.f32 %v3564, %v3852
  %v3854 = vpop.f32.mrb[0].mxu0
  %v3855 = vpop.f32.mrb[0].mxu0
  %v3856 = vadd.f32 %v3567, %v3855
  %v3857 = vpop.f32.mrb[0].mxu0
  %3858 = vmatprep.mubr.bf16.mxu0 0
  %3859 = vmatmul.mubr.bf16.gmra.mrb[0].mxu0 %v1689
  %v3860 = vpop.f32.mrb[0].mxu0
  %v3861 = vadd.f32 %v3572, %v3860
  %v3862 = vpop.f32.mrb[0].mxu0
  %v3863 = vpop.f32.mrb[0].mxu0
  %v3864 = vadd.f32 %v3575, %v3863
  %v3865 = vpop.f32.mrb[0].mxu0
  %3866 = vmatprep.mubr.bf16.mxu0 0
  %3867 = vmatmul.mubr.bf16.gmra.mrb[0].mxu0 %v1698
  %v3868 = vpop.f32.mrb[0].mxu0
  %v3869 = vadd.f32 %v3580, %v3868
  %v3870 = vpop.f32.mrb[0].mxu0
  %v3871 = vpop.f32.mrb[0].mxu0
  %v3872 = vadd.f32 %v3583, %v3871
  %v3873 = vpop.f32.mrb[0].mxu0
  %3874 = vmatprep.mubr.bf16.mxu0 0
  %3875 = vmatmul.mubr.bf16.gmra.mrb[0].mxu0 %v1707
  %v3876 = vpop.f32.mrb[0].mxu0
  %v3877 = vadd.f32 %v3588, %v3876
  %v3878 = vpop.f32.mrb[0].mxu0
  %v3879 = vpop.f32.mrb[0].mxu0
  %v3880 = vadd.f32 %v3591, %v3879
  %v3881 = vpop.f32.mrb[0].mxu0
  %3882 = vmatprep.mubr.bf16.mxu0 0
  %3883 = vmatmul.mubr.bf16.gmra.mrb[0].mxu0 %v1716
  %v3884 = vpop.f32.mrb[0].mxu0
  %v3885 = vadd.f32 %v3596, %v3884
  %v3886 = vpop.f32.mrb[0].mxu0
  %v3887 = vpop.f32.mrb[0].mxu0
  %v3888 = vadd.f32 %v3599, %v3887
  %v3889 = vpop.f32.mrb[0].mxu0
  %3890 = vmatprep.mubr.bf16.mxu0 0
  %3891 = vmatmul.mubr.bf16.gmra.mrb[0].mxu0 %v1725
  %v3892 = vpop.f32.mrb[0].mxu0
  %v3893 = vadd.f32 %v3604, %v3892
  %v3894 = vpop.f32.mrb[0].mxu0
  %v3895 = vpop.f32.mrb[0].mxu0
  %v3896 = vadd.f32 %v3607, %v3895
  %v3897 = vpop.f32.mrb[0].mxu0
  %3898 = vmatprep.mubr.bf16.mxu0 0
  %3899 = vmatmul.mubr.bf16.gmra.mrb[0].mxu0 %v1734
  %v3900 = vpop.f32.mrb[0].mxu0
  %v3901 = vadd.f32 %v3612, %v3900
  %v3902 = vpop.f32.mrb[0].mxu0
  %v3903 = vpop.f32.mrb[0].mxu0
  %v3904 = vadd.f32 %v3615, %v3903
  %v3905 = vpop.f32.mrb[0].mxu0
  %3906 = vmatprep.mubr.bf16.mxu0 0
  %3907 = vmatmul.mubr.bf16.gmra.mrb[0].mxu0 %v1743
  %v3908 = vpop.f32.mrb[0].mxu0
  %v3909 = vadd.f32 %v3620, %v3908
  %v3910 = vpop.f32.mrb[0].mxu0
  %v3911 = vpop.f32.mrb[0].mxu0
  %v3912 = vadd.f32 %v3623, %v3911
  %v3913 = vpop.f32.mrb[0].mxu0
  %3914 = vmatprep.mubr.bf16.mxu0 0
  %3915 = vmatmul.mubr.bf16.gmra.mrb[0].mxu0 %v1752
  %v3916 = vpop.f32.mrb[0].mxu0
  %v3917 = vadd.f32 %v3628, %v3916
  %v3918 = vpop.f32.mrb[0].mxu0
  %v3919 = vpop.f32.mrb[0].mxu0
  %v3920 = vadd.f32 %v3631, %v3919
  %v3921 = vpop.f32.mrb[0].mxu0
  %3922 = vmatprep.mubr.bf16.mxu0 0
  %3923 = vmatmul.mubr.bf16.gmra.mrb[0].mxu0 %v1761
  %v3924 = vpop.f32.mrb[0].mxu0
  %v3925 = vadd.f32 %v3636, %v3924
  %v3926 = vpop.f32.mrb[0].mxu0
  %v3927 = vpop.f32.mrb[0].mxu0
  %v3928 = vadd.f32 %v3639, %v3927
  %v3929 = vpop.f32.mrb[0].mxu0
  %3930 = vmatprep.mubr.bf16.mxu0 0
  %3931 = vmatmul.mubr.bf16.gmra.mrb[0].mxu0 %v1770
  %v3932 = vpop.f32.mrb[0].mxu0
  %v3933 = vadd.f32 %v3644, %v3932
  %v3934 = vpop.f32.mrb[0].mxu0
  %v3935 = vpop.f32.mrb[0].mxu0
  %v3936 = vadd.f32 %v3647, %v3935
  %v3937 = vpop.f32.mrb[0].mxu0
  %3938 = vmatprep.mubr.bf16.mxu0 0
  %3939 = vmatmul.mubr.bf16.gmra.mrb[0].mxu0 %v1779
  %v3940 = vpop.f32.mrb[0].mxu0
  %v3941 = vadd.f32 %v3652, %v3940
  %v3942 = vpop.f32.mrb[0].mxu0
  %v3943 = vpop.f32.mrb[0].mxu0
  %v3944 = vadd.f32 %v3655, %v3943
  %v3945 = vpop.f32.mrb[0].mxu0
  %3946 = vmatprep.mubr.bf16.mxu0 0
  %3947 = vmatmul.mubr.bf16.gmra.mrb[0].mxu0 %v1788
  %v3948 = vpop.f32.mrb[0].mxu0
  %v3949 = vadd.f32 %v3660, %v3948
  %v3950 = vpop.f32.mrb[0].mxu0
  %v3951 = vpop.f32.mrb[0].mxu0
  %v3952 = vadd.f32 %v3663, %v3951
  %v3953 = vpop.f32.mrb[0].mxu0
  %3954 = vmatprep.mubr.bf16.mxu0 0
  %3955 = vmatmul.mubr.bf16.gmra.mrb[0].mxu0 %v1797
  %v3956 = vpop.f32.mrb[0].mxu0
  %v3957 = vadd.f32 %v3668, %v3956
  %v3958 = vpop.f32.mrb[0].mxu0
  %v3959 = vpop.f32.mrb[0].mxu0
  %v3960 = vadd.f32 %v3671, %v3959
  %v3961 = vpop.f32.mrb[0].mxu0
  %3962 = vdwg.mxu0
  %v3963 = vadd.f32 %v86, %v3709
  %v3964 = vadd.f32 %v87, %v3712
  %v3965 = vadd.f32 %v88, %v3717
  %v3966 = vadd.f32 %v89, %v3720
  %v3967 = vadd.f32 %v90, %v3725
  %v3968 = vadd.f32 %v91, %v3728
  %v3969 = vadd.f32 %v92, %v3733
  %v3970 = vadd.f32 %v93, %v3736
  %v3971 = vadd.f32 %v94, %v3741
  %v3972 = vadd.f32 %v95, %v3744
  %v3973 = vadd.f32 %v96, %v3749
  %v3974 = vadd.f32 %v97, %v3752
  %v3975 = vadd.f32 %v98, %v3757
  %v3976 = vadd.f32 %v99, %v3760
  %v3977 = vadd.f32 %v100, %v3765
  %v3978 = vadd.f32 %v101, %v3768
  %v3979 = vadd.f32 %v102, %v3773
  %v3980 = vadd.f32 %v103, %v3776
  %v3981 = vadd.f32 %v104, %v3781
  %v3982 = vadd.f32 %v105, %v3784
  %v3983 = vadd.f32 %v106, %v3789
  %v3984 = vadd.f32 %v107, %v3792
  %v3985 = vadd.f32 %v108, %v3797
  %v3986 = vadd.f32 %v109, %v3800
  %v3987 = vadd.f32 %v110, %v3805
  %v3988 = vadd.f32 %v111, %v3808
  %v3989 = vadd.f32 %v112, %v3813
  %v3990 = vadd.f32 %v113, %v3816
  %v3991 = vadd.f32 %v114, %v3821
  %v3992 = vadd.f32 %v115, %v3824
  %v3993 = vadd.f32 %v116, %v3829
  %v3994 = vadd.f32 %v117, %v3832
  %v3995 = vadd.f32 %v118, %v3837
  %v3996 = vadd.f32 %v119, %v3840
  %v3997 = vadd.f32 %v120, %v3845
  %v3998 = vadd.f32 %v121, %v3848
  %v3999 = vadd.f32 %v122, %v3853
  %v4000 = vadd.f32 %v123, %v3856
  %v4001 = vadd.f32 %v124, %v3861
  %v4002 = vadd.f32 %v125, %v3864
  %v4003 = vadd.f32 %v126, %v3869
  %v4004 = vadd.f32 %v127, %v3872
  %v4005 = vadd.f32 %v128, %v3877
  %v4006 = vadd.f32 %v129, %v3880
  %v4007 = vadd.f32 %v130, %v3885
  %v4008 = vadd.f32 %v131, %v3888
  %v4009 = vadd.f32 %v132, %v3893
  %v4010 = vadd.f32 %v133, %v3896
  %v4011 = vadd.f32 %v134, %v3901
  %v4012 = vadd.f32 %v135, %v3904
  %v4013 = vadd.f32 %v136, %v3909
  %v4014 = vadd.f32 %v137, %v3912
  %v4015 = vadd.f32 %v138, %v3917
  %v4016 = vadd.f32 %v139, %v3920
  %v4017 = vadd.f32 %v140, %v3925
  %v4018 = vadd.f32 %v141, %v3928
  %v4019 = vadd.f32 %v142, %v3933
  %v4020 = vadd.f32 %v143, %v3936
  %v4021 = vadd.f32 %v144, %v3941
  %v4022 = vadd.f32 %v145, %v3944
  %v4023 = vadd.f32 %v146, %v3949
  %v4024 = vadd.f32 %v147, %v3952
  %v4025 = vadd.f32 %v148, %v3957
  %v4026 = vadd.f32 %v149, %v3960
  %4027 = vst [vmem:[#allocation2] sm:$0xff] %v3963
  %4028 = vst [vmem:[#allocation2 + $0x8] sm:$0xff] %v3964
  %4029 = vst [vmem:[#allocation2 + $0x10] sm:$0xff] %v3965
  %4030 = vst [vmem:[#allocation2 + $0x18] sm:$0xff] %v3966
  %4031 = vst [vmem:[#allocation2 + $0x20] sm:$0xff] %v3967
  %4032 = vst [vmem:[#allocation2 + $0x28] sm:$0xff] %v3968
  %4033 = vst [vmem:[#allocation2 + $0x30] sm:$0xff] %v3969
  %4034 = vst [vmem:[#allocation2 + $0x38] sm:$0xff] %v3970
  %4035 = vst [vmem:[#allocation2 + $0x40] sm:$0xff] %v3971
  %4036 = vst [vmem:[#allocation2 + $0x48] sm:$0xff] %v3972
  %4037 = vst [vmem:[#allocation2 + $0x50] sm:$0xff] %v3973
  %4038 = vst [vmem:[#allocation2 + $0x58] sm:$0xff] %v3974
  %4039 = vst [vmem:[#allocation2 + $0x60] sm:$0xff] %v3975
  %4040 = vst [vmem:[#allocation2 + $0x68] sm:$0xff] %v3976
  %4041 = vst [vmem:[#allocation2 + $0x70] sm:$0xff] %v3977
  %4042 = vst [vmem:[#allocation2 + $0x78] sm:$0xff] %v3978
  %4043 = vst [vmem:[#allocation2 + $0x80] sm:$0xff] %v3979
  %4044 = vst [vmem:[#allocation2 + $0x88] sm:$0xff] %v3980
  %4045 = vst [vmem:[#allocation2 + $0x90] sm:$0xff] %v3981
  %4046 = vst [vmem:[#allocation2 + $0x98] sm:$0xff] %v3982
  %4047 = vst [vmem:[#allocation2 + $0xa0] sm:$0xff] %v3983
  %4048 = vst [vmem:[#allocation2 + $0xa8] sm:$0xff] %v3984
  %4049 = vst [vmem:[#allocation2 + $0xb0] sm:$0xff] %v3985
  %4050 = vst [vmem:[#allocation2 + $0xb8] sm:$0xff] %v3986
  %4051 = vst [vmem:[#allocation2 + $0xc0] sm:$0xff] %v3987
  %4052 = vst [vmem:[#allocation2 + $0xc8] sm:$0xff] %v3988
  %4053 = vst [vmem:[#allocation2 + $0xd0] sm:$0xff] %v3989
  %4054 = vst [vmem:[#allocation2 + $0xd8] sm:$0xff] %v3990
  %4055 = vst [vmem:[#allocation2 + $0xe0] sm:$0xff] %v3991
  %4056 = vst [vmem:[#allocation2 + $0xe8] sm:$0xff] %v3992
  %4057 = vst [vmem:[#allocation2 + $0xf0] sm:$0xff] %v3993
  %4058 = vst [vmem:[#allocation2 + $0xf8] sm:$0xff] %v3994
  %4059 = vst [vmem:[#allocation2 + $0x100] sm:$0xff] %v3995
  %4060 = vst [vmem:[#allocation2 + $0x108] sm:$0xff] %v3996
  %4061 = vst [vmem:[#allocation2 + $0x110] sm:$0xff] %v3997
  %4062 = vst [vmem:[#allocation2 + $0x118] sm:$0xff] %v3998
  %4063 = vst [vmem:[#allocation2 + $0x120] sm:$0xff] %v3999
  %4064 = vst [vmem:[#allocation2 + $0x128] sm:$0xff] %v4000
  %4065 = vst [vmem:[#allocation2 + $0x130] sm:$0xff] %v4001
  %4066 = vst [vmem:[#allocation2 + $0x138] sm:$0xff] %v4002
  %4067 = vst [vmem:[#allocation2 + $0x140] sm:$0xff] %v4003
  %4068 = vst [vmem:[#allocation2 + $0x148] sm:$0xff] %v4004
  %4069 = vst [vmem:[#allocation2 + $0x150] sm:$0xff] %v4005
  %4070 = vst [vmem:[#allocation2 + $0x158] sm:$0xff] %v4006
  %4071 = vst [vmem:[#allocation2 + $0x160] sm:$0xff] %v4007
  %4072 = vst [vmem:[#allocation2 + $0x168] sm:$0xff] %v4008
  %4073 = vst [vmem:[#allocation2 + $0x170] sm:$0xff] %v4009
  %4074 = vst [vmem:[#allocation2 + $0x178] sm:$0xff] %v4010
  %4075 = vst [vmem:[#allocation2 + $0x180] sm:$0xff] %v4011
  %4076 = vst [vmem:[#allocation2 + $0x188] sm:$0xff] %v4012
  %4077 = vst [vmem:[#allocation2 + $0x190] sm:$0xff] %v4013
  %4078 = vst [vmem:[#allocation2 + $0x198] sm:$0xff] %v4014
  %4079 = vst [vmem:[#allocation2 + $0x1a0] sm:$0xff] %v4015
  %4080 = vst [vmem:[#allocation2 + $0x1a8] sm:$0xff] %v4016
  %4081 = vst [vmem:[#allocation2 + $0x1b0] sm:$0xff] %v4017
  %4082 = vst [vmem:[#allocation2 + $0x1b8] sm:$0xff] %v4018
  %4083 = vst [vmem:[#allocation2 + $0x1c0] sm:$0xff] %v4019
  %4084 = vst [vmem:[#allocation2 + $0x1c8] sm:$0xff] %v4020
  %4085 = vst [vmem:[#allocation2 + $0x1d0] sm:$0xff] %v4021
  %4086 = vst [vmem:[#allocation2 + $0x1d8] sm:$0xff] %v4022
  %4087 = vst [vmem:[#allocation2 + $0x1e0] sm:$0xff] %v4023
  %4088 = vst [vmem:[#allocation2 + $0x1e8] sm:$0xff] %v4024
  %4089 = vst [vmem:[#allocation2 + $0x1f0] sm:$0xff] %v4025
  %4090 = vst [vmem:[#allocation2 + $0x1f8] sm:$0xff] %v4026
  // Predicated region
  $region22: #{strided_encoder.11} parent=0 // pred_check
    %p4091 = pneg %p18
  $region23: #{strided_encoder.11} parent=0 // pred_check_branch
    %4093 = sbr.rel (%p4091) target = $region25
  $region24: #{strided_encoder.11} parent=0 // pred_region
    %v4094 = vld [vmem:[#allocation2] sm:$0xff]
    %v4095 = vld [vmem:[#allocation2 + $0x8] sm:$0xff]
    %v4096 = vld [vmem:[#allocation2 + $0x10] sm:$0xff]
    %v4097 = vld [vmem:[#allocation2 + $0x18] sm:$0xff]
    %v4098 = vld [vmem:[#allocation2 + $0x20] sm:$0xff]
    %v4099 = vld [vmem:[#allocation2 + $0x28] sm:$0xff]
    %v4100 = vld [vmem:[#allocation2 + $0x30] sm:$0xff]
    %v4101 = vld [vmem:[#allocation2 + $0x38] sm:$0xff]
    %v4102 = vld [vmem:[#allocation2 + $0x40] sm:$0xff]
    %v4103 = vld [vmem:[#allocation2 + $0x48] sm:$0xff]
    %v4104 = vld [vmem:[#allocation2 + $0x50] sm:$0xff]
    %v4105 = vld [vmem:[#allocation2 + $0x58] sm:$0xff]
    %v4106 = vld [vmem:[#allocation2 + $0x60] sm:$0xff]
    %v4107 = vld [vmem:[#allocation2 + $0x68] sm:$0xff]
    %v4108 = vld [vmem:[#allocation2 + $0x70] sm:$0xff]
    %v4109 = vld [vmem:[#allocation2 + $0x78] sm:$0xff]
    %v4110 = vld [vmem:[#allocation2 + $0x80] sm:$0xff]
    %v4111 = vld [vmem:[#allocation2 + $0x88] sm:$0xff]
    %v4112 = vld [vmem:[#allocation2 + $0x90] sm:$0xff]
    %v4113 = vld [vmem:[#allocation2 + $0x98] sm:$0xff]
    %v4114 = vld [vmem:[#allocation2 + $0xa0] sm:$0xff]
    %v4115 = vld [vmem:[#allocation2 + $0xa8] sm:$0xff]
    %v4116 = vld [vmem:[#allocation2 + $0xb0] sm:$0xff]
    %v4117 = vld [vmem:[#allocation2 + $0xb8] sm:$0xff]
    %v4118 = vld [vmem:[#allocation2 + $0xc0] sm:$0xff]
    %v4119 = vld [vmem:[#allocation2 + $0xc8] sm:$0xff]
    %v4120 = vld [vmem:[#allocation2 + $0xd0] sm:$0xff]
    %v4121 = vld [vmem:[#allocation2 + $0xd8] sm:$0xff]
    %v4122 = vld [vmem:[#allocation2 + $0xe0] sm:$0xff]
    %v4123 = vld [vmem:[#allocation2 + $0xe8] sm:$0xff]
    %v4124 = vld [vmem:[#allocation2 + $0xf0] sm:$0xff]
    %v4125 = vld [vmem:[#allocation2 + $0xf8] sm:$0xff]
    %v4126 = vld [vmem:[#allocation2 + $0x100] sm:$0xff]
    %v4127 = vld [vmem:[#allocation2 + $0x108] sm:$0xff]
    %v4128 = vld [vmem:[#allocation2 + $0x110] sm:$0xff]
    %v4129 = vld [vmem:[#allocation2 + $0x118] sm:$0xff]
    %v4130 = vld [vmem:[#allocation2 + $0x120] sm:$0xff]
    %v4131 = vld [vmem:[#allocation2 + $0x128] sm:$0xff]
    %v4132 = vld [vmem:[#allocation2 + $0x130] sm:$0xff]
    %v4133 = vld [vmem:[#allocation2 + $0x138] sm:$0xff]
    %v4134 = vld [vmem:[#allocation2 + $0x140] sm:$0xff]
    %v4135 = vld [vmem:[#allocation2 + $0x148] sm:$0xff]
    %v4136 = vld [vmem:[#allocation2 + $0x150] sm:$0xff]
    %v4137 = vld [vmem:[#allocation2 + $0x158] sm:$0xff]
    %v4138 = vld [vmem:[#allocation2 + $0x160] sm:$0xff]
    %v4139 = vld [vmem:[#allocation2 + $0x168] sm:$0xff]
    %v4140 = vld [vmem:[#allocation2 + $0x170] sm:$0xff]
    %v4141 = vld [vmem:[#allocation2 + $0x178] sm:$0xff]
    %v4142 = vld [vmem:[#allocation2 + $0x180] sm:$0xff]
    %v4143 = vld [vmem:[#allocation2 + $0x188] sm:$0xff]
    %v4144 = vld [vmem:[#allocation2 + $0x190] sm:$0xff]
    %v4145 = vld [vmem:[#allocation2 + $0x198] sm:$0xff]
    %v4146 = vld [vmem:[#allocation2 + $0x1a0] sm:$0xff]
    %v4147 = vld [vmem:[#allocation2 + $0x1a8] sm:$0xff]
    %v4148 = vld [vmem:[#allocation2 + $0x1b0] sm:$0xff]
    %v4149 = vld [vmem:[#allocation2 + $0x1b8] sm:$0xff]
    %v4150 = vld [vmem:[#allocation2 + $0x1c0] sm:$0xff]
    %v4151 = vld [vmem:[#allocation2 + $0x1c8] sm:$0xff]
    %v4152 = vld [vmem:[#allocation2 + $0x1d0] sm:$0xff]
    %v4153 = vld [vmem:[#allocation2 + $0x1d8] sm:$0xff]
    %v4154 = vld [vmem:[#allocation2 + $0x1e0] sm:$0xff]
    %v4155 = vld [vmem:[#allocation2 + $0x1e8] sm:$0xff]
    %v4156 = vld [vmem:[#allocation2 + $0x1f0] sm:$0xff]
    %v4157 = vld [vmem:[#allocation2 + $0x1f8] sm:$0xff]
    %v4158 = vld [vmem:[%s2] sm:$0x1]
    %v4160 = vlaneseq
    %v4161 = vshrl.u32 %v4160, 7
    %v4162 = vsub.s32 0, %v4161
    %v4163 = vrot.slane %v4158, %v4162
    %v4165 = vmul.f32 %v4094, %v4163
    %v4166 = vmul.f32 %v4095, %v4163
    %v4167 = vmul.f32 %v4096, %v4163
    %v4168 = vmul.f32 %v4097, %v4163
    %v4169 = vmul.f32 %v4098, %v4163
    %v4170 = vmul.f32 %v4099, %v4163
    %v4171 = vmul.f32 %v4100, %v4163
    %v4172 = vmul.f32 %v4101, %v4163
    %v4173 = vmul.f32 %v4102, %v4163
    %v4174 = vmul.f32 %v4103, %v4163
    %v4175 = vmul.f32 %v4104, %v4163
    %v4176 = vmul.f32 %v4105, %v4163
    %v4177 = vmul.f32 %v4106, %v4163
    %v4178 = vmul.f32 %v4107, %v4163
    %v4179 = vmul.f32 %v4108, %v4163
    %v4180 = vmul.f32 %v4109, %v4163
    %v4181 = vmul.f32 %v4110, %v4163
    %v4182 = vmul.f32 %v4111, %v4163
    %v4183 = vmul.f32 %v4112, %v4163
    %v4184 = vmul.f32 %v4113, %v4163
    %v4185 = vmul.f32 %v4114, %v4163
    %v4186 = vmul.f32 %v4115, %v4163
    %v4187 = vmul.f32 %v4116, %v4163
    %v4188 = vmul.f32 %v4117, %v4163
    %v4189 = vmul.f32 %v4118, %v4163
    %v4190 = vmul.f32 %v4119, %v4163
    %v4191 = vmul.f32 %v4120, %v4163
    %v4192 = vmul.f32 %v4121, %v4163
    %v4193 = vmul.f32 %v4122, %v4163
    %v4194 = vmul.f32 %v4123, %v4163
    %v4195 = vmul.f32 %v4124, %v4163
    %v4196 = vmul.f32 %v4125, %v4163
    %v4197 = vmul.f32 %v4126, %v4163
    %v4198 = vmul.f32 %v4127, %v4163
    %v4199 = vmul.f32 %v4128, %v4163
    %v4200 = vmul.f32 %v4129, %v4163
    %v4201 = vmul.f32 %v4130, %v4163
    %v4202 = vmul.f32 %v4131, %v4163
    %v4203 = vmul.f32 %v4132, %v4163
    %v4204 = vmul.f32 %v4133, %v4163
    %v4205 = vmul.f32 %v4134, %v4163
    %v4206 = vmul.f32 %v4135, %v4163
    %v4207 = vmul.f32 %v4136, %v4163
    %v4208 = vmul.f32 %v4137, %v4163
    %v4209 = vmul.f32 %v4138, %v4163
    %v4210 = vmul.f32 %v4139, %v4163
    %v4211 = vmul.f32 %v4140, %v4163
    %v4212 = vmul.f32 %v4141, %v4163
    %v4213 = vmul.f32 %v4142, %v4163
    %v4214 = vmul.f32 %v4143, %v4163
    %v4215 = vmul.f32 %v4144, %v4163
    %v4216 = vmul.f32 %v4145, %v4163
    %v4217 = vmul.f32 %v4146, %v4163
    %v4218 = vmul.f32 %v4147, %v4163
    %v4219 = vmul.f32 %v4148, %v4163
    %v4220 = vmul.f32 %v4149, %v4163
    %v4221 = vmul.f32 %v4150, %v4163
    %v4222 = vmul.f32 %v4151, %v4163
    %v4223 = vmul.f32 %v4152, %v4163
    %v4224 = vmul.f32 %v4153, %v4163
    %v4225 = vmul.f32 %v4154, %v4163
    %v4226 = vmul.f32 %v4155, %v4163
    %v4227 = vmul.f32 %v4156, %v4163
    %v4228 = vmul.f32 %v4157, %v4163
    %v4229 = vld [vmem:[%s3] sm:$0x1]
    %v4231 = vlaneseq
    %v4232 = vshrl.u32 %v4231, 7
    %v4233 = vsub.s32 0, %v4232
    %v4234 = vrot.slane %v4229, %v4233
    %v4236 = vadd.f32 %v4165, %v4234
    %v4237 = vadd.f32 %v4166, %v4234
    %v4238 = vadd.f32 %v4167, %v4234
    %v4239 = vadd.f32 %v4168, %v4234
    %v4240 = vadd.f32 %v4169, %v4234
    %v4241 = vadd.f32 %v4170, %v4234
    %v4242 = vadd.f32 %v4171, %v4234
    %v4243 = vadd.f32 %v4172, %v4234
    %v4244 = vadd.f32 %v4173, %v4234
    %v4245 = vadd.f32 %v4174, %v4234
    %v4246 = vadd.f32 %v4175, %v4234
    %v4247 = vadd.f32 %v4176, %v4234
    %v4248 = vadd.f32 %v4177, %v4234
    %v4249 = vadd.f32 %v4178, %v4234
    %v4250 = vadd.f32 %v4179, %v4234
    %v4251 = vadd.f32 %v4180, %v4234
    %v4252 = vadd.f32 %v4181, %v4234
    %v4253 = vadd.f32 %v4182, %v4234
    %v4254 = vadd.f32 %v4183, %v4234
    %v4255 = vadd.f32 %v4184, %v4234
    %v4256 = vadd.f32 %v4185, %v4234
    %v4257 = vadd.f32 %v4186, %v4234
    %v4258 = vadd.f32 %v4187, %v4234
    %v4259 = vadd.f32 %v4188, %v4234
    %v4260 = vadd.f32 %v4189, %v4234
    %v4261 = vadd.f32 %v4190, %v4234
    %v4262 = vadd.f32 %v4191, %v4234
    %v4263 = vadd.f32 %v4192, %v4234
    %v4264 = vadd.f32 %v4193, %v4234
    %v4265 = vadd.f32 %v4194, %v4234
    %v4266 = vadd.f32 %v4195, %v4234
    %v4267 = vadd.f32 %v4196, %v4234
    %v4268 = vadd.f32 %v4197, %v4234
    %v4269 = vadd.f32 %v4198, %v4234
    %v4270 = vadd.f32 %v4199, %v4234
    %v4271 = vadd.f32 %v4200, %v4234
    %v4272 = vadd.f32 %v4201, %v4234
    %v4273 = vadd.f32 %v4202, %v4234
    %v4274 = vadd.f32 %v4203, %v4234
    %v4275 = vadd.f32 %v4204, %v4234
    %v4276 = vadd.f32 %v4205, %v4234
    %v4277 = vadd.f32 %v4206, %v4234
    %v4278 = vadd.f32 %v4207, %v4234
    %v4279 = vadd.f32 %v4208, %v4234
    %v4280 = vadd.f32 %v4209, %v4234
    %v4281 = vadd.f32 %v4210, %v4234
    %v4282 = vadd.f32 %v4211, %v4234
    %v4283 = vadd.f32 %v4212, %v4234
    %v4284 = vadd.f32 %v4213, %v4234
    %v4285 = vadd.f32 %v4214, %v4234
    %v4286 = vadd.f32 %v4215, %v4234
    %v4287 = vadd.f32 %v4216, %v4234
    %v4288 = vadd.f32 %v4217, %v4234
    %v4289 = vadd.f32 %v4218, %v4234
    %v4290 = vadd.f32 %v4219, %v4234
    %v4291 = vadd.f32 %v4220, %v4234
    %v4292 = vadd.f32 %v4221, %v4234
    %v4293 = vadd.f32 %v4222, %v4234
    %v4294 = vadd.f32 %v4223, %v4234
    %v4295 = vadd.f32 %v4224, %v4234
    %v4296 = vadd.f32 %v4225, %v4234
    %v4297 = vadd.f32 %v4226, %v4234
    %v4298 = vadd.f32 %v4227, %v4234
    %v4299 = vadd.f32 %v4228, %v4234
    %v4300 = vmax.f32 %v4236, 0.0
    %v4301 = vmax.f32 %v4237, 0.0
    %v4302 = vmax.f32 %v4238, 0.0
    %v4303 = vmax.f32 %v4239, 0.0
    %v4304 = vmax.f32 %v4240, 0.0
    %v4305 = vmax.f32 %v4241, 0.0
    %v4306 = vmax.f32 %v4242, 0.0
    %v4307 = vmax.f32 %v4243, 0.0
    %v4308 = vmax.f32 %v4244, 0.0
    %v4309 = vmax.f32 %v4245, 0.0
    %v4310 = vmax.f32 %v4246, 0.0
    %v4311 = vmax.f32 %v4247, 0.0
    %v4312 = vmax.f32 %v4248, 0.0
    %v4313 = vmax.f32 %v4249, 0.0
    %v4314 = vmax.f32 %v4250, 0.0
    %v4315 = vmax.f32 %v4251, 0.0
    %v4316 = vmax.f32 %v4252, 0.0
    %v4317 = vmax.f32 %v4253, 0.0
    %v4318 = vmax.f32 %v4254, 0.0
    %v4319 = vmax.f32 %v4255, 0.0
    %v4320 = vmax.f32 %v4256, 0.0
    %v4321 = vmax.f32 %v4257, 0.0
    %v4322 = vmax.f32 %v4258, 0.0
    %v4323 = vmax.f32 %v4259, 0.0
    %v4324 = vmax.f32 %v4260, 0.0
    %v4325 = vmax.f32 %v4261, 0.0
    %v4326 = vmax.f32 %v4262, 0.0
    %v4327 = vmax.f32 %v4263, 0.0
    %v4328 = vmax.f32 %v4264, 0.0
    %v4329 = vmax.f32 %v4265, 0.0
    %v4330 = vmax.f32 %v4266, 0.0
    %v4331 = vmax.f32 %v4267, 0.0
    %v4332 = vmax.f32 %v4268, 0.0
    %v4333 = vmax.f32 %v4269, 0.0
    %v4334 = vmax.f32 %v4270, 0.0
    %v4335 = vmax.f32 %v4271, 0.0
    %v4336 = vmax.f32 %v4272, 0.0
    %v4337 = vmax.f32 %v4273, 0.0
    %v4338 = vmax.f32 %v4274, 0.0
    %v4339 = vmax.f32 %v4275, 0.0
    %v4340 = vmax.f32 %v4276, 0.0
    %v4341 = vmax.f32 %v4277, 0.0
    %v4342 = vmax.f32 %v4278, 0.0
    %v4343 = vmax.f32 %v4279, 0.0
    %v4344 = vmax.f32 %v4280, 0.0
    %v4345 = vmax.f32 %v4281, 0.0
    %v4346 = vmax.f32 %v4282, 0.0
    %v4347 = vmax.f32 %v4283, 0.0
    %v4348 = vmax.f32 %v4284, 0.0
    %v4349 = vmax.f32 %v4285, 0.0
    %v4350 = vmax.f32 %v4286, 0.0
    %v4351 = vmax.f32 %v4287, 0.0
    %v4352 = vmax.f32 %v4288, 0.0
    %v4353 = vmax.f32 %v4289, 0.0
    %v4354 = vmax.f32 %v4290, 0.0
    %v4355 = vmax.f32 %v4291, 0.0
    %v4356 = vmax.f32 %v4292, 0.0
    %v4357 = vmax.f32 %v4293, 0.0
    %v4358 = vmax.f32 %v4294, 0.0
    %v4359 = vmax.f32 %v4295, 0.0
    %v4360 = vmax.f32 %v4296, 0.0
    %v4361 = vmax.f32 %v4297, 0.0
    %v4362 = vmax.f32 %v4298, 0.0
    %v4363 = vmax.f32 %v4299, 0.0
    %v4364 = vpack.c.bf16 %v4301, %v4300
    %v4365 = vpack.c.bf16 %v4303, %v4302
    %v4366 = vpack.c.bf16 %v4305, %v4304
    %v4367 = vpack.c.bf16 %v4307, %v4306
    %v4368 = vpack.c.bf16 %v4309, %v4308
    %v4369 = vpack.c.bf16 %v4311, %v4310
    %v4370 = vpack.c.bf16 %v4313, %v4312
    %v4371 = vpack.c.bf16 %v4315, %v4314
    %v4372 = vpack.c.bf16 %v4317, %v4316
    %v4373 = vpack.c.bf16 %v4319, %v4318
    %v4374 = vpack.c.bf16 %v4321, %v4320
    %v4375 = vpack.c.bf16 %v4323, %v4322
    %v4376 = vpack.c.bf16 %v4325, %v4324
    %v4377 = vpack.c.bf16 %v4327, %v4326
    %v4378 = vpack.c.bf16 %v4329, %v4328
    %v4379 = vpack.c.bf16 %v4331, %v4330
    %v4380 = vpack.c.bf16 %v4333, %v4332
    %v4381 = vpack.c.bf16 %v4335, %v4334
    %v4382 = vpack.c.bf16 %v4337, %v4336
    %v4383 = vpack.c.bf16 %v4339, %v4338
    %v4384 = vpack.c.bf16 %v4341, %v4340
    %v4385 = vpack.c.bf16 %v4343, %v4342
    %v4386 = vpack.c.bf16 %v4345, %v4344
    %v4387 = vpack.c.bf16 %v4347, %v4346
    %v4388 = vpack.c.bf16 %v4349, %v4348
    %v4389 = vpack.c.bf16 %v4351, %v4350
    %v4390 = vpack.c.bf16 %v4353, %v4352
    %v4391 = vpack.c.bf16 %v4355, %v4354
    %v4392 = vpack.c.bf16 %v4357, %v4356
    %v4393 = vpack.c.bf16 %v4359, %v4358
    %v4394 = vpack.c.bf16 %v4361, %v4360
    %v4395 = vpack.c.bf16 %v4363, %v4362
    %v4428 = vunpack.c.l.b16 %v4364
    %v4429 = vunpack.c.h.b16 %v4364
    %v4430 = vunpack.c.l.b16 %v4365
    %v4431 = vunpack.c.h.b16 %v4365
    %v4432 = vunpack.c.l.b16 %v4366
    %v4433 = vunpack.c.h.b16 %v4366
    %v4434 = vunpack.c.l.b16 %v4367
    %v4435 = vunpack.c.h.b16 %v4367
    %v4436 = vunpack.c.l.b16 %v4368
    %v4437 = vunpack.c.h.b16 %v4368
    %v4438 = vunpack.c.l.b16 %v4369
    %v4439 = vunpack.c.h.b16 %v4369
    %v4440 = vunpack.c.l.b16 %v4370
    %v4441 = vunpack.c.h.b16 %v4370
    %v4442 = vunpack.c.l.b16 %v4371
    %v4443 = vunpack.c.h.b16 %v4371
    %v4444 = vunpack.c.l.b16 %v4372
    %v4445 = vunpack.c.h.b16 %v4372
    %v4446 = vunpack.c.l.b16 %v4373
    %v4447 = vunpack.c.h.b16 %v4373
    %v4448 = vunpack.c.l.b16 %v4374
    %v4449 = vunpack.c.h.b16 %v4374
    %v4450 = vunpack.c.l.b16 %v4375
    %v4451 = vunpack.c.h.b16 %v4375
    %v4452 = vunpack.c.l.b16 %v4376
    %v4453 = vunpack.c.h.b16 %v4376
    %v4454 = vunpack.c.l.b16 %v4377
    %v4455 = vunpack.c.h.b16 %v4377
    %v4456 = vunpack.c.l.b16 %v4378
    %v4457 = vunpack.c.h.b16 %v4378
    %v4458 = vunpack.c.l.b16 %v4379
    %v4459 = vunpack.c.h.b16 %v4379
    %v4460 = vunpack.c.l.b16 %v4380
    %v4461 = vunpack.c.h.b16 %v4380
    %v4462 = vunpack.c.l.b16 %v4381
    %v4463 = vunpack.c.h.b16 %v4381
    %v4464 = vunpack.c.l.b16 %v4382
    %v4465 = vunpack.c.h.b16 %v4382
    %v4466 = vunpack.c.l.b16 %v4383
    %v4467 = vunpack.c.h.b16 %v4383
    %v4468 = vunpack.c.l.b16 %v4384
    %v4469 = vunpack.c.h.b16 %v4384
    %v4470 = vunpack.c.l.b16 %v4385
    %v4471 = vunpack.c.h.b16 %v4385
    %v4472 = vunpack.c.l.b16 %v4386
    %v4473 = vunpack.c.h.b16 %v4386
    %v4474 = vunpack.c.l.b16 %v4387
    %v4475 = vunpack.c.h.b16 %v4387
    %v4476 = vunpack.c.l.b16 %v4388
    %v4477 = vunpack.c.h.b16 %v4388
    %v4478 = vunpack.c.l.b16 %v4389
    %v4479 = vunpack.c.h.b16 %v4389
    %v4480 = vunpack.c.l.b16 %v4390
    %v4481 = vunpack.c.h.b16 %v4390
    %v4482 = vunpack.c.l.b16 %v4391
    %v4483 = vunpack.c.h.b16 %v4391
    %v4484 = vunpack.c.l.b16 %v4392
    %v4485 = vunpack.c.h.b16 %v4392
    %v4486 = vunpack.c.l.b16 %v4393
    %v4487 = vunpack.c.h.b16 %v4393
    %v4488 = vunpack.c.l.b16 %v4394
    %v4489 = vunpack.c.h.b16 %v4394
    %v4490 = vunpack.c.l.b16 %v4395
    %v4491 = vunpack.c.h.b16 %v4395
    %v4492 = vpack.c.b16 %v4428, %v4428
    %v4493 = vpack.c.b16 %v4429, %v4429
    %v4494 = vpack.c.b16 %v4430, %v4430
    %v4495 = vpack.c.b16 %v4431, %v4431
    %v4496 = vpack.c.b16 %v4432, %v4432
    %v4497 = vpack.c.b16 %v4433, %v4433
    %v4498 = vpack.c.b16 %v4434, %v4434
    %v4499 = vpack.c.b16 %v4435, %v4435
    %v4500 = vpack.c.b16 %v4436, %v4436
    %v4501 = vpack.c.b16 %v4437, %v4437
    %v4502 = vpack.c.b16 %v4438, %v4438
    %v4503 = vpack.c.b16 %v4439, %v4439
    %v4504 = vpack.c.b16 %v4440, %v4440
    %v4505 = vpack.c.b16 %v4441, %v4441
    %v4506 = vpack.c.b16 %v4442, %v4442
    %v4507 = vpack.c.b16 %v4443, %v4443
    %v4508 = vpack.c.b16 %v4444, %v4444
    %v4509 = vpack.c.b16 %v4445, %v4445
    %v4510 = vpack.c.b16 %v4446, %v4446
    %v4511 = vpack.c.b16 %v4447, %v4447
    %v4512 = vpack.c.b16 %v4448, %v4448
    %v4513 = vpack.c.b16 %v4449, %v4449
    %v4514 = vpack.c.b16 %v4450, %v4450
    %v4515 = vpack.c.b16 %v4451, %v4451
    %v4516 = vpack.c.b16 %v4452, %v4452
    %v4517 = vpack.c.b16 %v4453, %v4453
    %v4518 = vpack.c.b16 %v4454, %v4454
    %v4519 = vpack.c.b16 %v4455, %v4455
    %v4520 = vpack.c.b16 %v4456, %v4456
    %v4521 = vpack.c.b16 %v4457, %v4457
    %v4522 = vpack.c.b16 %v4458, %v4458
    %v4523 = vpack.c.b16 %v4459, %v4459
    %v4524 = vpack.c.b16 %v4460, %v4460
    %v4525 = vpack.c.b16 %v4461, %v4461
    %v4526 = vpack.c.b16 %v4462, %v4462
    %v4527 = vpack.c.b16 %v4463, %v4463
    %v4528 = vpack.c.b16 %v4464, %v4464
    %v4529 = vpack.c.b16 %v4465, %v4465
    %v4530 = vpack.c.b16 %v4466, %v4466
    %v4531 = vpack.c.b16 %v4467, %v4467
    %v4532 = vpack.c.b16 %v4468, %v4468
    %v4533 = vpack.c.b16 %v4469, %v4469
    %v4534 = vpack.c.b16 %v4470, %v4470
    %v4535 = vpack.c.b16 %v4471, %v4471
    %v4536 = vpack.c.b16 %v4472, %v4472
    %v4537 = vpack.c.b16 %v4473, %v4473
    %v4538 = vpack.c.b16 %v4474, %v4474
    %v4539 = vpack.c.b16 %v4475, %v4475
    %v4540 = vpack.c.b16 %v4476, %v4476
    %v4541 = vpack.c.b16 %v4477, %v4477
    %v4542 = vpack.c.b16 %v4478, %v4478
    %v4543 = vpack.c.b16 %v4479, %v4479
    %v4544 = vpack.c.b16 %v4480, %v4480
    %v4545 = vpack.c.b16 %v4481, %v4481
    %v4546 = vpack.c.b16 %v4482, %v4482
    %v4547 = vpack.c.b16 %v4483, %v4483
    %v4548 = vpack.c.b16 %v4484, %v4484
    %v4549 = vpack.c.b16 %v4485, %v4485
    %v4550 = vpack.c.b16 %v4486, %v4486
    %v4551 = vpack.c.b16 %v4487, %v4487
    %v4552 = vpack.c.b16 %v4488, %v4488
    %v4553 = vpack.c.b16 %v4489, %v4489
    %v4554 = vpack.c.b16 %v4490, %v4490
    %v4555 = vpack.c.b16 %v4491, %v4491
    %4620 = vst [vmem:[%s4] sm:$0xf] %v4492
    %4621 = vst [vmem:[%s4 + $0x4] sm:$0xf] %v4493
    %4622 = vst [vmem:[%s4 + $0x8] sm:$0xf] %v4494
    %4623 = vst [vmem:[%s4 + $0xc] sm:$0xf] %v4495
    %4624 = vst [vmem:[%s4 + $0x10] sm:$0xf] %v4496
    %4625 = vst [vmem:[%s4 + $0x14] sm:$0xf] %v4497
    %4626 = vst [vmem:[%s4 + $0x18] sm:$0xf] %v4498
    %4627 = vst [vmem:[%s4 + $0x1c] sm:$0xf] %v4499
    %4628 = vst [vmem:[%s4 + $0x20] sm:$0xf] %v4500
    %4629 = vst [vmem:[%s4 + $0x24] sm:$0xf] %v4501
    %4630 = vst [vmem:[%s4 + $0x28] sm:$0xf] %v4502
    %4631 = vst [vmem:[%s4 + $0x2c] sm:$0xf] %v4503
    %4632 = vst [vmem:[%s4 + $0x30] sm:$0xf] %v4504
    %4633 = vst [vmem:[%s4 + $0x34] sm:$0xf] %v4505
    %4634 = vst [vmem:[%s4 + $0x38] sm:$0xf] %v4506
    %4635 = vst [vmem:[%s4 + $0x3c] sm:$0xf] %v4507
    %4636 = vst [vmem:[%s4 + $0x40] sm:$0xf] %v4508
    %4637 = vst [vmem:[%s4 + $0x44] sm:$0xf] %v4509
    %4638 = vst [vmem:[%s4 + $0x48] sm:$0xf] %v4510
    %4639 = vst [vmem:[%s4 + $0x4c] sm:$0xf] %v4511
    %4640 = vst [vmem:[%s4 + $0x50] sm:$0xf] %v4512
    %4641 = vst [vmem:[%s4 + $0x54] sm:$0xf] %v4513
    %4642 = vst [vmem:[%s4 + $0x58] sm:$0xf] %v4514
    %4643 = vst [vmem:[%s4 + $0x5c] sm:$0xf] %v4515
    %4644 = vst [vmem:[%s4 + $0x60] sm:$0xf] %v4516
    %4645 = vst [vmem:[%s4 + $0x64] sm:$0xf] %v4517
    %4646 = vst [vmem:[%s4 + $0x68] sm:$0xf] %v4518
    %4647 = vst [vmem:[%s4 + $0x6c] sm:$0xf] %v4519
    %4648 = vst [vmem:[%s4 + $0x70] sm:$0xf] %v4520
    %4649 = vst [vmem:[%s4 + $0x74] sm:$0xf] %v4521
    %4650 = vst [vmem:[%s4 + $0x78] sm:$0xf] %v4522
    %4651 = vst [vmem:[%s4 + $0x7c] sm:$0xf] %v4523
    %4652 = vst [vmem:[%s4 + $0x80] sm:$0xf] %v4524
    %4653 = vst [vmem:[%s4 + $0x84] sm:$0xf] %v4525
    %4654 = vst [vmem:[%s4 + $0x88] sm:$0xf] %v4526
    %4655 = vst [vmem:[%s4 + $0x8c] sm:$0xf] %v4527
    %4656 = vst [vmem:[%s4 + $0x90] sm:$0xf] %v4528
    %4657 = vst [vmem:[%s4 + $0x94] sm:$0xf] %v4529
    %4658 = vst [vmem:[%s4 + $0x98] sm:$0xf] %v4530
    %4659 = vst [vmem:[%s4 + $0x9c] sm:$0xf] %v4531
    %4660 = vst [vmem:[%s4 + $0xa0] sm:$0xf] %v4532
    %4661 = vst [vmem:[%s4 + $0xa4] sm:$0xf] %v4533
    %4662 = vst [vmem:[%s4 + $0xa8] sm:$0xf] %v4534
    %4663 = vst [vmem:[%s4 + $0xac] sm:$0xf] %v4535
    %4664 = vst [vmem:[%s4 + $0xb0] sm:$0xf] %v4536
    %4665 = vst [vmem:[%s4 + $0xb4] sm:$0xf] %v4537
    %4666 = vst [vmem:[%s4 + $0xb8] sm:$0xf] %v4538
    %4667 = vst [vmem:[%s4 + $0xbc] sm:$0xf] %v4539
    %4668 = vst [vmem:[%s4 + $0xc0] sm:$0xf] %v4540
    %4669 = vst [vmem:[%s4 + $0xc4] sm:$0xf] %v4541
    %4670 = vst [vmem:[%s4 + $0xc8] sm:$0xf] %v4542
    %4671 = vst [vmem:[%s4 + $0xcc] sm:$0xf] %v4543
    %4672 = vst [vmem:[%s4 + $0xd0] sm:$0xf] %v4544
    %4673 = vst [vmem:[%s4 + $0xd4] sm:$0xf] %v4545
    %4674 = vst [vmem:[%s4 + $0xd8] sm:$0xf] %v4546
    %4675 = vst [vmem:[%s4 + $0xdc] sm:$0xf] %v4547
    %4676 = vst [vmem:[%s4 + $0xe0] sm:$0xf] %v4548
    %4677 = vst [vmem:[%s4 + $0xe4] sm:$0xf] %v4549
    %4678 = vst [vmem:[%s4 + $0xe8] sm:$0xf] %v4550
    %4679 = vst [vmem:[%s4 + $0xec] sm:$0xf] %v4551
    %4680 = vst [vmem:[%s4 + $0xf0] sm:$0xf] %v4552
    %4681 = vst [vmem:[%s4 + $0xf4] sm:$0xf] %v4553
    %4682 = vst [vmem:[%s4 + $0xf8] sm:$0xf] %v4554
    %4683 = vst [vmem:[%s4 + $0xfc] sm:$0xf] %v4555
  $region25: #{strided_encoder.11} parent=0 // pred_fallthru
    _
  // Predicated region
  $region26: #{strided_encoder.11} parent=0 // pred_check
    _
  $region27: #{strided_encoder.11} parent=0 // pred_check_branch
    %4685 = sbr.rel (0) target = $region29
  $region28: #{strided_encoder.11} parent=0 // pred_region
    _
  $region29: #{strided_encoder.11} parent=0 // pred_fallthru
    _
  // Predicated region
  $region30: #{strided_encoder.11} parent=0 // pred_check
    _
  $region31: #{strided_encoder.11} parent=0 // pred_check_branch
    %4687 = sbr.rel (0) target = $region33
  $region32: #{strided_encoder.11} parent=0 // pred_region
    _
  $region33: #{strided_encoder.11} parent=0 // pred_fallthru
    _

// kernel: strided_encoder.12
$region0: #{strided_encoder.12}
  #allocation0 [shape = 'u32[]', space=smem, size = 0x4, offset = 0x4, fixed_abs, tag = 'smem constant byte address 0x4 - core index']
  #allocation1 [shape = 'u32[144,128]{1,0:T(1,128)}', space=vmem, size = 0x12000, scoped, tag = 'internal scratch']
  #allocation2 [shape = 'f32[128,128]{1,0:T(8,128)}', space=vmem, size = 0x10000, scoped, tag = 'scratch operand']
  %s0 = inlined_call_operand.vmem [shape: bf16[128,1152], index: 0, kind: input, shape index: {}]
  %s1 = inlined_call_operand.vmem [shape: bf16[1152,128], index: 1, kind: input, shape index: {}]
  %s2 = inlined_call_operand.vmem [shape: f32[1,128], index: 2, kind: input, shape index: {}]
  %s3 = inlined_call_operand.vmem [shape: f32[1,128], index: 3, kind: input, shape index: {}]
  %s4 = inlined_call_operand.vmem [shape: bf16[128,128], index: 4, kind: output, shape index: {}]
  %s5 = sld [smem:[#allocation0]]
  $region34: #{strided_encoder.12} parent=0
    _
  %s7 = ssub.s32 1, %s5
  %s8 = scalar_select 0, %s7, %s5
  // Predicated region
  $region2: #{strided_encoder.12} parent=0 // pred_check
    _
  $region3: #{strided_encoder.12} parent=0 // pred_check_branch
    %10 = sbr.rel (0) target = $region5
  $region4: #{strided_encoder.12} parent=0 // pred_region
    _
  $region5: #{strided_encoder.12} parent=0 // pred_fallthru
    _
  // Predicated region
  $region6: #{strided_encoder.12} parent=0 // pred_check
    _
  $region7: #{strided_encoder.12} parent=0 // pred_check_branch
    %12 = sbr.rel (0) target = $region9
  $region8: #{strided_encoder.12} parent=0 // pred_region
    _
  $region9: #{strided_encoder.12} parent=0 // pred_fallthru
    _
  // Predicated region
  $region10: #{strided_encoder.12} parent=0 // pred_check
    _
  $region11: #{strided_encoder.12} parent=0 // pred_check_branch
    %14 = sbr.rel (0) target = $region13
  $region12: #{strided_encoder.12} parent=0 // pred_region
    _
  $region13: #{strided_encoder.12} parent=0 // pred_fallthru
    _
  // Predicated region
  $region14: #{strided_encoder.12} parent=0 // pred_check
    _
  $region15: #{strided_encoder.12} parent=0 // pred_check_branch
    %16 = sbr.rel (0) target = $region17
  $region16: #{strided_encoder.12} parent=0 // pred_region
    _
  $region17: #{strided_encoder.12} parent=0 // pred_fallthru
    _
  %p18 = scmp.eq.s32.totalorder 0, 0
  // Predicated region
  $region18: #{strided_encoder.12} parent=0 // pred_check
    %p19 = pneg %p18
  $region19: #{strided_encoder.12} parent=0 // pred_check_branch
    %21 = sbr.rel (%p19) target = $region21
  $region20: #{strided_encoder.12} parent=0 // pred_region
    %22 = vst [vmem:[#allocation2] sm:$0xff] 0.0
    %23 = vst [vmem:[#allocation2 + $0x8] sm:$0xff] 0.0
    %24 = vst [vmem:[#allocation2 + $0x10] sm:$0xff] 0.0
    %25 = vst [vmem:[#allocation2 + $0x18] sm:$0xff] 0.0
    %26 = vst [vmem:[#allocation2 + $0x20] sm:$0xff] 0.0
    %27 = vst [vmem:[#allocation2 + $0x28] sm:$0xff] 0.0
    %28 = vst [vmem:[#allocation2 + $0x30] sm:$0xff] 0.0
    %29 = vst [vmem:[#allocation2 + $0x38] sm:$0xff] 0.0
    %30 = vst [vmem:[#allocation2 + $0x40] sm:$0xff] 0.0
    %31 = vst [vmem:[#allocation2 + $0x48] sm:$0xff] 0.0
    %32 = vst [vmem:[#allocation2 + $0x50] sm:$0xff] 0.0
    %33 = vst [vmem:[#allocation2 + $0x58] sm:$0xff] 0.0
    %34 = vst [vmem:[#allocation2 + $0x60] sm:$0xff] 0.0
    %35 = vst [vmem:[#allocation2 + $0x68] sm:$0xff] 0.0
    %36 = vst [vmem:[#allocation2 + $0x70] sm:$0xff] 0.0
    %37 = vst [vmem:[#allocation2 + $0x78] sm:$0xff] 0.0
  $region21: #{strided_encoder.12} parent=0 // pred_fallthru
    _
  %v38 = vld [vmem:[#allocation2] sm:$0xff]
  %v39 = vld [vmem:[#allocation2 + $0x8] sm:$0xff]
  %v40 = vld [vmem:[#allocation2 + $0x10] sm:$0xff]
  %v41 = vld [vmem:[#allocation2 + $0x18] sm:$0xff]
  %v42 = vld [vmem:[#allocation2 + $0x20] sm:$0xff]
  %v43 = vld [vmem:[#allocation2 + $0x28] sm:$0xff]
  %v44 = vld [vmem:[#allocation2 + $0x30] sm:$0xff]
  %v45 = vld [vmem:[#allocation2 + $0x38] sm:$0xff]
  %v46 = vld [vmem:[#allocation2 + $0x40] sm:$0xff]
  %v47 = vld [vmem:[#allocation2 + $0x48] sm:$0xff]
  %v48 = vld [vmem:[#allocation2 + $0x50] sm:$0xff]
  %v49 = vld [vmem:[#allocation2 + $0x58] sm:$0xff]
  %v50 = vld [vmem:[#allocation2 + $0x60] sm:$0xff]
  %v51 = vld [vmem:[#allocation2 + $0x68] sm:$0xff]
  %v52 = vld [vmem:[#allocation2 + $0x70] sm:$0xff]
  %v53 = vld [vmem:[#allocation2 + $0x78] sm:$0xff]
  %v54 = vld [vmem:[%s0] sm:$0xff]
  %v55 = vld [vmem:[%s0 + $0x8] sm:$0xff]
  %v56 = vld [vmem:[%s0 + $0x10] sm:$0xff]
  %v57 = vld [vmem:[%s0 + $0x18] sm:$0xff]
  %v58 = vld [vmem:[%s0 + $0x20] sm:$0xf]
  %v59 = vld [vmem:[%s0 + $0x24] sm:$0xff]
  %v60 = vld [vmem:[%s0 + $0x2c] sm:$0xff]
  %v61 = vld [vmem:[%s0 + $0x34] sm:$0xff]
  %v62 = vld [vmem:[%s0 + $0x3c] sm:$0xff]
  %v63 = vld [vmem:[%s0 + $0x44] sm:$0xf]
  %v64 = vld [vmem:[%s0 + $0x48] sm:$0xff]
  %v65 = vld [vmem:[%s0 + $0x50] sm:$0xff]
  %v66 = vld [vmem:[%s0 + $0x58] sm:$0xff]
  %v67 = vld [vmem:[%s0 + $0x60] sm:$0xff]
  %v68 = vld [vmem:[%s0 + $0x68] sm:$0xf]
  %v69 = vld [vmem:[%s0 + $0x6c] sm:$0xff]
  %v70 = vld [vmem:[%s0 + $0x74] sm:$0xff]
  %v71 = vld [vmem:[%s0 + $0x7c] sm:$0xff]
  %v72 = vld [vmem:[%s0 + $0x84] sm:$0xff]
  %v73 = vld [vmem:[%s0 + $0x8c] sm:$0xf]
  %v74 = vld [vmem:[%s0 + $0x90] sm:$0xff]
  %v75 = vld [vmem:[%s0 + $0x98] sm:$0xff]
  %v76 = vld [vmem:[%s0 + $0xa0] sm:$0xff]
  %v77 = vld [vmem:[%s0 + $0xa8] sm:$0xff]
  %v78 = vld [vmem:[%s0 + $0xb0] sm:$0xf]
  %v79 = vld [vmem:[%s0 + $0xb4] sm:$0xff]
  %v80 = vld [vmem:[%s0 + $0xbc] sm:$0xff]
  %v81 = vld [vmem:[%s0 + $0xc4] sm:$0xff]
  %v82 = vld [vmem:[%s0 + $0xcc] sm:$0xff]
  %v83 = vld [vmem:[%s0 + $0xd4] sm:$0xf]
  %v84 = vld [vmem:[%s0 + $0xd8] sm:$0xff]
  %v85 = vld [vmem:[%s0 + $0xe0] sm:$0xff]
  %v86 = vld [vmem:[%s0 + $0xe8] sm:$0xff]
  %v87 = vld [vmem:[%s0 + $0xf0] sm:$0xff]
  %v88 = vld [vmem:[%s0 + $0xf8] sm:$0xf]
  %v89 = vld [vmem:[%s0 + $0xfc] sm:$0xff]
  %v90 = vld [vmem:[%s0 + $0x104] sm:$0xff]
  %v91 = vld [vmem:[%s0 + $0x10c] sm:$0xff]
  %v92 = vld [vmem:[%s0 + $0x114] sm:$0xff]
  %v93 = vld [vmem:[%s0 + $0x11c] sm:$0xf]
  %v94 = vld [vmem:[%s0 + $0x120] sm:$0xff]
  %v95 = vld [vmem:[%s0 + $0x128] sm:$0xff]
  %v96 = vld [vmem:[%s0 + $0x130] sm:$0xff]
  %v97 = vld [vmem:[%s0 + $0x138] sm:$0xff]
  %v98 = vld [vmem:[%s0 + $0x140] sm:$0xf]
  %v99 = vld [vmem:[%s0 + $0x144] sm:$0xff]
  %v100 = vld [vmem:[%s0 + $0x14c] sm:$0xff]
  %v101 = vld [vmem:[%s0 + $0x154] sm:$0xff]
  %v102 = vld [vmem:[%s0 + $0x15c] sm:$0xff]
  %v103 = vld [vmem:[%s0 + $0x164] sm:$0xf]
  %v104 = vld [vmem:[%s0 + $0x168] sm:$0xff]
  %v105 = vld [vmem:[%s0 + $0x170] sm:$0xff]
  %v106 = vld [vmem:[%s0 + $0x178] sm:$0xff]
  %v107 = vld [vmem:[%s0 + $0x180] sm:$0xff]
  %v108 = vld [vmem:[%s0 + $0x188] sm:$0xf]
  %v109 = vld [vmem:[%s0 + $0x18c] sm:$0xff]
  %v110 = vld [vmem:[%s0 + $0x194] sm:$0xff]
  %v111 = vld [vmem:[%s0 + $0x19c] sm:$0xff]
  %v112 = vld [vmem:[%s0 + $0x1a4] sm:$0xff]
  %v113 = vld [vmem:[%s0 + $0x1ac] sm:$0xf]
  %v114 = vld [vmem:[%s0 + $0x1b0] sm:$0xff]
  %v115 = vld [vmem:[%s0 + $0x1b8] sm:$0xff]
  %v116 = vld [vmem:[%s0 + $0x1c0] sm:$0xff]
  %v117 = vld [vmem:[%s0 + $0x1c8] sm:$0xff]
  %v118 = vld [vmem:[%s0 + $0x1d0] sm:$0xf]
  %v119 = vld [vmem:[%s0 + $0x1d4] sm:$0xff]
  %v120 = vld [vmem:[%s0 + $0x1dc] sm:$0xff]
  %v121 = vld [vmem:[%s0 + $0x1e4] sm:$0xff]
  %v122 = vld [vmem:[%s0 + $0x1ec] sm:$0xff]
  %v123 = vld [vmem:[%s0 + $0x1f4] sm:$0xf]
  %v124 = vld [vmem:[%s0 + $0x1f8] sm:$0xff]
  %v125 = vld [vmem:[%s0 + $0x200] sm:$0xff]
  %v126 = vld [vmem:[%s0 + $0x208] sm:$0xff]
  %v127 = vld [vmem:[%s0 + $0x210] sm:$0xff]
  %v128 = vld [vmem:[%s0 + $0x218] sm:$0xf]
  %v129 = vld [vmem:[%s0 + $0x21c] sm:$0xff]
  %v130 = vld [vmem:[%s0 + $0x224] sm:$0xff]
  %v131 = vld [vmem:[%s0 + $0x22c] sm:$0xff]
  %v132 = vld [vmem:[%s0 + $0x234] sm:$0xff]
  %v133 = vld [vmem:[%s0 + $0x23c] sm:$0xf]
  %v134 = vld [vmem:[%s1] sm:$0xf]
  %v135 = vld [vmem:[%s1 + $0x4] sm:$0xf]
  %v136 = vld [vmem:[%s1 + $0x8] sm:$0xf]
  %v137 = vld [vmem:[%s1 + $0xc] sm:$0xf]
  %v138 = vld [vmem:[%s1 + $0x10] sm:$0xf]
  %v139 = vld [vmem:[%s1 + $0x14] sm:$0xf]
  %v140 = vld [vmem:[%s1 + $0x18] sm:$0xf]
  %v141 = vld [vmem:[%s1 + $0x1c] sm:$0xf]
  %v142 = vld [vmem:[%s1 + $0x20] sm:$0xf]
  %v143 = vld [vmem:[%s1 + $0x24] sm:$0xf]
  %v144 = vld [vmem:[%s1 + $0x28] sm:$0xf]
  %v145 = vld [vmem:[%s1 + $0x2c] sm:$0xf]
  %v146 = vld [vmem:[%s1 + $0x30] sm:$0xf]
  %v147 = vld [vmem:[%s1 + $0x34] sm:$0xf]
  %v148 = vld [vmem:[%s1 + $0x38] sm:$0xf]
  %v149 = vld [vmem:[%s1 + $0x3c] sm:$0xf]
  %v150 = vld [vmem:[%s1 + $0x40] sm:$0xf]
  %v151 = vld [vmem:[%s1 + $0x44] sm:$0xf]
  %v152 = vld [vmem:[%s1 + $0x48] sm:$0xf]
  %v153 = vld [vmem:[%s1 + $0x4c] sm:$0xf]
  %v154 = vld [vmem:[%s1 + $0x50] sm:$0xf]
  %v155 = vld [vmem:[%s1 + $0x54] sm:$0xf]
  %v156 = vld [vmem:[%s1 + $0x58] sm:$0xf]
  %v157 = vld [vmem:[%s1 + $0x5c] sm:$0xf]
  %v158 = vld [vmem:[%s1 + $0x60] sm:$0xf]
  %v159 = vld [vmem:[%s1 + $0x64] sm:$0xf]
  %v160 = vld [vmem:[%s1 + $0x68] sm:$0xf]
  %v161 = vld [vmem:[%s1 + $0x6c] sm:$0xf]
  %v162 = vld [vmem:[%s1 + $0x70] sm:$0xf]
  %v163 = vld [vmem:[%s1 + $0x74] sm:$0xf]
  %v164 = vld [vmem:[%s1 + $0x78] sm:$0xf]
  %v165 = vld [vmem:[%s1 + $0x7c] sm:$0xf]
  %v166 = vld [vmem:[%s1 + $0x80] sm:$0xf]
  %v167 = vld [vmem:[%s1 + $0x84] sm:$0xf]
  %v168 = vld [vmem:[%s1 + $0x88] sm:$0xf]
  %v169 = vld [vmem:[%s1 + $0x8c] sm:$0xf]
  %v170 = vld [vmem:[%s1 + $0x90] sm:$0xf]
  %v171 = vld [vmem:[%s1 + $0x94] sm:$0xf]
  %v172 = vld [vmem:[%s1 + $0x98] sm:$0xf]
  %v173 = vld [vmem:[%s1 + $0x9c] sm:$0xf]
  %v174 = vld [vmem:[%s1 + $0xa0] sm:$0xf]
  %v175 = vld [vmem:[%s1 + $0xa4] sm:$0xf]
  %v176 = vld [vmem:[%s1 + $0xa8] sm:$0xf]
  %v177 = vld [vmem:[%s1 + $0xac] sm:$0xf]
  %v178 = vld [vmem:[%s1 + $0xb0] sm:$0xf]
  %v179 = vld [vmem:[%s1 + $0xb4] sm:$0xf]
  %v180 = vld [vmem:[%s1 + $0xb8] sm:$0xf]
  %v181 = vld [vmem:[%s1 + $0xbc] sm:$0xf]
  %v182 = vld [vmem:[%s1 + $0xc0] sm:$0xf]
  %v183 = vld [vmem:[%s1 + $0xc4] sm:$0xf]
  %v184 = vld [vmem:[%s1 + $0xc8] sm:$0xf]
  %v185 = vld [vmem:[%s1 + $0xcc] sm:$0xf]
  %v186 = vld [vmem:[%s1 + $0xd0] sm:$0xf]
  %v187 = vld [vmem:[%s1 + $0xd4] sm:$0xf]
  %v188 = vld [vmem:[%s1 + $0xd8] sm:$0xf]
  %v189 = vld [vmem:[%s1 + $0xdc] sm:$0xf]
  %v190 = vld [vmem:[%s1 + $0xe0] sm:$0xf]
  %v191 = vld [vmem:[%s1 + $0xe4] sm:$0xf]
  %v192 = vld [vmem:[%s1 + $0xe8] sm:$0xf]
  %v193 = vld [vmem:[%s1 + $0xec] sm:$0xf]
  %v194 = vld [vmem:[%s1 + $0xf0] sm:$0xf]
  %v195 = vld [vmem:[%s1 + $0xf4] sm:$0xf]
  %v196 = vld [vmem:[%s1 + $0xf8] sm:$0xf]
  %v197 = vld [vmem:[%s1 + $0xfc] sm:$0xf]
  %v198 = vld [vmem:[%s1 + $0x100] sm:$0xf]
  %v199 = vld [vmem:[%s1 + $0x104] sm:$0xf]
  %v200 = vld [vmem:[%s1 + $0x108] sm:$0xf]
  %v201 = vld [vmem:[%s1 + $0x10c] sm:$0xf]
  %v202 = vld [vmem:[%s1 + $0x110] sm:$0xf]
  %v203 = vld [vmem:[%s1 + $0x114] sm:$0xf]
  %v204 = vld [vmem:[%s1 + $0x118] sm:$0xf]
  %v205 = vld [vmem:[%s1 + $0x11c] sm:$0xf]
  %v206 = vld [vmem:[%s1 + $0x120] sm:$0xf]
  %v207 = vld [vmem:[%s1 + $0x124] sm:$0xf]
  %v208 = vld [vmem:[%s1 + $0x128] sm:$0xf]
  %v209 = vld [vmem:[%s1 + $0x12c] sm:$0xf]
  %v210 = vld [vmem:[%s1 + $0x130] sm:$0xf]
  %v211 = vld [vmem:[%s1 + $0x134] sm:$0xf]
  %v212 = vld [vmem:[%s1 + $0x138] sm:$0xf]
  %v213 = vld [vmem:[%s1 + $0x13c] sm:$0xf]
  %v214 = vld [vmem:[%s1 + $0x140] sm:$0xf]
  %v215 = vld [vmem:[%s1 + $0x144] sm:$0xf]
  %v216 = vld [vmem:[%s1 + $0x148] sm:$0xf]
  %v217 = vld [vmem:[%s1 + $0x14c] sm:$0xf]
  %v218 = vld [vmem:[%s1 + $0x150] sm:$0xf]
  %v219 = vld [vmem:[%s1 + $0x154] sm:$0xf]
  %v220 = vld [vmem:[%s1 + $0x158] sm:$0xf]
  %v221 = vld [vmem:[%s1 + $0x15c] sm:$0xf]
  %v222 = vld [vmem:[%s1 + $0x160] sm:$0xf]
  %v223 = vld [vmem:[%s1 + $0x164] sm:$0xf]
  %v224 = vld [vmem:[%s1 + $0x168] sm:$0xf]
  %v225 = vld [vmem:[%s1 + $0x16c] sm:$0xf]
  %v226 = vld [vmem:[%s1 + $0x170] sm:$0xf]
  %v227 = vld [vmem:[%s1 + $0x174] sm:$0xf]
  %v228 = vld [vmem:[%s1 + $0x178] sm:$0xf]
  %v229 = vld [vmem:[%s1 + $0x17c] sm:$0xf]
  %v230 = vld [vmem:[%s1 + $0x180] sm:$0xf]
  %v231 = vld [vmem:[%s1 + $0x184] sm:$0xf]
  %v232 = vld [vmem:[%s1 + $0x188] sm:$0xf]
  %v233 = vld [vmem:[%s1 + $0x18c] sm:$0xf]
  %v234 = vld [vmem:[%s1 + $0x190] sm:$0xf]
  %v235 = vld [vmem:[%s1 + $0x194] sm:$0xf]
  %v236 = vld [vmem:[%s1 + $0x198] sm:$0xf]
  %v237 = vld [vmem:[%s1 + $0x19c] sm:$0xf]
  %v238 = vld [vmem:[%s1 + $0x1a0] sm:$0xf]
  %v239 = vld [vmem:[%s1 + $0x1a4] sm:$0xf]
  %v240 = vld [vmem:[%s1 + $0x1a8] sm:$0xf]
  %v241 = vld [vmem:[%s1 + $0x1ac] sm:$0xf]
  %v242 = vld [vmem:[%s1 + $0x1b0] sm:$0xf]
  %v243 = vld [vmem:[%s1 + $0x1b4] sm:$0xf]
  %v244 = vld [vmem:[%s1 + $0x1b8] sm:$0xf]
  %v245 = vld [vmem:[%s1 + $0x1bc] sm:$0xf]
  %v246 = vld [vmem:[%s1 + $0x1c0] sm:$0xf]
  %v247 = vld [vmem:[%s1 + $0x1c4] sm:$0xf]
  %v248 = vld [vmem:[%s1 + $0x1c8] sm:$0xf]
  %v249 = vld [vmem:[%s1 + $0x1cc] sm:$0xf]
  %v250 = vld [vmem:[%s1 + $0x1d0] sm:$0xf]
  %v251 = vld [vmem:[%s1 + $0x1d4] sm:$0xf]
  %v252 = vld [vmem:[%s1 + $0x1d8] sm:$0xf]
  %v253 = vld [vmem:[%s1 + $0x1dc] sm:$0xf]
  %v254 = vld [vmem:[%s1 + $0x1e0] sm:$0xf]
  %v255 = vld [vmem:[%s1 + $0x1e4] sm:$0xf]
  %v256 = vld [vmem:[%s1 + $0x1e8] sm:$0xf]
  %v257 = vld [vmem:[%s1 + $0x1ec] sm:$0xf]
  %v258 = vld [vmem:[%s1 + $0x1f0] sm:$0xf]
  %v259 = vld [vmem:[%s1 + $0x1f4] sm:$0xf]
  %v260 = vld [vmem:[%s1 + $0x1f8] sm:$0xf]
  %v261 = vld [vmem:[%s1 + $0x1fc] sm:$0xf]
  %v262 = vld [vmem:[%s1 + $0x200] sm:$0xf]
  %v263 = vld [vmem:[%s1 + $0x204] sm:$0xf]
  %v264 = vld [vmem:[%s1 + $0x208] sm:$0xf]
  %v265 = vld [vmem:[%s1 + $0x20c] sm:$0xf]
  %v266 = vld [vmem:[%s1 + $0x210] sm:$0xf]
  %v267 = vld [vmem:[%s1 + $0x214] sm:$0xf]
  %v268 = vld [vmem:[%s1 + $0x218] sm:$0xf]
  %v269 = vld [vmem:[%s1 + $0x21c] sm:$0xf]
  %v270 = vld [vmem:[%s1 + $0x220] sm:$0xf]
  %v271 = vld [vmem:[%s1 + $0x224] sm:$0xf]
  %v272 = vld [vmem:[%s1 + $0x228] sm:$0xf]
  %v273 = vld [vmem:[%s1 + $0x22c] sm:$0xf]
  %v274 = vld [vmem:[%s1 + $0x230] sm:$0xf]
  %v275 = vld [vmem:[%s1 + $0x234] sm:$0xf]
  %v276 = vld [vmem:[%s1 + $0x238] sm:$0xf]
  %v277 = vld [vmem:[%s1 + $0x23c] sm:$0xf]
  %v358 = vunpack.c.l.b16 %v54
  %v359 = vunpack.c.h.b16 %v54
  %v360 = vunpack.c.l.b16 %v55
  %v361 = vunpack.c.h.b16 %v55
  %v362 = vunpack.c.l.b16 %v56
  %v363 = vunpack.c.h.b16 %v56
  %v364 = vunpack.c.l.b16 %v57
  %v365 = vunpack.c.h.b16 %v57
  %v366 = vunpack.c.l.b16 %v58
  %v367 = vunpack.c.l.b16 %v59
  %v368 = vunpack.c.h.b16 %v59
  %v369 = vunpack.c.l.b16 %v60
  %v370 = vunpack.c.h.b16 %v60
  %v371 = vunpack.c.l.b16 %v61
  %v372 = vunpack.c.h.b16 %v61
  %v373 = vunpack.c.l.b16 %v62
  %v374 = vunpack.c.h.b16 %v62
  %v375 = vunpack.c.l.b16 %v63
  %v376 = vunpack.c.l.b16 %v64
  %v377 = vunpack.c.h.b16 %v64
  %v378 = vunpack.c.l.b16 %v65
  %v379 = vunpack.c.h.b16 %v65
  %v380 = vunpack.c.l.b16 %v66
  %v381 = vunpack.c.h.b16 %v66
  %v382 = vunpack.c.l.b16 %v67
  %v383 = vunpack.c.h.b16 %v67
  %v384 = vunpack.c.l.b16 %v68
  %v385 = vunpack.c.l.b16 %v69
  %v386 = vunpack.c.h.b16 %v69
  %v387 = vunpack.c.l.b16 %v70
  %v388 = vunpack.c.h.b16 %v70
  %v389 = vunpack.c.l.b16 %v71
  %v390 = vunpack.c.h.b16 %v71
  %v391 = vunpack.c.l.b16 %v72
  %v392 = vunpack.c.h.b16 %v72
  %v393 = vunpack.c.l.b16 %v73
  %v394 = vunpack.c.l.b16 %v74
  %v395 = vunpack.c.h.b16 %v74
  %v396 = vunpack.c.l.b16 %v75
  %v397 = vunpack.c.h.b16 %v75
  %v398 = vunpack.c.l.b16 %v76
  %v399 = vunpack.c.h.b16 %v76
  %v400 = vunpack.c.l.b16 %v77
  %v401 = vunpack.c.h.b16 %v77
  %v402 = vunpack.c.l.b16 %v78
  %v403 = vunpack.c.l.b16 %v79
  %v404 = vunpack.c.h.b16 %v79
  %v405 = vunpack.c.l.b16 %v80
  %v406 = vunpack.c.h.b16 %v80
  %v407 = vunpack.c.l.b16 %v81
  %v408 = vunpack.c.h.b16 %v81
  %v409 = vunpack.c.l.b16 %v82
  %v410 = vunpack.c.h.b16 %v82
  %v411 = vunpack.c.l.b16 %v83
  %v412 = vunpack.c.l.b16 %v84
  %v413 = vunpack.c.h.b16 %v84
  %v414 = vunpack.c.l.b16 %v85
  %v415 = vunpack.c.h.b16 %v85
  %v416 = vunpack.c.l.b16 %v86
  %v417 = vunpack.c.h.b16 %v86
  %v418 = vunpack.c.l.b16 %v87
  %v419 = vunpack.c.h.b16 %v87
  %v420 = vunpack.c.l.b16 %v88
  %v421 = vunpack.c.l.b16 %v89
  %v422 = vunpack.c.h.b16 %v89
  %v423 = vunpack.c.l.b16 %v90
  %v424 = vunpack.c.h.b16 %v90
  %v425 = vunpack.c.l.b16 %v91
  %v426 = vunpack.c.h.b16 %v91
  %v427 = vunpack.c.l.b16 %v92
  %v428 = vunpack.c.h.b16 %v92
  %v429 = vunpack.c.l.b16 %v93
  %v430 = vunpack.c.l.b16 %v94
  %v431 = vunpack.c.h.b16 %v94
  %v432 = vunpack.c.l.b16 %v95
  %v433 = vunpack.c.h.b16 %v95
  %v434 = vunpack.c.l.b16 %v96
  %v435 = vunpack.c.h.b16 %v96
  %v436 = vunpack.c.l.b16 %v97
  %v437 = vunpack.c.h.b16 %v97
  %v438 = vunpack.c.l.b16 %v98
  %v439 = vunpack.c.l.b16 %v99
  %v440 = vunpack.c.h.b16 %v99
  %v441 = vunpack.c.l.b16 %v100
  %v442 = vunpack.c.h.b16 %v100
  %v443 = vunpack.c.l.b16 %v101
  %v444 = vunpack.c.h.b16 %v101
  %v445 = vunpack.c.l.b16 %v102
  %v446 = vunpack.c.h.b16 %v102
  %v447 = vunpack.c.l.b16 %v103
  %v448 = vunpack.c.l.b16 %v104
  %v449 = vunpack.c.h.b16 %v104
  %v450 = vunpack.c.l.b16 %v105
  %v451 = vunpack.c.h.b16 %v105
  %v452 = vunpack.c.l.b16 %v106
  %v453 = vunpack.c.h.b16 %v106
  %v454 = vunpack.c.l.b16 %v107
  %v455 = vunpack.c.h.b16 %v107
  %v456 = vunpack.c.l.b16 %v108
  %v457 = vunpack.c.l.b16 %v109
  %v458 = vunpack.c.h.b16 %v109
  %v459 = vunpack.c.l.b16 %v110
  %v460 = vunpack.c.h.b16 %v110
  %v461 = vunpack.c.l.b16 %v111
  %v462 = vunpack.c.h.b16 %v111
  %v463 = vunpack.c.l.b16 %v112
  %v464 = vunpack.c.h.b16 %v112
  %v465 = vunpack.c.l.b16 %v113
  %v466 = vunpack.c.l.b16 %v114
  %v467 = vunpack.c.h.b16 %v114
  %v468 = vunpack.c.l.b16 %v115
  %v469 = vunpack.c.h.b16 %v115
  %v470 = vunpack.c.l.b16 %v116
  %v471 = vunpack.c.h.b16 %v116
  %v472 = vunpack.c.l.b16 %v117
  %v473 = vunpack.c.h.b16 %v117
  %v474 = vunpack.c.l.b16 %v118
  %v475 = vunpack.c.l.b16 %v119
  %v476 = vunpack.c.h.b16 %v119
  %v477 = vunpack.c.l.b16 %v120
  %v478 = vunpack.c.h.b16 %v120
  %v479 = vunpack.c.l.b16 %v121
  %v480 = vunpack.c.h.b16 %v121
  %v481 = vunpack.c.l.b16 %v122
  %v482 = vunpack.c.h.b16 %v122
  %v483 = vunpack.c.l.b16 %v123
  %v484 = vunpack.c.l.b16 %v124
  %v485 = vunpack.c.h.b16 %v124
  %v486 = vunpack.c.l.b16 %v125
  %v487 = vunpack.c.h.b16 %v125
  %v488 = vunpack.c.l.b16 %v126
  %v489 = vunpack.c.h.b16 %v126
  %v490 = vunpack.c.l.b16 %v127
  %v491 = vunpack.c.h.b16 %v127
  %v492 = vunpack.c.l.b16 %v128
  %v493 = vunpack.c.l.b16 %v129
  %v494 = vunpack.c.h.b16 %v129
  %v495 = vunpack.c.l.b16 %v130
  %v496 = vunpack.c.h.b16 %v130
  %v497 = vunpack.c.l.b16 %v131
  %v498 = vunpack.c.h.b16 %v131
  %v499 = vunpack.c.l.b16 %v132
  %v500 = vunpack.c.h.b16 %v132
  %v501 = vunpack.c.l.b16 %v133
  %v502 = vpack.c.b16 %v367, %v358
  %v503 = vpack.c.b16 %v368, %v359
  %v504 = vpack.c.b16 %v369, %v360
  %v505 = vpack.c.b16 %v370, %v361
  %v506 = vpack.c.b16 %v371, %v362
  %v507 = vpack.c.b16 %v372, %v363
  %v508 = vpack.c.b16 %v373, %v364
  %v509 = vpack.c.b16 %v374, %v365
  %v510 = vpack.c.b16 %v375, %v366
  %v511 = vpack.c.b16 %v385, %v376
  %v512 = vpack.c.b16 %v386, %v377
  %v513 = vpack.c.b16 %v387, %v378
  %v514 = vpack.c.b16 %v388, %v379
  %v515 = vpack.c.b16 %v389, %v380
  %v516 = vpack.c.b16 %v390, %v381
  %v517 = vpack.c.b16 %v391, %v382
  %v518 = vpack.c.b16 %v392, %v383
  %v519 = vpack.c.b16 %v393, %v384
  %v520 = vpack.c.b16 %v403, %v394
  %v521 = vpack.c.b16 %v404, %v395
  %v522 = vpack.c.b16 %v405, %v396
  %v523 = vpack.c.b16 %v406, %v397
  %v524 = vpack.c.b16 %v407, %v398
  %v525 = vpack.c.b16 %v408, %v399
  %v526 = vpack.c.b16 %v409, %v400
  %v527 = vpack.c.b16 %v410, %v401
  %v528 = vpack.c.b16 %v411, %v402
  %v529 = vpack.c.b16 %v421, %v412
  %v530 = vpack.c.b16 %v422, %v413
  %v531 = vpack.c.b16 %v423, %v414
  %v532 = vpack.c.b16 %v424, %v415
  %v533 = vpack.c.b16 %v425, %v416
  %v534 = vpack.c.b16 %v426, %v417
  %v535 = vpack.c.b16 %v427, %v418
  %v536 = vpack.c.b16 %v428, %v419
  %v537 = vpack.c.b16 %v429, %v420
  %v538 = vpack.c.b16 %v439, %v430
  %v539 = vpack.c.b16 %v440, %v431
  %v540 = vpack.c.b16 %v441, %v432
  %v541 = vpack.c.b16 %v442, %v433
  %v542 = vpack.c.b16 %v443, %v434
  %v543 = vpack.c.b16 %v444, %v435
  %v544 = vpack.c.b16 %v445, %v436
  %v545 = vpack.c.b16 %v446, %v437
  %v546 = vpack.c.b16 %v447, %v438
  %v547 = vpack.c.b16 %v457, %v448
  %v548 = vpack.c.b16 %v458, %v449
  %v549 = vpack.c.b16 %v459, %v450
  %v550 = vpack.c.b16 %v460, %v451
  %v551 = vpack.c.b16 %v461, %v452
  %v552 = vpack.c.b16 %v462, %v453
  %v553 = vpack.c.b16 %v463, %v454
  %v554 = vpack.c.b16 %v464, %v455
  %v555 = vpack.c.b16 %v465, %v456
  %v556 = vpack.c.b16 %v475, %v466
  %v557 = vpack.c.b16 %v476, %v467
  %v558 = vpack.c.b16 %v477, %v468
  %v559 = vpack.c.b16 %v478, %v469
  %v560 = vpack.c.b16 %v479, %v470
  %v561 = vpack.c.b16 %v480, %v471
  %v562 = vpack.c.b16 %v481, %v472
  %v563 = vpack.c.b16 %v482, %v473
  %v564 = vpack.c.b16 %v483, %v474
  %v565 = vpack.c.b16 %v493, %v484
  %v566 = vpack.c.b16 %v494, %v485
  %v567 = vpack.c.b16 %v495, %v486
  %v568 = vpack.c.b16 %v496, %v487
  %v569 = vpack.c.b16 %v497, %v488
  %v570 = vpack.c.b16 %v498, %v489
  %v571 = vpack.c.b16 %v499, %v490
  %v572 = vpack.c.b16 %v500, %v491
  %v573 = vpack.c.b16 %v501, %v492
  %v790 = vunpack.c.l.b16 %v134
  %v791 = vunpack.c.l.b16 %v135
  %v792 = vunpack.c.l.b16 %v136
  %v793 = vunpack.c.l.b16 %v137
  %v794 = vunpack.c.l.b16 %v138
  %v795 = vunpack.c.l.b16 %v139
  %v796 = vunpack.c.l.b16 %v140
  %v797 = vunpack.c.l.b16 %v141
  %v798 = vunpack.c.l.b16 %v142
  %v799 = vunpack.c.l.b16 %v143
  %v800 = vunpack.c.l.b16 %v144
  %v801 = vunpack.c.l.b16 %v145
  %v802 = vunpack.c.l.b16 %v146
  %v803 = vunpack.c.l.b16 %v147
  %v804 = vunpack.c.l.b16 %v148
  %v805 = vunpack.c.l.b16 %v149
  %v806 = vunpack.c.l.b16 %v150
  %v807 = vunpack.c.l.b16 %v151
  %v808 = vunpack.c.l.b16 %v152
  %v809 = vunpack.c.l.b16 %v153
  %v810 = vunpack.c.l.b16 %v154
  %v811 = vunpack.c.l.b16 %v155
  %v812 = vunpack.c.l.b16 %v156
  %v813 = vunpack.c.l.b16 %v157
  %v814 = vunpack.c.l.b16 %v158
  %v815 = vunpack.c.l.b16 %v159
  %v816 = vunpack.c.l.b16 %v160
  %v817 = vunpack.c.l.b16 %v161
  %v818 = vunpack.c.l.b16 %v162
  %v819 = vunpack.c.l.b16 %v163
  %v820 = vunpack.c.l.b16 %v164
  %v821 = vunpack.c.l.b16 %v165
  %v822 = vunpack.c.l.b16 %v166
  %v823 = vunpack.c.l.b16 %v167
  %v824 = vunpack.c.l.b16 %v168
  %v825 = vunpack.c.l.b16 %v169
  %v826 = vunpack.c.l.b16 %v170
  %v827 = vunpack.c.l.b16 %v171
  %v828 = vunpack.c.l.b16 %v172
  %v829 = vunpack.c.l.b16 %v173
  %v830 = vunpack.c.l.b16 %v174
  %v831 = vunpack.c.l.b16 %v175
  %v832 = vunpack.c.l.b16 %v176
  %v833 = vunpack.c.l.b16 %v177
  %v834 = vunpack.c.l.b16 %v178
  %v835 = vunpack.c.l.b16 %v179
  %v836 = vunpack.c.l.b16 %v180
  %v837 = vunpack.c.l.b16 %v181
  %v838 = vunpack.c.l.b16 %v182
  %v839 = vunpack.c.l.b16 %v183
  %v840 = vunpack.c.l.b16 %v184
  %v841 = vunpack.c.l.b16 %v185
  %v842 = vunpack.c.l.b16 %v186
  %v843 = vunpack.c.l.b16 %v187
  %v844 = vunpack.c.l.b16 %v188
  %v845 = vunpack.c.l.b16 %v189
  %v846 = vunpack.c.l.b16 %v190
  %v847 = vunpack.c.l.b16 %v191
  %v848 = vunpack.c.l.b16 %v192
  %v849 = vunpack.c.l.b16 %v193
  %v850 = vunpack.c.l.b16 %v194
  %v851 = vunpack.c.l.b16 %v195
  %v852 = vunpack.c.l.b16 %v196
  %v853 = vunpack.c.l.b16 %v197
  %v854 = vunpack.c.l.b16 %v198
  %v855 = vunpack.c.l.b16 %v199
  %v856 = vunpack.c.l.b16 %v200
  %v857 = vunpack.c.l.b16 %v201
  %v858 = vunpack.c.l.b16 %v202
  %v859 = vunpack.c.l.b16 %v203
  %v860 = vunpack.c.l.b16 %v204
  %v861 = vunpack.c.l.b16 %v205
  %v862 = vunpack.c.l.b16 %v206
  %v863 = vunpack.c.l.b16 %v207
  %v864 = vunpack.c.l.b16 %v208
  %v865 = vunpack.c.l.b16 %v209
  %v866 = vunpack.c.l.b16 %v210
  %v867 = vunpack.c.l.b16 %v211
  %v868 = vunpack.c.l.b16 %v212
  %v869 = vunpack.c.l.b16 %v213
  %v870 = vunpack.c.l.b16 %v214
  %v871 = vunpack.c.l.b16 %v215
  %v872 = vunpack.c.l.b16 %v216
  %v873 = vunpack.c.l.b16 %v217
  %v874 = vunpack.c.l.b16 %v218
  %v875 = vunpack.c.l.b16 %v219
  %v876 = vunpack.c.l.b16 %v220
  %v877 = vunpack.c.l.b16 %v221
  %v878 = vunpack.c.l.b16 %v222
  %v879 = vunpack.c.l.b16 %v223
  %v880 = vunpack.c.l.b16 %v224
  %v881 = vunpack.c.l.b16 %v225
  %v882 = vunpack.c.l.b16 %v226
  %v883 = vunpack.c.l.b16 %v227
  %v884 = vunpack.c.l.b16 %v228
  %v885 = vunpack.c.l.b16 %v229
  %v886 = vunpack.c.l.b16 %v230
  %v887 = vunpack.c.l.b16 %v231
  %v888 = vunpack.c.l.b16 %v232
  %v889 = vunpack.c.l.b16 %v233
  %v890 = vunpack.c.l.b16 %v234
  %v891 = vunpack.c.l.b16 %v235
  %v892 = vunpack.c.l.b16 %v236
  %v893 = vunpack.c.l.b16 %v237
  %v894 = vunpack.c.l.b16 %v238
  %v895 = vunpack.c.l.b16 %v239
  %v896 = vunpack.c.l.b16 %v240
  %v897 = vunpack.c.l.b16 %v241
  %v898 = vunpack.c.l.b16 %v242
  %v899 = vunpack.c.l.b16 %v243
  %v900 = vunpack.c.l.b16 %v244
  %v901 = vunpack.c.l.b16 %v245
  %v902 = vunpack.c.l.b16 %v246
  %v903 = vunpack.c.l.b16 %v247
  %v904 = vunpack.c.l.b16 %v248
  %v905 = vunpack.c.l.b16 %v249
  %v906 = vunpack.c.l.b16 %v250
  %v907 = vunpack.c.l.b16 %v251
  %v908 = vunpack.c.l.b16 %v252
  %v909 = vunpack.c.l.b16 %v253
  %v910 = vunpack.c.l.b16 %v254
  %v911 = vunpack.c.l.b16 %v255
  %v912 = vunpack.c.l.b16 %v256
  %v913 = vunpack.c.l.b16 %v257
  %v914 = vunpack.c.l.b16 %v258
  %v915 = vunpack.c.l.b16 %v259
  %v916 = vunpack.c.l.b16 %v260
  %v917 = vunpack.c.l.b16 %v261
  %v918 = vunpack.c.l.b16 %v262
  %v919 = vunpack.c.l.b16 %v263
  %v920 = vunpack.c.l.b16 %v264
  %v921 = vunpack.c.l.b16 %v265
  %v922 = vunpack.c.l.b16 %v266
  %v923 = vunpack.c.l.b16 %v267
  %v924 = vunpack.c.l.b16 %v268
  %v925 = vunpack.c.l.b16 %v269
  %v926 = vunpack.c.l.b16 %v270
  %v927 = vunpack.c.l.b16 %v271
  %v928 = vunpack.c.l.b16 %v272
  %v929 = vunpack.c.l.b16 %v273
  %v930 = vunpack.c.l.b16 %v274
  %v931 = vunpack.c.l.b16 %v275
  %v932 = vunpack.c.l.b16 %v276
  %v933 = vunpack.c.l.b16 %v277
  %v934 = vpack.c.b16 %v791, %v790
  %v935 = vpack.c.b16 %v793, %v792
  %v936 = vpack.c.b16 %v795, %v794
  %v937 = vpack.c.b16 %v797, %v796
  %v938 = vpack.c.b16 %v799, %v798
  %v939 = vpack.c.b16 %v801, %v800
  %v940 = vpack.c.b16 %v803, %v802
  %v941 = vpack.c.b16 %v805, %v804
  %v942 = vpack.c.b16 %v807, %v806
  %v943 = vpack.c.b16 %v809, %v808
  %v944 = vpack.c.b16 %v811, %v810
  %v945 = vpack.c.b16 %v813, %v812
  %v946 = vpack.c.b16 %v815, %v814
  %v947 = vpack.c.b16 %v817, %v816
  %v948 = vpack.c.b16 %v819, %v818
  %v949 = vpack.c.b16 %v821, %v820
  %v950 = vpack.c.b16 %v823, %v822
  %v951 = vpack.c.b16 %v825, %v824
  %v952 = vpack.c.b16 %v827, %v826
  %v953 = vpack.c.b16 %v829, %v828
  %v954 = vpack.c.b16 %v831, %v830
  %v955 = vpack.c.b16 %v833, %v832
  %v956 = vpack.c.b16 %v835, %v834
  %v957 = vpack.c.b16 %v837, %v836
  %v958 = vpack.c.b16 %v839, %v838
  %v959 = vpack.c.b16 %v841, %v840
  %v960 = vpack.c.b16 %v843, %v842
  %v961 = vpack.c.b16 %v845, %v844
  %v962 = vpack.c.b16 %v847, %v846
  %v963 = vpack.c.b16 %v849, %v848
  %v964 = vpack.c.b16 %v851, %v850
  %v965 = vpack.c.b16 %v853, %v852
  %v966 = vpack.c.b16 %v855, %v854
  %v967 = vpack.c.b16 %v857, %v856
  %v968 = vpack.c.b16 %v859, %v858
  %v969 = vpack.c.b16 %v861, %v860
  %v970 = vpack.c.b16 %v863, %v862
  %v971 = vpack.c.b16 %v865, %v864
  %v972 = vpack.c.b16 %v867, %v866
  %v973 = vpack.c.b16 %v869, %v868
  %v974 = vpack.c.b16 %v871, %v870
  %v975 = vpack.c.b16 %v873, %v872
  %v976 = vpack.c.b16 %v875, %v874
  %v977 = vpack.c.b16 %v877, %v876
  %v978 = vpack.c.b16 %v879, %v878
  %v979 = vpack.c.b16 %v881, %v880
  %v980 = vpack.c.b16 %v883, %v882
  %v981 = vpack.c.b16 %v885, %v884
  %v982 = vpack.c.b16 %v887, %v886
  %v983 = vpack.c.b16 %v889, %v888
  %v984 = vpack.c.b16 %v891, %v890
  %v985 = vpack.c.b16 %v893, %v892
  %v986 = vpack.c.b16 %v895, %v894
  %v987 = vpack.c.b16 %v897, %v896
  %v988 = vpack.c.b16 %v899, %v898
  %v989 = vpack.c.b16 %v901, %v900
  %v990 = vpack.c.b16 %v903, %v902
  %v991 = vpack.c.b16 %v905, %v904
  %v992 = vpack.c.b16 %v907, %v906
  %v993 = vpack.c.b16 %v909, %v908
  %v994 = vpack.c.b16 %v911, %v910
  %v995 = vpack.c.b16 %v913, %v912
  %v996 = vpack.c.b16 %v915, %v914
  %v997 = vpack.c.b16 %v917, %v916
  %v998 = vpack.c.b16 %v919, %v918
  %v999 = vpack.c.b16 %v921, %v920
  %v1000 = vpack.c.b16 %v923, %v922
  %v1001 = vpack.c.b16 %v925, %v924
  %v1002 = vpack.c.b16 %v927, %v926
  %v1003 = vpack.c.b16 %v929, %v928
  %v1004 = vpack.c.b16 %v931, %v930
  %v1005 = vpack.c.b16 %v933, %v932
  %1078 = vmatprep.subr.bf16.mxu0 0
  %1079 = vmatpush1.bf16.msra.mxu0 %v934
  %1080 = vmatprep.subr.bf16.mxu0 0
  %1081 = vmatpush1.bf16.msra.mxu0 %v935
  %1082 = vmatprep.subr.bf16.mxu0 0
  %1083 = vmatpush1.bf16.msra.mxu0 %v936
  %1084 = vmatprep.subr.bf16.mxu0 0
  %1085 = vmatpush1.bf16.msra.mxu0 %v937
  %1086 = vmatprep.subr.bf16.mxu0 0
  %1087 = vmatpush1.bf16.msra.mxu0 %v938
  %1088 = vmatprep.subr.bf16.mxu0 0
  %1089 = vmatpush1.bf16.msra.mxu0 %v939
  %1090 = vmatprep.subr.bf16.mxu0 0
  %1091 = vmatpush1.bf16.msra.mxu0 %v940
  %1092 = vmatprep.subr.bf16.mxu0 0
  %1093 = vmatpush1.bf16.msra.mxu0 %v941
  %1094 = vmatprep.subr.bf16.mxu0 0
  %1095 = vmatpush1.bf16.msra.mxu0 %v942
  %1096 = vmatprep.subr.bf16.mxu0 0
  %1097 = vmatpush1.bf16.msra.mxu0 %v943
  %1098 = vmatprep.subr.bf16.mxu0 0
  %1099 = vmatpush1.bf16.msra.mxu0 %v944
  %1100 = vmatprep.subr.bf16.mxu0 0
  %1101 = vmatpush1.bf16.msra.mxu0 %v945
  %1102 = vmatprep.subr.bf16.mxu0 0
  %1103 = vmatpush1.bf16.msra.mxu0 %v946
  %1104 = vmatprep.subr.bf16.mxu0 0
  %1105 = vmatpush1.bf16.msra.mxu0 %v947
  %1106 = vmatprep.subr.bf16.mxu0 0
  %1107 = vmatpush1.bf16.msra.mxu0 %v948
  %1108 = vmatprep.subr.bf16.mxu0 0
  %1109 = vmatpush1.bf16.msra.mxu0 %v949
  %1110 = vmatprep.mubr.bf16.mxu0 %v503
  %1111 = vmatmul.mubr.bf16.gmra.mrb[0].mxu0 %v502
  %v1112 = vpop.f32.mrb[0].mxu0
  %v1113 = vadd.f32 0.0, %v1112
  %v1114 = vpop.f32.mrb[0].mxu0
  %v1115 = vpop.f32.mrb[0].mxu0
  %v1116 = vadd.f32 0.0, %v1115
  %v1117 = vpop.f32.mrb[0].mxu0
  %1118 = vmatprep.mubr.bf16.mxu0 %v512
  %1119 = vmatmul.mubr.bf16.gmra.mrb[0].mxu0 %v511
  %v1120 = vpop.f32.mrb[0].mxu0
  %v1121 = vadd.f32 0.0, %v1120
  %v1122 = vpop.f32.mrb[0].mxu0
  %v1123 = vpop.f32.mrb[0].mxu0
  %v1124 = vadd.f32 0.0, %v1123
  %v1125 = vpop.f32.mrb[0].mxu0
  %1126 = vmatprep.mubr.bf16.mxu0 %v521
  %1127 = vmatmul.mubr.bf16.gmra.mrb[0].mxu0 %v520
  %v1128 = vpop.f32.mrb[0].mxu0
  %v1129 = vadd.f32 0.0, %v1128
  %v1130 = vpop.f32.mrb[0].mxu0
  %v1131 = vpop.f32.mrb[0].mxu0
  %v1132 = vadd.f32 0.0, %v1131
  %v1133 = vpop.f32.mrb[0].mxu0
  %1134 = vmatprep.mubr.bf16.mxu0 %v530
  %1135 = vmatmul.mubr.bf16.gmra.mrb[0].mxu0 %v529
  %v1136 = vpop.f32.mrb[0].mxu0
  %v1137 = vadd.f32 0.0, %v1136
  %v1138 = vpop.f32.mrb[0].mxu0
  %v1139 = vpop.f32.mrb[0].mxu0
  %v1140 = vadd.f32 0.0, %v1139
  %v1141 = vpop.f32.mrb[0].mxu0
  %1142 = vmatprep.mubr.bf16.mxu0 %v539
  %1143 = vmatmul.mubr.bf16.gmra.mrb[0].mxu0 %v538
  %v1144 = vpop.f32.mrb[0].mxu0
  %v1145 = vadd.f32 0.0, %v1144
  %v1146 = vpop.f32.mrb[0].mxu0
  %v1147 = vpop.f32.mrb[0].mxu0
  %v1148 = vadd.f32 0.0, %v1147
  %v1149 = vpop.f32.mrb[0].mxu0
  %1150 = vmatprep.mubr.bf16.mxu0 %v548
  %1151 = vmatmul.mubr.bf16.gmra.mrb[0].mxu0 %v547
  %v1152 = vpop.f32.mrb[0].mxu0
  %v1153 = vadd.f32 0.0, %v1152
  %v1154 = vpop.f32.mrb[0].mxu0
  %v1155 = vpop.f32.mrb[0].mxu0
  %v1156 = vadd.f32 0.0, %v1155
  %v1157 = vpop.f32.mrb[0].mxu0
  %1158 = vmatprep.mubr.bf16.mxu0 %v557
  %1159 = vmatmul.mubr.bf16.gmra.mrb[0].mxu0 %v556
  %v1160 = vpop.f32.mrb[0].mxu0
  %v1161 = vadd.f32 0.0, %v1160
  %v1162 = vpop.f32.mrb[0].mxu0
  %v1163 = vpop.f32.mrb[0].mxu0
  %v1164 = vadd.f32 0.0, %v1163
  %v1165 = vpop.f32.mrb[0].mxu0
  %1166 = vmatprep.mubr.bf16.mxu0 %v566
  %1167 = vmatmul.mubr.bf16.gmra.mrb[0].mxu0 %v565
  %v1168 = vpop.f32.mrb[0].mxu0
  %v1169 = vadd.f32 0.0, %v1168
  %v1170 = vpop.f32.mrb[0].mxu0
  %v1171 = vpop.f32.mrb[0].mxu0
  %v1172 = vadd.f32 0.0, %v1171
  %v1173 = vpop.f32.mrb[0].mxu0
  %1174 = vdwg.mxu0
  %1175 = vmatprep.subr.bf16.mxu0 0
  %1176 = vmatpush1.bf16.msra.mxu0 %v950
  %1177 = vmatprep.subr.bf16.mxu0 0
  %1178 = vmatpush1.bf16.msra.mxu0 %v951
  %1179 = vmatprep.subr.bf16.mxu0 0
  %1180 = vmatpush1.bf16.msra.mxu0 %v952
  %1181 = vmatprep.subr.bf16.mxu0 0
  %1182 = vmatpush1.bf16.msra.mxu0 %v953
  %1183 = vmatprep.subr.bf16.mxu0 0
  %1184 = vmatpush1.bf16.msra.mxu0 %v954
  %1185 = vmatprep.subr.bf16.mxu0 0
  %1186 = vmatpush1.bf16.msra.mxu0 %v955
  %1187 = vmatprep.subr.bf16.mxu0 0
  %1188 = vmatpush1.bf16.msra.mxu0 %v956
  %1189 = vmatprep.subr.bf16.mxu0 0
  %1190 = vmatpush1.bf16.msra.mxu0 %v957
  %1191 = vmatprep.subr.bf16.mxu0 0
  %1192 = vmatpush1.bf16.msra.mxu0 %v958
  %1193 = vmatprep.subr.bf16.mxu0 0
  %1194 = vmatpush1.bf16.msra.mxu0 %v959
  %1195 = vmatprep.subr.bf16.mxu0 0
  %1196 = vmatpush1.bf16.msra.mxu0 %v960
  %1197 = vmatprep.subr.bf16.mxu0 0
  %1198 = vmatpush1.bf16.msra.mxu0 %v961
  %1199 = vmatprep.subr.bf16.mxu0 0
  %1200 = vmatpush1.bf16.msra.mxu0 %v962
  %1201 = vmatprep.subr.bf16.mxu0 0
  %1202 = vmatpush1.bf16.msra.mxu0 %v963
  %1203 = vmatprep.subr.bf16.mxu0 0
  %1204 = vmatpush1.bf16.msra.mxu0 %v964
  %1205 = vmatprep.subr.bf16.mxu0 0
  %1206 = vmatpush1.bf16.msra.mxu0 %v965
  %1207 = vmatprep.mubr.bf16.mxu0 %v505
  %1208 = vmatmul.mubr.bf16.gmra.mrb[0].mxu0 %v504
  %v1209 = vpop.f32.mrb[0].mxu0
  %v1210 = vadd.f32 %v1113, %v1209
  %v1211 = vpop.f32.mrb[0].mxu0
  %v1212 = vpop.f32.mrb[0].mxu0
  %v1213 = vadd.f32 %v1116, %v1212
  %v1214 = vpop.f32.mrb[0].mxu0
  %1215 = vmatprep.mubr.bf16.mxu0 %v514
  %1216 = vmatmul.mubr.bf16.gmra.mrb[0].mxu0 %v513
  %v1217 = vpop.f32.mrb[0].mxu0
  %v1218 = vadd.f32 %v1121, %v1217
  %v1219 = vpop.f32.mrb[0].mxu0
  %v1220 = vpop.f32.mrb[0].mxu0
  %v1221 = vadd.f32 %v1124, %v1220
  %v1222 = vpop.f32.mrb[0].mxu0
  %1223 = vmatprep.mubr.bf16.mxu0 %v523
  %1224 = vmatmul.mubr.bf16.gmra.mrb[0].mxu0 %v522
  %v1225 = vpop.f32.mrb[0].mxu0
  %v1226 = vadd.f32 %v1129, %v1225
  %v1227 = vpop.f32.mrb[0].mxu0
  %v1228 = vpop.f32.mrb[0].mxu0
  %v1229 = vadd.f32 %v1132, %v1228
  %v1230 = vpop.f32.mrb[0].mxu0
  %1231 = vmatprep.mubr.bf16.mxu0 %v532
  %1232 = vmatmul.mubr.bf16.gmra.mrb[0].mxu0 %v531
  %v1233 = vpop.f32.mrb[0].mxu0
  %v1234 = vadd.f32 %v1137, %v1233
  %v1235 = vpop.f32.mrb[0].mxu0
  %v1236 = vpop.f32.mrb[0].mxu0
  %v1237 = vadd.f32 %v1140, %v1236
  %v1238 = vpop.f32.mrb[0].mxu0
  %1239 = vmatprep.mubr.bf16.mxu0 %v541
  %1240 = vmatmul.mubr.bf16.gmra.mrb[0].mxu0 %v540
  %v1241 = vpop.f32.mrb[0].mxu0
  %v1242 = vadd.f32 %v1145, %v1241
  %v1243 = vpop.f32.mrb[0].mxu0
  %v1244 = vpop.f32.mrb[0].mxu0
  %v1245 = vadd.f32 %v1148, %v1244
  %v1246 = vpop.f32.mrb[0].mxu0
  %1247 = vmatprep.mubr.bf16.mxu0 %v550
  %1248 = vmatmul.mubr.bf16.gmra.mrb[0].mxu0 %v549
  %v1249 = vpop.f32.mrb[0].mxu0
  %v1250 = vadd.f32 %v1153, %v1249
  %v1251 = vpop.f32.mrb[0].mxu0
  %v1252 = vpop.f32.mrb[0].mxu0
  %v1253 = vadd.f32 %v1156, %v1252
  %v1254 = vpop.f32.mrb[0].mxu0
  %1255 = vmatprep.mubr.bf16.mxu0 %v559
  %1256 = vmatmul.mubr.bf16.gmra.mrb[0].mxu0 %v558
  %v1257 = vpop.f32.mrb[0].mxu0
  %v1258 = vadd.f32 %v1161, %v1257
  %v1259 = vpop.f32.mrb[0].mxu0
  %v1260 = vpop.f32.mrb[0].mxu0
  %v1261 = vadd.f32 %v1164, %v1260
  %v1262 = vpop.f32.mrb[0].mxu0
  %1263 = vmatprep.mubr.bf16.mxu0 %v568
  %1264 = vmatmul.mubr.bf16.gmra.mrb[0].mxu0 %v567
  %v1265 = vpop.f32.mrb[0].mxu0
  %v1266 = vadd.f32 %v1169, %v1265
  %v1267 = vpop.f32.mrb[0].mxu0
  %v1268 = vpop.f32.mrb[0].mxu0
  %v1269 = vadd.f32 %v1172, %v1268
  %v1270 = vpop.f32.mrb[0].mxu0
  %1271 = vdwg.mxu0
  %1272 = vmatprep.subr.bf16.mxu0 0
  %1273 = vmatpush1.bf16.msra.mxu0 %v966
  %1274 = vmatprep.subr.bf16.mxu0 0
  %1275 = vmatpush1.bf16.msra.mxu0 %v967
  %1276 = vmatprep.subr.bf16.mxu0 0
  %1277 = vmatpush1.bf16.msra.mxu0 %v968
  %1278 = vmatprep.subr.bf16.mxu0 0
  %1279 = vmatpush1.bf16.msra.mxu0 %v969
  %1280 = vmatprep.subr.bf16.mxu0 0
  %1281 = vmatpush1.bf16.msra.mxu0 %v970
  %1282 = vmatprep.subr.bf16.mxu0 0
  %1283 = vmatpush1.bf16.msra.mxu0 %v971
  %1284 = vmatprep.subr.bf16.mxu0 0
  %1285 = vmatpush1.bf16.msra.mxu0 %v972
  %1286 = vmatprep.subr.bf16.mxu0 0
  %1287 = vmatpush1.bf16.msra.mxu0 %v973
  %1288 = vmatprep.subr.bf16.mxu0 0
  %1289 = vmatpush1.bf16.msra.mxu0 %v974
  %1290 = vmatprep.subr.bf16.mxu0 0
  %1291 = vmatpush1.bf16.msra.mxu0 %v975
  %1292 = vmatprep.subr.bf16.mxu0 0
  %1293 = vmatpush1.bf16.msra.mxu0 %v976
  %1294 = vmatprep.subr.bf16.mxu0 0
  %1295 = vmatpush1.bf16.msra.mxu0 %v977
  %1296 = vmatprep.subr.bf16.mxu0 0
  %1297 = vmatpush1.bf16.msra.mxu0 %v978
  %1298 = vmatprep.subr.bf16.mxu0 0
  %1299 = vmatpush1.bf16.msra.mxu0 %v979
  %1300 = vmatprep.subr.bf16.mxu0 0
  %1301 = vmatpush1.bf16.msra.mxu0 %v980
  %1302 = vmatprep.subr.bf16.mxu0 0
  %1303 = vmatpush1.bf16.msra.mxu0 %v981
  %1304 = vmatprep.mubr.bf16.mxu0 %v507
  %1305 = vmatmul.mubr.bf16.gmra.mrb[0].mxu0 %v506
  %v1306 = vpop.f32.mrb[0].mxu0
  %v1307 = vadd.f32 %v1210, %v1306
  %v1308 = vpop.f32.mrb[0].mxu0
  %v1309 = vpop.f32.mrb[0].mxu0
  %v1310 = vadd.f32 %v1213, %v1309
  %v1311 = vpop.f32.mrb[0].mxu0
  %1312 = vmatprep.mubr.bf16.mxu0 %v516
  %1313 = vmatmul.mubr.bf16.gmra.mrb[0].mxu0 %v515
  %v1314 = vpop.f32.mrb[0].mxu0
  %v1315 = vadd.f32 %v1218, %v1314
  %v1316 = vpop.f32.mrb[0].mxu0
  %v1317 = vpop.f32.mrb[0].mxu0
  %v1318 = vadd.f32 %v1221, %v1317
  %v1319 = vpop.f32.mrb[0].mxu0
  %1320 = vmatprep.mubr.bf16.mxu0 %v525
  %1321 = vmatmul.mubr.bf16.gmra.mrb[0].mxu0 %v524
  %v1322 = vpop.f32.mrb[0].mxu0
  %v1323 = vadd.f32 %v1226, %v1322
  %v1324 = vpop.f32.mrb[0].mxu0
  %v1325 = vpop.f32.mrb[0].mxu0
  %v1326 = vadd.f32 %v1229, %v1325
  %v1327 = vpop.f32.mrb[0].mxu0
  %1328 = vmatprep.mubr.bf16.mxu0 %v534
  %1329 = vmatmul.mubr.bf16.gmra.mrb[0].mxu0 %v533
  %v1330 = vpop.f32.mrb[0].mxu0
  %v1331 = vadd.f32 %v1234, %v1330
  %v1332 = vpop.f32.mrb[0].mxu0
  %v1333 = vpop.f32.mrb[0].mxu0
  %v1334 = vadd.f32 %v1237, %v1333
  %v1335 = vpop.f32.mrb[0].mxu0
  %1336 = vmatprep.mubr.bf16.mxu0 %v543
  %1337 = vmatmul.mubr.bf16.gmra.mrb[0].mxu0 %v542
  %v1338 = vpop.f32.mrb[0].mxu0
  %v1339 = vadd.f32 %v1242, %v1338
  %v1340 = vpop.f32.mrb[0].mxu0
  %v1341 = vpop.f32.mrb[0].mxu0
  %v1342 = vadd.f32 %v1245, %v1341
  %v1343 = vpop.f32.mrb[0].mxu0
  %1344 = vmatprep.mubr.bf16.mxu0 %v552
  %1345 = vmatmul.mubr.bf16.gmra.mrb[0].mxu0 %v551
  %v1346 = vpop.f32.mrb[0].mxu0
  %v1347 = vadd.f32 %v1250, %v1346
  %v1348 = vpop.f32.mrb[0].mxu0
  %v1349 = vpop.f32.mrb[0].mxu0
  %v1350 = vadd.f32 %v1253, %v1349
  %v1351 = vpop.f32.mrb[0].mxu0
  %1352 = vmatprep.mubr.bf16.mxu0 %v561
  %1353 = vmatmul.mubr.bf16.gmra.mrb[0].mxu0 %v560
  %v1354 = vpop.f32.mrb[0].mxu0
  %v1355 = vadd.f32 %v1258, %v1354
  %v1356 = vpop.f32.mrb[0].mxu0
  %v1357 = vpop.f32.mrb[0].mxu0
  %v1358 = vadd.f32 %v1261, %v1357
  %v1359 = vpop.f32.mrb[0].mxu0
  %1360 = vmatprep.mubr.bf16.mxu0 %v570
  %1361 = vmatmul.mubr.bf16.gmra.mrb[0].mxu0 %v569
  %v1362 = vpop.f32.mrb[0].mxu0
  %v1363 = vadd.f32 %v1266, %v1362
  %v1364 = vpop.f32.mrb[0].mxu0
  %v1365 = vpop.f32.mrb[0].mxu0
  %v1366 = vadd.f32 %v1269, %v1365
  %v1367 = vpop.f32.mrb[0].mxu0
  %1368 = vdwg.mxu0
  %1369 = vmatprep.subr.bf16.mxu0 0
  %1370 = vmatpush1.bf16.msra.mxu0 %v982
  %1371 = vmatprep.subr.bf16.mxu0 0
  %1372 = vmatpush1.bf16.msra.mxu0 %v983
  %1373 = vmatprep.subr.bf16.mxu0 0
  %1374 = vmatpush1.bf16.msra.mxu0 %v984
  %1375 = vmatprep.subr.bf16.mxu0 0
  %1376 = vmatpush1.bf16.msra.mxu0 %v985
  %1377 = vmatprep.subr.bf16.mxu0 0
  %1378 = vmatpush1.bf16.msra.mxu0 %v986
  %1379 = vmatprep.subr.bf16.mxu0 0
  %1380 = vmatpush1.bf16.msra.mxu0 %v987
  %1381 = vmatprep.subr.bf16.mxu0 0
  %1382 = vmatpush1.bf16.msra.mxu0 %v988
  %1383 = vmatprep.subr.bf16.mxu0 0
  %1384 = vmatpush1.bf16.msra.mxu0 %v989
  %1385 = vmatprep.subr.bf16.mxu0 0
  %1386 = vmatpush1.bf16.msra.mxu0 %v990
  %1387 = vmatprep.subr.bf16.mxu0 0
  %1388 = vmatpush1.bf16.msra.mxu0 %v991
  %1389 = vmatprep.subr.bf16.mxu0 0
  %1390 = vmatpush1.bf16.msra.mxu0 %v992
  %1391 = vmatprep.subr.bf16.mxu0 0
  %1392 = vmatpush1.bf16.msra.mxu0 %v993
  %1393 = vmatprep.subr.bf16.mxu0 0
  %1394 = vmatpush1.bf16.msra.mxu0 %v994
  %1395 = vmatprep.subr.bf16.mxu0 0
  %1396 = vmatpush1.bf16.msra.mxu0 %v995
  %1397 = vmatprep.subr.bf16.mxu0 0
  %1398 = vmatpush1.bf16.msra.mxu0 %v996
  %1399 = vmatprep.subr.bf16.mxu0 0
  %1400 = vmatpush1.bf16.msra.mxu0 %v997
  %1401 = vmatprep.mubr.bf16.mxu0 %v509
  %1402 = vmatmul.mubr.bf16.gmra.mrb[0].mxu0 %v508
  %v1403 = vpop.f32.mrb[0].mxu0
  %v1404 = vadd.f32 %v1307, %v1403
  %v1405 = vpop.f32.mrb[0].mxu0
  %v1406 = vpop.f32.mrb[0].mxu0
  %v1407 = vadd.f32 %v1310, %v1406
  %v1408 = vpop.f32.mrb[0].mxu0
  %1409 = vmatprep.mubr.bf16.mxu0 %v518
  %1410 = vmatmul.mubr.bf16.gmra.mrb[0].mxu0 %v517
  %v1411 = vpop.f32.mrb[0].mxu0
  %v1412 = vadd.f32 %v1315, %v1411
  %v1413 = vpop.f32.mrb[0].mxu0
  %v1414 = vpop.f32.mrb[0].mxu0
  %v1415 = vadd.f32 %v1318, %v1414
  %v1416 = vpop.f32.mrb[0].mxu0
  %1417 = vmatprep.mubr.bf16.mxu0 %v527
  %1418 = vmatmul.mubr.bf16.gmra.mrb[0].mxu0 %v526
  %v1419 = vpop.f32.mrb[0].mxu0
  %v1420 = vadd.f32 %v1323, %v1419
  %v1421 = vpop.f32.mrb[0].mxu0
  %v1422 = vpop.f32.mrb[0].mxu0
  %v1423 = vadd.f32 %v1326, %v1422
  %v1424 = vpop.f32.mrb[0].mxu0
  %1425 = vmatprep.mubr.bf16.mxu0 %v536
  %1426 = vmatmul.mubr.bf16.gmra.mrb[0].mxu0 %v535
  %v1427 = vpop.f32.mrb[0].mxu0
  %v1428 = vadd.f32 %v1331, %v1427
  %v1429 = vpop.f32.mrb[0].mxu0
  %v1430 = vpop.f32.mrb[0].mxu0
  %v1431 = vadd.f32 %v1334, %v1430
  %v1432 = vpop.f32.mrb[0].mxu0
  %1433 = vmatprep.mubr.bf16.mxu0 %v545
  %1434 = vmatmul.mubr.bf16.gmra.mrb[0].mxu0 %v544
  %v1435 = vpop.f32.mrb[0].mxu0
  %v1436 = vadd.f32 %v1339, %v1435
  %v1437 = vpop.f32.mrb[0].mxu0
  %v1438 = vpop.f32.mrb[0].mxu0
  %v1439 = vadd.f32 %v1342, %v1438
  %v1440 = vpop.f32.mrb[0].mxu0
  %1441 = vmatprep.mubr.bf16.mxu0 %v554
  %1442 = vmatmul.mubr.bf16.gmra.mrb[0].mxu0 %v553
  %v1443 = vpop.f32.mrb[0].mxu0
  %v1444 = vadd.f32 %v1347, %v1443
  %v1445 = vpop.f32.mrb[0].mxu0
  %v1446 = vpop.f32.mrb[0].mxu0
  %v1447 = vadd.f32 %v1350, %v1446
  %v1448 = vpop.f32.mrb[0].mxu0
  %1449 = vmatprep.mubr.bf16.mxu0 %v563
  %1450 = vmatmul.mubr.bf16.gmra.mrb[0].mxu0 %v562
  %v1451 = vpop.f32.mrb[0].mxu0
  %v1452 = vadd.f32 %v1355, %v1451
  %v1453 = vpop.f32.mrb[0].mxu0
  %v1454 = vpop.f32.mrb[0].mxu0
  %v1455 = vadd.f32 %v1358, %v1454
  %v1456 = vpop.f32.mrb[0].mxu0
  %1457 = vmatprep.mubr.bf16.mxu0 %v572
  %1458 = vmatmul.mubr.bf16.gmra.mrb[0].mxu0 %v571
  %v1459 = vpop.f32.mrb[0].mxu0
  %v1460 = vadd.f32 %v1363, %v1459
  %v1461 = vpop.f32.mrb[0].mxu0
  %v1462 = vpop.f32.mrb[0].mxu0
  %v1463 = vadd.f32 %v1366, %v1462
  %v1464 = vpop.f32.mrb[0].mxu0
  %1465 = vdwg.mxu0
  %1466 = vmatprep.subr.bf16.mxu0 0
  %1467 = vmatpush1.bf16.msra.mxu0 %v998
  %1468 = vmatprep.subr.bf16.mxu0 0
  %1469 = vmatpush1.bf16.msra.mxu0 %v999
  %1470 = vmatprep.subr.bf16.mxu0 0
  %1471 = vmatpush1.bf16.msra.mxu0 %v1000
  %1472 = vmatprep.subr.bf16.mxu0 0
  %1473 = vmatpush1.bf16.msra.mxu0 %v1001
  %1474 = vmatprep.subr.bf16.mxu0 0
  %1475 = vmatpush1.bf16.msra.mxu0 %v1002
  %1476 = vmatprep.subr.bf16.mxu0 0
  %1477 = vmatpush1.bf16.msra.mxu0 %v1003
  %1478 = vmatprep.subr.bf16.mxu0 0
  %1479 = vmatpush1.bf16.msra.mxu0 %v1004
  %1480 = vmatprep.subr.bf16.mxu0 0
  %1481 = vmatpush1.bf16.msra.mxu0 %v1005
  %1482 = vmatprep.subr.bf16.mxu0 0
  %1483 = vmatpush1.bf16.msra.mxu0 0
  %1484 = vmatprep.subr.bf16.mxu0 0
  %1485 = vmatpush1.bf16.msra.mxu0 0
  %1486 = vmatprep.subr.bf16.mxu0 0
  %1487 = vmatpush1.bf16.msra.mxu0 0
  %1488 = vmatprep.subr.bf16.mxu0 0
  %1489 = vmatpush1.bf16.msra.mxu0 0
  %1490 = vmatprep.subr.bf16.mxu0 0
  %1491 = vmatpush1.bf16.msra.mxu0 0
  %1492 = vmatprep.subr.bf16.mxu0 0
  %1493 = vmatpush1.bf16.msra.mxu0 0
  %1494 = vmatprep.subr.bf16.mxu0 0
  %1495 = vmatpush1.bf16.msra.mxu0 0
  %1496 = vmatprep.subr.bf16.mxu0 0
  %1497 = vmatpush1.bf16.msra.mxu0 0
  %1498 = vmatprep.mubr.bf16.mxu0 0
  %1499 = vmatmul.mubr.bf16.gmra.mrb[0].mxu0 %v510
  %v1500 = vpop.f32.mrb[0].mxu0
  %v1501 = vadd.f32 %v1404, %v1500
  %v1502 = vpop.f32.mrb[0].mxu0
  %v1503 = vpop.f32.mrb[0].mxu0
  %v1504 = vadd.f32 %v1407, %v1503
  %v1505 = vpop.f32.mrb[0].mxu0
  %1506 = vmatprep.mubr.bf16.mxu0 0
  %1507 = vmatmul.mubr.bf16.gmra.mrb[0].mxu0 %v519
  %v1508 = vpop.f32.mrb[0].mxu0
  %v1509 = vadd.f32 %v1412, %v1508
  %v1510 = vpop.f32.mrb[0].mxu0
  %v1511 = vpop.f32.mrb[0].mxu0
  %v1512 = vadd.f32 %v1415, %v1511
  %v1513 = vpop.f32.mrb[0].mxu0
  %1514 = vmatprep.mubr.bf16.mxu0 0
  %1515 = vmatmul.mubr.bf16.gmra.mrb[0].mxu0 %v528
  %v1516 = vpop.f32.mrb[0].mxu0
  %v1517 = vadd.f32 %v1420, %v1516
  %v1518 = vpop.f32.mrb[0].mxu0
  %v1519 = vpop.f32.mrb[0].mxu0
  %v1520 = vadd.f32 %v1423, %v1519
  %v1521 = vpop.f32.mrb[0].mxu0
  %1522 = vmatprep.mubr.bf16.mxu0 0
  %1523 = vmatmul.mubr.bf16.gmra.mrb[0].mxu0 %v537
  %v1524 = vpop.f32.mrb[0].mxu0
  %v1525 = vadd.f32 %v1428, %v1524
  %v1526 = vpop.f32.mrb[0].mxu0
  %v1527 = vpop.f32.mrb[0].mxu0
  %v1528 = vadd.f32 %v1431, %v1527
  %v1529 = vpop.f32.mrb[0].mxu0
  %1530 = vmatprep.mubr.bf16.mxu0 0
  %1531 = vmatmul.mubr.bf16.gmra.mrb[0].mxu0 %v546
  %v1532 = vpop.f32.mrb[0].mxu0
  %v1533 = vadd.f32 %v1436, %v1532
  %v1534 = vpop.f32.mrb[0].mxu0
  %v1535 = vpop.f32.mrb[0].mxu0
  %v1536 = vadd.f32 %v1439, %v1535
  %v1537 = vpop.f32.mrb[0].mxu0
  %1538 = vmatprep.mubr.bf16.mxu0 0
  %1539 = vmatmul.mubr.bf16.gmra.mrb[0].mxu0 %v555
  %v1540 = vpop.f32.mrb[0].mxu0
  %v1541 = vadd.f32 %v1444, %v1540
  %v1542 = vpop.f32.mrb[0].mxu0
  %v1543 = vpop.f32.mrb[0].mxu0
  %v1544 = vadd.f32 %v1447, %v1543
  %v1545 = vpop.f32.mrb[0].mxu0
  %1546 = vmatprep.mubr.bf16.mxu0 0
  %1547 = vmatmul.mubr.bf16.gmra.mrb[0].mxu0 %v564
  %v1548 = vpop.f32.mrb[0].mxu0
  %v1549 = vadd.f32 %v1452, %v1548
  %v1550 = vpop.f32.mrb[0].mxu0
  %v1551 = vpop.f32.mrb[0].mxu0
  %v1552 = vadd.f32 %v1455, %v1551
  %v1553 = vpop.f32.mrb[0].mxu0
  %1554 = vmatprep.mubr.bf16.mxu0 0
  %1555 = vmatmul.mubr.bf16.gmra.mrb[0].mxu0 %v573
  %v1556 = vpop.f32.mrb[0].mxu0
  %v1557 = vadd.f32 %v1460, %v1556
  %v1558 = vpop.f32.mrb[0].mxu0
  %v1559 = vpop.f32.mrb[0].mxu0
  %v1560 = vadd.f32 %v1463, %v1559
  %v1561 = vpop.f32.mrb[0].mxu0
  %1562 = vdwg.mxu0
  %v1563 = vadd.f32 %v38, %v1501
  %v1564 = vadd.f32 %v39, %v1504
  %v1565 = vadd.f32 %v40, %v1509
  %v1566 = vadd.f32 %v41, %v1512
  %v1567 = vadd.f32 %v42, %v1517
  %v1568 = vadd.f32 %v43, %v1520
  %v1569 = vadd.f32 %v44, %v1525
  %v1570 = vadd.f32 %v45, %v1528
  %v1571 = vadd.f32 %v46, %v1533
  %v1572 = vadd.f32 %v47, %v1536
  %v1573 = vadd.f32 %v48, %v1541
  %v1574 = vadd.f32 %v49, %v1544
  %v1575 = vadd.f32 %v50, %v1549
  %v1576 = vadd.f32 %v51, %v1552
  %v1577 = vadd.f32 %v52, %v1557
  %v1578 = vadd.f32 %v53, %v1560
  %1579 = vst [vmem:[#allocation2] sm:$0xff] %v1563
  %1580 = vst [vmem:[#allocation2 + $0x8] sm:$0xff] %v1564
  %1581 = vst [vmem:[#allocation2 + $0x10] sm:$0xff] %v1565
  %1582 = vst [vmem:[#allocation2 + $0x18] sm:$0xff] %v1566
  %1583 = vst [vmem:[#allocation2 + $0x20] sm:$0xff] %v1567
  %1584 = vst [vmem:[#allocation2 + $0x28] sm:$0xff] %v1568
  %1585 = vst [vmem:[#allocation2 + $0x30] sm:$0xff] %v1569
  %1586 = vst [vmem:[#allocation2 + $0x38] sm:$0xff] %v1570
  %1587 = vst [vmem:[#allocation2 + $0x40] sm:$0xff] %v1571
  %1588 = vst [vmem:[#allocation2 + $0x48] sm:$0xff] %v1572
  %1589 = vst [vmem:[#allocation2 + $0x50] sm:$0xff] %v1573
  %1590 = vst [vmem:[#allocation2 + $0x58] sm:$0xff] %v1574
  %1591 = vst [vmem:[#allocation2 + $0x60] sm:$0xff] %v1575
  %1592 = vst [vmem:[#allocation2 + $0x68] sm:$0xff] %v1576
  %1593 = vst [vmem:[#allocation2 + $0x70] sm:$0xff] %v1577
  %1594 = vst [vmem:[#allocation2 + $0x78] sm:$0xff] %v1578
  // Predicated region
  $region22: #{strided_encoder.12} parent=0 // pred_check
    %p1595 = pneg %p18
  $region23: #{strided_encoder.12} parent=0 // pred_check_branch
    %1597 = sbr.rel (%p1595) target = $region25
  $region24: #{strided_encoder.12} parent=0 // pred_region
    %v1598 = vld [vmem:[#allocation2] sm:$0xff]
    %v1599 = vld [vmem:[#allocation2 + $0x8] sm:$0xff]
    %v1600 = vld [vmem:[#allocation2 + $0x10] sm:$0xff]
    %v1601 = vld [vmem:[#allocation2 + $0x18] sm:$0xff]
    %v1602 = vld [vmem:[#allocation2 + $0x20] sm:$0xff]
    %v1603 = vld [vmem:[#allocation2 + $0x28] sm:$0xff]
    %v1604 = vld [vmem:[#allocation2 + $0x30] sm:$0xff]
    %v1605 = vld [vmem:[#allocation2 + $0x38] sm:$0xff]
    %v1606 = vld [vmem:[#allocation2 + $0x40] sm:$0xff]
    %v1607 = vld [vmem:[#allocation2 + $0x48] sm:$0xff]
    %v1608 = vld [vmem:[#allocation2 + $0x50] sm:$0xff]
    %v1609 = vld [vmem:[#allocation2 + $0x58] sm:$0xff]
    %v1610 = vld [vmem:[#allocation2 + $0x60] sm:$0xff]
    %v1611 = vld [vmem:[#allocation2 + $0x68] sm:$0xff]
    %v1612 = vld [vmem:[#allocation2 + $0x70] sm:$0xff]
    %v1613 = vld [vmem:[#allocation2 + $0x78] sm:$0xff]
    %v1614 = vld [vmem:[%s2] sm:$0x1]
    %v1616 = vlaneseq
    %v1617 = vshrl.u32 %v1616, 7
    %v1618 = vsub.s32 0, %v1617
    %v1619 = vrot.slane %v1614, %v1618
    %v1621 = vmul.f32 %v1598, %v1619
    %v1622 = vmul.f32 %v1599, %v1619
    %v1623 = vmul.f32 %v1600, %v1619
    %v1624 = vmul.f32 %v1601, %v1619
    %v1625 = vmul.f32 %v1602, %v1619
    %v1626 = vmul.f32 %v1603, %v1619
    %v1627 = vmul.f32 %v1604, %v1619
    %v1628 = vmul.f32 %v1605, %v1619
    %v1629 = vmul.f32 %v1606, %v1619
    %v1630 = vmul.f32 %v1607, %v1619
    %v1631 = vmul.f32 %v1608, %v1619
    %v1632 = vmul.f32 %v1609, %v1619
    %v1633 = vmul.f32 %v1610, %v1619
    %v1634 = vmul.f32 %v1611, %v1619
    %v1635 = vmul.f32 %v1612, %v1619
    %v1636 = vmul.f32 %v1613, %v1619
    %v1637 = vld [vmem:[%s3] sm:$0x1]
    %v1639 = vlaneseq
    %v1640 = vshrl.u32 %v1639, 7
    %v1641 = vsub.s32 0, %v1640
    %v1642 = vrot.slane %v1637, %v1641
    %v1644 = vadd.f32 %v1621, %v1642
    %v1645 = vadd.f32 %v1622, %v1642
    %v1646 = vadd.f32 %v1623, %v1642
    %v1647 = vadd.f32 %v1624, %v1642
    %v1648 = vadd.f32 %v1625, %v1642
    %v1649 = vadd.f32 %v1626, %v1642
    %v1650 = vadd.f32 %v1627, %v1642
    %v1651 = vadd.f32 %v1628, %v1642
    %v1652 = vadd.f32 %v1629, %v1642
    %v1653 = vadd.f32 %v1630, %v1642
    %v1654 = vadd.f32 %v1631, %v1642
    %v1655 = vadd.f32 %v1632, %v1642
    %v1656 = vadd.f32 %v1633, %v1642
    %v1657 = vadd.f32 %v1634, %v1642
    %v1658 = vadd.f32 %v1635, %v1642
    %v1659 = vadd.f32 %v1636, %v1642
    %v1660 = vmax.f32 %v1644, 0.0
    %v1661 = vmax.f32 %v1645, 0.0
    %v1662 = vmax.f32 %v1646, 0.0
    %v1663 = vmax.f32 %v1647, 0.0
    %v1664 = vmax.f32 %v1648, 0.0
    %v1665 = vmax.f32 %v1649, 0.0
    %v1666 = vmax.f32 %v1650, 0.0
    %v1667 = vmax.f32 %v1651, 0.0
    %v1668 = vmax.f32 %v1652, 0.0
    %v1669 = vmax.f32 %v1653, 0.0
    %v1670 = vmax.f32 %v1654, 0.0
    %v1671 = vmax.f32 %v1655, 0.0
    %v1672 = vmax.f32 %v1656, 0.0
    %v1673 = vmax.f32 %v1657, 0.0
    %v1674 = vmax.f32 %v1658, 0.0
    %v1675 = vmax.f32 %v1659, 0.0
    %v1676 = vpack.c.bf16 %v1661, %v1660
    %v1677 = vpack.c.bf16 %v1663, %v1662
    %v1678 = vpack.c.bf16 %v1665, %v1664
    %v1679 = vpack.c.bf16 %v1667, %v1666
    %v1680 = vpack.c.bf16 %v1669, %v1668
    %v1681 = vpack.c.bf16 %v1671, %v1670
    %v1682 = vpack.c.bf16 %v1673, %v1672
    %v1683 = vpack.c.bf16 %v1675, %v1674
    %v1692 = vunpack.c.l.b16 %v1676
    %v1693 = vunpack.c.h.b16 %v1676
    %v1694 = vunpack.c.l.b16 %v1677
    %v1695 = vunpack.c.h.b16 %v1677
    %v1696 = vunpack.c.l.b16 %v1678
    %v1697 = vunpack.c.h.b16 %v1678
    %v1698 = vunpack.c.l.b16 %v1679
    %v1699 = vunpack.c.h.b16 %v1679
    %v1700 = vunpack.c.l.b16 %v1680
    %v1701 = vunpack.c.h.b16 %v1680
    %v1702 = vunpack.c.l.b16 %v1681
    %v1703 = vunpack.c.h.b16 %v1681
    %v1704 = vunpack.c.l.b16 %v1682
    %v1705 = vunpack.c.h.b16 %v1682
    %v1706 = vunpack.c.l.b16 %v1683
    %v1707 = vunpack.c.h.b16 %v1683
    %v1708 = vpack.c.b16 %v1692, %v1692
    %v1709 = vpack.c.b16 %v1693, %v1693
    %v1710 = vpack.c.b16 %v1694, %v1694
    %v1711 = vpack.c.b16 %v1695, %v1695
    %v1712 = vpack.c.b16 %v1696, %v1696
    %v1713 = vpack.c.b16 %v1697, %v1697
    %v1714 = vpack.c.b16 %v1698, %v1698
    %v1715 = vpack.c.b16 %v1699, %v1699
    %v1716 = vpack.c.b16 %v1700, %v1700
    %v1717 = vpack.c.b16 %v1701, %v1701
    %v1718 = vpack.c.b16 %v1702, %v1702
    %v1719 = vpack.c.b16 %v1703, %v1703
    %v1720 = vpack.c.b16 %v1704, %v1704
    %v1721 = vpack.c.b16 %v1705, %v1705
    %v1722 = vpack.c.b16 %v1706, %v1706
    %v1723 = vpack.c.b16 %v1707, %v1707
    %1740 = vst [vmem:[%s4] sm:$0xf] %v1708
    %1741 = vst [vmem:[%s4 + $0x4] sm:$0xf] %v1709
    %1742 = vst [vmem:[%s4 + $0x8] sm:$0xf] %v1710
    %1743 = vst [vmem:[%s4 + $0xc] sm:$0xf] %v1711
    %1744 = vst [vmem:[%s4 + $0x10] sm:$0xf] %v1712
    %1745 = vst [vmem:[%s4 + $0x14] sm:$0xf] %v1713
    %1746 = vst [vmem:[%s4 + $0x18] sm:$0xf] %v1714
    %1747 = vst [vmem:[%s4 + $0x1c] sm:$0xf] %v1715
    %1748 = vst [vmem:[%s4 + $0x20] sm:$0xf] %v1716
    %1749 = vst [vmem:[%s4 + $0x24] sm:$0xf] %v1717
    %1750 = vst [vmem:[%s4 + $0x28] sm:$0xf] %v1718
    %1751 = vst [vmem:[%s4 + $0x2c] sm:$0xf] %v1719
    %1752 = vst [vmem:[%s4 + $0x30] sm:$0xf] %v1720
    %1753 = vst [vmem:[%s4 + $0x34] sm:$0xf] %v1721
    %1754 = vst [vmem:[%s4 + $0x38] sm:$0xf] %v1722
    %1755 = vst [vmem:[%s4 + $0x3c] sm:$0xf] %v1723
  $region25: #{strided_encoder.12} parent=0 // pred_fallthru
    _
  // Predicated region
  $region26: #{strided_encoder.12} parent=0 // pred_check
    _
  $region27: #{strided_encoder.12} parent=0 // pred_check_branch
    %1757 = sbr.rel (0) target = $region29
  $region28: #{strided_encoder.12} parent=0 // pred_region
    _
  $region29: #{strided_encoder.12} parent=0 // pred_fallthru
    _
  // Predicated region
  $region30: #{strided_encoder.12} parent=0 // pred_check
    _
  $region31: #{strided_encoder.12} parent=0 // pred_check_branch
    %1759 = sbr.rel (0) target = $region33
  $region32: #{strided_encoder.12} parent=0 // pred_region
    _
  $region33: #{strided_encoder.12} parent=0 // pred_fallthru
    _

// kernel: strided_encoder.14
$region0: #{strided_encoder.14}
  #allocation0 [shape = 'u32[]', space=smem, size = 0x4, offset = 0x4, fixed_abs, tag = 'smem constant byte address 0x4 - core index']
  #allocation1 [shape = 'u32[144,128]{1,0:T(1,128)}', space=vmem, size = 0x12000, scoped, tag = 'internal scratch']
  #allocation2 [shape = 'f32[32,128]{1,0:T(8,128)}', space=vmem, size = 0x4000, scoped, tag = 'scratch operand']
  %s0 = inlined_call_operand.vmem [shape: bf16[32,1152], index: 0, kind: input, shape index: {}]
  %s1 = inlined_call_operand.vmem [shape: bf16[1152,128], index: 1, kind: input, shape index: {}]
  %s2 = inlined_call_operand.vmem [shape: f32[1,128], index: 2, kind: input, shape index: {}]
  %s3 = inlined_call_operand.vmem [shape: f32[1,128], index: 3, kind: input, shape index: {}]
  %s4 = inlined_call_operand.vmem [shape: bf16[32,128], index: 4, kind: output, shape index: {}]
  %s5 = sld [smem:[#allocation0]]
  $region34: #{strided_encoder.14} parent=0
    _
  %s7 = ssub.s32 1, %s5
  %s8 = scalar_select 0, %s7, %s5
  // Predicated region
  $region2: #{strided_encoder.14} parent=0 // pred_check
    _
  $region3: #{strided_encoder.14} parent=0 // pred_check_branch
    %10 = sbr.rel (0) target = $region5
  $region4: #{strided_encoder.14} parent=0 // pred_region
    _
  $region5: #{strided_encoder.14} parent=0 // pred_fallthru
    _
  // Predicated region
  $region6: #{strided_encoder.14} parent=0 // pred_check
    _
  $region7: #{strided_encoder.14} parent=0 // pred_check_branch
    %12 = sbr.rel (0) target = $region9
  $region8: #{strided_encoder.14} parent=0 // pred_region
    _
  $region9: #{strided_encoder.14} parent=0 // pred_fallthru
    _
  // Predicated region
  $region10: #{strided_encoder.14} parent=0 // pred_check
    _
  $region11: #{strided_encoder.14} parent=0 // pred_check_branch
    %14 = sbr.rel (0) target = $region13
  $region12: #{strided_encoder.14} parent=0 // pred_region
    _
  $region13: #{strided_encoder.14} parent=0 // pred_fallthru
    _
  // Predicated region
  $region14: #{strided_encoder.14} parent=0 // pred_check
    _
  $region15: #{strided_encoder.14} parent=0 // pred_check_branch
    %16 = sbr.rel (0) target = $region17
  $region16: #{strided_encoder.14} parent=0 // pred_region
    _
  $region17: #{strided_encoder.14} parent=0 // pred_fallthru
    _
  %p18 = scmp.eq.s32.totalorder 0, 0
  // Predicated region
  $region18: #{strided_encoder.14} parent=0 // pred_check
    %p19 = pneg %p18
  $region19: #{strided_encoder.14} parent=0 // pred_check_branch
    %21 = sbr.rel (%p19) target = $region21
  $region20: #{strided_encoder.14} parent=0 // pred_region
    %22 = vst [vmem:[#allocation2] sm:$0xff] 0.0
    %23 = vst [vmem:[#allocation2 + $0x8] sm:$0xff] 0.0
    %24 = vst [vmem:[#allocation2 + $0x10] sm:$0xff] 0.0
    %25 = vst [vmem:[#allocation2 + $0x18] sm:$0xff] 0.0
  $region21: #{strided_encoder.14} parent=0 // pred_fallthru
    _
  %v26 = vld [vmem:[#allocation2] sm:$0xff]
  %v27 = vld [vmem:[#allocation2 + $0x8] sm:$0xff]
  %v28 = vld [vmem:[#allocation2 + $0x10] sm:$0xff]
  %v29 = vld [vmem:[#allocation2 + $0x18] sm:$0xff]
  %v30 = vld [vmem:[%s0] sm:$0xff]
  %v31 = vld [vmem:[%s0 + $0x8] sm:$0xff]
  %v32 = vld [vmem:[%s0 + $0x10] sm:$0xff]
  %v33 = vld [vmem:[%s0 + $0x18] sm:$0xff]
  %v34 = vld [vmem:[%s0 + $0x20] sm:$0xf]
  %v35 = vld [vmem:[%s0 + $0x24] sm:$0xff]
  %v36 = vld [vmem:[%s0 + $0x2c] sm:$0xff]
  %v37 = vld [vmem:[%s0 + $0x34] sm:$0xff]
  %v38 = vld [vmem:[%s0 + $0x3c] sm:$0xff]
  %v39 = vld [vmem:[%s0 + $0x44] sm:$0xf]
  %v40 = vld [vmem:[%s0 + $0x48] sm:$0xff]
  %v41 = vld [vmem:[%s0 + $0x50] sm:$0xff]
  %v42 = vld [vmem:[%s0 + $0x58] sm:$0xff]
  %v43 = vld [vmem:[%s0 + $0x60] sm:$0xff]
  %v44 = vld [vmem:[%s0 + $0x68] sm:$0xf]
  %v45 = vld [vmem:[%s0 + $0x6c] sm:$0xff]
  %v46 = vld [vmem:[%s0 + $0x74] sm:$0xff]
  %v47 = vld [vmem:[%s0 + $0x7c] sm:$0xff]
  %v48 = vld [vmem:[%s0 + $0x84] sm:$0xff]
  %v49 = vld [vmem:[%s0 + $0x8c] sm:$0xf]
  %v50 = vld [vmem:[%s1] sm:$0xf]
  %v51 = vld [vmem:[%s1 + $0x4] sm:$0xf]
  %v52 = vld [vmem:[%s1 + $0x8] sm:$0xf]
  %v53 = vld [vmem:[%s1 + $0xc] sm:$0xf]
  %v54 = vld [vmem:[%s1 + $0x10] sm:$0xf]
  %v55 = vld [vmem:[%s1 + $0x14] sm:$0xf]
  %v56 = vld [vmem:[%s1 + $0x18] sm:$0xf]
  %v57 = vld [vmem:[%s1 + $0x1c] sm:$0xf]
  %v58 = vld [vmem:[%s1 + $0x20] sm:$0xf]
  %v59 = vld [vmem:[%s1 + $0x24] sm:$0xf]
  %v60 = vld [vmem:[%s1 + $0x28] sm:$0xf]
  %v61 = vld [vmem:[%s1 + $0x2c] sm:$0xf]
  %v62 = vld [vmem:[%s1 + $0x30] sm:$0xf]
  %v63 = vld [vmem:[%s1 + $0x34] sm:$0xf]
  %v64 = vld [vmem:[%s1 + $0x38] sm:$0xf]
  %v65 = vld [vmem:[%s1 + $0x3c] sm:$0xf]
  %v66 = vld [vmem:[%s1 + $0x40] sm:$0xf]
  %v67 = vld [vmem:[%s1 + $0x44] sm:$0xf]
  %v68 = vld [vmem:[%s1 + $0x48] sm:$0xf]
  %v69 = vld [vmem:[%s1 + $0x4c] sm:$0xf]
  %v70 = vld [vmem:[%s1 + $0x50] sm:$0xf]
  %v71 = vld [vmem:[%s1 + $0x54] sm:$0xf]
  %v72 = vld [vmem:[%s1 + $0x58] sm:$0xf]
  %v73 = vld [vmem:[%s1 + $0x5c] sm:$0xf]
  %v74 = vld [vmem:[%s1 + $0x60] sm:$0xf]
  %v75 = vld [vmem:[%s1 + $0x64] sm:$0xf]
  %v76 = vld [vmem:[%s1 + $0x68] sm:$0xf]
  %v77 = vld [vmem:[%s1 + $0x6c] sm:$0xf]
  %v78 = vld [vmem:[%s1 + $0x70] sm:$0xf]
  %v79 = vld [vmem:[%s1 + $0x74] sm:$0xf]
  %v80 = vld [vmem:[%s1 + $0x78] sm:$0xf]
  %v81 = vld [vmem:[%s1 + $0x7c] sm:$0xf]
  %v82 = vld [vmem:[%s1 + $0x80] sm:$0xf]
  %v83 = vld [vmem:[%s1 + $0x84] sm:$0xf]
  %v84 = vld [vmem:[%s1 + $0x88] sm:$0xf]
  %v85 = vld [vmem:[%s1 + $0x8c] sm:$0xf]
  %v86 = vld [vmem:[%s1 + $0x90] sm:$0xf]
  %v87 = vld [vmem:[%s1 + $0x94] sm:$0xf]
  %v88 = vld [vmem:[%s1 + $0x98] sm:$0xf]
  %v89 = vld [vmem:[%s1 + $0x9c] sm:$0xf]
  %v90 = vld [vmem:[%s1 + $0xa0] sm:$0xf]
  %v91 = vld [vmem:[%s1 + $0xa4] sm:$0xf]
  %v92 = vld [vmem:[%s1 + $0xa8] sm:$0xf]
  %v93 = vld [vmem:[%s1 + $0xac] sm:$0xf]
  %v94 = vld [vmem:[%s1 + $0xb0] sm:$0xf]
  %v95 = vld [vmem:[%s1 + $0xb4] sm:$0xf]
  %v96 = vld [vmem:[%s1 + $0xb8] sm:$0xf]
  %v97 = vld [vmem:[%s1 + $0xbc] sm:$0xf]
  %v98 = vld [vmem:[%s1 + $0xc0] sm:$0xf]
  %v99 = vld [vmem:[%s1 + $0xc4] sm:$0xf]
  %v100 = vld [vmem:[%s1 + $0xc8] sm:$0xf]
  %v101 = vld [vmem:[%s1 + $0xcc] sm:$0xf]
  %v102 = vld [vmem:[%s1 + $0xd0] sm:$0xf]
  %v103 = vld [vmem:[%s1 + $0xd4] sm:$0xf]
  %v104 = vld [vmem:[%s1 + $0xd8] sm:$0xf]
  %v105 = vld [vmem:[%s1 + $0xdc] sm:$0xf]
  %v106 = vld [vmem:[%s1 + $0xe0] sm:$0xf]
  %v107 = vld [vmem:[%s1 + $0xe4] sm:$0xf]
  %v108 = vld [vmem:[%s1 + $0xe8] sm:$0xf]
  %v109 = vld [vmem:[%s1 + $0xec] sm:$0xf]
  %v110 = vld [vmem:[%s1 + $0xf0] sm:$0xf]
  %v111 = vld [vmem:[%s1 + $0xf4] sm:$0xf]
  %v112 = vld [vmem:[%s1 + $0xf8] sm:$0xf]
  %v113 = vld [vmem:[%s1 + $0xfc] sm:$0xf]
  %v114 = vld [vmem:[%s1 + $0x100] sm:$0xf]
  %v115 = vld [vmem:[%s1 + $0x104] sm:$0xf]
  %v116 = vld [vmem:[%s1 + $0x108] sm:$0xf]
  %v117 = vld [vmem:[%s1 + $0x10c] sm:$0xf]
  %v118 = vld [vmem:[%s1 + $0x110] sm:$0xf]
  %v119 = vld [vmem:[%s1 + $0x114] sm:$0xf]
  %v120 = vld [vmem:[%s1 + $0x118] sm:$0xf]
  %v121 = vld [vmem:[%s1 + $0x11c] sm:$0xf]
  %v122 = vld [vmem:[%s1 + $0x120] sm:$0xf]
  %v123 = vld [vmem:[%s1 + $0x124] sm:$0xf]
  %v124 = vld [vmem:[%s1 + $0x128] sm:$0xf]
  %v125 = vld [vmem:[%s1 + $0x12c] sm:$0xf]
  %v126 = vld [vmem:[%s1 + $0x130] sm:$0xf]
  %v127 = vld [vmem:[%s1 + $0x134] sm:$0xf]
  %v128 = vld [vmem:[%s1 + $0x138] sm:$0xf]
  %v129 = vld [vmem:[%s1 + $0x13c] sm:$0xf]
  %v130 = vld [vmem:[%s1 + $0x140] sm:$0xf]
  %v131 = vld [vmem:[%s1 + $0x144] sm:$0xf]
  %v132 = vld [vmem:[%s1 + $0x148] sm:$0xf]
  %v133 = vld [vmem:[%s1 + $0x14c] sm:$0xf]
  %v134 = vld [vmem:[%s1 + $0x150] sm:$0xf]
  %v135 = vld [vmem:[%s1 + $0x154] sm:$0xf]
  %v136 = vld [vmem:[%s1 + $0x158] sm:$0xf]
  %v137 = vld [vmem:[%s1 + $0x15c] sm:$0xf]
  %v138 = vld [vmem:[%s1 + $0x160] sm:$0xf]
  %v139 = vld [vmem:[%s1 + $0x164] sm:$0xf]
  %v140 = vld [vmem:[%s1 + $0x168] sm:$0xf]
  %v141 = vld [vmem:[%s1 + $0x16c] sm:$0xf]
  %v142 = vld [vmem:[%s1 + $0x170] sm:$0xf]
  %v143 = vld [vmem:[%s1 + $0x174] sm:$0xf]
  %v144 = vld [vmem:[%s1 + $0x178] sm:$0xf]
  %v145 = vld [vmem:[%s1 + $0x17c] sm:$0xf]
  %v146 = vld [vmem:[%s1 + $0x180] sm:$0xf]
  %v147 = vld [vmem:[%s1 + $0x184] sm:$0xf]
  %v148 = vld [vmem:[%s1 + $0x188] sm:$0xf]
  %v149 = vld [vmem:[%s1 + $0x18c] sm:$0xf]
  %v150 = vld [vmem:[%s1 + $0x190] sm:$0xf]
  %v151 = vld [vmem:[%s1 + $0x194] sm:$0xf]
  %v152 = vld [vmem:[%s1 + $0x198] sm:$0xf]
  %v153 = vld [vmem:[%s1 + $0x19c] sm:$0xf]
  %v154 = vld [vmem:[%s1 + $0x1a0] sm:$0xf]
  %v155 = vld [vmem:[%s1 + $0x1a4] sm:$0xf]
  %v156 = vld [vmem:[%s1 + $0x1a8] sm:$0xf]
  %v157 = vld [vmem:[%s1 + $0x1ac] sm:$0xf]
  %v158 = vld [vmem:[%s1 + $0x1b0] sm:$0xf]
  %v159 = vld [vmem:[%s1 + $0x1b4] sm:$0xf]
  %v160 = vld [vmem:[%s1 + $0x1b8] sm:$0xf]
  %v161 = vld [vmem:[%s1 + $0x1bc] sm:$0xf]
  %v162 = vld [vmem:[%s1 + $0x1c0] sm:$0xf]
  %v163 = vld [vmem:[%s1 + $0x1c4] sm:$0xf]
  %v164 = vld [vmem:[%s1 + $0x1c8] sm:$0xf]
  %v165 = vld [vmem:[%s1 + $0x1cc] sm:$0xf]
  %v166 = vld [vmem:[%s1 + $0x1d0] sm:$0xf]
  %v167 = vld [vmem:[%s1 + $0x1d4] sm:$0xf]
  %v168 = vld [vmem:[%s1 + $0x1d8] sm:$0xf]
  %v169 = vld [vmem:[%s1 + $0x1dc] sm:$0xf]
  %v170 = vld [vmem:[%s1 + $0x1e0] sm:$0xf]
  %v171 = vld [vmem:[%s1 + $0x1e4] sm:$0xf]
  %v172 = vld [vmem:[%s1 + $0x1e8] sm:$0xf]
  %v173 = vld [vmem:[%s1 + $0x1ec] sm:$0xf]
  %v174 = vld [vmem:[%s1 + $0x1f0] sm:$0xf]
  %v175 = vld [vmem:[%s1 + $0x1f4] sm:$0xf]
  %v176 = vld [vmem:[%s1 + $0x1f8] sm:$0xf]
  %v177 = vld [vmem:[%s1 + $0x1fc] sm:$0xf]
  %v178 = vld [vmem:[%s1 + $0x200] sm:$0xf]
  %v179 = vld [vmem:[%s1 + $0x204] sm:$0xf]
  %v180 = vld [vmem:[%s1 + $0x208] sm:$0xf]
  %v181 = vld [vmem:[%s1 + $0x20c] sm:$0xf]
  %v182 = vld [vmem:[%s1 + $0x210] sm:$0xf]
  %v183 = vld [vmem:[%s1 + $0x214] sm:$0xf]
  %v184 = vld [vmem:[%s1 + $0x218] sm:$0xf]
  %v185 = vld [vmem:[%s1 + $0x21c] sm:$0xf]
  %v186 = vld [vmem:[%s1 + $0x220] sm:$0xf]
  %v187 = vld [vmem:[%s1 + $0x224] sm:$0xf]
  %v188 = vld [vmem:[%s1 + $0x228] sm:$0xf]
  %v189 = vld [vmem:[%s1 + $0x22c] sm:$0xf]
  %v190 = vld [vmem:[%s1 + $0x230] sm:$0xf]
  %v191 = vld [vmem:[%s1 + $0x234] sm:$0xf]
  %v192 = vld [vmem:[%s1 + $0x238] sm:$0xf]
  %v193 = vld [vmem:[%s1 + $0x23c] sm:$0xf]
  %v214 = vunpack.c.l.b16 %v30
  %v215 = vunpack.c.h.b16 %v30
  %v216 = vunpack.c.l.b16 %v31
  %v217 = vunpack.c.h.b16 %v31
  %v218 = vunpack.c.l.b16 %v32
  %v219 = vunpack.c.h.b16 %v32
  %v220 = vunpack.c.l.b16 %v33
  %v221 = vunpack.c.h.b16 %v33
  %v222 = vunpack.c.l.b16 %v34
  %v223 = vunpack.c.l.b16 %v35
  %v224 = vunpack.c.h.b16 %v35
  %v225 = vunpack.c.l.b16 %v36
  %v226 = vunpack.c.h.b16 %v36
  %v227 = vunpack.c.l.b16 %v37
  %v228 = vunpack.c.h.b16 %v37
  %v229 = vunpack.c.l.b16 %v38
  %v230 = vunpack.c.h.b16 %v38
  %v231 = vunpack.c.l.b16 %v39
  %v232 = vunpack.c.l.b16 %v40
  %v233 = vunpack.c.h.b16 %v40
  %v234 = vunpack.c.l.b16 %v41
  %v235 = vunpack.c.h.b16 %v41
  %v236 = vunpack.c.l.b16 %v42
  %v237 = vunpack.c.h.b16 %v42
  %v238 = vunpack.c.l.b16 %v43
  %v239 = vunpack.c.h.b16 %v43
  %v240 = vunpack.c.l.b16 %v44
  %v241 = vunpack.c.l.b16 %v45
  %v242 = vunpack.c.h.b16 %v45
  %v243 = vunpack.c.l.b16 %v46
  %v244 = vunpack.c.h.b16 %v46
  %v245 = vunpack.c.l.b16 %v47
  %v246 = vunpack.c.h.b16 %v47
  %v247 = vunpack.c.l.b16 %v48
  %v248 = vunpack.c.h.b16 %v48
  %v249 = vunpack.c.l.b16 %v49
  %v250 = vpack.c.b16 %v223, %v214
  %v251 = vpack.c.b16 %v224, %v215
  %v252 = vpack.c.b16 %v225, %v216
  %v253 = vpack.c.b16 %v226, %v217
  %v254 = vpack.c.b16 %v227, %v218
  %v255 = vpack.c.b16 %v228, %v219
  %v256 = vpack.c.b16 %v229, %v220
  %v257 = vpack.c.b16 %v230, %v221
  %v258 = vpack.c.b16 %v231, %v222
  %v259 = vpack.c.b16 %v241, %v232
  %v260 = vpack.c.b16 %v242, %v233
  %v261 = vpack.c.b16 %v243, %v234
  %v262 = vpack.c.b16 %v244, %v235
  %v263 = vpack.c.b16 %v245, %v236
  %v264 = vpack.c.b16 %v246, %v237
  %v265 = vpack.c.b16 %v247, %v238
  %v266 = vpack.c.b16 %v248, %v239
  %v267 = vpack.c.b16 %v249, %v240
  %v430 = vunpack.c.l.b16 %v50
  %v431 = vunpack.c.l.b16 %v51
  %v432 = vunpack.c.l.b16 %v52
  %v433 = vunpack.c.l.b16 %v53
  %v434 = vunpack.c.l.b16 %v54
  %v435 = vunpack.c.l.b16 %v55
  %v436 = vunpack.c.l.b16 %v56
  %v437 = vunpack.c.l.b16 %v57
  %v438 = vunpack.c.l.b16 %v58
  %v439 = vunpack.c.l.b16 %v59
  %v440 = vunpack.c.l.b16 %v60
  %v441 = vunpack.c.l.b16 %v61
  %v442 = vunpack.c.l.b16 %v62
  %v443 = vunpack.c.l.b16 %v63
  %v444 = vunpack.c.l.b16 %v64
  %v445 = vunpack.c.l.b16 %v65
  %v446 = vunpack.c.l.b16 %v66
  %v447 = vunpack.c.l.b16 %v67
  %v448 = vunpack.c.l.b16 %v68
  %v449 = vunpack.c.l.b16 %v69
  %v450 = vunpack.c.l.b16 %v70
  %v451 = vunpack.c.l.b16 %v71
  %v452 = vunpack.c.l.b16 %v72
  %v453 = vunpack.c.l.b16 %v73
  %v454 = vunpack.c.l.b16 %v74
  %v455 = vunpack.c.l.b16 %v75
  %v456 = vunpack.c.l.b16 %v76
  %v457 = vunpack.c.l.b16 %v77
  %v458 = vunpack.c.l.b16 %v78
  %v459 = vunpack.c.l.b16 %v79
  %v460 = vunpack.c.l.b16 %v80
  %v461 = vunpack.c.l.b16 %v81
  %v462 = vunpack.c.l.b16 %v82
  %v463 = vunpack.c.l.b16 %v83
  %v464 = vunpack.c.l.b16 %v84
  %v465 = vunpack.c.l.b16 %v85
  %v466 = vunpack.c.l.b16 %v86
  %v467 = vunpack.c.l.b16 %v87
  %v468 = vunpack.c.l.b16 %v88
  %v469 = vunpack.c.l.b16 %v89
  %v470 = vunpack.c.l.b16 %v90
  %v471 = vunpack.c.l.b16 %v91
  %v472 = vunpack.c.l.b16 %v92
  %v473 = vunpack.c.l.b16 %v93
  %v474 = vunpack.c.l.b16 %v94
  %v475 = vunpack.c.l.b16 %v95
  %v476 = vunpack.c.l.b16 %v96
  %v477 = vunpack.c.l.b16 %v97
  %v478 = vunpack.c.l.b16 %v98
  %v479 = vunpack.c.l.b16 %v99
  %v480 = vunpack.c.l.b16 %v100
  %v481 = vunpack.c.l.b16 %v101
  %v482 = vunpack.c.l.b16 %v102
  %v483 = vunpack.c.l.b16 %v103
  %v484 = vunpack.c.l.b16 %v104
  %v485 = vunpack.c.l.b16 %v105
  %v486 = vunpack.c.l.b16 %v106
  %v487 = vunpack.c.l.b16 %v107
  %v488 = vunpack.c.l.b16 %v108
  %v489 = vunpack.c.l.b16 %v109
  %v490 = vunpack.c.l.b16 %v110
  %v491 = vunpack.c.l.b16 %v111
  %v492 = vunpack.c.l.b16 %v112
  %v493 = vunpack.c.l.b16 %v113
  %v494 = vunpack.c.l.b16 %v114
  %v495 = vunpack.c.l.b16 %v115
  %v496 = vunpack.c.l.b16 %v116
  %v497 = vunpack.c.l.b16 %v117
  %v498 = vunpack.c.l.b16 %v118
  %v499 = vunpack.c.l.b16 %v119
  %v500 = vunpack.c.l.b16 %v120
  %v501 = vunpack.c.l.b16 %v121
  %v502 = vunpack.c.l.b16 %v122
  %v503 = vunpack.c.l.b16 %v123
  %v504 = vunpack.c.l.b16 %v124
  %v505 = vunpack.c.l.b16 %v125
  %v506 = vunpack.c.l.b16 %v126
  %v507 = vunpack.c.l.b16 %v127
  %v508 = vunpack.c.l.b16 %v128
  %v509 = vunpack.c.l.b16 %v129
  %v510 = vunpack.c.l.b16 %v130
  %v511 = vunpack.c.l.b16 %v131
  %v512 = vunpack.c.l.b16 %v132
  %v513 = vunpack.c.l.b16 %v133
  %v514 = vunpack.c.l.b16 %v134
  %v515 = vunpack.c.l.b16 %v135
  %v516 = vunpack.c.l.b16 %v136
  %v517 = vunpack.c.l.b16 %v137
  %v518 = vunpack.c.l.b16 %v138
  %v519 = vunpack.c.l.b16 %v139
  %v520 = vunpack.c.l.b16 %v140
  %v521 = vunpack.c.l.b16 %v141
  %v522 = vunpack.c.l.b16 %v142
  %v523 = vunpack.c.l.b16 %v143
  %v524 = vunpack.c.l.b16 %v144
  %v525 = vunpack.c.l.b16 %v145
  %v526 = vunpack.c.l.b16 %v146
  %v527 = vunpack.c.l.b16 %v147
  %v528 = vunpack.c.l.b16 %v148
  %v529 = vunpack.c.l.b16 %v149
  %v530 = vunpack.c.l.b16 %v150
  %v531 = vunpack.c.l.b16 %v151
  %v532 = vunpack.c.l.b16 %v152
  %v533 = vunpack.c.l.b16 %v153
  %v534 = vunpack.c.l.b16 %v154
  %v535 = vunpack.c.l.b16 %v155
  %v536 = vunpack.c.l.b16 %v156
  %v537 = vunpack.c.l.b16 %v157
  %v538 = vunpack.c.l.b16 %v158
  %v539 = vunpack.c.l.b16 %v159
  %v540 = vunpack.c.l.b16 %v160
  %v541 = vunpack.c.l.b16 %v161
  %v542 = vunpack.c.l.b16 %v162
  %v543 = vunpack.c.l.b16 %v163
  %v544 = vunpack.c.l.b16 %v164
  %v545 = vunpack.c.l.b16 %v165
  %v546 = vunpack.c.l.b16 %v166
  %v547 = vunpack.c.l.b16 %v167
  %v548 = vunpack.c.l.b16 %v168
  %v549 = vunpack.c.l.b16 %v169
  %v550 = vunpack.c.l.b16 %v170
  %v551 = vunpack.c.l.b16 %v171
  %v552 = vunpack.c.l.b16 %v172
  %v553 = vunpack.c.l.b16 %v173
  %v554 = vunpack.c.l.b16 %v174
  %v555 = vunpack.c.l.b16 %v175
  %v556 = vunpack.c.l.b16 %v176
  %v557 = vunpack.c.l.b16 %v177
  %v558 = vunpack.c.l.b16 %v178
  %v559 = vunpack.c.l.b16 %v179
  %v560 = vunpack.c.l.b16 %v180
  %v561 = vunpack.c.l.b16 %v181
  %v562 = vunpack.c.l.b16 %v182
  %v563 = vunpack.c.l.b16 %v183
  %v564 = vunpack.c.l.b16 %v184
  %v565 = vunpack.c.l.b16 %v185
  %v566 = vunpack.c.l.b16 %v186
  %v567 = vunpack.c.l.b16 %v187
  %v568 = vunpack.c.l.b16 %v188
  %v569 = vunpack.c.l.b16 %v189
  %v570 = vunpack.c.l.b16 %v190
  %v571 = vunpack.c.l.b16 %v191
  %v572 = vunpack.c.l.b16 %v192
  %v573 = vunpack.c.l.b16 %v193
  %v574 = vpack.c.b16 %v431, %v430
  %v575 = vpack.c.b16 %v433, %v432
  %v576 = vpack.c.b16 %v435, %v434
  %v577 = vpack.c.b16 %v437, %v436
  %v578 = vpack.c.b16 %v439, %v438
  %v579 = vpack.c.b16 %v441, %v440
  %v580 = vpack.c.b16 %v443, %v442
  %v581 = vpack.c.b16 %v445, %v444
  %v582 = vpack.c.b16 %v447, %v446
  %v583 = vpack.c.b16 %v449, %v448
  %v584 = vpack.c.b16 %v451, %v450
  %v585 = vpack.c.b16 %v453, %v452
  %v586 = vpack.c.b16 %v455, %v454
  %v587 = vpack.c.b16 %v457, %v456
  %v588 = vpack.c.b16 %v459, %v458
  %v589 = vpack.c.b16 %v461, %v460
  %v590 = vpack.c.b16 %v463, %v462
  %v591 = vpack.c.b16 %v465, %v464
  %v592 = vpack.c.b16 %v467, %v466
  %v593 = vpack.c.b16 %v469, %v468
  %v594 = vpack.c.b16 %v471, %v470
  %v595 = vpack.c.b16 %v473, %v472
  %v596 = vpack.c.b16 %v475, %v474
  %v597 = vpack.c.b16 %v477, %v476
  %v598 = vpack.c.b16 %v479, %v478
  %v599 = vpack.c.b16 %v481, %v480
  %v600 = vpack.c.b16 %v483, %v482
  %v601 = vpack.c.b16 %v485, %v484
  %v602 = vpack.c.b16 %v487, %v486
  %v603 = vpack.c.b16 %v489, %v488
  %v604 = vpack.c.b16 %v491, %v490
  %v605 = vpack.c.b16 %v493, %v492
  %v606 = vpack.c.b16 %v495, %v494
  %v607 = vpack.c.b16 %v497, %v496
  %v608 = vpack.c.b16 %v499, %v498
  %v609 = vpack.c.b16 %v501, %v500
  %v610 = vpack.c.b16 %v503, %v502
  %v611 = vpack.c.b16 %v505, %v504
  %v612 = vpack.c.b16 %v507, %v506
  %v613 = vpack.c.b16 %v509, %v508
  %v614 = vpack.c.b16 %v511, %v510
  %v615 = vpack.c.b16 %v513, %v512
  %v616 = vpack.c.b16 %v515, %v514
  %v617 = vpack.c.b16 %v517, %v516
  %v618 = vpack.c.b16 %v519, %v518
  %v619 = vpack.c.b16 %v521, %v520
  %v620 = vpack.c.b16 %v523, %v522
  %v621 = vpack.c.b16 %v525, %v524
  %v622 = vpack.c.b16 %v527, %v526
  %v623 = vpack.c.b16 %v529, %v528
  %v624 = vpack.c.b16 %v531, %v530
  %v625 = vpack.c.b16 %v533, %v532
  %v626 = vpack.c.b16 %v535, %v534
  %v627 = vpack.c.b16 %v537, %v536
  %v628 = vpack.c.b16 %v539, %v538
  %v629 = vpack.c.b16 %v541, %v540
  %v630 = vpack.c.b16 %v543, %v542
  %v631 = vpack.c.b16 %v545, %v544
  %v632 = vpack.c.b16 %v547, %v546
  %v633 = vpack.c.b16 %v549, %v548
  %v634 = vpack.c.b16 %v551, %v550
  %v635 = vpack.c.b16 %v553, %v552
  %v636 = vpack.c.b16 %v555, %v554
  %v637 = vpack.c.b16 %v557, %v556
  %v638 = vpack.c.b16 %v559, %v558
  %v639 = vpack.c.b16 %v561, %v560
  %v640 = vpack.c.b16 %v563, %v562
  %v641 = vpack.c.b16 %v565, %v564
  %v642 = vpack.c.b16 %v567, %v566
  %v643 = vpack.c.b16 %v569, %v568
  %v644 = vpack.c.b16 %v571, %v570
  %v645 = vpack.c.b16 %v573, %v572
  %718 = vmatprep.subr.bf16.mxu0 0
  %719 = vmatpush1.bf16.msra.mxu0 %v574
  %720 = vmatprep.subr.bf16.mxu0 0
  %721 = vmatpush1.bf16.msra.mxu0 %v575
  %722 = vmatprep.subr.bf16.mxu0 0
  %723 = vmatpush1.bf16.msra.mxu0 %v576
  %724 = vmatprep.subr.bf16.mxu0 0
  %725 = vmatpush1.bf16.msra.mxu0 %v577
  %726 = vmatprep.subr.bf16.mxu0 0
  %727 = vmatpush1.bf16.msra.mxu0 %v578
  %728 = vmatprep.subr.bf16.mxu0 0
  %729 = vmatpush1.bf16.msra.mxu0 %v579
  %730 = vmatprep.subr.bf16.mxu0 0
  %731 = vmatpush1.bf16.msra.mxu0 %v580
  %732 = vmatprep.subr.bf16.mxu0 0
  %733 = vmatpush1.bf16.msra.mxu0 %v581
  %734 = vmatprep.subr.bf16.mxu0 0
  %735 = vmatpush1.bf16.msra.mxu0 %v582
  %736 = vmatprep.subr.bf16.mxu0 0
  %737 = vmatpush1.bf16.msra.mxu0 %v583
  %738 = vmatprep.subr.bf16.mxu0 0
  %739 = vmatpush1.bf16.msra.mxu0 %v584
  %740 = vmatprep.subr.bf16.mxu0 0
  %741 = vmatpush1.bf16.msra.mxu0 %v585
  %742 = vmatprep.subr.bf16.mxu0 0
  %743 = vmatpush1.bf16.msra.mxu0 %v586
  %744 = vmatprep.subr.bf16.mxu0 0
  %745 = vmatpush1.bf16.msra.mxu0 %v587
  %746 = vmatprep.subr.bf16.mxu0 0
  %747 = vmatpush1.bf16.msra.mxu0 %v588
  %748 = vmatprep.subr.bf16.mxu0 0
  %749 = vmatpush1.bf16.msra.mxu0 %v589
  %750 = vmatprep.mubr.bf16.mxu0 %v251
  %751 = vmatmul.mubr.bf16.gmra.mrb[0].mxu0 %v250
  %v752 = vpop.f32.mrb[0].mxu0
  %v753 = vadd.f32 0.0, %v752
  %v754 = vpop.f32.mrb[0].mxu0
  %v755 = vpop.f32.mrb[0].mxu0
  %v756 = vadd.f32 0.0, %v755
  %v757 = vpop.f32.mrb[0].mxu0
  %758 = vmatprep.mubr.bf16.mxu0 %v260
  %759 = vmatmul.mubr.bf16.gmra.mrb[0].mxu0 %v259
  %v760 = vpop.f32.mrb[0].mxu0
  %v761 = vadd.f32 0.0, %v760
  %v762 = vpop.f32.mrb[0].mxu0
  %v763 = vpop.f32.mrb[0].mxu0
  %v764 = vadd.f32 0.0, %v763
  %v765 = vpop.f32.mrb[0].mxu0
  %766 = vdwg.mxu0
  %767 = vmatprep.subr.bf16.mxu0 0
  %768 = vmatpush1.bf16.msra.mxu0 %v590
  %769 = vmatprep.subr.bf16.mxu0 0
  %770 = vmatpush1.bf16.msra.mxu0 %v591
  %771 = vmatprep.subr.bf16.mxu0 0
  %772 = vmatpush1.bf16.msra.mxu0 %v592
  %773 = vmatprep.subr.bf16.mxu0 0
  %774 = vmatpush1.bf16.msra.mxu0 %v593
  %775 = vmatprep.subr.bf16.mxu0 0
  %776 = vmatpush1.bf16.msra.mxu0 %v594
  %777 = vmatprep.subr.bf16.mxu0 0
  %778 = vmatpush1.bf16.msra.mxu0 %v595
  %779 = vmatprep.subr.bf16.mxu0 0
  %780 = vmatpush1.bf16.msra.mxu0 %v596
  %781 = vmatprep.subr.bf16.mxu0 0
  %782 = vmatpush1.bf16.msra.mxu0 %v597
  %783 = vmatprep.subr.bf16.mxu0 0
  %784 = vmatpush1.bf16.msra.mxu0 %v598
  %785 = vmatprep.subr.bf16.mxu0 0
  %786 = vmatpush1.bf16.msra.mxu0 %v599
  %787 = vmatprep.subr.bf16.mxu0 0
  %788 = vmatpush1.bf16.msra.mxu0 %v600
  %789 = vmatprep.subr.bf16.mxu0 0
  %790 = vmatpush1.bf16.msra.mxu0 %v601
  %791 = vmatprep.subr.bf16.mxu0 0
  %792 = vmatpush1.bf16.msra.mxu0 %v602
  %793 = vmatprep.subr.bf16.mxu0 0
  %794 = vmatpush1.bf16.msra.mxu0 %v603
  %795 = vmatprep.subr.bf16.mxu0 0
  %796 = vmatpush1.bf16.msra.mxu0 %v604
  %797 = vmatprep.subr.bf16.mxu0 0
  %798 = vmatpush1.bf16.msra.mxu0 %v605
  %799 = vmatprep.mubr.bf16.mxu0 %v253
  %800 = vmatmul.mubr.bf16.gmra.mrb[0].mxu0 %v252
  %v801 = vpop.f32.mrb[0].mxu0
  %v802 = vadd.f32 %v753, %v801
  %v803 = vpop.f32.mrb[0].mxu0
  %v804 = vpop.f32.mrb[0].mxu0
  %v805 = vadd.f32 %v756, %v804
  %v806 = vpop.f32.mrb[0].mxu0
  %807 = vmatprep.mubr.bf16.mxu0 %v262
  %808 = vmatmul.mubr.bf16.gmra.mrb[0].mxu0 %v261
  %v809 = vpop.f32.mrb[0].mxu0
  %v810 = vadd.f32 %v761, %v809
  %v811 = vpop.f32.mrb[0].mxu0
  %v812 = vpop.f32.mrb[0].mxu0
  %v813 = vadd.f32 %v764, %v812
  %v814 = vpop.f32.mrb[0].mxu0
  %815 = vdwg.mxu0
  %816 = vmatprep.subr.bf16.mxu0 0
  %817 = vmatpush1.bf16.msra.mxu0 %v606
  %818 = vmatprep.subr.bf16.mxu0 0
  %819 = vmatpush1.bf16.msra.mxu0 %v607
  %820 = vmatprep.subr.bf16.mxu0 0
  %821 = vmatpush1.bf16.msra.mxu0 %v608
  %822 = vmatprep.subr.bf16.mxu0 0
  %823 = vmatpush1.bf16.msra.mxu0 %v609
  %824 = vmatprep.subr.bf16.mxu0 0
  %825 = vmatpush1.bf16.msra.mxu0 %v610
  %826 = vmatprep.subr.bf16.mxu0 0
  %827 = vmatpush1.bf16.msra.mxu0 %v611
  %828 = vmatprep.subr.bf16.mxu0 0
  %829 = vmatpush1.bf16.msra.mxu0 %v612
  %830 = vmatprep.subr.bf16.mxu0 0
  %831 = vmatpush1.bf16.msra.mxu0 %v613
  %832 = vmatprep.subr.bf16.mxu0 0
  %833 = vmatpush1.bf16.msra.mxu0 %v614
  %834 = vmatprep.subr.bf16.mxu0 0
  %835 = vmatpush1.bf16.msra.mxu0 %v615
  %836 = vmatprep.subr.bf16.mxu0 0
  %837 = vmatpush1.bf16.msra.mxu0 %v616
  %838 = vmatprep.subr.bf16.mxu0 0
  %839 = vmatpush1.bf16.msra.mxu0 %v617
  %840 = vmatprep.subr.bf16.mxu0 0
  %841 = vmatpush1.bf16.msra.mxu0 %v618
  %842 = vmatprep.subr.bf16.mxu0 0
  %843 = vmatpush1.bf16.msra.mxu0 %v619
  %844 = vmatprep.subr.bf16.mxu0 0
  %845 = vmatpush1.bf16.msra.mxu0 %v620
  %846 = vmatprep.subr.bf16.mxu0 0
  %847 = vmatpush1.bf16.msra.mxu0 %v621
  %848 = vmatprep.mubr.bf16.mxu0 %v255
  %849 = vmatmul.mubr.bf16.gmra.mrb[0].mxu0 %v254
  %v850 = vpop.f32.mrb[0].mxu0
  %v851 = vadd.f32 %v802, %v850
  %v852 = vpop.f32.mrb[0].mxu0
  %v853 = vpop.f32.mrb[0].mxu0
  %v854 = vadd.f32 %v805, %v853
  %v855 = vpop.f32.mrb[0].mxu0
  %856 = vmatprep.mubr.bf16.mxu0 %v264
  %857 = vmatmul.mubr.bf16.gmra.mrb[0].mxu0 %v263
  %v858 = vpop.f32.mrb[0].mxu0
  %v859 = vadd.f32 %v810, %v858
  %v860 = vpop.f32.mrb[0].mxu0
  %v861 = vpop.f32.mrb[0].mxu0
  %v862 = vadd.f32 %v813, %v861
  %v863 = vpop.f32.mrb[0].mxu0
  %864 = vdwg.mxu0
  %865 = vmatprep.subr.bf16.mxu0 0
  %866 = vmatpush1.bf16.msra.mxu0 %v622
  %867 = vmatprep.subr.bf16.mxu0 0
  %868 = vmatpush1.bf16.msra.mxu0 %v623
  %869 = vmatprep.subr.bf16.mxu0 0
  %870 = vmatpush1.bf16.msra.mxu0 %v624
  %871 = vmatprep.subr.bf16.mxu0 0
  %872 = vmatpush1.bf16.msra.mxu0 %v625
  %873 = vmatprep.subr.bf16.mxu0 0
  %874 = vmatpush1.bf16.msra.mxu0 %v626
  %875 = vmatprep.subr.bf16.mxu0 0
  %876 = vmatpush1.bf16.msra.mxu0 %v627
  %877 = vmatprep.subr.bf16.mxu0 0
  %878 = vmatpush1.bf16.msra.mxu0 %v628
  %879 = vmatprep.subr.bf16.mxu0 0
  %880 = vmatpush1.bf16.msra.mxu0 %v629
  %881 = vmatprep.subr.bf16.mxu0 0
  %882 = vmatpush1.bf16.msra.mxu0 %v630
  %883 = vmatprep.subr.bf16.mxu0 0
  %884 = vmatpush1.bf16.msra.mxu0 %v631
  %885 = vmatprep.subr.bf16.mxu0 0
  %886 = vmatpush1.bf16.msra.mxu0 %v632
  %887 = vmatprep.subr.bf16.mxu0 0
  %888 = vmatpush1.bf16.msra.mxu0 %v633
  %889 = vmatprep.subr.bf16.mxu0 0
  %890 = vmatpush1.bf16.msra.mxu0 %v634
  %891 = vmatprep.subr.bf16.mxu0 0
  %892 = vmatpush1.bf16.msra.mxu0 %v635
  %893 = vmatprep.subr.bf16.mxu0 0
  %894 = vmatpush1.bf16.msra.mxu0 %v636
  %895 = vmatprep.subr.bf16.mxu0 0
  %896 = vmatpush1.bf16.msra.mxu0 %v637
  %897 = vmatprep.mubr.bf16.mxu0 %v257
  %898 = vmatmul.mubr.bf16.gmra.mrb[0].mxu0 %v256
  %v899 = vpop.f32.mrb[0].mxu0
  %v900 = vadd.f32 %v851, %v899
  %v901 = vpop.f32.mrb[0].mxu0
  %v902 = vpop.f32.mrb[0].mxu0
  %v903 = vadd.f32 %v854, %v902
  %v904 = vpop.f32.mrb[0].mxu0
  %905 = vmatprep.mubr.bf16.mxu0 %v266
  %906 = vmatmul.mubr.bf16.gmra.mrb[0].mxu0 %v265
  %v907 = vpop.f32.mrb[0].mxu0
  %v908 = vadd.f32 %v859, %v907
  %v909 = vpop.f32.mrb[0].mxu0
  %v910 = vpop.f32.mrb[0].mxu0
  %v911 = vadd.f32 %v862, %v910
  %v912 = vpop.f32.mrb[0].mxu0
  %913 = vdwg.mxu0
  %914 = vmatprep.subr.bf16.mxu0 0
  %915 = vmatpush1.bf16.msra.mxu0 %v638
  %916 = vmatprep.subr.bf16.mxu0 0
  %917 = vmatpush1.bf16.msra.mxu0 %v639
  %918 = vmatprep.subr.bf16.mxu0 0
  %919 = vmatpush1.bf16.msra.mxu0 %v640
  %920 = vmatprep.subr.bf16.mxu0 0
  %921 = vmatpush1.bf16.msra.mxu0 %v641
  %922 = vmatprep.subr.bf16.mxu0 0
  %923 = vmatpush1.bf16.msra.mxu0 %v642
  %924 = vmatprep.subr.bf16.mxu0 0
  %925 = vmatpush1.bf16.msra.mxu0 %v643
  %926 = vmatprep.subr.bf16.mxu0 0
  %927 = vmatpush1.bf16.msra.mxu0 %v644
  %928 = vmatprep.subr.bf16.mxu0 0
  %929 = vmatpush1.bf16.msra.mxu0 %v645
  %930 = vmatprep.subr.bf16.mxu0 0
  %931 = vmatpush1.bf16.msra.mxu0 0
  %932 = vmatprep.subr.bf16.mxu0 0
  %933 = vmatpush1.bf16.msra.mxu0 0
  %934 = vmatprep.subr.bf16.mxu0 0
  %935 = vmatpush1.bf16.msra.mxu0 0
  %936 = vmatprep.subr.bf16.mxu0 0
  %937 = vmatpush1.bf16.msra.mxu0 0
  %938 = vmatprep.subr.bf16.mxu0 0
  %939 = vmatpush1.bf16.msra.mxu0 0
  %940 = vmatprep.subr.bf16.mxu0 0
  %941 = vmatpush1.bf16.msra.mxu0 0
  %942 = vmatprep.subr.bf16.mxu0 0
  %943 = vmatpush1.bf16.msra.mxu0 0
  %944 = vmatprep.subr.bf16.mxu0 0
  %945 = vmatpush1.bf16.msra.mxu0 0
  %946 = vmatprep.mubr.bf16.mxu0 0
  %947 = vmatmul.mubr.bf16.gmra.mrb[0].mxu0 %v258
  %v948 = vpop.f32.mrb[0].mxu0
  %v949 = vadd.f32 %v900, %v948
  %v950 = vpop.f32.mrb[0].mxu0
  %v951 = vpop.f32.mrb[0].mxu0
  %v952 = vadd.f32 %v903, %v951
  %v953 = vpop.f32.mrb[0].mxu0
  %954 = vmatprep.mubr.bf16.mxu0 0
  %955 = vmatmul.mubr.bf16.gmra.mrb[0].mxu0 %v267
  %v956 = vpop.f32.mrb[0].mxu0
  %v957 = vadd.f32 %v908, %v956
  %v958 = vpop.f32.mrb[0].mxu0
  %v959 = vpop.f32.mrb[0].mxu0
  %v960 = vadd.f32 %v911, %v959
  %v961 = vpop.f32.mrb[0].mxu0
  %962 = vdwg.mxu0
  %v963 = vadd.f32 %v26, %v949
  %v964 = vadd.f32 %v27, %v952
  %v965 = vadd.f32 %v28, %v957
  %v966 = vadd.f32 %v29, %v960
  %967 = vst [vmem:[#allocation2] sm:$0xff] %v963
  %968 = vst [vmem:[#allocation2 + $0x8] sm:$0xff] %v964
  %969 = vst [vmem:[#allocation2 + $0x10] sm:$0xff] %v965
  %970 = vst [vmem:[#allocation2 + $0x18] sm:$0xff] %v966
  // Predicated region
  $region22: #{strided_encoder.14} parent=0 // pred_check
    %p971 = pneg %p18
  $region23: #{strided_encoder.14} parent=0 // pred_check_branch
    %973 = sbr.rel (%p971) target = $region25
  $region24: #{strided_encoder.14} parent=0 // pred_region
    %v974 = vld [vmem:[#allocation2] sm:$0xff]
    %v975 = vld [vmem:[#allocation2 + $0x8] sm:$0xff]
    %v976 = vld [vmem:[#allocation2 + $0x10] sm:$0xff]
    %v977 = vld [vmem:[#allocation2 + $0x18] sm:$0xff]
    %v978 = vld [vmem:[%s2] sm:$0x1]
    %v980 = vlaneseq
    %v981 = vshrl.u32 %v980, 7
    %v982 = vsub.s32 0, %v981
    %v983 = vrot.slane %v978, %v982
    %v985 = vmul.f32 %v974, %v983
    %v986 = vmul.f32 %v975, %v983
    %v987 = vmul.f32 %v976, %v983
    %v988 = vmul.f32 %v977, %v983
    %v989 = vld [vmem:[%s3] sm:$0x1]
    %v991 = vlaneseq
    %v992 = vshrl.u32 %v991, 7
    %v993 = vsub.s32 0, %v992
    %v994 = vrot.slane %v989, %v993
    %v996 = vadd.f32 %v985, %v994
    %v997 = vadd.f32 %v986, %v994
    %v998 = vadd.f32 %v987, %v994
    %v999 = vadd.f32 %v988, %v994
    %v1000 = vmax.f32 %v996, 0.0
    %v1001 = vmax.f32 %v997, 0.0
    %v1002 = vmax.f32 %v998, 0.0
    %v1003 = vmax.f32 %v999, 0.0
    %v1004 = vpack.c.bf16 %v1001, %v1000
    %v1005 = vpack.c.bf16 %v1003, %v1002
    %v1008 = vunpack.c.l.b16 %v1004
    %v1009 = vunpack.c.h.b16 %v1004
    %v1010 = vunpack.c.l.b16 %v1005
    %v1011 = vunpack.c.h.b16 %v1005
    %v1012 = vpack.c.b16 %v1008, %v1008
    %v1013 = vpack.c.b16 %v1009, %v1009
    %v1014 = vpack.c.b16 %v1010, %v1010
    %v1015 = vpack.c.b16 %v1011, %v1011
    %1020 = vst [vmem:[%s4] sm:$0xf] %v1012
    %1021 = vst [vmem:[%s4 + $0x4] sm:$0xf] %v1013
    %1022 = vst [vmem:[%s4 + $0x8] sm:$0xf] %v1014
    %1023 = vst [vmem:[%s4 + $0xc] sm:$0xf] %v1015
  $region25: #{strided_encoder.14} parent=0 // pred_fallthru
    _
  // Predicated region
  $region26: #{strided_encoder.14} parent=0 // pred_check
    _
  $region27: #{strided_encoder.14} parent=0 // pred_check_branch
    %1025 = sbr.rel (0) target = $region29
  $region28: #{strided_encoder.14} parent=0 // pred_region
    _
  $region29: #{strided_encoder.14} parent=0 // pred_fallthru
    _
  // Predicated region
  $region30: #{strided_encoder.14} parent=0 // pred_check
    _
  $region31: #{strided_encoder.14} parent=0 // pred_check_branch
    %1027 = sbr.rel (0) target = $region33
  $region32: #{strided_encoder.14} parent=0 // pred_region
    _
  $region33: #{strided_encoder.14} parent=0 // pred_fallthru
    _

// kernel: strided_encoder.16
$region0: #{strided_encoder.16}
  #allocation0 [shape = 'u32[]', space=smem, size = 0x4, offset = 0x4, fixed_abs, tag = 'smem constant byte address 0x4 - core index']
  #allocation1 [shape = 'u32[144,128]{1,0:T(1,128)}', space=vmem, size = 0x12000, scoped, tag = 'internal scratch']
  #allocation2 [shape = 'f32[16,128]{1,0:T(8,128)}', space=vmem, size = 0x2000, scoped, tag = 'scratch operand']
  %s0 = inlined_call_operand.vmem [shape: bf16[16,1152], index: 0, kind: input, shape index: {}]
  %s1 = inlined_call_operand.vmem [shape: bf16[1152,128], index: 1, kind: input, shape index: {}]
  %s2 = inlined_call_operand.vmem [shape: f32[1,128], index: 2, kind: input, shape index: {}]
  %s3 = inlined_call_operand.vmem [shape: f32[1,128], index: 3, kind: input, shape index: {}]
  %s4 = inlined_call_operand.vmem [shape: bf16[16,128], index: 4, kind: output, shape index: {}]
  %s5 = sld [smem:[#allocation0]]
  $region34: #{strided_encoder.16} parent=0
    _
  %s7 = ssub.s32 1, %s5
  %s8 = scalar_select 0, %s7, %s5
  // Predicated region
  $region2: #{strided_encoder.16} parent=0 // pred_check
    _
  $region3: #{strided_encoder.16} parent=0 // pred_check_branch
    %10 = sbr.rel (0) target = $region5
  $region4: #{strided_encoder.16} parent=0 // pred_region
    _
  $region5: #{strided_encoder.16} parent=0 // pred_fallthru
    _
  // Predicated region
  $region6: #{strided_encoder.16} parent=0 // pred_check
    _
  $region7: #{strided_encoder.16} parent=0 // pred_check_branch
    %12 = sbr.rel (0) target = $region9
  $region8: #{strided_encoder.16} parent=0 // pred_region
    _
  $region9: #{strided_encoder.16} parent=0 // pred_fallthru
    _
  // Predicated region
  $region10: #{strided_encoder.16} parent=0 // pred_check
    _
  $region11: #{strided_encoder.16} parent=0 // pred_check_branch
    %14 = sbr.rel (0) target = $region13
  $region12: #{strided_encoder.16} parent=0 // pred_region
    _
  $region13: #{strided_encoder.16} parent=0 // pred_fallthru
    _
  // Predicated region
  $region14: #{strided_encoder.16} parent=0 // pred_check
    _
  $region15: #{strided_encoder.16} parent=0 // pred_check_branch
    %16 = sbr.rel (0) target = $region17
  $region16: #{strided_encoder.16} parent=0 // pred_region
    _
  $region17: #{strided_encoder.16} parent=0 // pred_fallthru
    _
  %p18 = scmp.eq.s32.totalorder 0, 0
  // Predicated region
  $region18: #{strided_encoder.16} parent=0 // pred_check
    %p19 = pneg %p18
  $region19: #{strided_encoder.16} parent=0 // pred_check_branch
    %21 = sbr.rel (%p19) target = $region21
  $region20: #{strided_encoder.16} parent=0 // pred_region
    %22 = vst [vmem:[#allocation2] sm:$0xff] 0.0
    %23 = vst [vmem:[#allocation2 + $0x8] sm:$0xff] 0.0
  $region21: #{strided_encoder.16} parent=0 // pred_fallthru
    _
  %v24 = vld [vmem:[#allocation2] sm:$0xff]
  %v25 = vld [vmem:[#allocation2 + $0x8] sm:$0xff]
  %v26 = vld [vmem:[%s0] sm:$0xff]
  %v27 = vld [vmem:[%s0 + $0x8] sm:$0xff]
  %v28 = vld [vmem:[%s0 + $0x10] sm:$0xff]
  %v29 = vld [vmem:[%s0 + $0x18] sm:$0xff]
  %v30 = vld [vmem:[%s0 + $0x20] sm:$0xf]
  %v31 = vld [vmem:[%s0 + $0x24] sm:$0xff]
  %v32 = vld [vmem:[%s0 + $0x2c] sm:$0xff]
  %v33 = vld [vmem:[%s0 + $0x34] sm:$0xff]
  %v34 = vld [vmem:[%s0 + $0x3c] sm:$0xff]
  %v35 = vld [vmem:[%s0 + $0x44] sm:$0xf]
  %v36 = vld [vmem:[%s1] sm:$0xf]
  %v37 = vld [vmem:[%s1 + $0x4] sm:$0xf]
  %v38 = vld [vmem:[%s1 + $0x8] sm:$0xf]
  %v39 = vld [vmem:[%s1 + $0xc] sm:$0xf]
  %v40 = vld [vmem:[%s1 + $0x10] sm:$0xf]
  %v41 = vld [vmem:[%s1 + $0x14] sm:$0xf]
  %v42 = vld [vmem:[%s1 + $0x18] sm:$0xf]
  %v43 = vld [vmem:[%s1 + $0x1c] sm:$0xf]
  %v44 = vld [vmem:[%s1 + $0x20] sm:$0xf]
  %v45 = vld [vmem:[%s1 + $0x24] sm:$0xf]
  %v46 = vld [vmem:[%s1 + $0x28] sm:$0xf]
  %v47 = vld [vmem:[%s1 + $0x2c] sm:$0xf]
  %v48 = vld [vmem:[%s1 + $0x30] sm:$0xf]
  %v49 = vld [vmem:[%s1 + $0x34] sm:$0xf]
  %v50 = vld [vmem:[%s1 + $0x38] sm:$0xf]
  %v51 = vld [vmem:[%s1 + $0x3c] sm:$0xf]
  %v52 = vld [vmem:[%s1 + $0x40] sm:$0xf]
  %v53 = vld [vmem:[%s1 + $0x44] sm:$0xf]
  %v54 = vld [vmem:[%s1 + $0x48] sm:$0xf]
  %v55 = vld [vmem:[%s1 + $0x4c] sm:$0xf]
  %v56 = vld [vmem:[%s1 + $0x50] sm:$0xf]
  %v57 = vld [vmem:[%s1 + $0x54] sm:$0xf]
  %v58 = vld [vmem:[%s1 + $0x58] sm:$0xf]
  %v59 = vld [vmem:[%s1 + $0x5c] sm:$0xf]
  %v60 = vld [vmem:[%s1 + $0x60] sm:$0xf]
  %v61 = vld [vmem:[%s1 + $0x64] sm:$0xf]
  %v62 = vld [vmem:[%s1 + $0x68] sm:$0xf]
  %v63 = vld [vmem:[%s1 + $0x6c] sm:$0xf]
  %v64 = vld [vmem:[%s1 + $0x70] sm:$0xf]
  %v65 = vld [vmem:[%s1 + $0x74] sm:$0xf]
  %v66 = vld [vmem:[%s1 + $0x78] sm:$0xf]
  %v67 = vld [vmem:[%s1 + $0x7c] sm:$0xf]
  %v68 = vld [vmem:[%s1 + $0x80] sm:$0xf]
  %v69 = vld [vmem:[%s1 + $0x84] sm:$0xf]
  %v70 = vld [vmem:[%s1 + $0x88] sm:$0xf]
  %v71 = vld [vmem:[%s1 + $0x8c] sm:$0xf]
  %v72 = vld [vmem:[%s1 + $0x90] sm:$0xf]
  %v73 = vld [vmem:[%s1 + $0x94] sm:$0xf]
  %v74 = vld [vmem:[%s1 + $0x98] sm:$0xf]
  %v75 = vld [vmem:[%s1 + $0x9c] sm:$0xf]
  %v76 = vld [vmem:[%s1 + $0xa0] sm:$0xf]
  %v77 = vld [vmem:[%s1 + $0xa4] sm:$0xf]
  %v78 = vld [vmem:[%s1 + $0xa8] sm:$0xf]
  %v79 = vld [vmem:[%s1 + $0xac] sm:$0xf]
  %v80 = vld [vmem:[%s1 + $0xb0] sm:$0xf]
  %v81 = vld [vmem:[%s1 + $0xb4] sm:$0xf]
  %v82 = vld [vmem:[%s1 + $0xb8] sm:$0xf]
  %v83 = vld [vmem:[%s1 + $0xbc] sm:$0xf]
  %v84 = vld [vmem:[%s1 + $0xc0] sm:$0xf]
  %v85 = vld [vmem:[%s1 + $0xc4] sm:$0xf]
  %v86 = vld [vmem:[%s1 + $0xc8] sm:$0xf]
  %v87 = vld [vmem:[%s1 + $0xcc] sm:$0xf]
  %v88 = vld [vmem:[%s1 + $0xd0] sm:$0xf]
  %v89 = vld [vmem:[%s1 + $0xd4] sm:$0xf]
  %v90 = vld [vmem:[%s1 + $0xd8] sm:$0xf]
  %v91 = vld [vmem:[%s1 + $0xdc] sm:$0xf]
  %v92 = vld [vmem:[%s1 + $0xe0] sm:$0xf]
  %v93 = vld [vmem:[%s1 + $0xe4] sm:$0xf]
  %v94 = vld [vmem:[%s1 + $0xe8] sm:$0xf]
  %v95 = vld [vmem:[%s1 + $0xec] sm:$0xf]
  %v96 = vld [vmem:[%s1 + $0xf0] sm:$0xf]
  %v97 = vld [vmem:[%s1 + $0xf4] sm:$0xf]
  %v98 = vld [vmem:[%s1 + $0xf8] sm:$0xf]
  %v99 = vld [vmem:[%s1 + $0xfc] sm:$0xf]
  %v100 = vld [vmem:[%s1 + $0x100] sm:$0xf]
  %v101 = vld [vmem:[%s1 + $0x104] sm:$0xf]
  %v102 = vld [vmem:[%s1 + $0x108] sm:$0xf]
  %v103 = vld [vmem:[%s1 + $0x10c] sm:$0xf]
  %v104 = vld [vmem:[%s1 + $0x110] sm:$0xf]
  %v105 = vld [vmem:[%s1 + $0x114] sm:$0xf]
  %v106 = vld [vmem:[%s1 + $0x118] sm:$0xf]
  %v107 = vld [vmem:[%s1 + $0x11c] sm:$0xf]
  %v108 = vld [vmem:[%s1 + $0x120] sm:$0xf]
  %v109 = vld [vmem:[%s1 + $0x124] sm:$0xf]
  %v110 = vld [vmem:[%s1 + $0x128] sm:$0xf]
  %v111 = vld [vmem:[%s1 + $0x12c] sm:$0xf]
  %v112 = vld [vmem:[%s1 + $0x130] sm:$0xf]
  %v113 = vld [vmem:[%s1 + $0x134] sm:$0xf]
  %v114 = vld [vmem:[%s1 + $0x138] sm:$0xf]
  %v115 = vld [vmem:[%s1 + $0x13c] sm:$0xf]
  %v116 = vld [vmem:[%s1 + $0x140] sm:$0xf]
  %v117 = vld [vmem:[%s1 + $0x144] sm:$0xf]
  %v118 = vld [vmem:[%s1 + $0x148] sm:$0xf]
  %v119 = vld [vmem:[%s1 + $0x14c] sm:$0xf]
  %v120 = vld [vmem:[%s1 + $0x150] sm:$0xf]
  %v121 = vld [vmem:[%s1 + $0x154] sm:$0xf]
  %v122 = vld [vmem:[%s1 + $0x158] sm:$0xf]
  %v123 = vld [vmem:[%s1 + $0x15c] sm:$0xf]
  %v124 = vld [vmem:[%s1 + $0x160] sm:$0xf]
  %v125 = vld [vmem:[%s1 + $0x164] sm:$0xf]
  %v126 = vld [vmem:[%s1 + $0x168] sm:$0xf]
  %v127 = vld [vmem:[%s1 + $0x16c] sm:$0xf]
  %v128 = vld [vmem:[%s1 + $0x170] sm:$0xf]
  %v129 = vld [vmem:[%s1 + $0x174] sm:$0xf]
  %v130 = vld [vmem:[%s1 + $0x178] sm:$0xf]
  %v131 = vld [vmem:[%s1 + $0x17c] sm:$0xf]
  %v132 = vld [vmem:[%s1 + $0x180] sm:$0xf]
  %v133 = vld [vmem:[%s1 + $0x184] sm:$0xf]
  %v134 = vld [vmem:[%s1 + $0x188] sm:$0xf]
  %v135 = vld [vmem:[%s1 + $0x18c] sm:$0xf]
  %v136 = vld [vmem:[%s1 + $0x190] sm:$0xf]
  %v137 = vld [vmem:[%s1 + $0x194] sm:$0xf]
  %v138 = vld [vmem:[%s1 + $0x198] sm:$0xf]
  %v139 = vld [vmem:[%s1 + $0x19c] sm:$0xf]
  %v140 = vld [vmem:[%s1 + $0x1a0] sm:$0xf]
  %v141 = vld [vmem:[%s1 + $0x1a4] sm:$0xf]
  %v142 = vld [vmem:[%s1 + $0x1a8] sm:$0xf]
  %v143 = vld [vmem:[%s1 + $0x1ac] sm:$0xf]
  %v144 = vld [vmem:[%s1 + $0x1b0] sm:$0xf]
  %v145 = vld [vmem:[%s1 + $0x1b4] sm:$0xf]
  %v146 = vld [vmem:[%s1 + $0x1b8] sm:$0xf]
  %v147 = vld [vmem:[%s1 + $0x1bc] sm:$0xf]
  %v148 = vld [vmem:[%s1 + $0x1c0] sm:$0xf]
  %v149 = vld [vmem:[%s1 + $0x1c4] sm:$0xf]
  %v150 = vld [vmem:[%s1 + $0x1c8] sm:$0xf]
  %v151 = vld [vmem:[%s1 + $0x1cc] sm:$0xf]
  %v152 = vld [vmem:[%s1 + $0x1d0] sm:$0xf]
  %v153 = vld [vmem:[%s1 + $0x1d4] sm:$0xf]
  %v154 = vld [vmem:[%s1 + $0x1d8] sm:$0xf]
  %v155 = vld [vmem:[%s1 + $0x1dc] sm:$0xf]
  %v156 = vld [vmem:[%s1 + $0x1e0] sm:$0xf]
  %v157 = vld [vmem:[%s1 + $0x1e4] sm:$0xf]
  %v158 = vld [vmem:[%s1 + $0x1e8] sm:$0xf]
  %v159 = vld [vmem:[%s1 + $0x1ec] sm:$0xf]
  %v160 = vld [vmem:[%s1 + $0x1f0] sm:$0xf]
  %v161 = vld [vmem:[%s1 + $0x1f4] sm:$0xf]
  %v162 = vld [vmem:[%s1 + $0x1f8] sm:$0xf]
  %v163 = vld [vmem:[%s1 + $0x1fc] sm:$0xf]
  %v164 = vld [vmem:[%s1 + $0x200] sm:$0xf]
  %v165 = vld [vmem:[%s1 + $0x204] sm:$0xf]
  %v166 = vld [vmem:[%s1 + $0x208] sm:$0xf]
  %v167 = vld [vmem:[%s1 + $0x20c] sm:$0xf]
  %v168 = vld [vmem:[%s1 + $0x210] sm:$0xf]
  %v169 = vld [vmem:[%s1 + $0x214] sm:$0xf]
  %v170 = vld [vmem:[%s1 + $0x218] sm:$0xf]
  %v171 = vld [vmem:[%s1 + $0x21c] sm:$0xf]
  %v172 = vld [vmem:[%s1 + $0x220] sm:$0xf]
  %v173 = vld [vmem:[%s1 + $0x224] sm:$0xf]
  %v174 = vld [vmem:[%s1 + $0x228] sm:$0xf]
  %v175 = vld [vmem:[%s1 + $0x22c] sm:$0xf]
  %v176 = vld [vmem:[%s1 + $0x230] sm:$0xf]
  %v177 = vld [vmem:[%s1 + $0x234] sm:$0xf]
  %v178 = vld [vmem:[%s1 + $0x238] sm:$0xf]
  %v179 = vld [vmem:[%s1 + $0x23c] sm:$0xf]
  %v190 = vunpack.c.l.b16 %v26
  %v191 = vunpack.c.h.b16 %v26
  %v192 = vunpack.c.l.b16 %v27
  %v193 = vunpack.c.h.b16 %v27
  %v194 = vunpack.c.l.b16 %v28
  %v195 = vunpack.c.h.b16 %v28
  %v196 = vunpack.c.l.b16 %v29
  %v197 = vunpack.c.h.b16 %v29
  %v198 = vunpack.c.l.b16 %v30
  %v199 = vunpack.c.l.b16 %v31
  %v200 = vunpack.c.h.b16 %v31
  %v201 = vunpack.c.l.b16 %v32
  %v202 = vunpack.c.h.b16 %v32
  %v203 = vunpack.c.l.b16 %v33
  %v204 = vunpack.c.h.b16 %v33
  %v205 = vunpack.c.l.b16 %v34
  %v206 = vunpack.c.h.b16 %v34
  %v207 = vunpack.c.l.b16 %v35
  %v208 = vpack.c.b16 %v199, %v190
  %v209 = vpack.c.b16 %v200, %v191
  %v210 = vpack.c.b16 %v201, %v192
  %v211 = vpack.c.b16 %v202, %v193
  %v212 = vpack.c.b16 %v203, %v194
  %v213 = vpack.c.b16 %v204, %v195
  %v214 = vpack.c.b16 %v205, %v196
  %v215 = vpack.c.b16 %v206, %v197
  %v216 = vpack.c.b16 %v207, %v198
  %v370 = vunpack.c.l.b16 %v36
  %v371 = vunpack.c.l.b16 %v37
  %v372 = vunpack.c.l.b16 %v38
  %v373 = vunpack.c.l.b16 %v39
  %v374 = vunpack.c.l.b16 %v40
  %v375 = vunpack.c.l.b16 %v41
  %v376 = vunpack.c.l.b16 %v42
  %v377 = vunpack.c.l.b16 %v43
  %v378 = vunpack.c.l.b16 %v44
  %v379 = vunpack.c.l.b16 %v45
  %v380 = vunpack.c.l.b16 %v46
  %v381 = vunpack.c.l.b16 %v47
  %v382 = vunpack.c.l.b16 %v48
  %v383 = vunpack.c.l.b16 %v49
  %v384 = vunpack.c.l.b16 %v50
  %v385 = vunpack.c.l.b16 %v51
  %v386 = vunpack.c.l.b16 %v52
  %v387 = vunpack.c.l.b16 %v53
  %v388 = vunpack.c.l.b16 %v54
  %v389 = vunpack.c.l.b16 %v55
  %v390 = vunpack.c.l.b16 %v56
  %v391 = vunpack.c.l.b16 %v57
  %v392 = vunpack.c.l.b16 %v58
  %v393 = vunpack.c.l.b16 %v59
  %v394 = vunpack.c.l.b16 %v60
  %v395 = vunpack.c.l.b16 %v61
  %v396 = vunpack.c.l.b16 %v62
  %v397 = vunpack.c.l.b16 %v63
  %v398 = vunpack.c.l.b16 %v64
  %v399 = vunpack.c.l.b16 %v65
  %v400 = vunpack.c.l.b16 %v66
  %v401 = vunpack.c.l.b16 %v67
  %v402 = vunpack.c.l.b16 %v68
  %v403 = vunpack.c.l.b16 %v69
  %v404 = vunpack.c.l.b16 %v70
  %v405 = vunpack.c.l.b16 %v71
  %v406 = vunpack.c.l.b16 %v72
  %v407 = vunpack.c.l.b16 %v73
  %v408 = vunpack.c.l.b16 %v74
  %v409 = vunpack.c.l.b16 %v75
  %v410 = vunpack.c.l.b16 %v76
  %v411 = vunpack.c.l.b16 %v77
  %v412 = vunpack.c.l.b16 %v78
  %v413 = vunpack.c.l.b16 %v79
  %v414 = vunpack.c.l.b16 %v80
  %v415 = vunpack.c.l.b16 %v81
  %v416 = vunpack.c.l.b16 %v82
  %v417 = vunpack.c.l.b16 %v83
  %v418 = vunpack.c.l.b16 %v84
  %v419 = vunpack.c.l.b16 %v85
  %v420 = vunpack.c.l.b16 %v86
  %v421 = vunpack.c.l.b16 %v87
  %v422 = vunpack.c.l.b16 %v88
  %v423 = vunpack.c.l.b16 %v89
  %v424 = vunpack.c.l.b16 %v90
  %v425 = vunpack.c.l.b16 %v91
  %v426 = vunpack.c.l.b16 %v92
  %v427 = vunpack.c.l.b16 %v93
  %v428 = vunpack.c.l.b16 %v94
  %v429 = vunpack.c.l.b16 %v95
  %v430 = vunpack.c.l.b16 %v96
  %v431 = vunpack.c.l.b16 %v97
  %v432 = vunpack.c.l.b16 %v98
  %v433 = vunpack.c.l.b16 %v99
  %v434 = vunpack.c.l.b16 %v100
  %v435 = vunpack.c.l.b16 %v101
  %v436 = vunpack.c.l.b16 %v102
  %v437 = vunpack.c.l.b16 %v103
  %v438 = vunpack.c.l.b16 %v104
  %v439 = vunpack.c.l.b16 %v105
  %v440 = vunpack.c.l.b16 %v106
  %v441 = vunpack.c.l.b16 %v107
  %v442 = vunpack.c.l.b16 %v108
  %v443 = vunpack.c.l.b16 %v109
  %v444 = vunpack.c.l.b16 %v110
  %v445 = vunpack.c.l.b16 %v111
  %v446 = vunpack.c.l.b16 %v112
  %v447 = vunpack.c.l.b16 %v113
  %v448 = vunpack.c.l.b16 %v114
  %v449 = vunpack.c.l.b16 %v115
  %v450 = vunpack.c.l.b16 %v116
  %v451 = vunpack.c.l.b16 %v117
  %v452 = vunpack.c.l.b16 %v118
  %v453 = vunpack.c.l.b16 %v119
  %v454 = vunpack.c.l.b16 %v120
  %v455 = vunpack.c.l.b16 %v121
  %v456 = vunpack.c.l.b16 %v122
  %v457 = vunpack.c.l.b16 %v123
  %v458 = vunpack.c.l.b16 %v124
  %v459 = vunpack.c.l.b16 %v125
  %v460 = vunpack.c.l.b16 %v126
  %v461 = vunpack.c.l.b16 %v127
  %v462 = vunpack.c.l.b16 %v128
  %v463 = vunpack.c.l.b16 %v129
  %v464 = vunpack.c.l.b16 %v130
  %v465 = vunpack.c.l.b16 %v131
  %v466 = vunpack.c.l.b16 %v132
  %v467 = vunpack.c.l.b16 %v133
  %v468 = vunpack.c.l.b16 %v134
  %v469 = vunpack.c.l.b16 %v135
  %v470 = vunpack.c.l.b16 %v136
  %v471 = vunpack.c.l.b16 %v137
  %v472 = vunpack.c.l.b16 %v138
  %v473 = vunpack.c.l.b16 %v139
  %v474 = vunpack.c.l.b16 %v140
  %v475 = vunpack.c.l.b16 %v141
  %v476 = vunpack.c.l.b16 %v142
  %v477 = vunpack.c.l.b16 %v143
  %v478 = vunpack.c.l.b16 %v144
  %v479 = vunpack.c.l.b16 %v145
  %v480 = vunpack.c.l.b16 %v146
  %v481 = vunpack.c.l.b16 %v147
  %v482 = vunpack.c.l.b16 %v148
  %v483 = vunpack.c.l.b16 %v149
  %v484 = vunpack.c.l.b16 %v150
  %v485 = vunpack.c.l.b16 %v151
  %v486 = vunpack.c.l.b16 %v152
  %v487 = vunpack.c.l.b16 %v153
  %v488 = vunpack.c.l.b16 %v154
  %v489 = vunpack.c.l.b16 %v155
  %v490 = vunpack.c.l.b16 %v156
  %v491 = vunpack.c.l.b16 %v157
  %v492 = vunpack.c.l.b16 %v158
  %v493 = vunpack.c.l.b16 %v159
  %v494 = vunpack.c.l.b16 %v160
  %v495 = vunpack.c.l.b16 %v161
  %v496 = vunpack.c.l.b16 %v162
  %v497 = vunpack.c.l.b16 %v163
  %v498 = vunpack.c.l.b16 %v164
  %v499 = vunpack.c.l.b16 %v165
  %v500 = vunpack.c.l.b16 %v166
  %v501 = vunpack.c.l.b16 %v167
  %v502 = vunpack.c.l.b16 %v168
  %v503 = vunpack.c.l.b16 %v169
  %v504 = vunpack.c.l.b16 %v170
  %v505 = vunpack.c.l.b16 %v171
  %v506 = vunpack.c.l.b16 %v172
  %v507 = vunpack.c.l.b16 %v173
  %v508 = vunpack.c.l.b16 %v174
  %v509 = vunpack.c.l.b16 %v175
  %v510 = vunpack.c.l.b16 %v176
  %v511 = vunpack.c.l.b16 %v177
  %v512 = vunpack.c.l.b16 %v178
  %v513 = vunpack.c.l.b16 %v179
  %v514 = vpack.c.b16 %v371, %v370
  %v515 = vpack.c.b16 %v373, %v372
  %v516 = vpack.c.b16 %v375, %v374
  %v517 = vpack.c.b16 %v377, %v376
  %v518 = vpack.c.b16 %v379, %v378
  %v519 = vpack.c.b16 %v381, %v380
  %v520 = vpack.c.b16 %v383, %v382
  %v521 = vpack.c.b16 %v385, %v384
  %v522 = vpack.c.b16 %v387, %v386
  %v523 = vpack.c.b16 %v389, %v388
  %v524 = vpack.c.b16 %v391, %v390
  %v525 = vpack.c.b16 %v393, %v392
  %v526 = vpack.c.b16 %v395, %v394
  %v527 = vpack.c.b16 %v397, %v396
  %v528 = vpack.c.b16 %v399, %v398
  %v529 = vpack.c.b16 %v401, %v400
  %v530 = vpack.c.b16 %v403, %v402
  %v531 = vpack.c.b16 %v405, %v404
  %v532 = vpack.c.b16 %v407, %v406
  %v533 = vpack.c.b16 %v409, %v408
  %v534 = vpack.c.b16 %v411, %v410
  %v535 = vpack.c.b16 %v413, %v412
  %v536 = vpack.c.b16 %v415, %v414
  %v537 = vpack.c.b16 %v417, %v416
  %v538 = vpack.c.b16 %v419, %v418
  %v539 = vpack.c.b16 %v421, %v420
  %v540 = vpack.c.b16 %v423, %v422
  %v541 = vpack.c.b16 %v425, %v424
  %v542 = vpack.c.b16 %v427, %v426
  %v543 = vpack.c.b16 %v429, %v428
  %v544 = vpack.c.b16 %v431, %v430
  %v545 = vpack.c.b16 %v433, %v432
  %v546 = vpack.c.b16 %v435, %v434
  %v547 = vpack.c.b16 %v437, %v436
  %v548 = vpack.c.b16 %v439, %v438
  %v549 = vpack.c.b16 %v441, %v440
  %v550 = vpack.c.b16 %v443, %v442
  %v551 = vpack.c.b16 %v445, %v444
  %v552 = vpack.c.b16 %v447, %v446
  %v553 = vpack.c.b16 %v449, %v448
  %v554 = vpack.c.b16 %v451, %v450
  %v555 = vpack.c.b16 %v453, %v452
  %v556 = vpack.c.b16 %v455, %v454
  %v557 = vpack.c.b16 %v457, %v456
  %v558 = vpack.c.b16 %v459, %v458
  %v559 = vpack.c.b16 %v461, %v460
  %v560 = vpack.c.b16 %v463, %v462
  %v561 = vpack.c.b16 %v465, %v464
  %v562 = vpack.c.b16 %v467, %v466
  %v563 = vpack.c.b16 %v469, %v468
  %v564 = vpack.c.b16 %v471, %v470
  %v565 = vpack.c.b16 %v473, %v472
  %v566 = vpack.c.b16 %v475, %v474
  %v567 = vpack.c.b16 %v477, %v476
  %v568 = vpack.c.b16 %v479, %v478
  %v569 = vpack.c.b16 %v481, %v480
  %v570 = vpack.c.b16 %v483, %v482
  %v571 = vpack.c.b16 %v485, %v484
  %v572 = vpack.c.b16 %v487, %v486
  %v573 = vpack.c.b16 %v489, %v488
  %v574 = vpack.c.b16 %v491, %v490
  %v575 = vpack.c.b16 %v493, %v492
  %v576 = vpack.c.b16 %v495, %v494
  %v577 = vpack.c.b16 %v497, %v496
  %v578 = vpack.c.b16 %v499, %v498
  %v579 = vpack.c.b16 %v501, %v500
  %v580 = vpack.c.b16 %v503, %v502
  %v581 = vpack.c.b16 %v505, %v504
  %v582 = vpack.c.b16 %v507, %v506
  %v583 = vpack.c.b16 %v509, %v508
  %v584 = vpack.c.b16 %v511, %v510
  %v585 = vpack.c.b16 %v513, %v512
  %658 = vmatprep.subr.bf16.mxu0 0
  %659 = vmatpush1.bf16.msra.mxu0 %v514
  %660 = vmatprep.subr.bf16.mxu0 0
  %661 = vmatpush1.bf16.msra.mxu0 %v515
  %662 = vmatprep.subr.bf16.mxu0 0
  %663 = vmatpush1.bf16.msra.mxu0 %v516
  %664 = vmatprep.subr.bf16.mxu0 0
  %665 = vmatpush1.bf16.msra.mxu0 %v517
  %666 = vmatprep.subr.bf16.mxu0 0
  %667 = vmatpush1.bf16.msra.mxu0 %v518
  %668 = vmatprep.subr.bf16.mxu0 0
  %669 = vmatpush1.bf16.msra.mxu0 %v519
  %670 = vmatprep.subr.bf16.mxu0 0
  %671 = vmatpush1.bf16.msra.mxu0 %v520
  %672 = vmatprep.subr.bf16.mxu0 0
  %673 = vmatpush1.bf16.msra.mxu0 %v521
  %674 = vmatprep.subr.bf16.mxu0 0
  %675 = vmatpush1.bf16.msra.mxu0 %v522
  %676 = vmatprep.subr.bf16.mxu0 0
  %677 = vmatpush1.bf16.msra.mxu0 %v523
  %678 = vmatprep.subr.bf16.mxu0 0
  %679 = vmatpush1.bf16.msra.mxu0 %v524
  %680 = vmatprep.subr.bf16.mxu0 0
  %681 = vmatpush1.bf16.msra.mxu0 %v525
  %682 = vmatprep.subr.bf16.mxu0 0
  %683 = vmatpush1.bf16.msra.mxu0 %v526
  %684 = vmatprep.subr.bf16.mxu0 0
  %685 = vmatpush1.bf16.msra.mxu0 %v527
  %686 = vmatprep.subr.bf16.mxu0 0
  %687 = vmatpush1.bf16.msra.mxu0 %v528
  %688 = vmatprep.subr.bf16.mxu0 0
  %689 = vmatpush1.bf16.msra.mxu0 %v529
  %690 = vmatprep.mubr.bf16.mxu0 %v209
  %691 = vmatmul.mubr.bf16.gmra.mrb[0].mxu0 %v208
  %v692 = vpop.f32.mrb[0].mxu0
  %v693 = vadd.f32 0.0, %v692
  %v694 = vpop.f32.mrb[0].mxu0
  %v695 = vpop.f32.mrb[0].mxu0
  %v696 = vadd.f32 0.0, %v695
  %v697 = vpop.f32.mrb[0].mxu0
  %698 = vdwg.mxu0
  %699 = vmatprep.subr.bf16.mxu0 0
  %700 = vmatpush1.bf16.msra.mxu0 %v530
  %701 = vmatprep.subr.bf16.mxu0 0
  %702 = vmatpush1.bf16.msra.mxu0 %v531
  %703 = vmatprep.subr.bf16.mxu0 0
  %704 = vmatpush1.bf16.msra.mxu0 %v532
  %705 = vmatprep.subr.bf16.mxu0 0
  %706 = vmatpush1.bf16.msra.mxu0 %v533
  %707 = vmatprep.subr.bf16.mxu0 0
  %708 = vmatpush1.bf16.msra.mxu0 %v534
  %709 = vmatprep.subr.bf16.mxu0 0
  %710 = vmatpush1.bf16.msra.mxu0 %v535
  %711 = vmatprep.subr.bf16.mxu0 0
  %712 = vmatpush1.bf16.msra.mxu0 %v536
  %713 = vmatprep.subr.bf16.mxu0 0
  %714 = vmatpush1.bf16.msra.mxu0 %v537
  %715 = vmatprep.subr.bf16.mxu0 0
  %716 = vmatpush1.bf16.msra.mxu0 %v538
  %717 = vmatprep.subr.bf16.mxu0 0
  %718 = vmatpush1.bf16.msra.mxu0 %v539
  %719 = vmatprep.subr.bf16.mxu0 0
  %720 = vmatpush1.bf16.msra.mxu0 %v540
  %721 = vmatprep.subr.bf16.mxu0 0
  %722 = vmatpush1.bf16.msra.mxu0 %v541
  %723 = vmatprep.subr.bf16.mxu0 0
  %724 = vmatpush1.bf16.msra.mxu0 %v542
  %725 = vmatprep.subr.bf16.mxu0 0
  %726 = vmatpush1.bf16.msra.mxu0 %v543
  %727 = vmatprep.subr.bf16.mxu0 0
  %728 = vmatpush1.bf16.msra.mxu0 %v544
  %729 = vmatprep.subr.bf16.mxu0 0
  %730 = vmatpush1.bf16.msra.mxu0 %v545
  %731 = vmatprep.mubr.bf16.mxu0 %v211
  %732 = vmatmul.mubr.bf16.gmra.mrb[0].mxu0 %v210
  %v733 = vpop.f32.mrb[0].mxu0
  %v734 = vadd.f32 %v693, %v733
  %v735 = vpop.f32.mrb[0].mxu0
  %v736 = vpop.f32.mrb[0].mxu0
  %v737 = vadd.f32 %v696, %v736
  %v738 = vpop.f32.mrb[0].mxu0
  %739 = vdwg.mxu0
  %740 = vmatprep.subr.bf16.mxu0 0
  %741 = vmatpush1.bf16.msra.mxu0 %v546
  %742 = vmatprep.subr.bf16.mxu0 0
  %743 = vmatpush1.bf16.msra.mxu0 %v547
  %744 = vmatprep.subr.bf16.mxu0 0
  %745 = vmatpush1.bf16.msra.mxu0 %v548
  %746 = vmatprep.subr.bf16.mxu0 0
  %747 = vmatpush1.bf16.msra.mxu0 %v549
  %748 = vmatprep.subr.bf16.mxu0 0
  %749 = vmatpush1.bf16.msra.mxu0 %v550
  %750 = vmatprep.subr.bf16.mxu0 0
  %751 = vmatpush1.bf16.msra.mxu0 %v551
  %752 = vmatprep.subr.bf16.mxu0 0
  %753 = vmatpush1.bf16.msra.mxu0 %v552
  %754 = vmatprep.subr.bf16.mxu0 0
  %755 = vmatpush1.bf16.msra.mxu0 %v553
  %756 = vmatprep.subr.bf16.mxu0 0
  %757 = vmatpush1.bf16.msra.mxu0 %v554
  %758 = vmatprep.subr.bf16.mxu0 0
  %759 = vmatpush1.bf16.msra.mxu0 %v555
  %760 = vmatprep.subr.bf16.mxu0 0
  %761 = vmatpush1.bf16.msra.mxu0 %v556
  %762 = vmatprep.subr.bf16.mxu0 0
  %763 = vmatpush1.bf16.msra.mxu0 %v557
  %764 = vmatprep.subr.bf16.mxu0 0
  %765 = vmatpush1.bf16.msra.mxu0 %v558
  %766 = vmatprep.subr.bf16.mxu0 0
  %767 = vmatpush1.bf16.msra.mxu0 %v559
  %768 = vmatprep.subr.bf16.mxu0 0
  %769 = vmatpush1.bf16.msra.mxu0 %v560
  %770 = vmatprep.subr.bf16.mxu0 0
  %771 = vmatpush1.bf16.msra.mxu0 %v561
  %772 = vmatprep.mubr.bf16.mxu0 %v213
  %773 = vmatmul.mubr.bf16.gmra.mrb[0].mxu0 %v212
  %v774 = vpop.f32.mrb[0].mxu0
  %v775 = vadd.f32 %v734, %v774
  %v776 = vpop.f32.mrb[0].mxu0
  %v777 = vpop.f32.mrb[0].mxu0
  %v778 = vadd.f32 %v737, %v777
  %v779 = vpop.f32.mrb[0].mxu0
  %780 = vdwg.mxu0
  %781 = vmatprep.subr.bf16.mxu0 0
  %782 = vmatpush1.bf16.msra.mxu0 %v562
  %783 = vmatprep.subr.bf16.mxu0 0
  %784 = vmatpush1.bf16.msra.mxu0 %v563
  %785 = vmatprep.subr.bf16.mxu0 0
  %786 = vmatpush1.bf16.msra.mxu0 %v564
  %787 = vmatprep.subr.bf16.mxu0 0
  %788 = vmatpush1.bf16.msra.mxu0 %v565
  %789 = vmatprep.subr.bf16.mxu0 0
  %790 = vmatpush1.bf16.msra.mxu0 %v566
  %791 = vmatprep.subr.bf16.mxu0 0
  %792 = vmatpush1.bf16.msra.mxu0 %v567
  %793 = vmatprep.subr.bf16.mxu0 0
  %794 = vmatpush1.bf16.msra.mxu0 %v568
  %795 = vmatprep.subr.bf16.mxu0 0
  %796 = vmatpush1.bf16.msra.mxu0 %v569
  %797 = vmatprep.subr.bf16.mxu0 0
  %798 = vmatpush1.bf16.msra.mxu0 %v570
  %799 = vmatprep.subr.bf16.mxu0 0
  %800 = vmatpush1.bf16.msra.mxu0 %v571
  %801 = vmatprep.subr.bf16.mxu0 0
  %802 = vmatpush1.bf16.msra.mxu0 %v572
  %803 = vmatprep.subr.bf16.mxu0 0
  %804 = vmatpush1.bf16.msra.mxu0 %v573
  %805 = vmatprep.subr.bf16.mxu0 0
  %806 = vmatpush1.bf16.msra.mxu0 %v574
  %807 = vmatprep.subr.bf16.mxu0 0
  %808 = vmatpush1.bf16.msra.mxu0 %v575
  %809 = vmatprep.subr.bf16.mxu0 0
  %810 = vmatpush1.bf16.msra.mxu0 %v576
  %811 = vmatprep.subr.bf16.mxu0 0
  %812 = vmatpush1.bf16.msra.mxu0 %v577
  %813 = vmatprep.mubr.bf16.mxu0 %v215
  %814 = vmatmul.mubr.bf16.gmra.mrb[0].mxu0 %v214
  %v815 = vpop.f32.mrb[0].mxu0
  %v816 = vadd.f32 %v775, %v815
  %v817 = vpop.f32.mrb[0].mxu0
  %v818 = vpop.f32.mrb[0].mxu0
  %v819 = vadd.f32 %v778, %v818
  %v820 = vpop.f32.mrb[0].mxu0
  %821 = vdwg.mxu0
  %822 = vmatprep.subr.bf16.mxu0 0
  %823 = vmatpush1.bf16.msra.mxu0 %v578
  %824 = vmatprep.subr.bf16.mxu0 0
  %825 = vmatpush1.bf16.msra.mxu0 %v579
  %826 = vmatprep.subr.bf16.mxu0 0
  %827 = vmatpush1.bf16.msra.mxu0 %v580
  %828 = vmatprep.subr.bf16.mxu0 0
  %829 = vmatpush1.bf16.msra.mxu0 %v581
  %830 = vmatprep.subr.bf16.mxu0 0
  %831 = vmatpush1.bf16.msra.mxu0 %v582
  %832 = vmatprep.subr.bf16.mxu0 0
  %833 = vmatpush1.bf16.msra.mxu0 %v583
  %834 = vmatprep.subr.bf16.mxu0 0
  %835 = vmatpush1.bf16.msra.mxu0 %v584
  %836 = vmatprep.subr.bf16.mxu0 0
  %837 = vmatpush1.bf16.msra.mxu0 %v585
  %838 = vmatprep.subr.bf16.mxu0 0
  %839 = vmatpush1.bf16.msra.mxu0 0
  %840 = vmatprep.subr.bf16.mxu0 0
  %841 = vmatpush1.bf16.msra.mxu0 0
  %842 = vmatprep.subr.bf16.mxu0 0
  %843 = vmatpush1.bf16.msra.mxu0 0
  %844 = vmatprep.subr.bf16.mxu0 0
  %845 = vmatpush1.bf16.msra.mxu0 0
  %846 = vmatprep.subr.bf16.mxu0 0
  %847 = vmatpush1.bf16.msra.mxu0 0
  %848 = vmatprep.subr.bf16.mxu0 0
  %849 = vmatpush1.bf16.msra.mxu0 0
  %850 = vmatprep.subr.bf16.mxu0 0
  %851 = vmatpush1.bf16.msra.mxu0 0
  %852 = vmatprep.subr.bf16.mxu0 0
  %853 = vmatpush1.bf16.msra.mxu0 0
  %854 = vmatprep.mubr.bf16.mxu0 0
  %855 = vmatmul.mubr.bf16.gmra.mrb[0].mxu0 %v216
  %v856 = vpop.f32.mrb[0].mxu0
  %v857 = vadd.f32 %v816, %v856
  %v858 = vpop.f32.mrb[0].mxu0
  %v859 = vpop.f32.mrb[0].mxu0
  %v860 = vadd.f32 %v819, %v859
  %v861 = vpop.f32.mrb[0].mxu0
  %862 = vdwg.mxu0
  %v863 = vadd.f32 %v24, %v857
  %v864 = vadd.f32 %v25, %v860
  %865 = vst [vmem:[#allocation2] sm:$0xff] %v863
  %866 = vst [vmem:[#allocation2 + $0x8] sm:$0xff] %v864
  // Predicated region
  $region22: #{strided_encoder.16} parent=0 // pred_check
    %p867 = pneg %p18
  $region23: #{strided_encoder.16} parent=0 // pred_check_branch
    %869 = sbr.rel (%p867) target = $region25
  $region24: #{strided_encoder.16} parent=0 // pred_region
    %v870 = vld [vmem:[#allocation2] sm:$0xff]
    %v871 = vld [vmem:[#allocation2 + $0x8] sm:$0xff]
    %v872 = vld [vmem:[%s2] sm:$0x1]
    %v874 = vlaneseq
    %v875 = vshrl.u32 %v874, 7
    %v876 = vsub.s32 0, %v875
    %v877 = vrot.slane %v872, %v876
    %v879 = vmul.f32 %v870, %v877
    %v880 = vmul.f32 %v871, %v877
    %v881 = vld [vmem:[%s3] sm:$0x1]
    %v883 = vlaneseq
    %v884 = vshrl.u32 %v883, 7
    %v885 = vsub.s32 0, %v884
    %v886 = vrot.slane %v881, %v885
    %v888 = vadd.f32 %v879, %v886
    %v889 = vadd.f32 %v880, %v886
    %v890 = vmax.f32 %v888, 0.0
    %v891 = vmax.f32 %v889, 0.0
    %v892 = vpack.c.bf16 %v891, %v890
    %v894 = vunpack.c.l.b16 %v892
    %v895 = vunpack.c.h.b16 %v892
    %v896 = vpack.c.b16 %v894, %v894
    %v897 = vpack.c.b16 %v895, %v895
    %900 = vst [vmem:[%s4] sm:$0xf] %v896
    %901 = vst [vmem:[%s4 + $0x4] sm:$0xf] %v897
  $region25: #{strided_encoder.16} parent=0 // pred_fallthru
    _
  // Predicated region
  $region26: #{strided_encoder.16} parent=0 // pred_check
    _
  $region27: #{strided_encoder.16} parent=0 // pred_check_branch
    %903 = sbr.rel (0) target = $region29
  $region28: #{strided_encoder.16} parent=0 // pred_region
    _
  $region29: #{strided_encoder.16} parent=0 // pred_fallthru
    _
  // Predicated region
  $region30: #{strided_encoder.16} parent=0 // pred_check
    _
  $region31: #{strided_encoder.16} parent=0 // pred_check_branch
    %905 = sbr.rel (0) target = $region33
  $region32: #{strided_encoder.16} parent=0 // pred_region
    _
  $region33: #{strided_encoder.16} parent=0 // pred_fallthru
    _

</llo_original>
